<compile_context>
chip_gen: v7x
topology: tpu7x:2x2x1
jax: 0.10.0
libtpu: 0.0.40
codegen_flags: <defaults>
</compile_context>

<pallas_src>
import functools
import math

import jax
import jax.numpy as jnp
from jax.experimental import pallas as pl
from jax.experimental.pallas import tpu as pltpu

LANE = 128
VMEM_LIMIT = 32 * 1024 * 1024  # valid on v5e / v6e / v7x scoped VMEM


def _round_up(x, m):
    return ((x + m - 1) // m) * m


# ----------------------------------------------------------------------------
# Backbone stand-in: patch-conv (FrozenBN folded) -> ReLU -> 1x1 input_proj
# ----------------------------------------------------------------------------
def _backbone_kernel(x_ref, w1_ref, b1_ref, w2_ref, b2_ref, o_ref):
    """x:[tm,Kp] bf16, w1:[Kp,C1] bf16, b1:[1,C1] f32, w2:[C1,C2] bf16,
    b2:[1,C2] f32 -> o:[tm,C2] bf16."""
    h = jnp.dot(x_ref[...], w1_ref[...],
                preferred_element_type=jnp.float32) + b1_ref[...]
    h = jnp.maximum(h, 0.0)                                       # ReLU (stem)
    y = jnp.dot(h.astype(jnp.bfloat16), w2_ref[...],
                preferred_element_type=jnp.float32) + b2_ref[...]
    o_ref[...] = y.astype(o_ref.dtype)


def backbone_input_proj(x_patches, w1, b1, w2, b2, *, block_m=512):
    M, Kp = x_patches.shape
    C1 = w1.shape[1]
    C2 = w2.shape[1]
    tm = min(block_m, _round_up(M, 8))
    Mp = _round_up(M, tm)
    if Mp != M:
        x_patches = jnp.pad(x_patches, ((0, Mp - M), (0, 0)))
    out = pl.pallas_call(
        _backbone_kernel,
        out_shape=jax.ShapeDtypeStruct((Mp, C2), jnp.bfloat16),
        grid=(Mp // tm,),
        in_specs=[
            pl.BlockSpec((tm, Kp), lambda i: (i, 0)),
            pl.BlockSpec((Kp, C1), lambda i: (0, 0)),
            pl.BlockSpec((1, C1), lambda i: (0, 0)),
            pl.BlockSpec((C1, C2), lambda i: (0, 0)),
            pl.BlockSpec((1, C2), lambda i: (0, 0)),
        ],
        out_specs=pl.BlockSpec((tm, C2), lambda i: (i, 0)),
        compiler_params=pltpu.CompilerParams(
            dimension_semantics=("parallel",),
            vmem_limit_bytes=VMEM_LIMIT,
        ),
    )(x_patches, w1, b1, w2, b2)
    return out[:M]


# ----------------------------------------------------------------------------
# Fused decoder stack: ALL layers in one pallas_call, grid = (batch, layers)
# ----------------------------------------------------------------------------
def _decoder_stack_kernel(qpos_ref, mem_ref,
                          wq_ref, bq_ref, wkv_ref, bkv_ref, wo_ref, bo_ref,
                          w1_ref, b1_ref, w2_ref, b2_ref,
                          hs_ref, tgt_acc):
    """One (batch, layer) grid step of single-head cross-attention + FFN.

    qpos:[1,Qp,D] f32, mem:[1,S,D] bf16, weights:[1,...] bf16, biases:[1,1,*] f32.
    tgt is carried across the layer axis in the VMEM scratch `tgt_acc`.
    """
    layer = pl.program_id(1)

    @pl.when(layer == 0)
    def _():
        tgt_acc[...] = jnp.zeros_like(tgt_acc)   # decoder tgt starts at zeros

    D = tgt_acc.shape[-1]
    scale = 1.0 / math.sqrt(D)

    tgt = tgt_acc[...]                                            # [Qp, D] f32
    qin = (tgt + qpos_ref[0]).astype(jnp.bfloat16)
    q = jnp.dot(qin, wq_ref[0], preferred_element_type=jnp.float32) + bq_ref[0]

    # KV projection hoisted to one matmul over the full [S, D] memory block.
    memb = mem_ref[0]                                             # [S, D] bf16
    kv = jnp.dot(memb, wkv_ref[0],
                 preferred_element_type=jnp.float32) + bkv_ref[0]  # [S, 2D]
    k = kv[:, :D].astype(jnp.bfloat16)
    v = kv[:, D:].astype(jnp.bfloat16)

    s = jax.lax.dot_general(q.astype(jnp.bfloat16), k,
                            (((1,), (1,)), ((), ())),
                            preferred_element_type=jnp.float32) * scale   # [Qp, S]
    s = s - jnp.max(s, axis=-1, keepdims=True)
    p = jnp.exp(s)
    p = p * pl.reciprocal(jnp.sum(p, axis=-1, keepdims=True), approx=True)
    attn = jnp.dot(p.astype(jnp.bfloat16), v,
                   preferred_element_type=jnp.float32)             # [Qp, D]

    attn_out = jnp.dot(attn.astype(jnp.bfloat16), wo_ref[0],
                       preferred_element_type=jnp.float32) + bo_ref[0]
    tgt2 = tgt + attn_out                                          # residual

    h = jnp.maximum(jnp.dot(tgt2.astype(jnp.bfloat16), w1_ref[0],
                            preferred_element_type=jnp.float32) + b1_ref[0], 0.0)
    ffn = jnp.dot(h.astype(jnp.bfloat16), w2_ref[0],
                  preferred_element_type=jnp.float32) + b2_ref[0]
    new_tgt = tgt2 + ffn                                           # residual

    tgt_acc[...] = new_tgt
    hs_ref[...] = new_tgt[None, None, :, :].astype(hs_ref.dtype)


def decoder_stack(qpos3, mem3, dec):
    """qpos3:[B,Qp,D] f32, mem3:[B,S,D] bf16, dec: stacked [L,...] weights."""
    B, QP, D = qpos3.shape
    S = mem3.shape[1]
    L = dec["wq"].shape[0]
    F = dec["w1"].shape[-1]

    weight_specs = [
        pl.BlockSpec((1, D, D), lambda b, l: (l, 0, 0)),       # wq
        pl.BlockSpec((1, 1, D), lambda b, l: (l, 0, 0)),       # bq
        pl.BlockSpec((1, D, 2 * D), lambda b, l: (l, 0, 0)),   # wkv
        pl.BlockSpec((1, 1, 2 * D), lambda b, l: (l, 0, 0)),   # bkv
        pl.BlockSpec((1, D, D), lambda b, l: (l, 0, 0)),       # wo
        pl.BlockSpec((1, 1, D), lambda b, l: (l, 0, 0)),       # bo
        pl.BlockSpec((1, D, F), lambda b, l: (l, 0, 0)),       # w1
        pl.BlockSpec((1, 1, F), lambda b, l: (l, 0, 0)),       # b1
        pl.BlockSpec((1, F, D), lambda b, l: (l, 0, 0)),       # w2
        pl.BlockSpec((1, 1, D), lambda b, l: (l, 0, 0)),       # b2
    ]
    return pl.pallas_call(
        _decoder_stack_kernel,
        out_shape=jax.ShapeDtypeStruct((L, B, QP, D), jnp.float32),
        grid=(B, L),
        in_specs=[
            pl.BlockSpec((1, QP, D), lambda b, l: (b, 0, 0)),  # qpos
            pl.BlockSpec((1, S, D), lambda b, l: (b, 0, 0)),   # mem
        ] + weight_specs,
        out_specs=pl.BlockSpec((1, 1, QP, D), lambda b, l: (l, b, 0, 0)),
        scratch_shapes=[pltpu.VMEM((QP, D), jnp.float32)],
        compiler_params=pltpu.CompilerParams(
            dimension_semantics=("parallel", "arbitrary"),
            vmem_limit_bytes=VMEM_LIMIT,
        ),
    )(qpos3, mem3,
      dec["wq"], dec["bq"], dec["wkv"], dec["bkv"], dec["wo"], dec["bo"],
      dec["w1"], dec["b1"], dec["w2"], dec["b2"])


# ----------------------------------------------------------------------------
# Fused prediction heads: class Linear + 3-layer box MLP (+sigmoid)
# Single lane-dense [rows, 128] output slab; rows tiled with a parallel grid.
# ----------------------------------------------------------------------------
def _head_kernel(x_ref, cw_ref, cb_ref, w1_ref, b1_ref, w2_ref, b2_ref,
                 w3_ref, b3_ref, o_ref, *, n_cls):
    xb = x_ref[...].astype(jnp.bfloat16)
    logits = jnp.dot(xb, cw_ref[...],
                     preferred_element_type=jnp.float32) + cb_ref[...]
    h = jnp.maximum(jnp.dot(xb, w1_ref[...],
                            preferred_element_type=jnp.float32) + b1_ref[...], 0.0)
    h = jnp.maximum(jnp.dot(h.astype(jnp.bfloat16), w2_ref[...],
                            preferred_element_type=jnp.float32) + b2_ref[...], 0.0)
    boxes = jax.nn.sigmoid(jnp.dot(h.astype(jnp.bfloat16), w3_ref[...],
                                   preferred_element_type=jnp.float32) + b3_ref[...])
    col = jax.lax.broadcasted_iota(jnp.int32, logits.shape, 1)
    o_ref[...] = jnp.where(col < n_cls, logits, boxes).astype(o_ref.dtype)


def prediction_heads(flat, prep, *, n_cls, block_m=256):
    M, D = flat.shape
    tm = min(block_m, _round_up(M, 8))
    Mp = _round_up(M, tm)
    if Mp != M:
        flat = jnp.pad(flat, ((0, Mp - M), (0, 0)))
    kern = functools.partial(_head_kernel, n_cls=n_cls)
    out = pl.pallas_call(
        kern,
        out_shape=jax.ShapeDtypeStruct((Mp, LANE), jnp.float32),
        grid=(Mp // tm,),
        in_specs=[
            pl.BlockSpec((tm, D), lambda i: (i, 0)),
            pl.BlockSpec(prep["cls_w"].shape, lambda i: (0, 0)),
            pl.BlockSpec(prep["cls_b"].shape, lambda i: (0, 0)),
            pl.BlockSpec(prep["box_w1"].shape, lambda i: (0, 0)),
            pl.BlockSpec(prep["box_b1"].shape, lambda i: (0, 0)),
            pl.BlockSpec(prep["box_w2"].shape, lambda i: (0, 0)),
            pl.BlockSpec(prep["box_b2"].shape, lambda i: (0, 0)),
            pl.BlockSpec(prep["box_w3"].shape, lambda i: (0, 0)),
            pl.BlockSpec(prep["box_b3"].shape, lambda i: (0, 0)),
        ],
        out_specs=pl.BlockSpec((tm, LANE), lambda i: (i, 0)),
        compiler_params=pltpu.CompilerParams(
            dimension_semantics=("parallel",),
            vmem_limit_bytes=VMEM_LIMIT,
        ),
    )(flat, prep["cls_w"], prep["cls_b"],
      prep["box_w1"], prep["box_b1"], prep["box_w2"], prep["box_b2"],
      prep["box_w3"], prep["box_b3"])
    return out[:M]


# ----------------------------------------------------------------------------
# Parameter init (deterministic, synthetic) + prep (fold / stack / pad / cast)
# ----------------------------------------------------------------------------
def init_params(key, num_classes, num_queries, d_model, backbone_c, patch, in_c,
                n_dec_layers):
    ks = iter(jax.random.split(key, 64))
    nrm = lambda shape, s=0.02: (s * jax.random.normal(next(ks), shape)).astype(jnp.float32)
    p = {}
    # backbone stand-in: patchify conv (no bias, like resnet stem) + FrozenBN
    p["patch_w"] = nrm((patch * patch * in_c, backbone_c))
    p["bn_w"] = 1.0 + nrm((backbone_c,), 0.1)
    p["bn_b"] = nrm((backbone_c,), 0.1)
    p["bn_rm"] = nrm((backbone_c,), 0.1)
    p["bn_rv"] = 1.0 + jnp.abs(nrm((backbone_c,), 0.1))
    # input_proj: Conv2d(2048, 256, kernel_size=1) == matmul over channels
    p["proj_w"] = nrm((backbone_c, d_model))
    p["proj_b"] = nrm((d_model,))
    # query_embed: nn.Embedding(num_queries, d_model)
    p["query_embed"] = nrm((num_queries, d_model), 1.0)
    # transformer decoder stand-in
    p["dec"] = []
    for _ in range(n_dec_layers):
        p["dec"].append({
            "wq": nrm((d_model, d_model)), "bq": nrm((d_model,)),
            "wk": nrm((d_model, d_model)), "bk": nrm((d_model,)),
            "wv": nrm((d_model, d_model)), "bv": nrm((d_model,)),
            "wo": nrm((d_model, d_model)), "bo": nrm((d_model,)),
            "ffn_w1": nrm((d_model, 2 * d_model)), "ffn_b1": nrm((2 * d_model,)),
            "ffn_w2": nrm((2 * d_model, d_model)), "ffn_b2": nrm((d_model,)),
        })
    # class_layer: Linear(d_model, num_classes + 1)
    p["cls_w"] = nrm((d_model, num_classes + 1))
    p["cls_b"] = nrm((num_classes + 1,))
    # box_layer: Linear(256,256) ReLU Linear(256,256) ReLU Linear(256,4)
    p["box_w1"] = nrm((256, 256)); p["box_b1"] = nrm((256,))
    p["box_w2"] = nrm((256, 256)); p["box_b2"] = nrm((256,))
    p["box_w3"] = nrm((256, 4));   p["box_b3"] = nrm((4,))
    return p


def prepare_params(p):
    """Fold FrozenBN into the patch conv, stack decoder weights on a layer
    axis, concat K/V, pad queries to a 16-row multiple, pack the class/box
    head outputs into one 128-lane slab, cast matmul weights to bf16."""
    eps = 1e-5
    scale = p["bn_w"] * jax.lax.rsqrt(p["bn_rv"] + eps)            # [C1]
    bb_w1 = (p["patch_w"] * scale[None, :]).astype(jnp.bfloat16)
    bb_b1 = (p["bn_b"] - p["bn_rm"] * scale).reshape(1, -1)

    n_cls = p["cls_w"].shape[1]
    assert n_cls + 4 <= LANE, "class+box columns must fit in one 128-lane slab"

    Q = p["query_embed"].shape[0]
    QP = _round_up(max(Q, 8), 16)                                  # bf16 sublane pack

    prep = {
        "bb_w1": bb_w1, "bb_b1": bb_b1,
        "proj_w": p["proj_w"].astype(jnp.bfloat16),
        "proj_b": p["proj_b"].reshape(1, -1),
        "query_embed_pad": jnp.pad(p["query_embed"], ((0, QP - Q), (0, 0))),
        # class logits in columns [0, n_cls), sigmoid boxes in [n_cls, n_cls+4)
        "cls_w": jnp.pad(p["cls_w"], ((0, 0), (0, LANE - n_cls))).astype(jnp.bfloat16),
        "cls_b": jnp.pad(p["cls_b"], (0, LANE - n_cls)).reshape(1, -1),
        "box_w1": p["box_w1"].astype(jnp.bfloat16), "box_b1": p["box_b1"].reshape(1, -1),
        "box_w2": p["box_w2"].astype(jnp.bfloat16), "box_b2": p["box_b2"].reshape(1, -1),
        "box_w3": jnp.pad(p["box_w3"],
                          ((0, 0), (n_cls, LANE - 4 - n_cls))).astype(jnp.bfloat16),
        "box_b3": jnp.pad(p["box_b3"], (n_cls, LANE - 4 - n_cls)).reshape(1, -1),
    }
    # stacked decoder weights: leading layer axis
    stack = lambda name: jnp.stack([l[name] for l in p["dec"]])
    prep["dec"] = {
        "wq": stack("wq").astype(jnp.bfloat16),
        "bq": jnp.stack([l["bq"].reshape(1, -1) for l in p["dec"]]),
        "wkv": jnp.stack([jnp.concatenate([l["wk"], l["wv"]], axis=1)
                          for l in p["dec"]]).astype(jnp.bfloat16),
        "bkv": jnp.stack([jnp.concatenate([l["bk"], l["bv"]]).reshape(1, -1)
                          for l in p["dec"]]),
        "wo": stack("wo").astype(jnp.bfloat16),
        "bo": jnp.stack([l["bo"].reshape(1, -1) for l in p["dec"]]),
        "w1": stack("ffn_w1").astype(jnp.bfloat16),
        "b1": jnp.stack([l["ffn_b1"].reshape(1, -1) for l in p["dec"]]),
        "w2": stack("ffn_w2").astype(jnp.bfloat16),
        "b2": jnp.stack([l["ffn_b2"].reshape(1, -1) for l in p["dec"]]),
    }
    return prep


# ----------------------------------------------------------------------------
# DETR forward
# ----------------------------------------------------------------------------
def detr_forward(prep, x_nchw, *, patch, d_model, num_queries, num_classes):
    B, C_in, H, W = x_nchw.shape
    Hf, Wf = H // patch, W // patch
    HW = Hf * Wf
    n_cls = num_classes + 1                      # static Python int
    QP = prep["query_embed_pad"].shape[0]        # padded query count (static)

    # ---- backbone stand-in (resnet50 not in reference) -----------------------
    x = jnp.transpose(x_nchw, (0, 2, 3, 1))                        # NCHW -> NHWC
    x = x.reshape(B, Hf, patch, Wf, patch, C_in)
    x = jnp.transpose(x, (0, 1, 3, 2, 4, 5)).reshape(B * HW, patch * patch * C_in)
    x = x.astype(jnp.bfloat16)                                     # bf16 HBM stream

    # fused: patch-matmul (BN folded) + ReLU + 1x1 input_proj -> [B*HW, 256] bf16
    mem = backbone_input_proj(x, prep["bb_w1"], prep["bb_b1"],
                              prep["proj_w"], prep["proj_b"])
    mem3 = mem.reshape(B, HW, d_model)

    # ---- transformer stand-in (DETR Transformer not in reference) ------------
    qpos3 = jnp.broadcast_to(prep["query_embed_pad"][None], (B, QP, d_model))
    hs = decoder_stack(qpos3, mem3, prep["dec"])                   # [L, B, QP, D]
    L = hs.shape[0]

    # ---- fused class head + box MLP (+sigmoid), single lane-dense slab -------
    flat = hs.reshape(L * B * QP, d_model)
    out_slab = prediction_heads(flat, prep, n_cls=n_cls)           # [L*B*QP, 128]
    out4 = out_slab.reshape(L, B, QP, LANE)
    outputs_class = out4[:, :, :num_queries, :n_cls]
    outputs_coord = out4[:, :, :num_queries, n_cls:n_cls + 4]

    out = {"pred_logits": outputs_class[-1], "pred_boxes": outputs_coord[-1]}
    out["aux_outputs"] = [
        {"pred_logits": outputs_class[i], "pred_boxes": outputs_coord[i]}
        for i in range(L - 1)
    ]
    return out


# ----------------------------------------------------------------------------
if __name__ == "__main__":
    # Small but shape-faithful config: d_model / box-MLP widths / backbone
    # channel count are the hard-coded 256 / 2048 from the reference module.
    B, C_in, H, W = 2, 3, 32, 32
    NUM_CLASSES, NUM_QUERIES, D_MODEL = 4, 8, 256
    BACKBONE_C, PATCH, N_DEC_LAYERS = 2048, 16, 2

    key = jax.random.PRNGKey(0)
    pkey, xkey = jax.random.split(key)
    params = init_params(pkey, NUM_CLASSES, NUM_QUERIES, D_MODEL,
                         BACKBONE_C, PATCH, C_in, N_DEC_LAYERS)
    prep = prepare_params(params)
    x = jax.random.normal(xkey, (B, C_in, H, W), dtype=jnp.float32)

    forward = jax.jit(functools.partial(detr_forward, patch=PATCH,
                                        d_model=D_MODEL,
                                        num_queries=NUM_QUERIES,
                                        num_classes=NUM_CLASSES))
    out = forward(prep, x)
    jax.block_until_ready(out["pred_logits"])
    jax.block_until_ready(out["pred_boxes"])
    for aux in out["aux_outputs"]:
        jax.block_until_ready(aux["pred_logits"])

    assert out["pred_logits"].shape == (B, NUM_QUERIES, NUM_CLASSES + 1)
    assert out["pred_boxes"].shape == (B, NUM_QUERIES, 4)
    assert len(out["aux_outputs"]) == N_DEC_LAYERS - 1
    assert bool(jnp.all(jnp.isfinite(out["pred_logits"])))
    assert bool(jnp.all((out["pred_boxes"] >= 0.0) & (out["pred_boxes"] <= 1.0)))
    print("KERNEL_OK")
</pallas_src>

<mosaic_0001>
module attributes {stable_mosaic.version = 11 : i64} {
  func.func @_backbone_kernel(%arg0: i32, %arg1: memref<8x768xbf16, #tpu.memory_space<vmem>>, %arg2: memref<768x2048xbf16, #tpu.memory_space<vmem>>, %arg3: memref<1x2048xf32, #tpu.memory_space<vmem>>, %arg4: memref<2048x256xbf16, #tpu.memory_space<vmem>>, %arg5: memref<1x256xf32, #tpu.memory_space<vmem>>, %arg6: memref<8x256xbf16, #tpu.memory_space<vmem>>) attributes {dimension_semantics = [#tpu.dimension_semantics<parallel>], iteration_bounds = array<i64: 1>, scalar_prefetch = 0 : i64, scratch_operands = 0 : i64, tpu.core_type = #tpu.core_type<tc>, window_params = [{transform_indices = @transform_0, window_bounds = array<i64: 8, 768>}, {pipeline_mode = #tpu.pipeline_mode<synchronous>, transform_indices = @transform_1, window_bounds = array<i64: 768, 2048>}, {pipeline_mode = #tpu.pipeline_mode<synchronous>, transform_indices = @transform_2, window_bounds = array<i64: 1, 2048>}, {pipeline_mode = #tpu.pipeline_mode<synchronous>, transform_indices = @transform_3, window_bounds = array<i64: 2048, 256>}, {pipeline_mode = #tpu.pipeline_mode<synchronous>, transform_indices = @transform_4, window_bounds = array<i64: 1, 256>}, {transform_indices = @transform_5, window_bounds = array<i64: 8, 256>}]} {
    %c0 = arith.constant 0 : index
    %c0_0 = arith.constant 0 : index
    %0 = vector.load %arg1[%c0, %c0_0] : memref<8x768xbf16, #tpu.memory_space<vmem>>, vector<8x768xbf16>
    %c0_1 = arith.constant 0 : index
    %c0_2 = arith.constant 0 : index
    %1 = vector.load %arg2[%c0_1, %c0_2] : memref<768x2048xbf16, #tpu.memory_space<vmem>>, vector<768x2048xbf16>
    %cst = arith.constant dense<0.000000e+00> : vector<8x2048xf32>
    %2 = tpu.matmul %0, %1, %cst {dimension_numbers = #tpu.dot_dimension_numbers<[1], [0], [0], [1], [0, 0, 1, 1], [], []>} : vector<8x768xbf16>, vector<768x2048xbf16>, vector<8x2048xf32> -> vector<8x2048xf32>
    %c0_3 = arith.constant 0 : index
    %c0_4 = arith.constant 0 : index
    %3 = vector.load %arg3[%c0_3, %c0_4] : memref<1x2048xf32, #tpu.memory_space<vmem>>, vector<1x2048xf32>
    %4 = vector.broadcast %3 : vector<1x2048xf32> to vector<8x2048xf32>
    %5 = arith.addf %2, %4 : vector<8x2048xf32>
    %cst_5 = arith.constant 0.000000e+00 : f32
    %6 = vector.broadcast %cst_5 : f32 to vector<8x2048xf32>
    %7 = arith.maximumf %5, %6 : vector<8x2048xf32>
    %8 = arith.truncf %7 : vector<8x2048xf32> to vector<8x2048xbf16>
    %c0_6 = arith.constant 0 : index
    %c0_7 = arith.constant 0 : index
    %9 = vector.load %arg4[%c0_6, %c0_7] : memref<2048x256xbf16, #tpu.memory_space<vmem>>, vector<2048x256xbf16>
    %cst_8 = arith.constant dense<0.000000e+00> : vector<8x256xf32>
    %10 = tpu.matmul %8, %9, %cst_8 {dimension_numbers = #tpu.dot_dimension_numbers<[1], [0], [0], [1], [0, 0, 1, 1], [], []>} : vector<8x2048xbf16>, vector<2048x256xbf16>, vector<8x256xf32> -> vector<8x256xf32>
    %c0_9 = arith.constant 0 : index
    %c0_10 = arith.constant 0 : index
    %11 = vector.load %arg5[%c0_9, %c0_10] : memref<1x256xf32, #tpu.memory_space<vmem>>, vector<1x256xf32>
    %12 = vector.broadcast %11 : vector<1x256xf32> to vector<8x256xf32>
    %13 = arith.addf %10, %12 : vector<8x256xf32>
    %14 = arith.truncf %13 : vector<8x256xf32> to vector<8x256xbf16>
    %c0_11 = arith.constant 0 : index
    %c0_12 = arith.constant 0 : index
    %15 = vector.load %arg6[%c0_11, %c0_12] : memref<8x256xbf16, #tpu.memory_space<vmem>>, vector<8x256xbf16>
    tpu.vector_store %arg6[%c0_11, %c0_12], %14 {strides = array<i32>} : memref<8x256xbf16, #tpu.memory_space<vmem>>, vector<8x256xbf16>,
    return
  }
  func.func @transform_0(%arg0: i32) -> (i32, i32) {
    %c0_i32 = arith.constant 0 : i32
    %c0_i32_0 = arith.constant 0 : i32
    return %arg0, %c0_i32 : i32, i32
  }
  func.func @transform_1(%arg0: i32) -> (i32, i32) {
    %c0_i32 = arith.constant 0 : i32
    %c0_i32_0 = arith.constant 0 : i32
    %c0_i32_1 = arith.constant 0 : i32
    return %c0_i32, %c0_i32_0 : i32, i32
  }
  func.func @transform_2(%arg0: i32) -> (i32, i32) {
    %c0_i32 = arith.constant 0 : i32
    %c0_i32_0 = arith.constant 0 : i32
    %c0_i32_1 = arith.constant 0 : i32
    return %c0_i32, %c0_i32_0 : i32, i32
  }
  func.func @transform_3(%arg0: i32) -> (i32, i32) {
    %c0_i32 = arith.constant 0 : i32
    %c0_i32_0 = arith.constant 0 : i32
    %c0_i32_1 = arith.constant 0 : i32
    return %c0_i32, %c0_i32_0 : i32, i32
  }
  func.func @transform_4(%arg0: i32) -> (i32, i32) {
    %c0_i32 = arith.constant 0 : i32
    %c0_i32_0 = arith.constant 0 : i32
    %c0_i32_1 = arith.constant 0 : i32
    return %c0_i32, %c0_i32_0 : i32, i32
  }
  func.func @transform_5(%arg0: i32) -> (i32, i32) {
    %c0_i32 = arith.constant 0 : i32
    %c0_i32_0 = arith.constant 0 : i32
    return %arg0, %c0_i32 : i32, i32
  }
}

module attributes {stable_mosaic.version = 11 : i64} {
  func.func @_decoder_stack_kernel(%arg0: i32, %arg1: i32, %arg2: memref<1x16x256xf32, #tpu.memory_space<vmem>>, %arg3: memref<1x4x256xbf16, #tpu.memory_space<vmem>>, %arg4: memref<1x256x256xbf16, #tpu.memory_space<vmem>>, %arg5: memref<1x1x256xf32, #tpu.memory_space<vmem>>, %arg6: memref<1x256x512xbf16, #tpu.memory_space<vmem>>, %arg7: memref<1x1x512xf32, #tpu.memory_space<vmem>>, %arg8: memref<1x256x256xbf16, #tpu.memory_space<vmem>>, %arg9: memref<1x1x256xf32, #tpu.memory_space<vmem>>, %arg10: memref<1x256x512xbf16, #tpu.memory_space<vmem>>, %arg11: memref<1x1x512xf32, #tpu.memory_space<vmem>>, %arg12: memref<1x512x256xbf16, #tpu.memory_space<vmem>>, %arg13: memref<1x1x256xf32, #tpu.memory_space<vmem>>, %arg14: memref<1x1x16x256xf32, #tpu.memory_space<vmem>>, %arg15: memref<16x256xf32, #tpu.memory_space<vmem>>) attributes {dimension_semantics = [#tpu.dimension_semantics<parallel>, #tpu.dimension_semantics<arbitrary>], iteration_bounds = array<i64: 2, 2>, scalar_prefetch = 0 : i64, scratch_operands = 1 : i64, tpu.core_type = #tpu.core_type<tc>, window_params = [{transform_indices = @transform_0, window_bounds = array<i64: 1, 16, 256>}, {transform_indices = @transform_1, window_bounds = array<i64: 1, 4, 256>}, {transform_indices = @transform_2, window_bounds = array<i64: 1, 256, 256>}, {transform_indices = @transform_3, window_bounds = array<i64: 1, 1, 256>}, {transform_indices = @transform_4, window_bounds = array<i64: 1, 256, 512>}, {transform_indices = @transform_5, window_bounds = array<i64: 1, 1, 512>}, {transform_indices = @transform_6, window_bounds = array<i64: 1, 256, 256>}, {transform_indices = @transform_7, window_bounds = array<i64: 1, 1, 256>}, {transform_indices = @transform_8, window_bounds = array<i64: 1, 256, 512>}, {transform_indices = @transform_9, window_bounds = array<i64: 1, 1, 512>}, {transform_indices = @transform_10, window_bounds = array<i64: 1, 512, 256>}, {transform_indices = @transform_11, window_bounds = array<i64: 1, 1, 256>}, {transform_indices = @transform_12, window_bounds = array<i64: 1, 1, 16, 256>}]} {
    %c0_i32 = arith.constant 0 : i32
    %0 = arith.cmpi eq, %arg1, %c0_i32 : i32
    %1 = arith.extui %0 : i1 to i32
    %c0_i32_0 = arith.constant 0 : i32
    %2 = arith.cmpi ne, %1, %c0_i32_0 : i32
    scf.if %2 {
      %cst_54 = arith.constant 0.000000e+00 : f32
      %75 = vector.broadcast %cst_54 : f32 to vector<16x256xf32>
      %c0_55 = arith.constant 0 : index
      %c0_56 = arith.constant 0 : index
      %76 = vector.load %arg15[%c0_55, %c0_56] : memref<16x256xf32, #tpu.memory_space<vmem>>, vector<16x256xf32>
      tpu.vector_store %arg15[%c0_55, %c0_56], %75 {strides = array<i32>} : memref<16x256xf32, #tpu.memory_space<vmem>>, vector<16x256xf32>,
    } else {
    }
    %c0 = arith.constant 0 : index
    %c0_1 = arith.constant 0 : index
    %3 = vector.load %arg15[%c0, %c0_1] : memref<16x256xf32, #tpu.memory_space<vmem>>, vector<16x256xf32>
    %c0_2 = arith.constant 0 : index
    %c0_3 = arith.constant 0 : index
    %c0_4 = arith.constant 0 : index
    %4 = vector.load %arg2[%c0_2, %c0_3, %c0_4] : memref<1x16x256xf32, #tpu.memory_space<vmem>>, vector<1x16x256xf32>
    %5 = vector.shape_cast %4 : vector<1x16x256xf32> to vector<16x256xf32>
    %6 = arith.addf %3, %5 : vector<16x256xf32>
    %7 = arith.truncf %6 : vector<16x256xf32> to vector<16x256xbf16>
    %c0_5 = arith.constant 0 : index
    %c0_6 = arith.constant 0 : index
    %c0_7 = arith.constant 0 : index
    %8 = vector.load %arg4[%c0_5, %c0_6, %c0_7] : memref<1x256x256xbf16, #tpu.memory_space<vmem>>, vector<1x256x256xbf16>
    %9 = vector.shape_cast %8 : vector<1x256x256xbf16> to vector<256x256xbf16>
    %cst = arith.constant dense<0.000000e+00> : vector<16x256xf32>
    %10 = tpu.matmul %7, %9, %cst {dimension_numbers = #tpu.dot_dimension_numbers<[1], [0], [0], [1], [0, 0, 1, 1], [], []>} : vector<16x256xbf16>, vector<256x256xbf16>, vector<16x256xf32> -> vector<16x256xf32>
    %c0_8 = arith.constant 0 : index
    %c0_9 = arith.constant 0 : index
    %c0_10 = arith.constant 0 : index
    %11 = vector.load %arg5[%c0_8, %c0_9, %c0_10] : memref<1x1x256xf32, #tpu.memory_space<vmem>>, vector<1x1x256xf32>
    %12 = vector.shape_cast %11 : vector<1x1x256xf32> to vector<1x256xf32>
    %13 = vector.broadcast %12 : vector<1x256xf32> to vector<16x256xf32>
    %14 = arith.addf %10, %13 : vector<16x256xf32>
    %c0_11 = arith.constant 0 : index
    %c0_12 = arith.constant 0 : index
    %c0_13 = arith.constant 0 : index
    %15 = vector.load %arg3[%c0_11, %c0_12, %c0_13] : memref<1x4x256xbf16, #tpu.memory_space<vmem>>, vector<1x4x256xbf16>
    %16 = vector.shape_cast %15 : vector<1x4x256xbf16> to vector<4x256xbf16>
    %c0_14 = arith.constant 0 : index
    %c0_15 = arith.constant 0 : index
    %c0_16 = arith.constant 0 : index
    %17 = vector.load %arg6[%c0_14, %c0_15, %c0_16] : memref<1x256x512xbf16, #tpu.memory_space<vmem>>, vector<1x256x512xbf16>
    %18 = vector.shape_cast %17 : vector<1x256x512xbf16> to vector<256x512xbf16>
    %cst_17 = arith.constant dense<0.000000e+00> : vector<4x512xf32>
    %19 = tpu.matmul %16, %18, %cst_17 {dimension_numbers = #tpu.dot_dimension_numbers<[1], [0], [0], [1], [0, 0, 1, 1], [], []>} : vector<4x256xbf16>, vector<256x512xbf16>, vector<4x512xf32> -> vector<4x512xf32>
    %c0_18 = arith.constant 0 : index
    %c0_19 = arith.constant 0 : index
    %c0_20 = arith.constant 0 : index
    %20 = vector.load %arg7[%c0_18, %c0_19, %c0_20] : memref<1x1x512xf32, #tpu.memory_space<vmem>>, vector<1x1x512xf32>
    %21 = vector.shape_cast %20 : vector<1x1x512xf32> to vector<1x512xf32>
    %22 = vector.broadcast %21 : vector<1x512xf32> to vector<4x512xf32>
    %23 = arith.addf %19, %22 : vector<4x512xf32>
    %24 = vector.extract_strided_slice %23 {offsets = [0, 0], sizes = [4, 256], strides = [1, 1]} : vector<4x512xf32> to vector<4x256xf32>
    %25 = arith.truncf %24 : vector<4x256xf32> to vector<4x256xbf16>
    %26 = vector.extract_strided_slice %23 {offsets = [0, 256], sizes = [4, 256], strides = [1, 1]} : vector<4x512xf32> to vector<4x256xf32>
    %27 = arith.truncf %26 : vector<4x256xf32> to vector<4x256xbf16>
    %28 = arith.truncf %14 : vector<16x256xf32> to vector<16x256xbf16>
    %cst_21 = arith.constant dense<0.000000e+00> : vector<16x4xf32>
    %29 = tpu.matmul %28, %25, %cst_21 {dimension_numbers = #tpu.dot_dimension_numbers<[1], [1], [0], [0], [0, 0, 1, 0], [], []>} : vector<16x256xbf16>, vector<4x256xbf16>, vector<16x4xf32> -> vector<16x4xf32>
    %cst_22 = arith.constant 6.250000e-02 : f32
    %30 = vector.broadcast %cst_22 : f32 to vector<16x4xf32>
    %31 = arith.mulf %29, %30 : vector<16x4xf32>
    %cst_23 = arith.constant dense<0xFF800000> : vector<16xf32>
    %32 = vector.multi_reduction <maximumf>, %31, %cst_23 [1] : vector<16x4xf32> to vector<16xf32>
    %33 = vector.shape_cast %32 : vector<16xf32> to vector<16x1xf32>
    %34 = vector.broadcast %33 : vector<16x1xf32> to vector<16x4xf32>
    %35 = arith.subf %31, %34 : vector<16x4xf32>
    %36 = math.exp %35 : vector<16x4xf32>
    %cst_24 = arith.constant dense<0.000000e+00> : vector<16xf32>
    %37 = vector.multi_reduction <add>, %36, %cst_24 [1] : vector<16x4xf32> to vector<16xf32>
    %38 = vector.shape_cast %37 : vector<16xf32> to vector<16x1xf32>
    %39 = tpu.reciprocal %38 {approx = true} : vector<16x1xf32> -> vector<16x1xf32>
    %40 = vector.broadcast %39 : vector<16x1xf32> to vector<16x4xf32>
    %41 = arith.mulf %36, %40 : vector<16x4xf32>
    %42 = arith.truncf %41 : vector<16x4xf32> to vector<16x4xbf16>
    %cst_25 = arith.constant dense<0.000000e+00> : vector<16x256xf32>
    %43 = tpu.matmul %42, %27, %cst_25 {dimension_numbers = #tpu.dot_dimension_numbers<[1], [0], [0], [1], [0, 0, 1, 1], [], []>} : vector<16x4xbf16>, vector<4x256xbf16>, vector<16x256xf32> -> vector<16x256xf32>
    %44 = arith.truncf %43 : vector<16x256xf32> to vector<16x256xbf16>
    %c0_26 = arith.constant 0 : index
    %c0_27 = arith.constant 0 : index
    %c0_28 = arith.constant 0 : index
    %45 = vector.load %arg8[%c0_26, %c0_27, %c0_28] : memref<1x256x256xbf16, #tpu.memory_space<vmem>>, vector<1x256x256xbf16>
    %46 = vector.shape_cast %45 : vector<1x256x256xbf16> to vector<256x256xbf16>
    %cst_29 = arith.constant dense<0.000000e+00> : vector<16x256xf32>
    %47 = tpu.matmul %44, %46, %cst_29 {dimension_numbers = #tpu.dot_dimension_numbers<[1], [0], [0], [1], [0, 0, 1, 1], [], []>} : vector<16x256xbf16>, vector<256x256xbf16>, vector<16x256xf32> -> vector<16x256xf32>
    %c0_30 = arith.constant 0 : index
    %c0_31 = arith.constant 0 : index
    %c0_32 = arith.constant 0 : index
    %48 = vector.load %arg9[%c0_30, %c0_31, %c0_32] : memref<1x1x256xf32, #tpu.memory_space<vmem>>, vector<1x1x256xf32>
    %49 = vector.shape_cast %48 : vector<1x1x256xf32> to vector<1x256xf32>
    %50 = vector.broadcast %49 : vector<1x256xf32> to vector<16x256xf32>
    %51 = arith.addf %47, %50 : vector<16x256xf32>
    %52 = arith.addf %3, %51 : vector<16x256xf32>
    %53 = arith.truncf %52 : vector<16x256xf32> to vector<16x256xbf16>
    %c0_33 = arith.constant 0 : index
    %c0_34 = arith.constant 0 : index
    %c0_35 = arith.constant 0 : index
    %54 = vector.load %arg10[%c0_33, %c0_34, %c0_35] : memref<1x256x512xbf16, #tpu.memory_space<vmem>>, vector<1x256x512xbf16>
    %55 = vector.shape_cast %54 : vector<1x256x512xbf16> to vector<256x512xbf16>
    %cst_36 = arith.constant dense<0.000000e+00> : vector<16x512xf32>
    %56 = tpu.matmul %53, %55, %cst_36 {dimension_numbers = #tpu.dot_dimension_numbers<[1], [0], [0], [1], [0, 0, 1, 1], [], []>} : vector<16x256xbf16>, vector<256x512xbf16>, vector<16x512xf32> -> vector<16x512xf32>
    %c0_37 = arith.constant 0 : index
    %c0_38 = arith.constant 0 : index
    %c0_39 = arith.constant 0 : index
    %57 = vector.load %arg11[%c0_37, %c0_38, %c0_39] : memref<1x1x512xf32, #tpu.memory_space<vmem>>, vector<1x1x512xf32>
    %58 = vector.shape_cast %57 : vector<1x1x512xf32> to vector<1x512xf32>
    %59 = vector.broadcast %58 : vector<1x512xf32> to vector<16x512xf32>
    %60 = arith.addf %56, %59 : vector<16x512xf32>
    %cst_40 = arith.constant 0.000000e+00 : f32
    %61 = vector.broadcast %cst_40 : f32 to vector<16x512xf32>
    %62 = arith.maximumf %60, %61 : vector<16x512xf32>
    %63 = arith.truncf %62 : vector<16x512xf32> to vector<16x512xbf16>
    %c0_41 = arith.constant 0 : index
    %c0_42 = arith.constant 0 : index
    %c0_43 = arith.constant 0 : index
    %64 = vector.load %arg12[%c0_41, %c0_42, %c0_43] : memref<1x512x256xbf16, #tpu.memory_space<vmem>>, vector<1x512x256xbf16>
    %65 = vector.shape_cast %64 : vector<1x512x256xbf16> to vector<512x256xbf16>
    %cst_44 = arith.constant dense<0.000000e+00> : vector<16x256xf32>
    %66 = tpu.matmul %63, %65, %cst_44 {dimension_numbers = #tpu.dot_dimension_numbers<[1], [0], [0], [1], [0, 0, 1, 1], [], []>} : vector<16x512xbf16>, vector<512x256xbf16>, vector<16x256xf32> -> vector<16x256xf32>
    %c0_45 = arith.constant 0 : index
    %c0_46 = arith.constant 0 : index
    %c0_47 = arith.constant 0 : index
    %67 = vector.load %arg13[%c0_45, %c0_46, %c0_47] : memref<1x1x256xf32, #tpu.memory_space<vmem>>, vector<1x1x256xf32>
    %68 = vector.shape_cast %67 : vector<1x1x256xf32> to vector<1x256xf32>
    %69 = vector.broadcast %68 : vector<1x256xf32> to vector<16x256xf32>
    %70 = arith.addf %66, %69 : vector<16x256xf32>
    %71 = arith.addf %52, %70 : vector<16x256xf32>
    %c0_48 = arith.constant 0 : index
    %c0_49 = arith.constant 0 : index
    %72 = vector.load %arg15[%c0_48, %c0_49] : memref<16x256xf32, #tpu.memory_space<vmem>>, vector<16x256xf32>
    tpu.vector_store %arg15[%c0_48, %c0_49], %71 {strides = array<i32>} : memref<16x256xf32, #tpu.memory_space<vmem>>, vector<16x256xf32>,
    %73 = vector.shape_cast %71 : vector<16x256xf32> to vector<1x1x16x256xf32>
    %c0_50 = arith.constant 0 : index
    %c0_51 = arith.constant 0 : index
    %c0_52 = arith.constant 0 : index
    %c0_53 = arith.constant 0 : index
    %74 = vector.load %arg14[%c0_50, %c0_51, %c0_52, %c0_53] : memref<1x1x16x256xf32, #tpu.memory_space<vmem>>, vector<1x1x16x256xf32>
    tpu.vector_store %arg14[%c0_50, %c0_51, %c0_52, %c0_53], %73 {strides = array<i32>} : memref<1x1x16x256xf32, #tpu.memory_space<vmem>>, vector<1x1x16x256xf32>,
    return
  }
  func.func @transform_0(%arg0: i32, %arg1: i32) -> (i32, i32, i32) {
    %c0_i32 = arith.constant 0 : i32
    %c0_i32_0 = arith.constant 0 : i32
    %c0_i32_1 = arith.constant 0 : i32
    return %arg0, %c0_i32, %c0_i32_0 : i32, i32, i32
  }
  func.func @transform_1(%arg0: i32, %arg1: i32) -> (i32, i32, i32) {
    %c0_i32 = arith.constant 0 : i32
    %c0_i32_0 = arith.constant 0 : i32
    %c0_i32_1 = arith.constant 0 : i32
    return %arg0, %c0_i32, %c0_i32_0 : i32, i32, i32
  }
  func.func @transform_2(%arg0: i32, %arg1: i32) -> (i32, i32, i32) {
    %c0_i32 = arith.constant 0 : i32
    %c0_i32_0 = arith.constant 0 : i32
    %c0_i32_1 = arith.constant 0 : i32
    return %arg1, %c0_i32, %c0_i32_0 : i32, i32, i32
  }
  func.func @transform_3(%arg0: i32, %arg1: i32) -> (i32, i32, i32) {
    %c0_i32 = arith.constant 0 : i32
    %c0_i32_0 = arith.constant 0 : i32
    %c0_i32_1 = arith.constant 0 : i32
    return %arg1, %c0_i32, %c0_i32_0 : i32, i32, i32
  }
  func.func @transform_4(%arg0: i32, %arg1: i32) -> (i32, i32, i32) {
    %c0_i32 = arith.constant 0 : i32
    %c0_i32_0 = arith.constant 0 : i32
    %c0_i32_1 = arith.constant 0 : i32
    return %arg1, %c0_i32, %c0_i32_0 : i32, i32, i32
  }
  func.func @transform_5(%arg0: i32, %arg1: i32) -> (i32, i32, i32) {
    %c0_i32 = arith.constant 0 : i32
    %c0_i32_0 = arith.constant 0 : i32
    %c0_i32_1 = arith.constant 0 : i32
    return %arg1, %c0_i32, %c0_i32_0 : i32, i32, i32
  }
  func.func @transform_6(%arg0: i32, %arg1: i32) -> (i32, i32, i32) {
    %c0_i32 = arith.constant 0 : i32
    %c0_i32_0 = arith.constant 0 : i32
    %c0_i32_1 = arith.constant 0 : i32
    return %arg1, %c0_i32, %c0_i32_0 : i32, i32, i32
  }
  func.func @transform_7(%arg0: i32, %arg1: i32) -> (i32, i32, i32) {
    %c0_i32 = arith.constant 0 : i32
    %c0_i32_0 = arith.constant 0 : i32
    %c0_i32_1 = arith.constant 0 : i32
    return %arg1, %c0_i32, %c0_i32_0 : i32, i32, i32
  }
  func.func @transform_8(%arg0: i32, %arg1: i32) -> (i32, i32, i32) {
    %c0_i32 = arith.constant 0 : i32
    %c0_i32_0 = arith.constant 0 : i32
    %c0_i32_1 = arith.constant 0 : i32
    return %arg1, %c0_i32, %c0_i32_0 : i32, i32, i32
  }
  func.func @transform_9(%arg0: i32, %arg1: i32) -> (i32, i32, i32) {
    %c0_i32 = arith.constant 0 : i32
    %c0_i32_0 = arith.constant 0 : i32
    %c0_i32_1 = arith.constant 0 : i32
    return %arg1, %c0_i32, %c0_i32_0 : i32, i32, i32
  }
  func.func @transform_10(%arg0: i32, %arg1: i32) -> (i32, i32, i32) {
    %c0_i32 = arith.constant 0 : i32
    %c0_i32_0 = arith.constant 0 : i32
    %c0_i32_1 = arith.constant 0 : i32
    return %arg1, %c0_i32, %c0_i32_0 : i32, i32, i32
  }
  func.func @transform_11(%arg0: i32, %arg1: i32) -> (i32, i32, i32) {
    %c0_i32 = arith.constant 0 : i32
    %c0_i32_0 = arith.constant 0 : i32
    %c0_i32_1 = arith.constant 0 : i32
    return %arg1, %c0_i32, %c0_i32_0 : i32, i32, i32
  }
  func.func @transform_12(%arg0: i32, %arg1: i32) -> (i32, i32, i32, i32) {
    %c0_i32 = arith.constant 0 : i32
    %c0_i32_0 = arith.constant 0 : i32
    %c0_i32_1 = arith.constant 0 : i32
    return %arg1, %arg0, %c0_i32, %c0_i32_0 : i32, i32, i32, i32
  }
}

module attributes {stable_mosaic.version = 11 : i64} {
  func.func @_head_kernel(%arg0: i32, %arg1: memref<64x256xf32, #tpu.memory_space<vmem>>, %arg2: memref<256x128xbf16, #tpu.memory_space<vmem>>, %arg3: memref<1x128xf32, #tpu.memory_space<vmem>>, %arg4: memref<256x256xbf16, #tpu.memory_space<vmem>>, %arg5: memref<1x256xf32, #tpu.memory_space<vmem>>, %arg6: memref<256x256xbf16, #tpu.memory_space<vmem>>, %arg7: memref<1x256xf32, #tpu.memory_space<vmem>>, %arg8: memref<256x128xbf16, #tpu.memory_space<vmem>>, %arg9: memref<1x128xf32, #tpu.memory_space<vmem>>, %arg10: memref<64x128xf32, #tpu.memory_space<vmem>>) attributes {dimension_semantics = [#tpu.dimension_semantics<parallel>], iteration_bounds = array<i64: 1>, scalar_prefetch = 0 : i64, scratch_operands = 0 : i64, tpu.core_type = #tpu.core_type<tc>, window_params = [{transform_indices = @transform_0, window_bounds = array<i64: 64, 256>}, {pipeline_mode = #tpu.pipeline_mode<synchronous>, transform_indices = @transform_1, window_bounds = array<i64: 256, 128>}, {pipeline_mode = #tpu.pipeline_mode<synchronous>, transform_indices = @transform_2, window_bounds = array<i64: 1, 128>}, {pipeline_mode = #tpu.pipeline_mode<synchronous>, transform_indices = @transform_3, window_bounds = array<i64: 256, 256>}, {pipeline_mode = #tpu.pipeline_mode<synchronous>, transform_indices = @transform_4, window_bounds = array<i64: 1, 256>}, {pipeline_mode = #tpu.pipeline_mode<synchronous>, transform_indices = @transform_5, window_bounds = array<i64: 256, 256>}, {pipeline_mode = #tpu.pipeline_mode<synchronous>, transform_indices = @transform_6, window_bounds = array<i64: 1, 256>}, {pipeline_mode = #tpu.pipeline_mode<synchronous>, transform_indices = @transform_7, window_bounds = array<i64: 256, 128>}, {pipeline_mode = #tpu.pipeline_mode<synchronous>, transform_indices = @transform_8, window_bounds = array<i64: 1, 128>}, {transform_indices = @transform_9, window_bounds = array<i64: 64, 128>}]} {
    %c0 = arith.constant 0 : index
    %c0_0 = arith.constant 0 : index
    %0 = vector.load %arg1[%c0, %c0_0] : memref<64x256xf32, #tpu.memory_space<vmem>>, vector<64x256xf32>
    %1 = arith.truncf %0 : vector<64x256xf32> to vector<64x256xbf16>
    %c0_1 = arith.constant 0 : index
    %c0_2 = arith.constant 0 : index
    %2 = vector.load %arg2[%c0_1, %c0_2] : memref<256x128xbf16, #tpu.memory_space<vmem>>, vector<256x128xbf16>
    %cst = arith.constant dense<0.000000e+00> : vector<64x128xf32>
    %3 = tpu.matmul %1, %2, %cst {dimension_numbers = #tpu.dot_dimension_numbers<[1], [0], [0], [1], [0, 0, 1, 1], [], []>} : vector<64x256xbf16>, vector<256x128xbf16>, vector<64x128xf32> -> vector<64x128xf32>
    %c0_3 = arith.constant 0 : index
    %c0_4 = arith.constant 0 : index
    %4 = vector.load %arg3[%c0_3, %c0_4] : memref<1x128xf32, #tpu.memory_space<vmem>>, vector<1x128xf32>
    %5 = vector.broadcast %4 : vector<1x128xf32> to vector<64x128xf32>
    %6 = arith.addf %3, %5 : vector<64x128xf32>
    %c0_5 = arith.constant 0 : index
    %c0_6 = arith.constant 0 : index
    %7 = vector.load %arg4[%c0_5, %c0_6] : memref<256x256xbf16, #tpu.memory_space<vmem>>, vector<256x256xbf16>
    %cst_7 = arith.constant dense<0.000000e+00> : vector<64x256xf32>
    %8 = tpu.matmul %1, %7, %cst_7 {dimension_numbers = #tpu.dot_dimension_numbers<[1], [0], [0], [1], [0, 0, 1, 1], [], []>} : vector<64x256xbf16>, vector<256x256xbf16>, vector<64x256xf32> -> vector<64x256xf32>
    %c0_8 = arith.constant 0 : index
    %c0_9 = arith.constant 0 : index
    %9 = vector.load %arg5[%c0_8, %c0_9] : memref<1x256xf32, #tpu.memory_space<vmem>>, vector<1x256xf32>
    %10 = vector.broadcast %9 : vector<1x256xf32> to vector<64x256xf32>
    %11 = arith.addf %8, %10 : vector<64x256xf32>
    %cst_10 = arith.constant 0.000000e+00 : f32
    %12 = vector.broadcast %cst_10 : f32 to vector<64x256xf32>
    %13 = arith.maximumf %11, %12 : vector<64x256xf32>
    %14 = arith.truncf %13 : vector<64x256xf32> to vector<64x256xbf16>
    %c0_11 = arith.constant 0 : index
    %c0_12 = arith.constant 0 : index
    %15 = vector.load %arg6[%c0_11, %c0_12] : memref<256x256xbf16, #tpu.memory_space<vmem>>, vector<256x256xbf16>
    %cst_13 = arith.constant dense<0.000000e+00> : vector<64x256xf32>
    %16 = tpu.matmul %14, %15, %cst_13 {dimension_numbers = #tpu.dot_dimension_numbers<[1], [0], [0], [1], [0, 0, 1, 1], [], []>} : vector<64x256xbf16>, vector<256x256xbf16>, vector<64x256xf32> -> vector<64x256xf32>
    %c0_14 = arith.constant 0 : index
    %c0_15 = arith.constant 0 : index
    %17 = vector.load %arg7[%c0_14, %c0_15] : memref<1x256xf32, #tpu.memory_space<vmem>>, vector<1x256xf32>
    %18 = vector.broadcast %17 : vector<1x256xf32> to vector<64x256xf32>
    %19 = arith.addf %16, %18 : vector<64x256xf32>
    %cst_16 = arith.constant 0.000000e+00 : f32
    %20 = vector.broadcast %cst_16 : f32 to vector<64x256xf32>
    %21 = arith.maximumf %19, %20 : vector<64x256xf32>
    %22 = arith.truncf %21 : vector<64x256xf32> to vector<64x256xbf16>
    %c0_17 = arith.constant 0 : index
    %c0_18 = arith.constant 0 : index
    %23 = vector.load %arg8[%c0_17, %c0_18] : memref<256x128xbf16, #tpu.memory_space<vmem>>, vector<256x128xbf16>
    %cst_19 = arith.constant dense<0.000000e+00> : vector<64x128xf32>
    %24 = tpu.matmul %22, %23, %cst_19 {dimension_numbers = #tpu.dot_dimension_numbers<[1], [0], [0], [1], [0, 0, 1, 1], [], []>} : vector<64x256xbf16>, vector<256x128xbf16>, vector<64x128xf32> -> vector<64x128xf32>
    %c0_20 = arith.constant 0 : index
    %c0_21 = arith.constant 0 : index
    %25 = vector.load %arg9[%c0_20, %c0_21] : memref<1x128xf32, #tpu.memory_space<vmem>>, vector<1x128xf32>
    %26 = vector.broadcast %25 : vector<1x128xf32> to vector<64x128xf32>
    %27 = arith.addf %24, %26 : vector<64x128xf32>
    %28 = arith.negf %27 : vector<64x128xf32>
    %29 = math.exp %28 : vector<64x128xf32>
    %cst_22 = arith.constant 1.000000e+00 : f32
    %30 = vector.broadcast %cst_22 : f32 to vector<64x128xf32>
    %31 = arith.addf %30, %29 : vector<64x128xf32>
    %32 = arith.divf %30, %31 : vector<64x128xf32>
    %33 = tpu.iota {dimensions = array<i32: 1>} : vector<64x128xi32>
    %c5_i32 = arith.constant 5 : i32
    %34 = vector.broadcast %c5_i32 : i32 to vector<64x128xi32>
    %35 = arith.cmpi slt, %33, %34 : vector<64x128xi32>
    %36 = arith.select %35, %6, %32 : vector<64x128xi1>, vector<64x128xf32>
    %c0_23 = arith.constant 0 : index
    %c0_24 = arith.constant 0 : index
    %37 = vector.load %arg10[%c0_23, %c0_24] : memref<64x128xf32, #tpu.memory_space<vmem>>, vector<64x128xf32>
    tpu.vector_store %arg10[%c0_23, %c0_24], %36 {strides = array<i32>} : memref<64x128xf32, #tpu.memory_space<vmem>>, vector<64x128xf32>,
    return
  }
  func.func @transform_0(%arg0: i32) -> (i32, i32) {
    %c0_i32 = arith.constant 0 : i32
    %c0_i32_0 = arith.constant 0 : i32
    return %arg0, %c0_i32 : i32, i32
  }
  func.func @transform_1(%arg0: i32) -> (i32, i32) {
    %c0_i32 = arith.constant 0 : i32
    %c0_i32_0 = arith.constant 0 : i32
    %c0_i32_1 = arith.constant 0 : i32
    return %c0_i32, %c0_i32_0 : i32, i32
  }
  func.func @transform_2(%arg0: i32) -> (i32, i32) {
    %c0_i32 = arith.constant 0 : i32
    %c0_i32_0 = arith.constant 0 : i32
    %c0_i32_1 = arith.constant 0 : i32
    return %c0_i32, %c0_i32_0 : i32, i32
  }
  func.func @transform_3(%arg0: i32) -> (i32, i32) {
    %c0_i32 = arith.constant 0 : i32
    %c0_i32_0 = arith.constant 0 : i32
    %c0_i32_1 = arith.constant 0 : i32
    return %c0_i32, %c0_i32_0 : i32, i32
  }
  func.func @transform_4(%arg0: i32) -> (i32, i32) {
    %c0_i32 = arith.constant 0 : i32
    %c0_i32_0 = arith.constant 0 : i32
    %c0_i32_1 = arith.constant 0 : i32
    return %c0_i32, %c0_i32_0 : i32, i32
  }
  func.func @transform_5(%arg0: i32) -> (i32, i32) {
    %c0_i32 = arith.constant 0 : i32
    %c0_i32_0 = arith.constant 0 : i32
    %c0_i32_1 = arith.constant 0 : i32
    return %c0_i32, %c0_i32_0 : i32, i32
  }
  func.func @transform_6(%arg0: i32) -> (i32, i32) {
    %c0_i32 = arith.constant 0 : i32
    %c0_i32_0 = arith.constant 0 : i32
    %c0_i32_1 = arith.constant 0 : i32
    return %c0_i32, %c0_i32_0 : i32, i32
  }
  func.func @transform_7(%arg0: i32) -> (i32, i32) {
    %c0_i32 = arith.constant 0 : i32
    %c0_i32_0 = arith.constant 0 : i32
    %c0_i32_1 = arith.constant 0 : i32
    return %c0_i32, %c0_i32_0 : i32, i32
  }
  func.func @transform_8(%arg0: i32) -> (i32, i32) {
    %c0_i32 = arith.constant 0 : i32
    %c0_i32_0 = arith.constant 0 : i32
    %c0_i32_1 = arith.constant 0 : i32
    return %c0_i32, %c0_i32_0 : i32, i32
  }
  func.func @transform_9(%arg0: i32) -> (i32, i32) {
    %c0_i32 = arith.constant 0 : i32
    %c0_i32_0 = arith.constant 0 : i32
    return %arg0, %c0_i32 : i32, i32
  }
}

</mosaic_0001>

<llo_original>
// kernel: detr_forward.5
$region0: #{detr_forward.5}
  #allocation0 [shape = 'u32[]', space=smem, size = 0x4, offset = 0x4, fixed_abs, tag = 'smem constant byte address 0x4 - core index']
  #allocation1 [shape = 'u32[144,128]{1,0:T(1,128)}', space=vmem, size = 0x12000, scoped, tag = 'internal scratch']
  %s0 = inlined_call_operand.vmem [shape: f32[64,256], index: 0, kind: input, shape index: {}]
  %s1 = inlined_call_operand.vmem [shape: bf16[256,128], index: 1, kind: input, shape index: {}]
  %s2 = inlined_call_operand.vmem [shape: f32[1,128], index: 2, kind: input, shape index: {}]
  %s3 = inlined_call_operand.vmem [shape: bf16[256,256], index: 3, kind: input, shape index: {}]
  %s4 = inlined_call_operand.vmem [shape: f32[1,256], index: 4, kind: input, shape index: {}]
  %s5 = inlined_call_operand.vmem [shape: bf16[256,256], index: 5, kind: input, shape index: {}]
  %s6 = inlined_call_operand.vmem [shape: f32[1,256], index: 6, kind: input, shape index: {}]
  %s7 = inlined_call_operand.vmem [shape: bf16[256,128], index: 7, kind: input, shape index: {}]
  %s8 = inlined_call_operand.vmem [shape: f32[1,128], index: 8, kind: input, shape index: {}]
  %s9 = inlined_call_operand.vmem [shape: f32[64,128], index: 9, kind: output, shape index: {}]
  %s10 = sld [smem:[#allocation0]]
  $region46: #{detr_forward.5} parent=0
    _
  %s12 = ssub.s32 1, %s10
  %s13 = scalar_select 0, %s12, %s10
  // Predicated region
  $region2: #{detr_forward.5} parent=0 // pred_check
    _
  $region3: #{detr_forward.5} parent=0 // pred_check_branch
    %15 = sbr.rel (0) target = $region5
  $region4: #{detr_forward.5} parent=0 // pred_region
    _
  $region5: #{detr_forward.5} parent=0 // pred_fallthru
    _
  // Predicated region
  $region6: #{detr_forward.5} parent=0 // pred_check
    _
  $region7: #{detr_forward.5} parent=0 // pred_check_branch
    %17 = sbr.rel (0) target = $region9
  $region8: #{detr_forward.5} parent=0 // pred_region
    _
  $region9: #{detr_forward.5} parent=0 // pred_fallthru
    _
  // Predicated region
  $region10: #{detr_forward.5} parent=0 // pred_check
    _
  $region11: #{detr_forward.5} parent=0 // pred_check_branch
    %19 = sbr.rel (0) target = $region13
  $region12: #{detr_forward.5} parent=0 // pred_region
    _
  $region13: #{detr_forward.5} parent=0 // pred_fallthru
    _
  // Predicated region
  $region14: #{detr_forward.5} parent=0 // pred_check
    _
  $region15: #{detr_forward.5} parent=0 // pred_check_branch
    %21 = sbr.rel (0) target = $region17
  $region16: #{detr_forward.5} parent=0 // pred_region
    _
  $region17: #{detr_forward.5} parent=0 // pred_fallthru
    _
  // Predicated region
  $region18: #{detr_forward.5} parent=0 // pred_check
    _
  $region19: #{detr_forward.5} parent=0 // pred_check_branch
    %23 = sbr.rel (0) target = $region21
  $region20: #{detr_forward.5} parent=0 // pred_region
    _
  $region21: #{detr_forward.5} parent=0 // pred_fallthru
    _
  // Predicated region
  $region22: #{detr_forward.5} parent=0 // pred_check
    _
  $region23: #{detr_forward.5} parent=0 // pred_check_branch
    %25 = sbr.rel (0) target = $region25
  $region24: #{detr_forward.5} parent=0 // pred_region
    _
  $region25: #{detr_forward.5} parent=0 // pred_fallthru
    _
  // Predicated region
  $region26: #{detr_forward.5} parent=0 // pred_check
    _
  $region27: #{detr_forward.5} parent=0 // pred_check_branch
    %27 = sbr.rel (0) target = $region29
  $region28: #{detr_forward.5} parent=0 // pred_region
    _
  $region29: #{detr_forward.5} parent=0 // pred_fallthru
    _
  // Predicated region
  $region30: #{detr_forward.5} parent=0 // pred_check
    _
  $region31: #{detr_forward.5} parent=0 // pred_check_branch
    %29 = sbr.rel (0) target = $region33
  $region32: #{detr_forward.5} parent=0 // pred_region
    _
  $region33: #{detr_forward.5} parent=0 // pred_fallthru
    _
  // Predicated region
  $region34: #{detr_forward.5} parent=0 // pred_check
    _
  $region35: #{detr_forward.5} parent=0 // pred_check_branch
    %31 = sbr.rel (0) target = $region37
  $region36: #{detr_forward.5} parent=0 // pred_region
    _
  $region37: #{detr_forward.5} parent=0 // pred_fallthru
    _
  %v33 = vld [vmem:[%s0] sm:$0xff]
  %v34 = vld [vmem:[%s0 + $0x8] sm:$0xff]
  %v35 = vld [vmem:[%s0 + $0x10] sm:$0xff]
  %v36 = vld [vmem:[%s0 + $0x18] sm:$0xff]
  %v37 = vld [vmem:[%s0 + $0x20] sm:$0xff]
  %v38 = vld [vmem:[%s0 + $0x28] sm:$0xff]
  %v39 = vld [vmem:[%s0 + $0x30] sm:$0xff]
  %v40 = vld [vmem:[%s0 + $0x38] sm:$0xff]
  %v41 = vld [vmem:[%s0 + $0x40] sm:$0xff]
  %v42 = vld [vmem:[%s0 + $0x48] sm:$0xff]
  %v43 = vld [vmem:[%s0 + $0x50] sm:$0xff]
  %v44 = vld [vmem:[%s0 + $0x58] sm:$0xff]
  %v45 = vld [vmem:[%s0 + $0x60] sm:$0xff]
  %v46 = vld [vmem:[%s0 + $0x68] sm:$0xff]
  %v47 = vld [vmem:[%s0 + $0x70] sm:$0xff]
  %v48 = vld [vmem:[%s0 + $0x78] sm:$0xff]
  %v49 = vpack.c.bf16 %v35, %v33
  %v50 = vpack.c.bf16 %v36, %v34
  %v51 = vpack.c.bf16 %v39, %v37
  %v52 = vpack.c.bf16 %v40, %v38
  %v53 = vpack.c.bf16 %v43, %v41
  %v54 = vpack.c.bf16 %v44, %v42
  %v55 = vpack.c.bf16 %v47, %v45
  %v56 = vpack.c.bf16 %v48, %v46
  %v57 = vld [vmem:[%s1] sm:$0xf]
  %v58 = vld [vmem:[%s1 + $0x4] sm:$0xf]
  %v59 = vld [vmem:[%s1 + $0x8] sm:$0xf]
  %v60 = vld [vmem:[%s1 + $0xc] sm:$0xf]
  %v61 = vld [vmem:[%s1 + $0x10] sm:$0xf]
  %v62 = vld [vmem:[%s1 + $0x14] sm:$0xf]
  %v63 = vld [vmem:[%s1 + $0x18] sm:$0xf]
  %v64 = vld [vmem:[%s1 + $0x1c] sm:$0xf]
  %v65 = vld [vmem:[%s1 + $0x20] sm:$0xf]
  %v66 = vld [vmem:[%s1 + $0x24] sm:$0xf]
  %v67 = vld [vmem:[%s1 + $0x28] sm:$0xf]
  %v68 = vld [vmem:[%s1 + $0x2c] sm:$0xf]
  %v69 = vld [vmem:[%s1 + $0x30] sm:$0xf]
  %v70 = vld [vmem:[%s1 + $0x34] sm:$0xf]
  %v71 = vld [vmem:[%s1 + $0x38] sm:$0xf]
  %v72 = vld [vmem:[%s1 + $0x3c] sm:$0xf]
  %v73 = vld [vmem:[%s1 + $0x40] sm:$0xf]
  %v74 = vld [vmem:[%s1 + $0x44] sm:$0xf]
  %v75 = vld [vmem:[%s1 + $0x48] sm:$0xf]
  %v76 = vld [vmem:[%s1 + $0x4c] sm:$0xf]
  %v77 = vld [vmem:[%s1 + $0x50] sm:$0xf]
  %v78 = vld [vmem:[%s1 + $0x54] sm:$0xf]
  %v79 = vld [vmem:[%s1 + $0x58] sm:$0xf]
  %v80 = vld [vmem:[%s1 + $0x5c] sm:$0xf]
  %v81 = vld [vmem:[%s1 + $0x60] sm:$0xf]
  %v82 = vld [vmem:[%s1 + $0x64] sm:$0xf]
  %v83 = vld [vmem:[%s1 + $0x68] sm:$0xf]
  %v84 = vld [vmem:[%s1 + $0x6c] sm:$0xf]
  %v85 = vld [vmem:[%s1 + $0x70] sm:$0xf]
  %v86 = vld [vmem:[%s1 + $0x74] sm:$0xf]
  %v87 = vld [vmem:[%s1 + $0x78] sm:$0xf]
  %v88 = vld [vmem:[%s1 + $0x7c] sm:$0xf]
  %v89 = vld [vmem:[%s2] sm:$0x1]
  %v91 = vlaneseq
  %v92 = vshrl.u32 %v91, 7
  %v93 = vsub.s32 0, %v92
  %v94 = vrot.slane %v89, %v93
  %v128 = vunpack.c.l.b16 %v57
  %v129 = vunpack.c.l.b16 %v58
  %v130 = vunpack.c.l.b16 %v59
  %v131 = vunpack.c.l.b16 %v60
  %v132 = vunpack.c.l.b16 %v61
  %v133 = vunpack.c.l.b16 %v62
  %v134 = vunpack.c.l.b16 %v63
  %v135 = vunpack.c.l.b16 %v64
  %v136 = vunpack.c.l.b16 %v65
  %v137 = vunpack.c.l.b16 %v66
  %v138 = vunpack.c.l.b16 %v67
  %v139 = vunpack.c.l.b16 %v68
  %v140 = vunpack.c.l.b16 %v69
  %v141 = vunpack.c.l.b16 %v70
  %v142 = vunpack.c.l.b16 %v71
  %v143 = vunpack.c.l.b16 %v72
  %v144 = vunpack.c.l.b16 %v73
  %v145 = vunpack.c.l.b16 %v74
  %v146 = vunpack.c.l.b16 %v75
  %v147 = vunpack.c.l.b16 %v76
  %v148 = vunpack.c.l.b16 %v77
  %v149 = vunpack.c.l.b16 %v78
  %v150 = vunpack.c.l.b16 %v79
  %v151 = vunpack.c.l.b16 %v80
  %v152 = vunpack.c.l.b16 %v81
  %v153 = vunpack.c.l.b16 %v82
  %v154 = vunpack.c.l.b16 %v83
  %v155 = vunpack.c.l.b16 %v84
  %v156 = vunpack.c.l.b16 %v85
  %v157 = vunpack.c.l.b16 %v86
  %v158 = vunpack.c.l.b16 %v87
  %v159 = vunpack.c.l.b16 %v88
  %v160 = vpack.c.b16 %v129, %v128
  %v161 = vpack.c.b16 %v131, %v130
  %v162 = vpack.c.b16 %v133, %v132
  %v163 = vpack.c.b16 %v135, %v134
  %v164 = vpack.c.b16 %v137, %v136
  %v165 = vpack.c.b16 %v139, %v138
  %v166 = vpack.c.b16 %v141, %v140
  %v167 = vpack.c.b16 %v143, %v142
  %v168 = vpack.c.b16 %v145, %v144
  %v169 = vpack.c.b16 %v147, %v146
  %v170 = vpack.c.b16 %v149, %v148
  %v171 = vpack.c.b16 %v151, %v150
  %v172 = vpack.c.b16 %v153, %v152
  %v173 = vpack.c.b16 %v155, %v154
  %v174 = vpack.c.b16 %v157, %v156
  %v175 = vpack.c.b16 %v159, %v158
  %192 = vmatprep.subr.bf16.mxu0 0
  %193 = vmatpush1.bf16.msra.mxu0 %v160
  %194 = vmatprep.subr.bf16.mxu0 0
  %195 = vmatpush1.bf16.msra.mxu0 %v161
  %196 = vmatprep.subr.bf16.mxu0 0
  %197 = vmatpush1.bf16.msra.mxu0 %v162
  %198 = vmatprep.subr.bf16.mxu0 0
  %199 = vmatpush1.bf16.msra.mxu0 %v163
  %200 = vmatprep.subr.bf16.mxu0 0
  %201 = vmatpush1.bf16.msra.mxu0 %v164
  %202 = vmatprep.subr.bf16.mxu0 0
  %203 = vmatpush1.bf16.msra.mxu0 %v165
  %204 = vmatprep.subr.bf16.mxu0 0
  %205 = vmatpush1.bf16.msra.mxu0 %v166
  %206 = vmatprep.subr.bf16.mxu0 0
  %207 = vmatpush1.bf16.msra.mxu0 %v167
  %208 = vmatprep.subr.bf16.mxu0 0
  %209 = vmatpush1.bf16.msra.mxu0 %v168
  %210 = vmatprep.subr.bf16.mxu0 0
  %211 = vmatpush1.bf16.msra.mxu0 %v169
  %212 = vmatprep.subr.bf16.mxu0 0
  %213 = vmatpush1.bf16.msra.mxu0 %v170
  %214 = vmatprep.subr.bf16.mxu0 0
  %215 = vmatpush1.bf16.msra.mxu0 %v171
  %216 = vmatprep.subr.bf16.mxu0 0
  %217 = vmatpush1.bf16.msra.mxu0 %v172
  %218 = vmatprep.subr.bf16.mxu0 0
  %219 = vmatpush1.bf16.msra.mxu0 %v173
  %220 = vmatprep.subr.bf16.mxu0 0
  %221 = vmatpush1.bf16.msra.mxu0 %v174
  %222 = vmatprep.subr.bf16.mxu0 0
  %223 = vmatpush1.bf16.msra.mxu0 %v175
  %224 = vmatprep.mubr.bf16.mxu0 %v50
  %225 = vmatmul.mubr.bf16.gmra.mrb[0].mxu0 %v49
  %v226 = vpop.f32.mrb[0].mxu0
  %v227 = vadd.f32 %v94, %v226
  %v228 = vpop.f32.mrb[0].mxu0
  %v229 = vpop.f32.mrb[0].mxu0
  %v230 = vadd.f32 %v94, %v229
  %v231 = vpop.f32.mrb[0].mxu0
  %232 = vmatprep.mubr.bf16.mxu0 %v52
  %233 = vmatmul.mubr.bf16.gmra.mrb[0].mxu0 %v51
  %v234 = vpop.f32.mrb[0].mxu0
  %v235 = vadd.f32 %v94, %v234
  %v236 = vpop.f32.mrb[0].mxu0
  %v237 = vpop.f32.mrb[0].mxu0
  %v238 = vadd.f32 %v94, %v237
  %v239 = vpop.f32.mrb[0].mxu0
  %240 = vmatprep.mubr.bf16.mxu0 %v54
  %241 = vmatmul.mubr.bf16.gmra.mrb[0].mxu0 %v53
  %v242 = vpop.f32.mrb[0].mxu0
  %v243 = vadd.f32 %v94, %v242
  %v244 = vpop.f32.mrb[0].mxu0
  %v245 = vpop.f32.mrb[0].mxu0
  %v246 = vadd.f32 %v94, %v245
  %v247 = vpop.f32.mrb[0].mxu0
  %248 = vmatprep.mubr.bf16.mxu0 %v56
  %249 = vmatmul.mubr.bf16.gmra.mrb[0].mxu0 %v55
  %v250 = vpop.f32.mrb[0].mxu0
  %v251 = vadd.f32 %v94, %v250
  %v252 = vpop.f32.mrb[0].mxu0
  %v253 = vpop.f32.mrb[0].mxu0
  %v254 = vadd.f32 %v94, %v253
  %v255 = vpop.f32.mrb[0].mxu0
  %256 = vdwg.mxu0
  %v257 = vld [vmem:[%s3] sm:$0xff]
  %v258 = vld [vmem:[%s3 + $0x8] sm:$0xff]
  %v259 = vld [vmem:[%s3 + $0x10] sm:$0xff]
  %v260 = vld [vmem:[%s3 + $0x18] sm:$0xff]
  %v261 = vld [vmem:[%s3 + $0x20] sm:$0xff]
  %v262 = vld [vmem:[%s3 + $0x28] sm:$0xff]
  %v263 = vld [vmem:[%s3 + $0x30] sm:$0xff]
  %v264 = vld [vmem:[%s3 + $0x38] sm:$0xff]
  %v265 = vld [vmem:[%s3 + $0x40] sm:$0xff]
  %v266 = vld [vmem:[%s3 + $0x48] sm:$0xff]
  %v267 = vld [vmem:[%s3 + $0x50] sm:$0xff]
  %v268 = vld [vmem:[%s3 + $0x58] sm:$0xff]
  %v269 = vld [vmem:[%s3 + $0x60] sm:$0xff]
  %v270 = vld [vmem:[%s3 + $0x68] sm:$0xff]
  %v271 = vld [vmem:[%s3 + $0x70] sm:$0xff]
  %v272 = vld [vmem:[%s3 + $0x78] sm:$0xff]
  %v273 = vld [vmem:[%s3 + $0x80] sm:$0xff]
  %v274 = vld [vmem:[%s3 + $0x88] sm:$0xff]
  %v275 = vld [vmem:[%s3 + $0x90] sm:$0xff]
  %v276 = vld [vmem:[%s3 + $0x98] sm:$0xff]
  %v277 = vld [vmem:[%s3 + $0xa0] sm:$0xff]
  %v278 = vld [vmem:[%s3 + $0xa8] sm:$0xff]
  %v279 = vld [vmem:[%s3 + $0xb0] sm:$0xff]
  %v280 = vld [vmem:[%s3 + $0xb8] sm:$0xff]
  %v281 = vld [vmem:[%s3 + $0xc0] sm:$0xff]
  %v282 = vld [vmem:[%s3 + $0xc8] sm:$0xff]
  %v283 = vld [vmem:[%s3 + $0xd0] sm:$0xff]
  %v284 = vld [vmem:[%s3 + $0xd8] sm:$0xff]
  %v285 = vld [vmem:[%s3 + $0xe0] sm:$0xff]
  %v286 = vld [vmem:[%s3 + $0xe8] sm:$0xff]
  %v287 = vld [vmem:[%s3 + $0xf0] sm:$0xff]
  %v288 = vld [vmem:[%s3 + $0xf8] sm:$0xff]
  %v289 = vld [vmem:[%s4] sm:$0x3]
  %v291 = vlaneseq
  %v292 = vshrl.u32 %v291, 7
  %v293 = vsub.s32 0, %v292
  %v294 = vrot.slane %v289, %v293
  %v295 = vlaneseq
  %v296 = vshrl.u32 %v295, 7
  %v297 = vsub.s32 1, %v296
  %v298 = vrot.slane %v289, %v297
  %v333 = vunpack.c.l.b16 %v257
  %v334 = vunpack.c.h.b16 %v257
  %v335 = vunpack.c.l.b16 %v258
  %v336 = vunpack.c.h.b16 %v258
  %v337 = vunpack.c.l.b16 %v259
  %v338 = vunpack.c.h.b16 %v259
  %v339 = vunpack.c.l.b16 %v260
  %v340 = vunpack.c.h.b16 %v260
  %v341 = vunpack.c.l.b16 %v261
  %v342 = vunpack.c.h.b16 %v261
  %v343 = vunpack.c.l.b16 %v262
  %v344 = vunpack.c.h.b16 %v262
  %v345 = vunpack.c.l.b16 %v263
  %v346 = vunpack.c.h.b16 %v263
  %v347 = vunpack.c.l.b16 %v264
  %v348 = vunpack.c.h.b16 %v264
  %v349 = vunpack.c.l.b16 %v265
  %v350 = vunpack.c.h.b16 %v265
  %v351 = vunpack.c.l.b16 %v266
  %v352 = vunpack.c.h.b16 %v266
  %v353 = vunpack.c.l.b16 %v267
  %v354 = vunpack.c.h.b16 %v267
  %v355 = vunpack.c.l.b16 %v268
  %v356 = vunpack.c.h.b16 %v268
  %v357 = vunpack.c.l.b16 %v269
  %v358 = vunpack.c.h.b16 %v269
  %v359 = vunpack.c.l.b16 %v270
  %v360 = vunpack.c.h.b16 %v270
  %v361 = vunpack.c.l.b16 %v271
  %v362 = vunpack.c.h.b16 %v271
  %v363 = vunpack.c.l.b16 %v272
  %v364 = vunpack.c.h.b16 %v272
  %v365 = vunpack.c.l.b16 %v273
  %v366 = vunpack.c.h.b16 %v273
  %v367 = vunpack.c.l.b16 %v274
  %v368 = vunpack.c.h.b16 %v274
  %v369 = vunpack.c.l.b16 %v275
  %v370 = vunpack.c.h.b16 %v275
  %v371 = vunpack.c.l.b16 %v276
  %v372 = vunpack.c.h.b16 %v276
  %v373 = vunpack.c.l.b16 %v277
  %v374 = vunpack.c.h.b16 %v277
  %v375 = vunpack.c.l.b16 %v278
  %v376 = vunpack.c.h.b16 %v278
  %v377 = vunpack.c.l.b16 %v279
  %v378 = vunpack.c.h.b16 %v279
  %v379 = vunpack.c.l.b16 %v280
  %v380 = vunpack.c.h.b16 %v280
  %v381 = vunpack.c.l.b16 %v281
  %v382 = vunpack.c.h.b16 %v281
  %v383 = vunpack.c.l.b16 %v282
  %v384 = vunpack.c.h.b16 %v282
  %v385 = vunpack.c.l.b16 %v283
  %v386 = vunpack.c.h.b16 %v283
  %v387 = vunpack.c.l.b16 %v284
  %v388 = vunpack.c.h.b16 %v284
  %v389 = vunpack.c.l.b16 %v285
  %v390 = vunpack.c.h.b16 %v285
  %v391 = vunpack.c.l.b16 %v286
  %v392 = vunpack.c.h.b16 %v286
  %v393 = vunpack.c.l.b16 %v287
  %v394 = vunpack.c.h.b16 %v287
  %v395 = vunpack.c.l.b16 %v288
  %v396 = vunpack.c.h.b16 %v288
  %v397 = vpack.c.b16 %v335, %v333
  %v398 = vpack.c.b16 %v336, %v334
  %v399 = vpack.c.b16 %v339, %v337
  %v400 = vpack.c.b16 %v340, %v338
  %v401 = vpack.c.b16 %v343, %v341
  %v402 = vpack.c.b16 %v344, %v342
  %v403 = vpack.c.b16 %v347, %v345
  %v404 = vpack.c.b16 %v348, %v346
  %v405 = vpack.c.b16 %v351, %v349
  %v406 = vpack.c.b16 %v352, %v350
  %v407 = vpack.c.b16 %v355, %v353
  %v408 = vpack.c.b16 %v356, %v354
  %v409 = vpack.c.b16 %v359, %v357
  %v410 = vpack.c.b16 %v360, %v358
  %v411 = vpack.c.b16 %v363, %v361
  %v412 = vpack.c.b16 %v364, %v362
  %v413 = vpack.c.b16 %v367, %v365
  %v414 = vpack.c.b16 %v368, %v366
  %v415 = vpack.c.b16 %v371, %v369
  %v416 = vpack.c.b16 %v372, %v370
  %v417 = vpack.c.b16 %v375, %v373
  %v418 = vpack.c.b16 %v376, %v374
  %v419 = vpack.c.b16 %v379, %v377
  %v420 = vpack.c.b16 %v380, %v378
  %v421 = vpack.c.b16 %v383, %v381
  %v422 = vpack.c.b16 %v384, %v382
  %v423 = vpack.c.b16 %v387, %v385
  %v424 = vpack.c.b16 %v388, %v386
  %v425 = vpack.c.b16 %v391, %v389
  %v426 = vpack.c.b16 %v392, %v390
  %v427 = vpack.c.b16 %v395, %v393
  %v428 = vpack.c.b16 %v396, %v394
  %461 = vmatprep.subr.bf16.mxu0 %v398
  %462 = vmatpush1.bf16.msra.mxu0 %v397
  %463 = vmatprep.subr.bf16.mxu0 %v400
  %464 = vmatpush1.bf16.msra.mxu0 %v399
  %465 = vmatprep.subr.bf16.mxu0 %v402
  %466 = vmatpush1.bf16.msra.mxu0 %v401
  %467 = vmatprep.subr.bf16.mxu0 %v404
  %468 = vmatpush1.bf16.msra.mxu0 %v403
  %469 = vmatprep.subr.bf16.mxu0 %v406
  %470 = vmatpush1.bf16.msra.mxu0 %v405
  %471 = vmatprep.subr.bf16.mxu0 %v408
  %472 = vmatpush1.bf16.msra.mxu0 %v407
  %473 = vmatprep.subr.bf16.mxu0 %v410
  %474 = vmatpush1.bf16.msra.mxu0 %v409
  %475 = vmatprep.subr.bf16.mxu0 %v412
  %476 = vmatpush1.bf16.msra.mxu0 %v411
  %477 = vmatprep.subr.bf16.mxu0 %v414
  %478 = vmatpush1.bf16.msra.mxu0 %v413
  %479 = vmatprep.subr.bf16.mxu0 %v416
  %480 = vmatpush1.bf16.msra.mxu0 %v415
  %481 = vmatprep.subr.bf16.mxu0 %v418
  %482 = vmatpush1.bf16.msra.mxu0 %v417
  %483 = vmatprep.subr.bf16.mxu0 %v420
  %484 = vmatpush1.bf16.msra.mxu0 %v419
  %485 = vmatprep.subr.bf16.mxu0 %v422
  %486 = vmatpush1.bf16.msra.mxu0 %v421
  %487 = vmatprep.subr.bf16.mxu0 %v424
  %488 = vmatpush1.bf16.msra.mxu0 %v423
  %489 = vmatprep.subr.bf16.mxu0 %v426
  %490 = vmatpush1.bf16.msra.mxu0 %v425
  %491 = vmatprep.subr.bf16.mxu0 %v428
  %492 = vmatpush1.bf16.msra.mxu0 %v427
  %493 = vmatprep.mubr.bf16.mxu0 %v50
  %494 = vmatmul.mubr.bf16.gmra.mrb[0].mxu0 %v49
  %v495 = vpop.f32.mrb[0].mxu0
  %v496 = vadd.f32 %v294, %v495
  %v497 = vpop.f32.mrb[0].mxu0
  %v498 = vadd.f32 %v298, %v497
  %v499 = vpop.f32.mrb[0].mxu0
  %v500 = vadd.f32 %v294, %v499
  %v501 = vpop.f32.mrb[0].mxu0
  %v502 = vadd.f32 %v298, %v501
  %503 = vmatprep.mubr.bf16.mxu0 %v52
  %504 = vmatmul.mubr.bf16.gmra.mrb[0].mxu0 %v51
  %v505 = vpop.f32.mrb[0].mxu0
  %v506 = vadd.f32 %v294, %v505
  %v507 = vpop.f32.mrb[0].mxu0
  %v508 = vadd.f32 %v298, %v507
  %v509 = vpop.f32.mrb[0].mxu0
  %v510 = vadd.f32 %v294, %v509
  %v511 = vpop.f32.mrb[0].mxu0
  %v512 = vadd.f32 %v298, %v511
  %513 = vmatprep.mubr.bf16.mxu0 %v54
  %514 = vmatmul.mubr.bf16.gmra.mrb[0].mxu0 %v53
  %v515 = vpop.f32.mrb[0].mxu0
  %v516 = vadd.f32 %v294, %v515
  %v517 = vpop.f32.mrb[0].mxu0
  %v518 = vadd.f32 %v298, %v517
  %v519 = vpop.f32.mrb[0].mxu0
  %v520 = vadd.f32 %v294, %v519
  %v521 = vpop.f32.mrb[0].mxu0
  %v522 = vadd.f32 %v298, %v521
  %523 = vmatprep.mubr.bf16.mxu0 %v56
  %524 = vmatmul.mubr.bf16.gmra.mrb[0].mxu0 %v55
  %v525 = vpop.f32.mrb[0].mxu0
  %v526 = vadd.f32 %v294, %v525
  %v527 = vpop.f32.mrb[0].mxu0
  %v528 = vadd.f32 %v298, %v527
  %v529 = vpop.f32.mrb[0].mxu0
  %v530 = vadd.f32 %v294, %v529
  %v531 = vpop.f32.mrb[0].mxu0
  %v532 = vadd.f32 %v298, %v531
  %533 = vdwg.mxu0
  %v534 = vmax.f32 %v496, 0.0
  %v535 = vmax.f32 %v498, 0.0
  %v536 = vmax.f32 %v500, 0.0
  %v537 = vmax.f32 %v502, 0.0
  %v538 = vmax.f32 %v506, 0.0
  %v539 = vmax.f32 %v508, 0.0
  %v540 = vmax.f32 %v510, 0.0
  %v541 = vmax.f32 %v512, 0.0
  %v542 = vmax.f32 %v516, 0.0
  %v543 = vmax.f32 %v518, 0.0
  %v544 = vmax.f32 %v520, 0.0
  %v545 = vmax.f32 %v522, 0.0
  %v546 = vmax.f32 %v526, 0.0
  %v547 = vmax.f32 %v528, 0.0
  %v548 = vmax.f32 %v530, 0.0
  %v549 = vmax.f32 %v532, 0.0
  %v550 = vpack.c.bf16 %v536, %v534
  %v551 = vpack.c.bf16 %v537, %v535
  %v552 = vpack.c.bf16 %v540, %v538
  %v553 = vpack.c.bf16 %v541, %v539
  %v554 = vpack.c.bf16 %v544, %v542
  %v555 = vpack.c.bf16 %v545, %v543
  %v556 = vpack.c.bf16 %v548, %v546
  %v557 = vpack.c.bf16 %v549, %v547
  %v558 = vld [vmem:[%s5] sm:$0xff]
  %v559 = vld [vmem:[%s5 + $0x8] sm:$0xff]
  %v560 = vld [vmem:[%s5 + $0x10] sm:$0xff]
  %v561 = vld [vmem:[%s5 + $0x18] sm:$0xff]
  %v562 = vld [vmem:[%s5 + $0x20] sm:$0xff]
  %v563 = vld [vmem:[%s5 + $0x28] sm:$0xff]
  %v564 = vld [vmem:[%s5 + $0x30] sm:$0xff]
  %v565 = vld [vmem:[%s5 + $0x38] sm:$0xff]
  %v566 = vld [vmem:[%s5 + $0x40] sm:$0xff]
  %v567 = vld [vmem:[%s5 + $0x48] sm:$0xff]
  %v568 = vld [vmem:[%s5 + $0x50] sm:$0xff]
  %v569 = vld [vmem:[%s5 + $0x58] sm:$0xff]
  %v570 = vld [vmem:[%s5 + $0x60] sm:$0xff]
  %v571 = vld [vmem:[%s5 + $0x68] sm:$0xff]
  %v572 = vld [vmem:[%s5 + $0x70] sm:$0xff]
  %v573 = vld [vmem:[%s5 + $0x78] sm:$0xff]
  %v574 = vld [vmem:[%s5 + $0x80] sm:$0xff]
  %v575 = vld [vmem:[%s5 + $0x88] sm:$0xff]
  %v576 = vld [vmem:[%s5 + $0x90] sm:$0xff]
  %v577 = vld [vmem:[%s5 + $0x98] sm:$0xff]
  %v578 = vld [vmem:[%s5 + $0xa0] sm:$0xff]
  %v579 = vld [vmem:[%s5 + $0xa8] sm:$0xff]
  %v580 = vld [vmem:[%s5 + $0xb0] sm:$0xff]
  %v581 = vld [vmem:[%s5 + $0xb8] sm:$0xff]
  %v582 = vld [vmem:[%s5 + $0xc0] sm:$0xff]
  %v583 = vld [vmem:[%s5 + $0xc8] sm:$0xff]
  %v584 = vld [vmem:[%s5 + $0xd0] sm:$0xff]
  %v585 = vld [vmem:[%s5 + $0xd8] sm:$0xff]
  %v586 = vld [vmem:[%s5 + $0xe0] sm:$0xff]
  %v587 = vld [vmem:[%s5 + $0xe8] sm:$0xff]
  %v588 = vld [vmem:[%s5 + $0xf0] sm:$0xff]
  %v589 = vld [vmem:[%s5 + $0xf8] sm:$0xff]
  %v590 = vld [vmem:[%s6] sm:$0x3]
  %v592 = vlaneseq
  %v593 = vshrl.u32 %v592, 7
  %v594 = vsub.s32 0, %v593
  %v595 = vrot.slane %v590, %v594
  %v596 = vlaneseq
  %v597 = vshrl.u32 %v596, 7
  %v598 = vsub.s32 1, %v597
  %v599 = vrot.slane %v590, %v598
  %v634 = vunpack.c.l.b16 %v558
  %v635 = vunpack.c.h.b16 %v558
  %v636 = vunpack.c.l.b16 %v559
  %v637 = vunpack.c.h.b16 %v559
  %v638 = vunpack.c.l.b16 %v560
  %v639 = vunpack.c.h.b16 %v560
  %v640 = vunpack.c.l.b16 %v561
  %v641 = vunpack.c.h.b16 %v561
  %v642 = vunpack.c.l.b16 %v562
  %v643 = vunpack.c.h.b16 %v562
  %v644 = vunpack.c.l.b16 %v563
  %v645 = vunpack.c.h.b16 %v563
  %v646 = vunpack.c.l.b16 %v564
  %v647 = vunpack.c.h.b16 %v564
  %v648 = vunpack.c.l.b16 %v565
  %v649 = vunpack.c.h.b16 %v565
  %v650 = vunpack.c.l.b16 %v566
  %v651 = vunpack.c.h.b16 %v566
  %v652 = vunpack.c.l.b16 %v567
  %v653 = vunpack.c.h.b16 %v567
  %v654 = vunpack.c.l.b16 %v568
  %v655 = vunpack.c.h.b16 %v568
  %v656 = vunpack.c.l.b16 %v569
  %v657 = vunpack.c.h.b16 %v569
  %v658 = vunpack.c.l.b16 %v570
  %v659 = vunpack.c.h.b16 %v570
  %v660 = vunpack.c.l.b16 %v571
  %v661 = vunpack.c.h.b16 %v571
  %v662 = vunpack.c.l.b16 %v572
  %v663 = vunpack.c.h.b16 %v572
  %v664 = vunpack.c.l.b16 %v573
  %v665 = vunpack.c.h.b16 %v573
  %v666 = vunpack.c.l.b16 %v574
  %v667 = vunpack.c.h.b16 %v574
  %v668 = vunpack.c.l.b16 %v575
  %v669 = vunpack.c.h.b16 %v575
  %v670 = vunpack.c.l.b16 %v576
  %v671 = vunpack.c.h.b16 %v576
  %v672 = vunpack.c.l.b16 %v577
  %v673 = vunpack.c.h.b16 %v577
  %v674 = vunpack.c.l.b16 %v578
  %v675 = vunpack.c.h.b16 %v578
  %v676 = vunpack.c.l.b16 %v579
  %v677 = vunpack.c.h.b16 %v579
  %v678 = vunpack.c.l.b16 %v580
  %v679 = vunpack.c.h.b16 %v580
  %v680 = vunpack.c.l.b16 %v581
  %v681 = vunpack.c.h.b16 %v581
  %v682 = vunpack.c.l.b16 %v582
  %v683 = vunpack.c.h.b16 %v582
  %v684 = vunpack.c.l.b16 %v583
  %v685 = vunpack.c.h.b16 %v583
  %v686 = vunpack.c.l.b16 %v584
  %v687 = vunpack.c.h.b16 %v584
  %v688 = vunpack.c.l.b16 %v585
  %v689 = vunpack.c.h.b16 %v585
  %v690 = vunpack.c.l.b16 %v586
  %v691 = vunpack.c.h.b16 %v586
  %v692 = vunpack.c.l.b16 %v587
  %v693 = vunpack.c.h.b16 %v587
  %v694 = vunpack.c.l.b16 %v588
  %v695 = vunpack.c.h.b16 %v588
  %v696 = vunpack.c.l.b16 %v589
  %v697 = vunpack.c.h.b16 %v589
  %v698 = vpack.c.b16 %v636, %v634
  %v699 = vpack.c.b16 %v637, %v635
  %v700 = vpack.c.b16 %v640, %v638
  %v701 = vpack.c.b16 %v641, %v639
  %v702 = vpack.c.b16 %v644, %v642
  %v703 = vpack.c.b16 %v645, %v643
  %v704 = vpack.c.b16 %v648, %v646
  %v705 = vpack.c.b16 %v649, %v647
  %v706 = vpack.c.b16 %v652, %v650
  %v707 = vpack.c.b16 %v653, %v651
  %v708 = vpack.c.b16 %v656, %v654
  %v709 = vpack.c.b16 %v657, %v655
  %v710 = vpack.c.b16 %v660, %v658
  %v711 = vpack.c.b16 %v661, %v659
  %v712 = vpack.c.b16 %v664, %v662
  %v713 = vpack.c.b16 %v665, %v663
  %v714 = vpack.c.b16 %v668, %v666
  %v715 = vpack.c.b16 %v669, %v667
  %v716 = vpack.c.b16 %v672, %v670
  %v717 = vpack.c.b16 %v673, %v671
  %v718 = vpack.c.b16 %v676, %v674
  %v719 = vpack.c.b16 %v677, %v675
  %v720 = vpack.c.b16 %v680, %v678
  %v721 = vpack.c.b16 %v681, %v679
  %v722 = vpack.c.b16 %v684, %v682
  %v723 = vpack.c.b16 %v685, %v683
  %v724 = vpack.c.b16 %v688, %v686
  %v725 = vpack.c.b16 %v689, %v687
  %v726 = vpack.c.b16 %v692, %v690
  %v727 = vpack.c.b16 %v693, %v691
  %v728 = vpack.c.b16 %v696, %v694
  %v729 = vpack.c.b16 %v697, %v695
  %762 = vmatprep.subr.bf16.mxu0 %v699
  %763 = vmatpush1.bf16.msra.mxu0 %v698
  %764 = vmatprep.subr.bf16.mxu0 %v701
  %765 = vmatpush1.bf16.msra.mxu0 %v700
  %766 = vmatprep.subr.bf16.mxu0 %v703
  %767 = vmatpush1.bf16.msra.mxu0 %v702
  %768 = vmatprep.subr.bf16.mxu0 %v705
  %769 = vmatpush1.bf16.msra.mxu0 %v704
  %770 = vmatprep.subr.bf16.mxu0 %v707
  %771 = vmatpush1.bf16.msra.mxu0 %v706
  %772 = vmatprep.subr.bf16.mxu0 %v709
  %773 = vmatpush1.bf16.msra.mxu0 %v708
  %774 = vmatprep.subr.bf16.mxu0 %v711
  %775 = vmatpush1.bf16.msra.mxu0 %v710
  %776 = vmatprep.subr.bf16.mxu0 %v713
  %777 = vmatpush1.bf16.msra.mxu0 %v712
  %778 = vmatprep.subr.bf16.mxu0 %v715
  %779 = vmatpush1.bf16.msra.mxu0 %v714
  %780 = vmatprep.subr.bf16.mxu0 %v717
  %781 = vmatpush1.bf16.msra.mxu0 %v716
  %782 = vmatprep.subr.bf16.mxu0 %v719
  %783 = vmatpush1.bf16.msra.mxu0 %v718
  %784 = vmatprep.subr.bf16.mxu0 %v721
  %785 = vmatpush1.bf16.msra.mxu0 %v720
  %786 = vmatprep.subr.bf16.mxu0 %v723
  %787 = vmatpush1.bf16.msra.mxu0 %v722
  %788 = vmatprep.subr.bf16.mxu0 %v725
  %789 = vmatpush1.bf16.msra.mxu0 %v724
  %790 = vmatprep.subr.bf16.mxu0 %v727
  %791 = vmatpush1.bf16.msra.mxu0 %v726
  %792 = vmatprep.subr.bf16.mxu0 %v729
  %793 = vmatpush1.bf16.msra.mxu0 %v728
  %794 = vmatprep.mubr.bf16.mxu0 %v551
  %795 = vmatmul.mubr.bf16.gmra.mrb[0].mxu0 %v550
  %v796 = vpop.f32.mrb[0].mxu0
  %v797 = vadd.f32 %v595, %v796
  %v798 = vpop.f32.mrb[0].mxu0
  %v799 = vadd.f32 %v599, %v798
  %v800 = vpop.f32.mrb[0].mxu0
  %v801 = vadd.f32 %v595, %v800
  %v802 = vpop.f32.mrb[0].mxu0
  %v803 = vadd.f32 %v599, %v802
  %804 = vmatprep.mubr.bf16.mxu0 %v553
  %805 = vmatmul.mubr.bf16.gmra.mrb[0].mxu0 %v552
  %v806 = vpop.f32.mrb[0].mxu0
  %v807 = vadd.f32 %v595, %v806
  %v808 = vpop.f32.mrb[0].mxu0
  %v809 = vadd.f32 %v599, %v808
  %v810 = vpop.f32.mrb[0].mxu0
  %v811 = vadd.f32 %v595, %v810
  %v812 = vpop.f32.mrb[0].mxu0
  %v813 = vadd.f32 %v599, %v812
  %814 = vmatprep.mubr.bf16.mxu0 %v555
  %815 = vmatmul.mubr.bf16.gmra.mrb[0].mxu0 %v554
  %v816 = vpop.f32.mrb[0].mxu0
  %v817 = vadd.f32 %v595, %v816
  %v818 = vpop.f32.mrb[0].mxu0
  %v819 = vadd.f32 %v599, %v818
  %v820 = vpop.f32.mrb[0].mxu0
  %v821 = vadd.f32 %v595, %v820
  %v822 = vpop.f32.mrb[0].mxu0
  %v823 = vadd.f32 %v599, %v822
  %824 = vmatprep.mubr.bf16.mxu0 %v557
  %825 = vmatmul.mubr.bf16.gmra.mrb[0].mxu0 %v556
  %v826 = vpop.f32.mrb[0].mxu0
  %v827 = vadd.f32 %v595, %v826
  %v828 = vpop.f32.mrb[0].mxu0
  %v829 = vadd.f32 %v599, %v828
  %v830 = vpop.f32.mrb[0].mxu0
  %v831 = vadd.f32 %v595, %v830
  %v832 = vpop.f32.mrb[0].mxu0
  %v833 = vadd.f32 %v599, %v832
  %834 = vdwg.mxu0
  %v835 = vmax.f32 %v797, 0.0
  %v836 = vmax.f32 %v799, 0.0
  %v837 = vmax.f32 %v801, 0.0
  %v838 = vmax.f32 %v803, 0.0
  %v839 = vmax.f32 %v807, 0.0
  %v840 = vmax.f32 %v809, 0.0
  %v841 = vmax.f32 %v811, 0.0
  %v842 = vmax.f32 %v813, 0.0
  %v843 = vmax.f32 %v817, 0.0
  %v844 = vmax.f32 %v819, 0.0
  %v845 = vmax.f32 %v821, 0.0
  %v846 = vmax.f32 %v823, 0.0
  %v847 = vmax.f32 %v827, 0.0
  %v848 = vmax.f32 %v829, 0.0
  %v849 = vmax.f32 %v831, 0.0
  %v850 = vmax.f32 %v833, 0.0
  %v851 = vpack.c.bf16 %v837, %v835
  %v852 = vpack.c.bf16 %v838, %v836
  %v853 = vpack.c.bf16 %v841, %v839
  %v854 = vpack.c.bf16 %v842, %v840
  %v855 = vpack.c.bf16 %v845, %v843
  %v856 = vpack.c.bf16 %v846, %v844
  %v857 = vpack.c.bf16 %v849, %v847
  %v858 = vpack.c.bf16 %v850, %v848
  %v859 = vld [vmem:[%s7] sm:$0xf]
  %v860 = vld [vmem:[%s7 + $0x4] sm:$0xf]
  %v861 = vld [vmem:[%s7 + $0x8] sm:$0xf]
  %v862 = vld [vmem:[%s7 + $0xc] sm:$0xf]
  %v863 = vld [vmem:[%s7 + $0x10] sm:$0xf]
  %v864 = vld [vmem:[%s7 + $0x14] sm:$0xf]
  %v865 = vld [vmem:[%s7 + $0x18] sm:$0xf]
  %v866 = vld [vmem:[%s7 + $0x1c] sm:$0xf]
  %v867 = vld [vmem:[%s7 + $0x20] sm:$0xf]
  %v868 = vld [vmem:[%s7 + $0x24] sm:$0xf]
  %v869 = vld [vmem:[%s7 + $0x28] sm:$0xf]
  %v870 = vld [vmem:[%s7 + $0x2c] sm:$0xf]
  %v871 = vld [vmem:[%s7 + $0x30] sm:$0xf]
  %v872 = vld [vmem:[%s7 + $0x34] sm:$0xf]
  %v873 = vld [vmem:[%s7 + $0x38] sm:$0xf]
  %v874 = vld [vmem:[%s7 + $0x3c] sm:$0xf]
  %v875 = vld [vmem:[%s7 + $0x40] sm:$0xf]
  %v876 = vld [vmem:[%s7 + $0x44] sm:$0xf]
  %v877 = vld [vmem:[%s7 + $0x48] sm:$0xf]
  %v878 = vld [vmem:[%s7 + $0x4c] sm:$0xf]
  %v879 = vld [vmem:[%s7 + $0x50] sm:$0xf]
  %v880 = vld [vmem:[%s7 + $0x54] sm:$0xf]
  %v881 = vld [vmem:[%s7 + $0x58] sm:$0xf]
  %v882 = vld [vmem:[%s7 + $0x5c] sm:$0xf]
  %v883 = vld [vmem:[%s7 + $0x60] sm:$0xf]
  %v884 = vld [vmem:[%s7 + $0x64] sm:$0xf]
  %v885 = vld [vmem:[%s7 + $0x68] sm:$0xf]
  %v886 = vld [vmem:[%s7 + $0x6c] sm:$0xf]
  %v887 = vld [vmem:[%s7 + $0x70] sm:$0xf]
  %v888 = vld [vmem:[%s7 + $0x74] sm:$0xf]
  %v889 = vld [vmem:[%s7 + $0x78] sm:$0xf]
  %v890 = vld [vmem:[%s7 + $0x7c] sm:$0xf]
  %v891 = vld [vmem:[%s8] sm:$0x1]
  %v893 = vlaneseq
  %v894 = vshrl.u32 %v893, 7
  %v895 = vsub.s32 0, %v894
  %v896 = vrot.slane %v891, %v895
  %v930 = vunpack.c.l.b16 %v859
  %v931 = vunpack.c.l.b16 %v860
  %v932 = vunpack.c.l.b16 %v861
  %v933 = vunpack.c.l.b16 %v862
  %v934 = vunpack.c.l.b16 %v863
  %v935 = vunpack.c.l.b16 %v864
  %v936 = vunpack.c.l.b16 %v865
  %v937 = vunpack.c.l.b16 %v866
  %v938 = vunpack.c.l.b16 %v867
  %v939 = vunpack.c.l.b16 %v868
  %v940 = vunpack.c.l.b16 %v869
  %v941 = vunpack.c.l.b16 %v870
  %v942 = vunpack.c.l.b16 %v871
  %v943 = vunpack.c.l.b16 %v872
  %v944 = vunpack.c.l.b16 %v873
  %v945 = vunpack.c.l.b16 %v874
  %v946 = vunpack.c.l.b16 %v875
  %v947 = vunpack.c.l.b16 %v876
  %v948 = vunpack.c.l.b16 %v877
  %v949 = vunpack.c.l.b16 %v878
  %v950 = vunpack.c.l.b16 %v879
  %v951 = vunpack.c.l.b16 %v880
  %v952 = vunpack.c.l.b16 %v881
  %v953 = vunpack.c.l.b16 %v882
  %v954 = vunpack.c.l.b16 %v883
  %v955 = vunpack.c.l.b16 %v884
  %v956 = vunpack.c.l.b16 %v885
  %v957 = vunpack.c.l.b16 %v886
  %v958 = vunpack.c.l.b16 %v887
  %v959 = vunpack.c.l.b16 %v888
  %v960 = vunpack.c.l.b16 %v889
  %v961 = vunpack.c.l.b16 %v890
  %v962 = vpack.c.b16 %v931, %v930
  %v963 = vpack.c.b16 %v933, %v932
  %v964 = vpack.c.b16 %v935, %v934
  %v965 = vpack.c.b16 %v937, %v936
  %v966 = vpack.c.b16 %v939, %v938
  %v967 = vpack.c.b16 %v941, %v940
  %v968 = vpack.c.b16 %v943, %v942
  %v969 = vpack.c.b16 %v945, %v944
  %v970 = vpack.c.b16 %v947, %v946
  %v971 = vpack.c.b16 %v949, %v948
  %v972 = vpack.c.b16 %v951, %v950
  %v973 = vpack.c.b16 %v953, %v952
  %v974 = vpack.c.b16 %v955, %v954
  %v975 = vpack.c.b16 %v957, %v956
  %v976 = vpack.c.b16 %v959, %v958
  %v977 = vpack.c.b16 %v961, %v960
  %994 = vmatprep.subr.bf16.mxu0 0
  %995 = vmatpush1.bf16.msra.mxu0 %v962
  %996 = vmatprep.subr.bf16.mxu0 0
  %997 = vmatpush1.bf16.msra.mxu0 %v963
  %998 = vmatprep.subr.bf16.mxu0 0
  %999 = vmatpush1.bf16.msra.mxu0 %v964
  %1000 = vmatprep.subr.bf16.mxu0 0
  %1001 = vmatpush1.bf16.msra.mxu0 %v965
  %1002 = vmatprep.subr.bf16.mxu0 0
  %1003 = vmatpush1.bf16.msra.mxu0 %v966
  %1004 = vmatprep.subr.bf16.mxu0 0
  %1005 = vmatpush1.bf16.msra.mxu0 %v967
  %1006 = vmatprep.subr.bf16.mxu0 0
  %1007 = vmatpush1.bf16.msra.mxu0 %v968
  %1008 = vmatprep.subr.bf16.mxu0 0
  %1009 = vmatpush1.bf16.msra.mxu0 %v969
  %1010 = vmatprep.subr.bf16.mxu0 0
  %1011 = vmatpush1.bf16.msra.mxu0 %v970
  %1012 = vmatprep.subr.bf16.mxu0 0
  %1013 = vmatpush1.bf16.msra.mxu0 %v971
  %1014 = vmatprep.subr.bf16.mxu0 0
  %1015 = vmatpush1.bf16.msra.mxu0 %v972
  %1016 = vmatprep.subr.bf16.mxu0 0
  %1017 = vmatpush1.bf16.msra.mxu0 %v973
  %1018 = vmatprep.subr.bf16.mxu0 0
  %1019 = vmatpush1.bf16.msra.mxu0 %v974
  %1020 = vmatprep.subr.bf16.mxu0 0
  %1021 = vmatpush1.bf16.msra.mxu0 %v975
  %1022 = vmatprep.subr.bf16.mxu0 0
  %1023 = vmatpush1.bf16.msra.mxu0 %v976
  %1024 = vmatprep.subr.bf16.mxu0 0
  %1025 = vmatpush1.bf16.msra.mxu0 %v977
  %1026 = vmatprep.mubr.bf16.mxu0 %v852
  %1027 = vmatmul.mubr.bf16.gmra.mrb[0].mxu0 %v851
  %v1028 = vpop.f32.mrb[0].mxu0
  %v1029 = vadd.f32 %v896, %v1028
  %v1030 = vpop.f32.mrb[0].mxu0
  %v1031 = vpop.f32.mrb[0].mxu0
  %v1032 = vadd.f32 %v896, %v1031
  %v1033 = vpop.f32.mrb[0].mxu0
  %1034 = vmatprep.mubr.bf16.mxu0 %v854
  %1035 = vmatmul.mubr.bf16.gmra.mrb[0].mxu0 %v853
  %v1036 = vpop.f32.mrb[0].mxu0
  %v1037 = vadd.f32 %v896, %v1036
  %v1038 = vpop.f32.mrb[0].mxu0
  %v1039 = vpop.f32.mrb[0].mxu0
  %v1040 = vadd.f32 %v896, %v1039
  %v1041 = vpop.f32.mrb[0].mxu0
  %1042 = vmatprep.mubr.bf16.mxu0 %v856
  %1043 = vmatmul.mubr.bf16.gmra.mrb[0].mxu0 %v855
  %v1044 = vpop.f32.mrb[0].mxu0
  %v1045 = vadd.f32 %v896, %v1044
  %v1046 = vpop.f32.mrb[0].mxu0
  %v1047 = vpop.f32.mrb[0].mxu0
  %v1048 = vadd.f32 %v896, %v1047
  %v1049 = vpop.f32.mrb[0].mxu0
  %1050 = vmatprep.mubr.bf16.mxu0 %v858
  %1051 = vmatmul.mubr.bf16.gmra.mrb[0].mxu0 %v857
  %v1052 = vpop.f32.mrb[0].mxu0
  %v1053 = vadd.f32 %v896, %v1052
  %v1054 = vpop.f32.mrb[0].mxu0
  %v1055 = vpop.f32.mrb[0].mxu0
  %v1056 = vadd.f32 %v896, %v1055
  %v1057 = vpop.f32.mrb[0].mxu0
  %1058 = vdwg.mxu0
  %v1059 = vxor.u32 %v1029, 2147483648
  %v1060 = vxor.u32 %v1032, 2147483648
  %v1061 = vxor.u32 %v1037, 2147483648
  %v1062 = vxor.u32 %v1040, 2147483648
  %v1063 = vxor.u32 %v1045, 2147483648
  %v1064 = vxor.u32 %v1048, 2147483648
  %v1065 = vxor.u32 %v1053, 2147483648
  %v1066 = vxor.u32 %v1056, 2147483648
  %v1067 = vmul.f32 %v1059, 1.442695
  %v1068 = vpow.pop %v1067
  %v1069 = vmul.f32 %v1060, 1.442695
  %v1070 = vpow.pop %v1069
  %v1071 = vmul.f32 %v1061, 1.442695
  %v1072 = vpow.pop %v1071
  %v1073 = vmul.f32 %v1062, 1.442695
  %v1074 = vpow.pop %v1073
  %v1075 = vmul.f32 %v1063, 1.442695
  %v1076 = vpow.pop %v1075
  %v1077 = vmul.f32 %v1064, 1.442695
  %v1078 = vpow.pop %v1077
  %v1079 = vmul.f32 %v1065, 1.442695
  %v1080 = vpow.pop %v1079
  %v1081 = vmul.f32 %v1066, 1.442695
  %v1082 = vpow.pop %v1081
  %v1083 = vadd.f32 %v1068, 1.0
  %v1084 = vadd.f32 %v1070, 1.0
  %v1085 = vadd.f32 %v1072, 1.0
  %v1086 = vadd.f32 %v1074, 1.0
  %v1087 = vadd.f32 %v1076, 1.0
  %v1088 = vadd.f32 %v1078, 1.0
  %v1089 = vadd.f32 %v1080, 1.0
  %v1090 = vadd.f32 %v1082, 1.0
  %v1091 = vrcp.pop %v1083
  %v1092 = vmul.f32 1.0, %v1091
  %v1093 = vrcp.pop %v1084
  %v1094 = vmul.f32 1.0, %v1093
  %v1095 = vrcp.pop %v1085
  %v1096 = vmul.f32 1.0, %v1095
  %v1097 = vrcp.pop %v1086
  %v1098 = vmul.f32 1.0, %v1097
  %v1099 = vrcp.pop %v1087
  %v1100 = vmul.f32 1.0, %v1099
  %v1101 = vrcp.pop %v1088
  %v1102 = vmul.f32 1.0, %v1101
  %v1103 = vrcp.pop %v1089
  %v1104 = vmul.f32 1.0, %v1103
  %v1105 = vrcp.pop %v1090
  %v1106 = vmul.f32 1.0, %v1105
  %v1107 = vlaneseq
  %v1108 = vand.u32 %v1107, 127
  %vm1109 = vcmp.lt.s32.totalorder %v1108, 5
  %v1110 = vsel %vm1109, %v227, %v1092
  %v1111 = vsel %vm1109, %v230, %v1094
  %v1112 = vsel %vm1109, %v235, %v1096
  %v1113 = vsel %vm1109, %v238, %v1098
  %v1114 = vsel %vm1109, %v243, %v1100
  %v1115 = vsel %vm1109, %v246, %v1102
  %v1116 = vsel %vm1109, %v251, %v1104
  %v1117 = vsel %vm1109, %v254, %v1106
  %1118 = vst [vmem:[%s9] sm:$0xff] %v1110
  %1119 = vst [vmem:[%s9 + $0x8] sm:$0xff] %v1111
  %1120 = vst [vmem:[%s9 + $0x10] sm:$0xff] %v1112
  %1121 = vst [vmem:[%s9 + $0x18] sm:$0xff] %v1113
  %1122 = vst [vmem:[%s9 + $0x20] sm:$0xff] %v1114
  %1123 = vst [vmem:[%s9 + $0x28] sm:$0xff] %v1115
  %1124 = vst [vmem:[%s9 + $0x30] sm:$0xff] %v1116
  %1125 = vst [vmem:[%s9 + $0x38] sm:$0xff] %v1117
  // Predicated region
  $region38: #{detr_forward.5} parent=0 // pred_check
    _
  $region39: #{detr_forward.5} parent=0 // pred_check_branch
    %1127 = sbr.rel (0) target = $region41
  $region40: #{detr_forward.5} parent=0 // pred_region
    _
  $region41: #{detr_forward.5} parent=0 // pred_fallthru
    _
  // Predicated region
  $region42: #{detr_forward.5} parent=0 // pred_check
    _
  $region43: #{detr_forward.5} parent=0 // pred_check_branch
    %1129 = sbr.rel (0) target = $region45
  $region44: #{detr_forward.5} parent=0 // pred_region
    _
  $region45: #{detr_forward.5} parent=0 // pred_fallthru
    _

// kernel: detr_forward.4
$region0: #{detr_forward.4}
  #allocation0 [shape = 'u32[]', space=smem, size = 0x4, offset = 0x4, fixed_abs, tag = 'smem constant byte address 0x4 - core index']
  #allocation1 [shape = 'u32[144,128]{1,0:T(1,128)}', space=vmem, size = 0x12000, scoped, tag = 'internal scratch']
  #allocation2 [shape = 'f32[16,256]{1,0:T(8,128)}', space=vmem, size = 0x4000, scoped, tag = 'scratch operand']
  %s0 = inlined_call_operand.vmem [shape: f32[2,16,256], index: 0, kind: input, shape index: {}]
  %s1 = inlined_call_operand.vmem [shape: bf16[2,4,256], index: 1, kind: input, shape index: {}]
  %s2 = inlined_call_operand.vmem [shape: bf16[2,256,256], index: 2, kind: input, shape index: {}]
  %s3 = inlined_call_operand.vmem [shape: f32[2,1,256], index: 3, kind: input, shape index: {}]
  %s4 = inlined_call_operand.vmem [shape: bf16[2,256,512], index: 4, kind: input, shape index: {}]
  %s5 = inlined_call_operand.vmem [shape: f32[2,1,512], index: 5, kind: input, shape index: {}]
  %s6 = inlined_call_operand.vmem [shape: bf16[2,256,256], index: 6, kind: input, shape index: {}]
  %s7 = inlined_call_operand.vmem [shape: f32[2,1,256], index: 7, kind: input, shape index: {}]
  %s8 = inlined_call_operand.vmem [shape: bf16[2,256,512], index: 8, kind: input, shape index: {}]
  %s9 = inlined_call_operand.vmem [shape: f32[2,1,512], index: 9, kind: input, shape index: {}]
  %s10 = inlined_call_operand.vmem [shape: bf16[2,512,256], index: 10, kind: input, shape index: {}]
  %s11 = inlined_call_operand.vmem [shape: f32[2,1,256], index: 11, kind: input, shape index: {}]
  %s12 = inlined_call_operand.vmem [shape: f32[2,2,16,256], index: 12, kind: output, shape index: {}]
  %s13 = sld [smem:[#allocation0]]
  $region85: #{detr_forward.4} parent=0
    _
  %s15 = ssub.s32 1, %s13
  %s16 = scalar_select 0, %s15, %s13
  loop: start=0, step=1, limit=6
  $region2: #{detr_forward.4} parent=0 // loop_pre_header
    _
  $region3: #{detr_forward.4} parent=0 // loop_header
    %s18 = sphi 0, %s22
    %p19 = scmp.ge.s32.totalorder %s18, 6
    %s25 = sphi 0, %s37
    %s26 = sphi 0, %s33
    %s27 = sphi 0, %s25
    %s28 = sphi 0, %s26
    %s29 = sphi 0, %s27
    %s30 = sphi 0, %s28
    %s40 = sphi 0, %s42
    %s43 = sphi 0, %s40
    %s44 = sphi 0, %s43
    %s60 = sphi 0, %s44
    %s66 = sphi 0, %s68
    %s69 = sphi 0, %s66
    %s70 = sphi 0, %s69
    %s86 = sphi 0, %s70
    %s92 = sphi 0, %s94
    %s95 = sphi 0, %s92
    %s96 = sphi 0, %s95
    %s112 = sphi 0, %s96
    %s118 = sphi 0, %s120
    %s121 = sphi 0, %s118
    %s122 = sphi 0, %s121
    %s138 = sphi 0, %s122
    %s144 = sphi 0, %s146
    %s147 = sphi 0, %s144
    %s148 = sphi 0, %s147
    %s164 = sphi 0, %s148
    %s170 = sphi 0, %s172
    %s173 = sphi 0, %s170
    %s174 = sphi 0, %s173
    %s190 = sphi 0, %s174
    %s196 = sphi 0, %s198
    %s199 = sphi 0, %s196
    %s200 = sphi 0, %s199
    %s216 = sphi 0, %s200
    %s222 = sphi 0, %s224
    %s225 = sphi 0, %s222
    %s226 = sphi 0, %s225
    %s242 = sphi 0, %s226
    %s248 = sphi 0, %s250
    %s251 = sphi 0, %s248
    %s252 = sphi 0, %s251
    %s268 = sphi 0, %s252
    %s274 = sphi 0, %s276
    %s277 = sphi 0, %s274
    %s278 = sphi 0, %s277
    %s294 = sphi 0, %s278
    %s300 = sphi 0, %s302
    %s303 = sphi 0, %s300
    %s304 = sphi 0, %s303
    %s320 = sphi 0, %s304
    %s326 = sphi 0, %s328
    %s329 = sphi 0, %s326
    %s330 = sphi 0, %s329
    %s346 = sphi 0, %s330
    %s354 = sphi 0, %s356
    %s357 = sphi 0, %s354
    %s358 = sphi 0, %s357
    %s374 = sphi 0, %s358
  $region4: #{detr_forward.4} parent=0 // loop_header_branch
    %21 = sbr.rel (%p19) target = $region8
  $region5: #{detr_forward.4} parent=0 // loop_body
    %s23 = ssub.s32 %s18, 1
    %s24 = ssub.s32 %s18, 2
    %s31 = sadd.s32 1, %s26
    %p32 = scmp.ge.s32.totalorder %s31, 2
    %s33 = scalar_select %p32, 0, %s31
    %s34 = sadd.s32 1, %s25
    %s35 = scalar_select %p32, %s34, %s25
    %p36 = scmp.ge.s32.totalorder %s35, 2
    %s37 = scalar_select %p36, 0, %s35
    %s38 = ssub.s32 %s25, %s37
    %p39 = scmp.eq.s32.totalorder %s38, 0
    %s41 = sadd.s32 %s40, 1
    %s42 = scalar_select %p39, %s40, %s41
    %p45 = pneg %p39
    %p46 = scmp.eq.s32.totalorder %s18, 3
    %p47 = por %p45, %p46
    %p48 = scmp.ne.s32.totalorder %s40, %s43
    %p49 = scmp.eq.s32.totalorder %s18, 0
    %p50 = por %p48, %p49
    %p51 = scmp.ne.s32.totalorder %s40, %s43
    %p52 = scmp.eq.s32.totalorder %s23, 3
    %p53 = por %p51, %p52
    %p54 = scmp.ne.s32.totalorder %s43, %s44
    %p55 = scmp.eq.s32.totalorder %s23, 0
    %p56 = por %p54, %p55
    %p57 = scmp.ne.s32.totalorder %s43, %s44
    %p58 = scmp.eq.s32.totalorder %s24, 3
    %p59 = por %p57, %p58
    %p61 = scmp.ne.s32.totalorder %s44, %s60
    %p62 = scmp.eq.s32.totalorder %s24, 0
    %p63 = por %p61, %p62
    %s64 = ssub.s32 %s25, %s37
    %p65 = scmp.eq.s32.totalorder %s64, 0
    %s67 = sadd.s32 %s66, 1
    %s68 = scalar_select %p65, %s66, %s67
    %p71 = pneg %p65
    %p72 = scmp.eq.s32.totalorder %s18, 3
    %p73 = por %p71, %p72
    %p74 = scmp.ne.s32.totalorder %s66, %s69
    %p75 = scmp.eq.s32.totalorder %s18, 0
    %p76 = por %p74, %p75
    %p77 = scmp.ne.s32.totalorder %s66, %s69
    %p78 = scmp.eq.s32.totalorder %s23, 3
    %p79 = por %p77, %p78
    %p80 = scmp.ne.s32.totalorder %s69, %s70
    %p81 = scmp.eq.s32.totalorder %s23, 0
    %p82 = por %p80, %p81
    %p83 = scmp.ne.s32.totalorder %s69, %s70
    %p84 = scmp.eq.s32.totalorder %s24, 3
    %p85 = por %p83, %p84
    %p87 = scmp.ne.s32.totalorder %s70, %s86
    %p88 = scmp.eq.s32.totalorder %s24, 0
    %p89 = por %p87, %p88
    %s90 = ssub.s32 %s26, %s33
    %p91 = scmp.eq.s32.totalorder %s90, 0
    %s93 = sadd.s32 %s92, 1
    %s94 = scalar_select %p91, %s92, %s93
    %p97 = pneg %p91
    %p98 = scmp.eq.s32.totalorder %s18, 3
    %p99 = por %p97, %p98
    %p100 = scmp.ne.s32.totalorder %s92, %s95
    %p101 = scmp.eq.s32.totalorder %s18, 0
    %p102 = por %p100, %p101
    %p103 = scmp.ne.s32.totalorder %s92, %s95
    %p104 = scmp.eq.s32.totalorder %s23, 3
    %p105 = por %p103, %p104
    %p106 = scmp.ne.s32.totalorder %s95, %s96
    %p107 = scmp.eq.s32.totalorder %s23, 0
    %p108 = por %p106, %p107
    %p109 = scmp.ne.s32.totalorder %s95, %s96
    %p110 = scmp.eq.s32.totalorder %s24, 3
    %p111 = por %p109, %p110
    %p113 = scmp.ne.s32.totalorder %s96, %s112
    %p114 = scmp.eq.s32.totalorder %s24, 0
    %p115 = por %p113, %p114
    %s116 = ssub.s32 %s26, %s33
    %p117 = scmp.eq.s32.totalorder %s116, 0
    %s119 = sadd.s32 %s118, 1
    %s120 = scalar_select %p117, %s118, %s119
    %p123 = pneg %p117
    %p124 = scmp.eq.s32.totalorder %s18, 3
    %p125 = por %p123, %p124
    %p126 = scmp.ne.s32.totalorder %s118, %s121
    %p127 = scmp.eq.s32.totalorder %s18, 0
    %p128 = por %p126, %p127
    %p129 = scmp.ne.s32.totalorder %s118, %s121
    %p130 = scmp.eq.s32.totalorder %s23, 3
    %p131 = por %p129, %p130
    %p132 = scmp.ne.s32.totalorder %s121, %s122
    %p133 = scmp.eq.s32.totalorder %s23, 0
    %p134 = por %p132, %p133
    %p135 = scmp.ne.s32.totalorder %s121, %s122
    %p136 = scmp.eq.s32.totalorder %s24, 3
    %p137 = por %p135, %p136
    %p139 = scmp.ne.s32.totalorder %s122, %s138
    %p140 = scmp.eq.s32.totalorder %s24, 0
    %p141 = por %p139, %p140
    %s142 = ssub.s32 %s26, %s33
    %p143 = scmp.eq.s32.totalorder %s142, 0
    %s145 = sadd.s32 %s144, 1
    %s146 = scalar_select %p143, %s144, %s145
    %p149 = pneg %p143
    %p150 = scmp.eq.s32.totalorder %s18, 3
    %p151 = por %p149, %p150
    %p152 = scmp.ne.s32.totalorder %s144, %s147
    %p153 = scmp.eq.s32.totalorder %s18, 0
    %p154 = por %p152, %p153
    %p155 = scmp.ne.s32.totalorder %s144, %s147
    %p156 = scmp.eq.s32.totalorder %s23, 3
    %p157 = por %p155, %p156
    %p158 = scmp.ne.s32.totalorder %s147, %s148
    %p159 = scmp.eq.s32.totalorder %s23, 0
    %p160 = por %p158, %p159
    %p161 = scmp.ne.s32.totalorder %s147, %s148
    %p162 = scmp.eq.s32.totalorder %s24, 3
    %p163 = por %p161, %p162
    %p165 = scmp.ne.s32.totalorder %s148, %s164
    %p166 = scmp.eq.s32.totalorder %s24, 0
    %p167 = por %p165, %p166
    %s168 = ssub.s32 %s26, %s33
    %p169 = scmp.eq.s32.totalorder %s168, 0
    %s171 = sadd.s32 %s170, 1
    %s172 = scalar_select %p169, %s170, %s171
    %p175 = pneg %p169
    %p176 = scmp.eq.s32.totalorder %s18, 3
    %p177 = por %p175, %p176
    %p178 = scmp.ne.s32.totalorder %s170, %s173
    %p179 = scmp.eq.s32.totalorder %s18, 0
    %p180 = por %p178, %p179
    %p181 = scmp.ne.s32.totalorder %s170, %s173
    %p182 = scmp.eq.s32.totalorder %s23, 3
    %p183 = por %p181, %p182
    %p184 = scmp.ne.s32.totalorder %s173, %s174
    %p185 = scmp.eq.s32.totalorder %s23, 0
    %p186 = por %p184, %p185
    %p187 = scmp.ne.s32.totalorder %s173, %s174
    %p188 = scmp.eq.s32.totalorder %s24, 3
    %p189 = por %p187, %p188
    %p191 = scmp.ne.s32.totalorder %s174, %s190
    %p192 = scmp.eq.s32.totalorder %s24, 0
    %p193 = por %p191, %p192
    %s194 = ssub.s32 %s26, %s33
    %p195 = scmp.eq.s32.totalorder %s194, 0
    %s197 = sadd.s32 %s196, 1
    %s198 = scalar_select %p195, %s196, %s197
    %p201 = pneg %p195
    %p202 = scmp.eq.s32.totalorder %s18, 3
    %p203 = por %p201, %p202
    %p204 = scmp.ne.s32.totalorder %s196, %s199
    %p205 = scmp.eq.s32.totalorder %s18, 0
    %p206 = por %p204, %p205
    %p207 = scmp.ne.s32.totalorder %s196, %s199
    %p208 = scmp.eq.s32.totalorder %s23, 3
    %p209 = por %p207, %p208
    %p210 = scmp.ne.s32.totalorder %s199, %s200
    %p211 = scmp.eq.s32.totalorder %s23, 0
    %p212 = por %p210, %p211
    %p213 = scmp.ne.s32.totalorder %s199, %s200
    %p214 = scmp.eq.s32.totalorder %s24, 3
    %p215 = por %p213, %p214
    %p217 = scmp.ne.s32.totalorder %s200, %s216
    %p218 = scmp.eq.s32.totalorder %s24, 0
    %p219 = por %p217, %p218
    %s220 = ssub.s32 %s26, %s33
    %p221 = scmp.eq.s32.totalorder %s220, 0
    %s223 = sadd.s32 %s222, 1
    %s224 = scalar_select %p221, %s222, %s223
    %p227 = pneg %p221
    %p228 = scmp.eq.s32.totalorder %s18, 3
    %p229 = por %p227, %p228
    %p230 = scmp.ne.s32.totalorder %s222, %s225
    %p231 = scmp.eq.s32.totalorder %s18, 0
    %p232 = por %p230, %p231
    %p233 = scmp.ne.s32.totalorder %s222, %s225
    %p234 = scmp.eq.s32.totalorder %s23, 3
    %p235 = por %p233, %p234
    %p236 = scmp.ne.s32.totalorder %s225, %s226
    %p237 = scmp.eq.s32.totalorder %s23, 0
    %p238 = por %p236, %p237
    %p239 = scmp.ne.s32.totalorder %s225, %s226
    %p240 = scmp.eq.s32.totalorder %s24, 3
    %p241 = por %p239, %p240
    %p243 = scmp.ne.s32.totalorder %s226, %s242
    %p244 = scmp.eq.s32.totalorder %s24, 0
    %p245 = por %p243, %p244
    %s246 = ssub.s32 %s26, %s33
    %p247 = scmp.eq.s32.totalorder %s246, 0
    %s249 = sadd.s32 %s248, 1
    %s250 = scalar_select %p247, %s248, %s249
    %p253 = pneg %p247
    %p254 = scmp.eq.s32.totalorder %s18, 3
    %p255 = por %p253, %p254
    %p256 = scmp.ne.s32.totalorder %s248, %s251
    %p257 = scmp.eq.s32.totalorder %s18, 0
    %p258 = por %p256, %p257
    %p259 = scmp.ne.s32.totalorder %s248, %s251
    %p260 = scmp.eq.s32.totalorder %s23, 3
    %p261 = por %p259, %p260
    %p262 = scmp.ne.s32.totalorder %s251, %s252
    %p263 = scmp.eq.s32.totalorder %s23, 0
    %p264 = por %p262, %p263
    %p265 = scmp.ne.s32.totalorder %s251, %s252
    %p266 = scmp.eq.s32.totalorder %s24, 3
    %p267 = por %p265, %p266
    %p269 = scmp.ne.s32.totalorder %s252, %s268
    %p270 = scmp.eq.s32.totalorder %s24, 0
    %p271 = por %p269, %p270
    %s272 = ssub.s32 %s26, %s33
    %p273 = scmp.eq.s32.totalorder %s272, 0
    %s275 = sadd.s32 %s274, 1
    %s276 = scalar_select %p273, %s274, %s275
    %p279 = pneg %p273
    %p280 = scmp.eq.s32.totalorder %s18, 3
    %p281 = por %p279, %p280
    %p282 = scmp.ne.s32.totalorder %s274, %s277
    %p283 = scmp.eq.s32.totalorder %s18, 0
    %p284 = por %p282, %p283
    %p285 = scmp.ne.s32.totalorder %s274, %s277
    %p286 = scmp.eq.s32.totalorder %s23, 3
    %p287 = por %p285, %p286
    %p288 = scmp.ne.s32.totalorder %s277, %s278
    %p289 = scmp.eq.s32.totalorder %s23, 0
    %p290 = por %p288, %p289
    %p291 = scmp.ne.s32.totalorder %s277, %s278
    %p292 = scmp.eq.s32.totalorder %s24, 3
    %p293 = por %p291, %p292
    %p295 = scmp.ne.s32.totalorder %s278, %s294
    %p296 = scmp.eq.s32.totalorder %s24, 0
    %p297 = por %p295, %p296
    %s298 = ssub.s32 %s26, %s33
    %p299 = scmp.eq.s32.totalorder %s298, 0
    %s301 = sadd.s32 %s300, 1
    %s302 = scalar_select %p299, %s300, %s301
    %p305 = pneg %p299
    %p306 = scmp.eq.s32.totalorder %s18, 3
    %p307 = por %p305, %p306
    %p308 = scmp.ne.s32.totalorder %s300, %s303
    %p309 = scmp.eq.s32.totalorder %s18, 0
    %p310 = por %p308, %p309
    %p311 = scmp.ne.s32.totalorder %s300, %s303
    %p312 = scmp.eq.s32.totalorder %s23, 3
    %p313 = por %p311, %p312
    %p314 = scmp.ne.s32.totalorder %s303, %s304
    %p315 = scmp.eq.s32.totalorder %s23, 0
    %p316 = por %p314, %p315
    %p317 = scmp.ne.s32.totalorder %s303, %s304
    %p318 = scmp.eq.s32.totalorder %s24, 3
    %p319 = por %p317, %p318
    %p321 = scmp.ne.s32.totalorder %s304, %s320
    %p322 = scmp.eq.s32.totalorder %s24, 0
    %p323 = por %p321, %p322
    %s324 = ssub.s32 %s26, %s33
    %p325 = scmp.eq.s32.totalorder %s324, 0
    %s327 = sadd.s32 %s326, 1
    %s328 = scalar_select %p325, %s326, %s327
    %p331 = pneg %p325
    %p332 = scmp.eq.s32.totalorder %s18, 3
    %p333 = por %p331, %p332
    %p334 = scmp.ne.s32.totalorder %s326, %s329
    %p335 = scmp.eq.s32.totalorder %s18, 0
    %p336 = por %p334, %p335
    %p337 = scmp.ne.s32.totalorder %s326, %s329
    %p338 = scmp.eq.s32.totalorder %s23, 3
    %p339 = por %p337, %p338
    %p340 = scmp.ne.s32.totalorder %s329, %s330
    %p341 = scmp.eq.s32.totalorder %s23, 0
    %p342 = por %p340, %p341
    %p343 = scmp.ne.s32.totalorder %s329, %s330
    %p344 = scmp.eq.s32.totalorder %s24, 3
    %p345 = por %p343, %p344
    %p347 = scmp.ne.s32.totalorder %s330, %s346
    %p348 = scmp.eq.s32.totalorder %s24, 0
    %p349 = por %p347, %p348
    %s350 = ssub.s32 %s26, %s33
    %s351 = ssub.s32 %s25, %s37
    %s352 = sor.u32 %s350, %s351
    %p353 = scmp.eq.s32.totalorder %s352, 0
    %s355 = sadd.s32 %s354, 1
    %s356 = scalar_select %p353, %s354, %s355
    %p359 = pneg %p353
    %p360 = scmp.eq.s32.totalorder %s18, 3
    %p361 = por %p359, %p360
    %p362 = scmp.ne.s32.totalorder %s354, %s357
    %p363 = scmp.eq.s32.totalorder %s18, 0
    %p364 = por %p362, %p363
    %p365 = scmp.ne.s32.totalorder %s354, %s357
    %p366 = scmp.eq.s32.totalorder %s23, 3
    %p367 = por %p365, %p366
    %p368 = scmp.ne.s32.totalorder %s357, %s358
    %p369 = scmp.eq.s32.totalorder %s23, 0
    %p370 = por %p368, %p369
    %p371 = scmp.ne.s32.totalorder %s357, %s358
    %p372 = scmp.eq.s32.totalorder %s24, 3
    %p373 = por %p371, %p372
    %p375 = scmp.ne.s32.totalorder %s358, %s374
    %p376 = scmp.eq.s32.totalorder %s24, 0
    %p377 = por %p375, %p376
    %p378 = scmp.le.s32.totalorder 1, %s18
    %p379 = scmp.lt.s32.totalorder %s18, 5
    %p380 = pnand %p378, %p379
    %p381 = pneg %p380
    // Predicated region
    $region9: #{detr_forward.4} parent=5 // pred_check
      _
    $region10: #{detr_forward.4} parent=5 // pred_check_branch
      %383 = sbr.rel (%p380) target = $region12
    $region11: #{detr_forward.4} parent=5 // pred_region
      %s384 = ssub.s32 %s18, 1
    $region12: #{detr_forward.4} parent=5 // pred_fallthru
      _
    %p385 = scmp.lt.s32.totalorder %s18, 4
    // Predicated region
    $region13: #{detr_forward.4} parent=5 // pred_check
      %p386 = pneg %p385
    $region14: #{detr_forward.4} parent=5 // pred_check_branch
      %388 = sbr.rel (%p386) target = $region16
    $region15: #{detr_forward.4} parent=5 // pred_region
      // Predicated region
      $region17: #{detr_forward.4} parent=15 // pred_check
        %p389 = pneg %p50
      $region18: #{detr_forward.4} parent=15 // pred_check_branch
        %391 = sbr.rel (%p389) target = $region20
      $region19: #{detr_forward.4} parent=15 // pred_region
        %p392 = scmp.lt.s32.totalorder %s25, 1
        %s393 = scalar_select %p392, %s25, 1
        %s394 = smul.addr %s393, 4
        %s395 = smul.addr %s394, 8
        %s396 = scalar_lea.vmem %s0, %s395
      $region20: #{detr_forward.4} parent=15 // pred_fallthru
        _
      // Predicated region
      $region21: #{detr_forward.4} parent=15 // pred_check
        %p397 = pneg %p76
      $region22: #{detr_forward.4} parent=15 // pred_check_branch
        %399 = sbr.rel (%p397) target = $region24
      $region23: #{detr_forward.4} parent=15 // pred_region
        %p400 = scmp.lt.s32.totalorder %s25, 1
        %s401 = scalar_select %p400, %s25, 1
        %s402 = smul.addr %s401, 2
        %s403 = smul.addr %s402, 2
        %s404 = scalar_lea.vmem %s1, %s403
      $region24: #{detr_forward.4} parent=15 // pred_fallthru
        _
      // Predicated region
      $region25: #{detr_forward.4} parent=15 // pred_check
        %p405 = pneg %p102
      $region26: #{detr_forward.4} parent=15 // pred_check_branch
        %407 = sbr.rel (%p405) target = $region28
      $region27: #{detr_forward.4} parent=15 // pred_region
        %p408 = scmp.lt.s32.totalorder %s26, 1
        %s409 = scalar_select %p408, %s26, 1
        %s410 = smul.addr %s409, 64
        %s411 = smul.addr %s410, 4
        %s412 = scalar_lea.vmem %s2, %s411
      $region28: #{detr_forward.4} parent=15 // pred_fallthru
        _
      // Predicated region
      $region29: #{detr_forward.4} parent=15 // pred_check
        %p413 = pneg %p128
      $region30: #{detr_forward.4} parent=15 // pred_check_branch
        %415 = sbr.rel (%p413) target = $region32
      $region31: #{detr_forward.4} parent=15 // pred_region
        %p416 = scmp.lt.s32.totalorder %s26, 1
        %s417 = scalar_select %p416, %s26, 1
        %s418 = smul.addr %s417, 2
        %s419 = scalar_lea.vmem %s3, %s418
      $region32: #{detr_forward.4} parent=15 // pred_fallthru
        _
      // Predicated region
      $region33: #{detr_forward.4} parent=15 // pred_check
        %p420 = pneg %p154
      $region34: #{detr_forward.4} parent=15 // pred_check_branch
        %422 = sbr.rel (%p420) target = $region36
      $region35: #{detr_forward.4} parent=15 // pred_region
        %p423 = scmp.lt.s32.totalorder %s26, 1
        %s424 = scalar_select %p423, %s26, 1
        %s425 = smul.addr %s424, 128
        %s426 = smul.addr %s425, 4
        %s427 = scalar_lea.vmem %s4, %s426
      $region36: #{detr_forward.4} parent=15 // pred_fallthru
        _
      // Predicated region
      $region37: #{detr_forward.4} parent=15 // pred_check
        %p428 = pneg %p180
      $region38: #{detr_forward.4} parent=15 // pred_check_branch
        %430 = sbr.rel (%p428) target = $region40
      $region39: #{detr_forward.4} parent=15 // pred_region
        %p431 = scmp.lt.s32.totalorder %s26, 1
        %s432 = scalar_select %p431, %s26, 1
        %s433 = smul.addr %s432, 4
        %s434 = scalar_lea.vmem %s5, %s433
      $region40: #{detr_forward.4} parent=15 // pred_fallthru
        _
      // Predicated region
      $region41: #{detr_forward.4} parent=15 // pred_check
        %p435 = pneg %p206
      $region42: #{detr_forward.4} parent=15 // pred_check_branch
        %437 = sbr.rel (%p435) target = $region44
      $region43: #{detr_forward.4} parent=15 // pred_region
        %p438 = scmp.lt.s32.totalorder %s26, 1
        %s439 = scalar_select %p438, %s26, 1
        %s440 = smul.addr %s439, 64
        %s441 = smul.addr %s440, 4
        %s442 = scalar_lea.vmem %s6, %s441
      $region44: #{detr_forward.4} parent=15 // pred_fallthru
        _
      // Predicated region
      $region45: #{detr_forward.4} parent=15 // pred_check
        %p443 = pneg %p232
      $region46: #{detr_forward.4} parent=15 // pred_check_branch
        %445 = sbr.rel (%p443) target = $region48
      $region47: #{detr_forward.4} parent=15 // pred_region
        %p446 = scmp.lt.s32.totalorder %s26, 1
        %s447 = scalar_select %p446, %s26, 1
        %s448 = smul.addr %s447, 2
        %s449 = scalar_lea.vmem %s7, %s448
      $region48: #{detr_forward.4} parent=15 // pred_fallthru
        _
      // Predicated region
      $region49: #{detr_forward.4} parent=15 // pred_check
        %p450 = pneg %p258
      $region50: #{detr_forward.4} parent=15 // pred_check_branch
        %452 = sbr.rel (%p450) target = $region52
      $region51: #{detr_forward.4} parent=15 // pred_region
        %p453 = scmp.lt.s32.totalorder %s26, 1
        %s454 = scalar_select %p453, %s26, 1
        %s455 = smul.addr %s454, 128
        %s456 = smul.addr %s455, 4
        %s457 = scalar_lea.vmem %s8, %s456
      $region52: #{detr_forward.4} parent=15 // pred_fallthru
        _
      // Predicated region
      $region53: #{detr_forward.4} parent=15 // pred_check
        %p458 = pneg %p284
      $region54: #{detr_forward.4} parent=15 // pred_check_branch
        %460 = sbr.rel (%p458) target = $region56
      $region55: #{detr_forward.4} parent=15 // pred_region
        %p461 = scmp.lt.s32.totalorder %s26, 1
        %s462 = scalar_select %p461, %s26, 1
        %s463 = smul.addr %s462, 4
        %s464 = scalar_lea.vmem %s9, %s463
      $region56: #{detr_forward.4} parent=15 // pred_fallthru
        _
      // Predicated region
      $region57: #{detr_forward.4} parent=15 // pred_check
        %p465 = pneg %p310
      $region58: #{detr_forward.4} parent=15 // pred_check_branch
        %467 = sbr.rel (%p465) target = $region60
      $region59: #{detr_forward.4} parent=15 // pred_region
        %p468 = scmp.lt.s32.totalorder %s26, 1
        %s469 = scalar_select %p468, %s26, 1
        %s470 = smul.addr %s469, 128
        %s471 = smul.addr %s470, 4
        %s472 = scalar_lea.vmem %s10, %s471
      $region60: #{detr_forward.4} parent=15 // pred_fallthru
        _
      // Predicated region
      $region61: #{detr_forward.4} parent=15 // pred_check
        %p473 = pneg %p336
      $region62: #{detr_forward.4} parent=15 // pred_check_branch
        %475 = sbr.rel (%p473) target = $region64
      $region63: #{detr_forward.4} parent=15 // pred_region
        %p476 = scmp.lt.s32.totalorder %s26, 1
        %s477 = scalar_select %p476, %s26, 1
        %s478 = smul.addr %s477, 2
        %s479 = scalar_lea.vmem %s11, %s478
      $region64: #{detr_forward.4} parent=15 // pred_fallthru
        _
    $region16: #{detr_forward.4} parent=5 // pred_fallthru
      _
    %p480 = scmp.le.s32.totalorder 1, %s18
    %p481 = scmp.lt.s32.totalorder %s18, 5
    %p482 = pnand %p480, %p481
    %p483 = pneg %p482
    // Predicated region
    $region65: #{detr_forward.4} parent=5 // pred_check
      _
    $region66: #{detr_forward.4} parent=5 // pred_check_branch
      %485 = sbr.rel (%p482) target = $region68
    $region67: #{detr_forward.4} parent=5 // pred_region
      %s486 = ssub.s32 %s18, 1
      %p487 = scmp.lt.s32.totalorder %s27, 1
      %s488 = scalar_select %p487, %s27, 1
      %s489 = smul.addr %s488, 4
      %s490 = smul.addr %s489, 8
      %s491 = scalar_lea.vmem %s0, %s490
      %p492 = pneg %p56
      %p493 = pneg %p53
      %p494 = scmp.lt.s32.totalorder %s27, 1
      %s495 = scalar_select %p494, %s27, 1
      %s496 = smul.addr %s495, 2
      %s497 = smul.addr %s496, 2
      %s498 = scalar_lea.vmem %s1, %s497
      %p499 = pneg %p82
      %p500 = pneg %p79
      %p501 = scmp.lt.s32.totalorder %s28, 1
      %s502 = scalar_select %p501, %s28, 1
      %s503 = smul.addr %s502, 64
      %s504 = smul.addr %s503, 4
      %s505 = scalar_lea.vmem %s2, %s504
      %p506 = pneg %p108
      %p507 = pneg %p105
      %p508 = scmp.lt.s32.totalorder %s28, 1
      %s509 = scalar_select %p508, %s28, 1
      %s510 = smul.addr %s509, 2
      %s511 = scalar_lea.vmem %s3, %s510
      %p512 = pneg %p134
      %p513 = pneg %p131
      %p514 = scmp.lt.s32.totalorder %s28, 1
      %s515 = scalar_select %p514, %s28, 1
      %s516 = smul.addr %s515, 128
      %s517 = smul.addr %s516, 4
      %s518 = scalar_lea.vmem %s4, %s517
      %p519 = pneg %p160
      %p520 = pneg %p157
      %p521 = scmp.lt.s32.totalorder %s28, 1
      %s522 = scalar_select %p521, %s28, 1
      %s523 = smul.addr %s522, 4
      %s524 = scalar_lea.vmem %s5, %s523
      %p525 = pneg %p186
      %p526 = pneg %p183
      %p527 = scmp.lt.s32.totalorder %s28, 1
      %s528 = scalar_select %p527, %s28, 1
      %s529 = smul.addr %s528, 64
      %s530 = smul.addr %s529, 4
      %s531 = scalar_lea.vmem %s6, %s530
      %p532 = pneg %p212
      %p533 = pneg %p209
      %p534 = scmp.lt.s32.totalorder %s28, 1
      %s535 = scalar_select %p534, %s28, 1
      %s536 = smul.addr %s535, 2
      %s537 = scalar_lea.vmem %s7, %s536
      %p538 = pneg %p238
      %p539 = pneg %p235
      %p540 = scmp.lt.s32.totalorder %s28, 1
      %s541 = scalar_select %p540, %s28, 1
      %s542 = smul.addr %s541, 128
      %s543 = smul.addr %s542, 4
      %s544 = scalar_lea.vmem %s8, %s543
      %p545 = pneg %p264
      %p546 = pneg %p261
      %p547 = scmp.lt.s32.totalorder %s28, 1
      %s548 = scalar_select %p547, %s28, 1
      %s549 = smul.addr %s548, 4
      %s550 = scalar_lea.vmem %s9, %s549
      %p551 = pneg %p290
      %p552 = pneg %p287
      %p553 = scmp.lt.s32.totalorder %s28, 1
      %s554 = scalar_select %p553, %s28, 1
      %s555 = smul.addr %s554, 128
      %s556 = smul.addr %s555, 4
      %s557 = scalar_lea.vmem %s10, %s556
      %p558 = pneg %p316
      %p559 = pneg %p313
      %p560 = scmp.lt.s32.totalorder %s28, 1
      %s561 = scalar_select %p560, %s28, 1
      %s562 = smul.addr %s561, 2
      %s563 = scalar_lea.vmem %s11, %s562
      %p564 = pneg %p342
      %p565 = pneg %p339
      %p566 = pneg %p370
      %p567 = pneg %p367
      %p568 = scmp.lt.s32.totalorder %s28, 1
      %s569 = scalar_select %p568, %s28, 1
      %p570 = scmp.lt.s32.totalorder %s27, 1
      %s571 = scalar_select %p570, %s27, 1
      %s572 = smul.addr %s571, 4
      %s573 = smul.addr %s569, 8
      %s574 = sadd.s32 %s572, %s573
      %s575 = smul.addr %s574, 8
      %s576 = scalar_lea.vmem %s12, %s575
      %p577 = scmp.lt.s32.totalorder %s27, 1
      %s578 = scalar_select %p577, %s27, 1
      %s579 = smul.addr %s578, 4
      %s580 = smul.addr %s579, 8
      %s581 = scalar_lea.vmem %s0, %s580
      %p582 = scmp.lt.s32.totalorder %s27, 1
      %s583 = scalar_select %p582, %s27, 1
      %s584 = smul.addr %s583, 2
      %s585 = smul.addr %s584, 2
      %s586 = scalar_lea.vmem %s1, %s585
      %p587 = scmp.lt.s32.totalorder %s28, 1
      %s588 = scalar_select %p587, %s28, 1
      %s589 = smul.addr %s588, 64
      %s590 = smul.addr %s589, 4
      %s591 = scalar_lea.vmem %s2, %s590
      %p592 = scmp.lt.s32.totalorder %s28, 1
      %s593 = scalar_select %p592, %s28, 1
      %s594 = smul.addr %s593, 2
      %s595 = scalar_lea.vmem %s3, %s594
      %p596 = scmp.lt.s32.totalorder %s28, 1
      %s597 = scalar_select %p596, %s28, 1
      %s598 = smul.addr %s597, 128
      %s599 = smul.addr %s598, 4
      %s600 = scalar_lea.vmem %s4, %s599
      %p601 = scmp.lt.s32.totalorder %s28, 1
      %s602 = scalar_select %p601, %s28, 1
      %s603 = smul.addr %s602, 4
      %s604 = scalar_lea.vmem %s5, %s603
      %p605 = scmp.lt.s32.totalorder %s28, 1
      %s606 = scalar_select %p605, %s28, 1
      %s607 = smul.addr %s606, 64
      %s608 = smul.addr %s607, 4
      %s609 = scalar_lea.vmem %s6, %s608
      %p610 = scmp.lt.s32.totalorder %s28, 1
      %s611 = scalar_select %p610, %s28, 1
      %s612 = smul.addr %s611, 2
      %s613 = scalar_lea.vmem %s7, %s612
      %p614 = scmp.lt.s32.totalorder %s28, 1
      %s615 = scalar_select %p614, %s28, 1
      %s616 = smul.addr %s615, 128
      %s617 = smul.addr %s616, 4
      %s618 = scalar_lea.vmem %s8, %s617
      %p619 = scmp.lt.s32.totalorder %s28, 1
      %s620 = scalar_select %p619, %s28, 1
      %s621 = smul.addr %s620, 4
      %s622 = scalar_lea.vmem %s9, %s621
      %p623 = scmp.lt.s32.totalorder %s28, 1
      %s624 = scalar_select %p623, %s28, 1
      %s625 = smul.addr %s624, 128
      %s626 = smul.addr %s625, 4
      %s627 = scalar_lea.vmem %s10, %s626
      %p628 = scmp.lt.s32.totalorder %s28, 1
      %s629 = scalar_select %p628, %s28, 1
      %s630 = smul.addr %s629, 2
      %s631 = scalar_lea.vmem %s11, %s630
      %p632 = scmp.lt.s32.totalorder %s28, 1
      %s633 = scalar_select %p632, %s28, 1
      %p634 = scmp.lt.s32.totalorder %s27, 1
      %s635 = scalar_select %p634, %s27, 1
      %s636 = smul.addr %s635, 4
      %s637 = smul.addr %s633, 8
      %s638 = sadd.s32 %s636, %s637
      %s639 = smul.addr %s638, 8
      %s640 = scalar_lea.vmem %s12, %s639
      %p642 = scmp.eq.s32.totalorder %s28, 0
      // Predicated region
      $region69: #{detr_forward.4} parent=67 // pred_check
        %p643 = pneg %p642
      $region70: #{detr_forward.4} parent=67 // pred_check_branch
        %645 = sbr.rel (%p643) target = $region72
      $region71: #{detr_forward.4} parent=67 // pred_region
        %646 = vst [vmem:[#allocation2] sm:$0xff] 0.0
        %647 = vst [vmem:[#allocation2 + $0x8] sm:$0xff] 0.0
        %648 = vst [vmem:[#allocation2 + $0x10] sm:$0xff] 0.0
        %649 = vst [vmem:[#allocation2 + $0x18] sm:$0xff] 0.0
      $region72: #{detr_forward.4} parent=67 // pred_fallthru
        _
      %v650 = vld [vmem:[#allocation2] sm:$0xff]
      %v651 = vld [vmem:[#allocation2 + $0x8] sm:$0xff]
      %v652 = vld [vmem:[#allocation2 + $0x10] sm:$0xff]
      %v653 = vld [vmem:[#allocation2 + $0x18] sm:$0xff]
      %v654 = vld [vmem:[%s581] sm:$0xff]
      %v655 = vld [vmem:[%s581 + $0x8] sm:$0xff]
      %v656 = vld [vmem:[%s581 + $0x10] sm:$0xff]
      %v657 = vld [vmem:[%s581 + $0x18] sm:$0xff]
      %v658 = vadd.f32 %v650, %v654
      %v659 = vadd.f32 %v651, %v655
      %v660 = vadd.f32 %v652, %v656
      %v661 = vadd.f32 %v653, %v657
      %v662 = vpack.c.bf16 %v660, %v658
      %v663 = vpack.c.bf16 %v661, %v659
      %v664 = vld [vmem:[%s591] sm:$0xff]
      %v665 = vld [vmem:[%s591 + $0x8] sm:$0xff]
      %v666 = vld [vmem:[%s591 + $0x10] sm:$0xff]
      %v667 = vld [vmem:[%s591 + $0x18] sm:$0xff]
      %v668 = vld [vmem:[%s591 + $0x20] sm:$0xff]
      %v669 = vld [vmem:[%s591 + $0x28] sm:$0xff]
      %v670 = vld [vmem:[%s591 + $0x30] sm:$0xff]
      %v671 = vld [vmem:[%s591 + $0x38] sm:$0xff]
      %v672 = vld [vmem:[%s591 + $0x40] sm:$0xff]
      %v673 = vld [vmem:[%s591 + $0x48] sm:$0xff]
      %v674 = vld [vmem:[%s591 + $0x50] sm:$0xff]
      %v675 = vld [vmem:[%s591 + $0x58] sm:$0xff]
      %v676 = vld [vmem:[%s591 + $0x60] sm:$0xff]
      %v677 = vld [vmem:[%s591 + $0x68] sm:$0xff]
      %v678 = vld [vmem:[%s591 + $0x70] sm:$0xff]
      %v679 = vld [vmem:[%s591 + $0x78] sm:$0xff]
      %v680 = vld [vmem:[%s591 + $0x80] sm:$0xff]
      %v681 = vld [vmem:[%s591 + $0x88] sm:$0xff]
      %v682 = vld [vmem:[%s591 + $0x90] sm:$0xff]
      %v683 = vld [vmem:[%s591 + $0x98] sm:$0xff]
      %v684 = vld [vmem:[%s591 + $0xa0] sm:$0xff]
      %v685 = vld [vmem:[%s591 + $0xa8] sm:$0xff]
      %v686 = vld [vmem:[%s591 + $0xb0] sm:$0xff]
      %v687 = vld [vmem:[%s591 + $0xb8] sm:$0xff]
      %v688 = vld [vmem:[%s591 + $0xc0] sm:$0xff]
      %v689 = vld [vmem:[%s591 + $0xc8] sm:$0xff]
      %v690 = vld [vmem:[%s591 + $0xd0] sm:$0xff]
      %v691 = vld [vmem:[%s591 + $0xd8] sm:$0xff]
      %v692 = vld [vmem:[%s591 + $0xe0] sm:$0xff]
      %v693 = vld [vmem:[%s591 + $0xe8] sm:$0xff]
      %v694 = vld [vmem:[%s591 + $0xf0] sm:$0xff]
      %v695 = vld [vmem:[%s591 + $0xf8] sm:$0xff]
      %v696 = vld [vmem:[%s595] sm:$0x3]
      %v698 = vlaneseq
      %v699 = vshrl.u32 %v698, 7
      %v700 = vsub.s32 0, %v699
      %v701 = vrot.slane %v696, %v700
      %v702 = vlaneseq
      %v703 = vshrl.u32 %v702, 7
      %v704 = vsub.s32 1, %v703
      %v705 = vrot.slane %v696, %v704
      %v740 = vunpack.c.l.b16 %v664
      %v741 = vunpack.c.h.b16 %v664
      %v742 = vunpack.c.l.b16 %v665
      %v743 = vunpack.c.h.b16 %v665
      %v744 = vunpack.c.l.b16 %v666
      %v745 = vunpack.c.h.b16 %v666
      %v746 = vunpack.c.l.b16 %v667
      %v747 = vunpack.c.h.b16 %v667
      %v748 = vunpack.c.l.b16 %v668
      %v749 = vunpack.c.h.b16 %v668
      %v750 = vunpack.c.l.b16 %v669
      %v751 = vunpack.c.h.b16 %v669
      %v752 = vunpack.c.l.b16 %v670
      %v753 = vunpack.c.h.b16 %v670
      %v754 = vunpack.c.l.b16 %v671
      %v755 = vunpack.c.h.b16 %v671
      %v756 = vunpack.c.l.b16 %v672
      %v757 = vunpack.c.h.b16 %v672
      %v758 = vunpack.c.l.b16 %v673
      %v759 = vunpack.c.h.b16 %v673
      %v760 = vunpack.c.l.b16 %v674
      %v761 = vunpack.c.h.b16 %v674
      %v762 = vunpack.c.l.b16 %v675
      %v763 = vunpack.c.h.b16 %v675
      %v764 = vunpack.c.l.b16 %v676
      %v765 = vunpack.c.h.b16 %v676
      %v766 = vunpack.c.l.b16 %v677
      %v767 = vunpack.c.h.b16 %v677
      %v768 = vunpack.c.l.b16 %v678
      %v769 = vunpack.c.h.b16 %v678
      %v770 = vunpack.c.l.b16 %v679
      %v771 = vunpack.c.h.b16 %v679
      %v772 = vunpack.c.l.b16 %v680
      %v773 = vunpack.c.h.b16 %v680
      %v774 = vunpack.c.l.b16 %v681
      %v775 = vunpack.c.h.b16 %v681
      %v776 = vunpack.c.l.b16 %v682
      %v777 = vunpack.c.h.b16 %v682
      %v778 = vunpack.c.l.b16 %v683
      %v779 = vunpack.c.h.b16 %v683
      %v780 = vunpack.c.l.b16 %v684
      %v781 = vunpack.c.h.b16 %v684
      %v782 = vunpack.c.l.b16 %v685
      %v783 = vunpack.c.h.b16 %v685
      %v784 = vunpack.c.l.b16 %v686
      %v785 = vunpack.c.h.b16 %v686
      %v786 = vunpack.c.l.b16 %v687
      %v787 = vunpack.c.h.b16 %v687
      %v788 = vunpack.c.l.b16 %v688
      %v789 = vunpack.c.h.b16 %v688
      %v790 = vunpack.c.l.b16 %v689
      %v791 = vunpack.c.h.b16 %v689
      %v792 = vunpack.c.l.b16 %v690
      %v793 = vunpack.c.h.b16 %v690
      %v794 = vunpack.c.l.b16 %v691
      %v795 = vunpack.c.h.b16 %v691
      %v796 = vunpack.c.l.b16 %v692
      %v797 = vunpack.c.h.b16 %v692
      %v798 = vunpack.c.l.b16 %v693
      %v799 = vunpack.c.h.b16 %v693
      %v800 = vunpack.c.l.b16 %v694
      %v801 = vunpack.c.h.b16 %v694
      %v802 = vunpack.c.l.b16 %v695
      %v803 = vunpack.c.h.b16 %v695
      %v804 = vpack.c.b16 %v742, %v740
      %v805 = vpack.c.b16 %v743, %v741
      %v806 = vpack.c.b16 %v746, %v744
      %v807 = vpack.c.b16 %v747, %v745
      %v808 = vpack.c.b16 %v750, %v748
      %v809 = vpack.c.b16 %v751, %v749
      %v810 = vpack.c.b16 %v754, %v752
      %v811 = vpack.c.b16 %v755, %v753
      %v812 = vpack.c.b16 %v758, %v756
      %v813 = vpack.c.b16 %v759, %v757
      %v814 = vpack.c.b16 %v762, %v760
      %v815 = vpack.c.b16 %v763, %v761
      %v816 = vpack.c.b16 %v766, %v764
      %v817 = vpack.c.b16 %v767, %v765
      %v818 = vpack.c.b16 %v770, %v768
      %v819 = vpack.c.b16 %v771, %v769
      %v820 = vpack.c.b16 %v774, %v772
      %v821 = vpack.c.b16 %v775, %v773
      %v822 = vpack.c.b16 %v778, %v776
      %v823 = vpack.c.b16 %v779, %v777
      %v824 = vpack.c.b16 %v782, %v780
      %v825 = vpack.c.b16 %v783, %v781
      %v826 = vpack.c.b16 %v786, %v784
      %v827 = vpack.c.b16 %v787, %v785
      %v828 = vpack.c.b16 %v790, %v788
      %v829 = vpack.c.b16 %v791, %v789
      %v830 = vpack.c.b16 %v794, %v792
      %v831 = vpack.c.b16 %v795, %v793
      %v832 = vpack.c.b16 %v798, %v796
      %v833 = vpack.c.b16 %v799, %v797
      %v834 = vpack.c.b16 %v802, %v800
      %v835 = vpack.c.b16 %v803, %v801
      %868 = vmatprep.subr.bf16.mxu0 %v805
      %869 = vmatpush1.bf16.msra.mxu0 %v804
      %870 = vmatprep.subr.bf16.mxu0 %v807
      %871 = vmatpush1.bf16.msra.mxu0 %v806
      %872 = vmatprep.subr.bf16.mxu0 %v809
      %873 = vmatpush1.bf16.msra.mxu0 %v808
      %874 = vmatprep.subr.bf16.mxu0 %v811
      %875 = vmatpush1.bf16.msra.mxu0 %v810
      %876 = vmatprep.subr.bf16.mxu0 %v813
      %877 = vmatpush1.bf16.msra.mxu0 %v812
      %878 = vmatprep.subr.bf16.mxu0 %v815
      %879 = vmatpush1.bf16.msra.mxu0 %v814
      %880 = vmatprep.subr.bf16.mxu0 %v817
      %881 = vmatpush1.bf16.msra.mxu0 %v816
      %882 = vmatprep.subr.bf16.mxu0 %v819
      %883 = vmatpush1.bf16.msra.mxu0 %v818
      %884 = vmatprep.subr.bf16.mxu0 %v821
      %885 = vmatpush1.bf16.msra.mxu0 %v820
      %886 = vmatprep.subr.bf16.mxu0 %v823
      %887 = vmatpush1.bf16.msra.mxu0 %v822
      %888 = vmatprep.subr.bf16.mxu0 %v825
      %889 = vmatpush1.bf16.msra.mxu0 %v824
      %890 = vmatprep.subr.bf16.mxu0 %v827
      %891 = vmatpush1.bf16.msra.mxu0 %v826
      %892 = vmatprep.subr.bf16.mxu0 %v829
      %893 = vmatpush1.bf16.msra.mxu0 %v828
      %894 = vmatprep.subr.bf16.mxu0 %v831
      %895 = vmatpush1.bf16.msra.mxu0 %v830
      %896 = vmatprep.subr.bf16.mxu0 %v833
      %897 = vmatpush1.bf16.msra.mxu0 %v832
      %898 = vmatprep.subr.bf16.mxu0 %v835
      %899 = vmatpush1.bf16.msra.mxu0 %v834
      %900 = vmatprep.mubr.bf16.mxu0 %v663
      %901 = vmatmul.mubr.bf16.gmra.mrb[0].mxu0 %v662
      %v902 = vpop.f32.mrb[0].mxu0
      %v903 = vadd.f32 %v701, %v902
      %v904 = vpop.f32.mrb[0].mxu0
      %v905 = vadd.f32 %v705, %v904
      %v906 = vpop.f32.mrb[0].mxu0
      %v907 = vadd.f32 %v701, %v906
      %v908 = vpop.f32.mrb[0].mxu0
      %v909 = vadd.f32 %v705, %v908
      %910 = vdwg.mxu0
      %v911 = vld [vmem:[%s586] sm:$0xf]
      %v912 = vld [vmem:[%s600] sm:$0xff]
      %v913 = vld [vmem:[%s600 + $0x8] sm:$0xff]
      %v914 = vld [vmem:[%s600 + $0x10] sm:$0xff]
      %v915 = vld [vmem:[%s600 + $0x18] sm:$0xff]
      %v916 = vld [vmem:[%s600 + $0x20] sm:$0xff]
      %v917 = vld [vmem:[%s600 + $0x28] sm:$0xff]
      %v918 = vld [vmem:[%s600 + $0x30] sm:$0xff]
      %v919 = vld [vmem:[%s600 + $0x38] sm:$0xff]
      %v920 = vld [vmem:[%s600 + $0x40] sm:$0xff]
      %v921 = vld [vmem:[%s600 + $0x48] sm:$0xff]
      %v922 = vld [vmem:[%s600 + $0x50] sm:$0xff]
      %v923 = vld [vmem:[%s600 + $0x58] sm:$0xff]
      %v924 = vld [vmem:[%s600 + $0x60] sm:$0xff]
      %v925 = vld [vmem:[%s600 + $0x68] sm:$0xff]
      %v926 = vld [vmem:[%s600 + $0x70] sm:$0xff]
      %v927 = vld [vmem:[%s600 + $0x78] sm:$0xff]
      %v928 = vld [vmem:[%s600 + $0x80] sm:$0xff]
      %v929 = vld [vmem:[%s600 + $0x88] sm:$0xff]
      %v930 = vld [vmem:[%s600 + $0x90] sm:$0xff]
      %v931 = vld [vmem:[%s600 + $0x98] sm:$0xff]
      %v932 = vld [vmem:[%s600 + $0xa0] sm:$0xff]
      %v933 = vld [vmem:[%s600 + $0xa8] sm:$0xff]
      %v934 = vld [vmem:[%s600 + $0xb0] sm:$0xff]
      %v935 = vld [vmem:[%s600 + $0xb8] sm:$0xff]
      %v936 = vld [vmem:[%s600 + $0xc0] sm:$0xff]
      %v937 = vld [vmem:[%s600 + $0xc8] sm:$0xff]
      %v938 = vld [vmem:[%s600 + $0xd0] sm:$0xff]
      %v939 = vld [vmem:[%s600 + $0xd8] sm:$0xff]
      %v940 = vld [vmem:[%s600 + $0xe0] sm:$0xff]
      %v941 = vld [vmem:[%s600 + $0xe8] sm:$0xff]
      %v942 = vld [vmem:[%s600 + $0xf0] sm:$0xff]
      %v943 = vld [vmem:[%s600 + $0xf8] sm:$0xff]
      %v944 = vld [vmem:[%s600 + $0x100] sm:$0xff]
      %v945 = vld [vmem:[%s600 + $0x108] sm:$0xff]
      %v946 = vld [vmem:[%s600 + $0x110] sm:$0xff]
      %v947 = vld [vmem:[%s600 + $0x118] sm:$0xff]
      %v948 = vld [vmem:[%s600 + $0x120] sm:$0xff]
      %v949 = vld [vmem:[%s600 + $0x128] sm:$0xff]
      %v950 = vld [vmem:[%s600 + $0x130] sm:$0xff]
      %v951 = vld [vmem:[%s600 + $0x138] sm:$0xff]
      %v952 = vld [vmem:[%s600 + $0x140] sm:$0xff]
      %v953 = vld [vmem:[%s600 + $0x148] sm:$0xff]
      %v954 = vld [vmem:[%s600 + $0x150] sm:$0xff]
      %v955 = vld [vmem:[%s600 + $0x158] sm:$0xff]
      %v956 = vld [vmem:[%s600 + $0x160] sm:$0xff]
      %v957 = vld [vmem:[%s600 + $0x168] sm:$0xff]
      %v958 = vld [vmem:[%s600 + $0x170] sm:$0xff]
      %v959 = vld [vmem:[%s600 + $0x178] sm:$0xff]
      %v960 = vld [vmem:[%s600 + $0x180] sm:$0xff]
      %v961 = vld [vmem:[%s600 + $0x188] sm:$0xff]
      %v962 = vld [vmem:[%s600 + $0x190] sm:$0xff]
      %v963 = vld [vmem:[%s600 + $0x198] sm:$0xff]
      %v964 = vld [vmem:[%s600 + $0x1a0] sm:$0xff]
      %v965 = vld [vmem:[%s600 + $0x1a8] sm:$0xff]
      %v966 = vld [vmem:[%s600 + $0x1b0] sm:$0xff]
      %v967 = vld [vmem:[%s600 + $0x1b8] sm:$0xff]
      %v968 = vld [vmem:[%s600 + $0x1c0] sm:$0xff]
      %v969 = vld [vmem:[%s600 + $0x1c8] sm:$0xff]
      %v970 = vld [vmem:[%s600 + $0x1d0] sm:$0xff]
      %v971 = vld [vmem:[%s600 + $0x1d8] sm:$0xff]
      %v972 = vld [vmem:[%s600 + $0x1e0] sm:$0xff]
      %v973 = vld [vmem:[%s600 + $0x1e8] sm:$0xff]
      %v974 = vld [vmem:[%s600 + $0x1f0] sm:$0xff]
      %v975 = vld [vmem:[%s600 + $0x1f8] sm:$0xff]
      %v976 = vld [vmem:[%s604] sm:$0xf]
      %v978 = vlaneseq
      %v979 = vshrl.u32 %v978, 7
      %v980 = vsub.s32 0, %v979
      %v981 = vrot.slane %v976, %v980
      %v982 = vlaneseq
      %v983 = vshrl.u32 %v982, 7
      %v984 = vsub.s32 1, %v983
      %v985 = vrot.slane %v976, %v984
      %v986 = vlaneseq
      %v987 = vshrl.u32 %v986, 7
      %v988 = vsub.s32 2, %v987
      %v989 = vrot.slane %v976, %v988
      %v990 = vlaneseq
      %v991 = vshrl.u32 %v990, 7
      %v992 = vsub.s32 3, %v991
      %v993 = vrot.slane %v976, %v992
      %v1000 = vunpack.c.l.s4 1983009808
      %v1001 = vunpack.c.0.s8 %v1000
      %v1002 = vlaneseq
      %v1003 = vshrl.u32 %v1002, 7
      %v1004 = vsub.s32 %v1001, %v1003
      %v1005 = vrot.slane %v911, %v1004
      %v1006 = vcombine.high %v1005, %v1005
      %v1073 = vunpack.c.l.b16 %v912
      %v1074 = vunpack.c.h.b16 %v912
      %v1075 = vunpack.c.l.b16 %v913
      %v1076 = vunpack.c.h.b16 %v913
      %v1077 = vunpack.c.l.b16 %v914
      %v1078 = vunpack.c.h.b16 %v914
      %v1079 = vunpack.c.l.b16 %v915
      %v1080 = vunpack.c.h.b16 %v915
      %v1081 = vunpack.c.l.b16 %v916
      %v1082 = vunpack.c.h.b16 %v916
      %v1083 = vunpack.c.l.b16 %v917
      %v1084 = vunpack.c.h.b16 %v917
      %v1085 = vunpack.c.l.b16 %v918
      %v1086 = vunpack.c.h.b16 %v918
      %v1087 = vunpack.c.l.b16 %v919
      %v1088 = vunpack.c.h.b16 %v919
      %v1089 = vunpack.c.l.b16 %v920
      %v1090 = vunpack.c.h.b16 %v920
      %v1091 = vunpack.c.l.b16 %v921
      %v1092 = vunpack.c.h.b16 %v921
      %v1093 = vunpack.c.l.b16 %v922
      %v1094 = vunpack.c.h.b16 %v922
      %v1095 = vunpack.c.l.b16 %v923
      %v1096 = vunpack.c.h.b16 %v923
      %v1097 = vunpack.c.l.b16 %v924
      %v1098 = vunpack.c.h.b16 %v924
      %v1099 = vunpack.c.l.b16 %v925
      %v1100 = vunpack.c.h.b16 %v925
      %v1101 = vunpack.c.l.b16 %v926
      %v1102 = vunpack.c.h.b16 %v926
      %v1103 = vunpack.c.l.b16 %v927
      %v1104 = vunpack.c.h.b16 %v927
      %v1105 = vunpack.c.l.b16 %v928
      %v1106 = vunpack.c.h.b16 %v928
      %v1107 = vunpack.c.l.b16 %v929
      %v1108 = vunpack.c.h.b16 %v929
      %v1109 = vunpack.c.l.b16 %v930
      %v1110 = vunpack.c.h.b16 %v930
      %v1111 = vunpack.c.l.b16 %v931
      %v1112 = vunpack.c.h.b16 %v931
      %v1113 = vunpack.c.l.b16 %v932
      %v1114 = vunpack.c.h.b16 %v932
      %v1115 = vunpack.c.l.b16 %v933
      %v1116 = vunpack.c.h.b16 %v933
      %v1117 = vunpack.c.l.b16 %v934
      %v1118 = vunpack.c.h.b16 %v934
      %v1119 = vunpack.c.l.b16 %v935
      %v1120 = vunpack.c.h.b16 %v935
      %v1121 = vunpack.c.l.b16 %v936
      %v1122 = vunpack.c.h.b16 %v936
      %v1123 = vunpack.c.l.b16 %v937
      %v1124 = vunpack.c.h.b16 %v937
      %v1125 = vunpack.c.l.b16 %v938
      %v1126 = vunpack.c.h.b16 %v938
      %v1127 = vunpack.c.l.b16 %v939
      %v1128 = vunpack.c.h.b16 %v939
      %v1129 = vunpack.c.l.b16 %v940
      %v1130 = vunpack.c.h.b16 %v940
      %v1131 = vunpack.c.l.b16 %v941
      %v1132 = vunpack.c.h.b16 %v941
      %v1133 = vunpack.c.l.b16 %v942
      %v1134 = vunpack.c.h.b16 %v942
      %v1135 = vunpack.c.l.b16 %v943
      %v1136 = vunpack.c.h.b16 %v943
      %v1137 = vunpack.c.l.b16 %v944
      %v1138 = vunpack.c.h.b16 %v944
      %v1139 = vunpack.c.l.b16 %v945
      %v1140 = vunpack.c.h.b16 %v945
      %v1141 = vunpack.c.l.b16 %v946
      %v1142 = vunpack.c.h.b16 %v946
      %v1143 = vunpack.c.l.b16 %v947
      %v1144 = vunpack.c.h.b16 %v947
      %v1145 = vunpack.c.l.b16 %v948
      %v1146 = vunpack.c.h.b16 %v948
      %v1147 = vunpack.c.l.b16 %v949
      %v1148 = vunpack.c.h.b16 %v949
      %v1149 = vunpack.c.l.b16 %v950
      %v1150 = vunpack.c.h.b16 %v950
      %v1151 = vunpack.c.l.b16 %v951
      %v1152 = vunpack.c.h.b16 %v951
      %v1153 = vunpack.c.l.b16 %v952
      %v1154 = vunpack.c.h.b16 %v952
      %v1155 = vunpack.c.l.b16 %v953
      %v1156 = vunpack.c.h.b16 %v953
      %v1157 = vunpack.c.l.b16 %v954
      %v1158 = vunpack.c.h.b16 %v954
      %v1159 = vunpack.c.l.b16 %v955
      %v1160 = vunpack.c.h.b16 %v955
      %v1161 = vunpack.c.l.b16 %v956
      %v1162 = vunpack.c.h.b16 %v956
      %v1163 = vunpack.c.l.b16 %v957
      %v1164 = vunpack.c.h.b16 %v957
      %v1165 = vunpack.c.l.b16 %v958
      %v1166 = vunpack.c.h.b16 %v958
      %v1167 = vunpack.c.l.b16 %v959
      %v1168 = vunpack.c.h.b16 %v959
      %v1169 = vunpack.c.l.b16 %v960
      %v1170 = vunpack.c.h.b16 %v960
      %v1171 = vunpack.c.l.b16 %v961
      %v1172 = vunpack.c.h.b16 %v961
      %v1173 = vunpack.c.l.b16 %v962
      %v1174 = vunpack.c.h.b16 %v962
      %v1175 = vunpack.c.l.b16 %v963
      %v1176 = vunpack.c.h.b16 %v963
      %v1177 = vunpack.c.l.b16 %v964
      %v1178 = vunpack.c.h.b16 %v964
      %v1179 = vunpack.c.l.b16 %v965
      %v1180 = vunpack.c.h.b16 %v965
      %v1181 = vunpack.c.l.b16 %v966
      %v1182 = vunpack.c.h.b16 %v966
      %v1183 = vunpack.c.l.b16 %v967
      %v1184 = vunpack.c.h.b16 %v967
      %v1185 = vunpack.c.l.b16 %v968
      %v1186 = vunpack.c.h.b16 %v968
      %v1187 = vunpack.c.l.b16 %v969
      %v1188 = vunpack.c.h.b16 %v969
      %v1189 = vunpack.c.l.b16 %v970
      %v1190 = vunpack.c.h.b16 %v970
      %v1191 = vunpack.c.l.b16 %v971
      %v1192 = vunpack.c.h.b16 %v971
      %v1193 = vunpack.c.l.b16 %v972
      %v1194 = vunpack.c.h.b16 %v972
      %v1195 = vunpack.c.l.b16 %v973
      %v1196 = vunpack.c.h.b16 %v973
      %v1197 = vunpack.c.l.b16 %v974
      %v1198 = vunpack.c.h.b16 %v974
      %v1199 = vunpack.c.l.b16 %v975
      %v1200 = vunpack.c.h.b16 %v975
      %v1201 = vpack.c.b16 %v1077, %v1073
      %v1202 = vpack.c.b16 %v1078, %v1074
      %v1203 = vpack.c.b16 %v1079, %v1075
      %v1204 = vpack.c.b16 %v1080, %v1076
      %v1205 = vpack.c.b16 %v1085, %v1081
      %v1206 = vpack.c.b16 %v1086, %v1082
      %v1207 = vpack.c.b16 %v1087, %v1083
      %v1208 = vpack.c.b16 %v1088, %v1084
      %v1209 = vpack.c.b16 %v1093, %v1089
      %v1210 = vpack.c.b16 %v1094, %v1090
      %v1211 = vpack.c.b16 %v1095, %v1091
      %v1212 = vpack.c.b16 %v1096, %v1092
      %v1213 = vpack.c.b16 %v1101, %v1097
      %v1214 = vpack.c.b16 %v1102, %v1098
      %v1215 = vpack.c.b16 %v1103, %v1099
      %v1216 = vpack.c.b16 %v1104, %v1100
      %v1217 = vpack.c.b16 %v1109, %v1105
      %v1218 = vpack.c.b16 %v1110, %v1106
      %v1219 = vpack.c.b16 %v1111, %v1107
      %v1220 = vpack.c.b16 %v1112, %v1108
      %v1221 = vpack.c.b16 %v1117, %v1113
      %v1222 = vpack.c.b16 %v1118, %v1114
      %v1223 = vpack.c.b16 %v1119, %v1115
      %v1224 = vpack.c.b16 %v1120, %v1116
      %v1225 = vpack.c.b16 %v1125, %v1121
      %v1226 = vpack.c.b16 %v1126, %v1122
      %v1227 = vpack.c.b16 %v1127, %v1123
      %v1228 = vpack.c.b16 %v1128, %v1124
      %v1229 = vpack.c.b16 %v1133, %v1129
      %v1230 = vpack.c.b16 %v1134, %v1130
      %v1231 = vpack.c.b16 %v1135, %v1131
      %v1232 = vpack.c.b16 %v1136, %v1132
      %v1233 = vpack.c.b16 %v1141, %v1137
      %v1234 = vpack.c.b16 %v1142, %v1138
      %v1235 = vpack.c.b16 %v1143, %v1139
      %v1236 = vpack.c.b16 %v1144, %v1140
      %v1237 = vpack.c.b16 %v1149, %v1145
      %v1238 = vpack.c.b16 %v1150, %v1146
      %v1239 = vpack.c.b16 %v1151, %v1147
      %v1240 = vpack.c.b16 %v1152, %v1148
      %v1241 = vpack.c.b16 %v1157, %v1153
      %v1242 = vpack.c.b16 %v1158, %v1154
      %v1243 = vpack.c.b16 %v1159, %v1155
      %v1244 = vpack.c.b16 %v1160, %v1156
      %v1245 = vpack.c.b16 %v1165, %v1161
      %v1246 = vpack.c.b16 %v1166, %v1162
      %v1247 = vpack.c.b16 %v1167, %v1163
      %v1248 = vpack.c.b16 %v1168, %v1164
      %v1249 = vpack.c.b16 %v1173, %v1169
      %v1250 = vpack.c.b16 %v1174, %v1170
      %v1251 = vpack.c.b16 %v1175, %v1171
      %v1252 = vpack.c.b16 %v1176, %v1172
      %v1253 = vpack.c.b16 %v1181, %v1177
      %v1254 = vpack.c.b16 %v1182, %v1178
      %v1255 = vpack.c.b16 %v1183, %v1179
      %v1256 = vpack.c.b16 %v1184, %v1180
      %v1257 = vpack.c.b16 %v1189, %v1185
      %v1258 = vpack.c.b16 %v1190, %v1186
      %v1259 = vpack.c.b16 %v1191, %v1187
      %v1260 = vpack.c.b16 %v1192, %v1188
      %v1261 = vpack.c.b16 %v1197, %v1193
      %v1262 = vpack.c.b16 %v1198, %v1194
      %v1263 = vpack.c.b16 %v1199, %v1195
      %v1264 = vpack.c.b16 %v1200, %v1196
      %1329 = vmatprep.subr.bf16.mxu0 %v1202
      %1330 = vmatpush1.bf16.msra.mxu0 %v1201
      %1331 = vmatprep.subr.bf16.mxu0 %v1206
      %1332 = vmatpush1.bf16.msra.mxu0 %v1205
      %1333 = vmatprep.subr.bf16.mxu0 %v1210
      %1334 = vmatpush1.bf16.msra.mxu0 %v1209
      %1335 = vmatprep.subr.bf16.mxu0 %v1214
      %1336 = vmatpush1.bf16.msra.mxu0 %v1213
      %1337 = vmatprep.subr.bf16.mxu0 %v1218
      %1338 = vmatpush1.bf16.msra.mxu0 %v1217
      %1339 = vmatprep.subr.bf16.mxu0 %v1222
      %1340 = vmatpush1.bf16.msra.mxu0 %v1221
      %1341 = vmatprep.subr.bf16.mxu0 %v1226
      %1342 = vmatpush1.bf16.msra.mxu0 %v1225
      %1343 = vmatprep.subr.bf16.mxu0 %v1230
      %1344 = vmatpush1.bf16.msra.mxu0 %v1229
      %1345 = vmatprep.subr.bf16.mxu0 %v1234
      %1346 = vmatpush1.bf16.msra.mxu0 %v1233
      %1347 = vmatprep.subr.bf16.mxu0 %v1238
      %1348 = vmatpush1.bf16.msra.mxu0 %v1237
      %1349 = vmatprep.subr.bf16.mxu0 %v1242
      %1350 = vmatpush1.bf16.msra.mxu0 %v1241
      %1351 = vmatprep.subr.bf16.mxu0 %v1246
      %1352 = vmatpush1.bf16.msra.mxu0 %v1245
      %1353 = vmatprep.subr.bf16.mxu0 %v1250
      %1354 = vmatpush1.bf16.msra.mxu0 %v1249
      %1355 = vmatprep.subr.bf16.mxu0 %v1254
      %1356 = vmatpush1.bf16.msra.mxu0 %v1253
      %1357 = vmatprep.subr.bf16.mxu0 %v1258
      %1358 = vmatpush1.bf16.msra.mxu0 %v1257
      %1359 = vmatprep.subr.bf16.mxu0 %v1262
      %1360 = vmatpush1.bf16.msra.mxu0 %v1261
      %1361 = vmatprep.mubr.bf16.mxu0 %v1006
      %1362 = vmatmul.mubr.bf16.gmra.mrb[0].mxu0 %v1005
      %v1363 = vpop.f32.mrb[0].mxu0
      %v1364 = vadd.f32 %v981, %v1363
      %v1365 = vpop.f32.mrb[0].mxu0
      %v1366 = vadd.f32 %v985, %v1365
      %v1367 = vpop.f32.mrb[0].mxu0
      %v1368 = vpop.f32.mrb[0].mxu0
      %1369 = vdwg.mxu0
      %1370 = vmatprep.subr.bf16.mxu0 %v1204
      %1371 = vmatpush1.bf16.msra.mxu0 %v1203
      %1372 = vmatprep.subr.bf16.mxu0 %v1208
      %1373 = vmatpush1.bf16.msra.mxu0 %v1207
      %1374 = vmatprep.subr.bf16.mxu0 %v1212
      %1375 = vmatpush1.bf16.msra.mxu0 %v1211
      %1376 = vmatprep.subr.bf16.mxu0 %v1216
      %1377 = vmatpush1.bf16.msra.mxu0 %v1215
      %1378 = vmatprep.subr.bf16.mxu0 %v1220
      %1379 = vmatpush1.bf16.msra.mxu0 %v1219
      %1380 = vmatprep.subr.bf16.mxu0 %v1224
      %1381 = vmatpush1.bf16.msra.mxu0 %v1223
      %1382 = vmatprep.subr.bf16.mxu0 %v1228
      %1383 = vmatpush1.bf16.msra.mxu0 %v1227
      %1384 = vmatprep.subr.bf16.mxu0 %v1232
      %1385 = vmatpush1.bf16.msra.mxu0 %v1231
      %1386 = vmatprep.subr.bf16.mxu0 %v1236
      %1387 = vmatpush1.bf16.msra.mxu0 %v1235
      %1388 = vmatprep.subr.bf16.mxu0 %v1240
      %1389 = vmatpush1.bf16.msra.mxu0 %v1239
      %1390 = vmatprep.subr.bf16.mxu0 %v1244
      %1391 = vmatpush1.bf16.msra.mxu0 %v1243
      %1392 = vmatprep.subr.bf16.mxu0 %v1248
      %1393 = vmatpush1.bf16.msra.mxu0 %v1247
      %1394 = vmatprep.subr.bf16.mxu0 %v1252
      %1395 = vmatpush1.bf16.msra.mxu0 %v1251
      %1396 = vmatprep.subr.bf16.mxu0 %v1256
      %1397 = vmatpush1.bf16.msra.mxu0 %v1255
      %1398 = vmatprep.subr.bf16.mxu0 %v1260
      %1399 = vmatpush1.bf16.msra.mxu0 %v1259
      %1400 = vmatprep.subr.bf16.mxu0 %v1264
      %1401 = vmatpush1.bf16.msra.mxu0 %v1263
      %1402 = vmatprep.mubr.bf16.mxu0 %v1006
      %1403 = vmatmul.mubr.bf16.gmra.mrb[0].mxu0 %v1005
      %v1404 = vpop.f32.mrb[0].mxu0
      %v1405 = vadd.f32 %v989, %v1404
      %v1406 = vpop.f32.mrb[0].mxu0
      %v1407 = vadd.f32 %v993, %v1406
      %v1408 = vpop.f32.mrb[0].mxu0
      %v1409 = vpop.f32.mrb[0].mxu0
      %1410 = vdwg.mxu0
      %v1411 = vpack.c.bf16 %v1364, %v1364
      %v1412 = vpack.c.bf16 %v1366, %v1366
      %v1413 = vpack.c.bf16 %v1405, %v1405
      %v1414 = vpack.c.bf16 %v1407, %v1407
      %v1415 = vpack.c.bf16 %v907, %v903
      %v1416 = vpack.c.bf16 %v909, %v905
      %1417 = vmatprep.subr.bf16.mxu0 %v1412
      %1418 = vmatpush1.bf16.xpose.msra.mxu0 %v1411
      %1419 = vmatprep.subr.bf16.mxu0 0
      %1420 = vmatpush1.bf16.xpose.msra.mxu0 0
      %1421 = vmatprep.subr.bf16.mxu0 0
      %1422 = vmatpush1.bf16.xpose.msra.mxu0 0
      %1423 = vmatprep.subr.bf16.mxu0 0
      %1424 = vmatpush1.bf16.xpose.msra.mxu0 0
      %1425 = vmatprep.subr.bf16.mxu0 0
      %1426 = vmatpush1.bf16.xpose.msra.mxu0 0
      %1427 = vmatprep.subr.bf16.mxu0 0
      %1428 = vmatpush1.bf16.xpose.msra.mxu0 0
      %1429 = vmatprep.subr.bf16.mxu0 0
      %1430 = vmatpush1.bf16.xpose.msra.mxu0 0
      %1431 = vmatprep.subr.bf16.mxu0 0
      %1432 = vmatpush1.bf16.xpose.msra.mxu0 0
      %1433 = vmatprep.subr.bf16.mxu0 0
      %1434 = vmatpush1.bf16.xpose.msra.mxu0 0
      %1435 = vmatprep.subr.bf16.mxu0 0
      %1436 = vmatpush1.bf16.xpose.msra.mxu0 0
      %1437 = vmatprep.subr.bf16.mxu0 0
      %1438 = vmatpush1.bf16.xpose.msra.mxu0 0
      %1439 = vmatprep.subr.bf16.mxu0 0
      %1440 = vmatpush1.bf16.xpose.msra.mxu0 0
      %1441 = vmatprep.subr.bf16.mxu0 0
      %1442 = vmatpush1.bf16.xpose.msra.mxu0 0
      %1443 = vmatprep.subr.bf16.mxu0 0
      %1444 = vmatpush1.bf16.xpose.msra.mxu0 0
      %1445 = vmatprep.subr.bf16.mxu0 0
      %1446 = vmatpush1.bf16.xpose.msra.mxu0 0
      %1447 = vmatprep.subr.bf16.mxu0 0
      %1448 = vmatpush1.bf16.xpose.msra.mxu0 0
      %1449 = vmatprep.mubr.bf16.mxu0 %v1416
      %1450 = vmatmul.mubr.bf16.gmra.mrb[0].mxu0 %v1415
      %v1451 = vpop.f32.mrb[0].mxu0
      %v1452 = vadd.f32 0.0, %v1451
      %v1453 = vpop.f32.mrb[0].mxu0
      %v1454 = vpop.f32.mrb[0].mxu0
      %v1455 = vadd.f32 0.0, %v1454
      %v1456 = vpop.f32.mrb[0].mxu0
      %1457 = vdwg.mxu0
      %v1458 = vmul.f32 %v1452, 0.0625
      %v1459 = vmul.f32 %v1455, 0.0625
      %vm1460 = vcmask 31744
      %v1461 = vsel %vm1460, %v1458, -inf
      %1462 = vmax.xlane.f32.xlu0 %v1461
      %v1463 = vpop.xlane.xlu0 %1462
      %v1464 = vsel %vm1460, %v1459, -inf
      %1465 = vmax.xlane.f32.xlu0 %v1464
      %v1466 = vpop.xlane.xlu0 %1465
      %v1467 = vsub.f32 %v1458, %v1463
      %v1468 = vsub.f32 %v1459, %v1466
      %v1469 = vmul.f32 %v1467, 1.442695
      %v1470 = vpow.pop %v1469
      %v1471 = vmul.f32 %v1468, 1.442695
      %v1472 = vpow.pop %v1471
      %v1473 = vsel %vm1460, %v1470, 0.0
      %1474 = vadd.xlane.f32.xlu0 %v1473
      %v1475 = vpop.xlane.xlu0 %1474
      %v1476 = vsel %vm1460, %v1472, 0.0
      %1477 = vadd.xlane.f32.xlu0 %v1476
      %v1478 = vpop.xlane.xlu0 %1477
      %v1479 = vrcp.pop %v1475
      %v1480 = vrcp.pop %v1478
      %v1481 = vmul.f32 %v1470, %v1479
      %v1482 = vmul.f32 %v1472, %v1480
      %v1483 = vpack.c.bf16 %v1482, %v1481
      %v1485 = vsel %vm1460, %v1483, 0
      %vm1487 = vcmask 1041408
      %v1489 = vsel %vm1487, %v1413, 0
      %v1492 = vsel %vm1487, %v1414, 0
      %1494 = vmatprep.subr.bf16.mxu0 %v1492
      %1495 = vmatpush1.bf16.msra.mxu0 %v1489
      %1496 = vmatprep.subr.bf16.mxu0 0
      %1497 = vmatpush1.bf16.msra.mxu0 0
      %1498 = vmatprep.subr.bf16.mxu0 0
      %1499 = vmatpush1.bf16.msra.mxu0 0
      %1500 = vmatprep.subr.bf16.mxu0 0
      %1501 = vmatpush1.bf16.msra.mxu0 0
      %1502 = vmatprep.subr.bf16.mxu0 0
      %1503 = vmatpush1.bf16.msra.mxu0 0
      %1504 = vmatprep.subr.bf16.mxu0 0
      %1505 = vmatpush1.bf16.msra.mxu0 0
      %1506 = vmatprep.subr.bf16.mxu0 0
      %1507 = vmatpush1.bf16.msra.mxu0 0
      %1508 = vmatprep.subr.bf16.mxu0 0
      %1509 = vmatpush1.bf16.msra.mxu0 0
      %1510 = vmatprep.subr.bf16.mxu0 0
      %1511 = vmatpush1.bf16.msra.mxu0 0
      %1512 = vmatprep.subr.bf16.mxu0 0
      %1513 = vmatpush1.bf16.msra.mxu0 0
      %1514 = vmatprep.subr.bf16.mxu0 0
      %1515 = vmatpush1.bf16.msra.mxu0 0
      %1516 = vmatprep.subr.bf16.mxu0 0
      %1517 = vmatpush1.bf16.msra.mxu0 0
      %1518 = vmatprep.subr.bf16.mxu0 0
      %1519 = vmatpush1.bf16.msra.mxu0 0
      %1520 = vmatprep.subr.bf16.mxu0 0
      %1521 = vmatpush1.bf16.msra.mxu0 0
      %1522 = vmatprep.subr.bf16.mxu0 0
      %1523 = vmatpush1.bf16.msra.mxu0 0
      %1524 = vmatprep.subr.bf16.mxu0 0
      %1525 = vmatpush1.bf16.msra.mxu0 0
      %1526 = vmatprep.mubr.bf16.mxu0 0
      %1527 = vmatmul.mubr.bf16.gmra.mrb[0].mxu0 %v1485
      %v1528 = vpop.f32.mrb[0].mxu0
      %v1529 = vadd.f32 0.0, %v1528
      %v1530 = vpop.f32.mrb[0].mxu0
      %v1531 = vadd.f32 0.0, %v1530
      %v1532 = vpop.f32.mrb[0].mxu0
      %v1533 = vadd.f32 0.0, %v1532
      %v1534 = vpop.f32.mrb[0].mxu0
      %v1535 = vadd.f32 0.0, %v1534
      %1536 = vdwg.mxu0
      %v1537 = vpack.c.bf16 %v1533, %v1529
      %v1538 = vpack.c.bf16 %v1535, %v1531
      %v1539 = vld [vmem:[%s609] sm:$0xff]
      %v1540 = vld [vmem:[%s609 + $0x8] sm:$0xff]
      %v1541 = vld [vmem:[%s609 + $0x10] sm:$0xff]
      %v1542 = vld [vmem:[%s609 + $0x18] sm:$0xff]
      %v1543 = vld [vmem:[%s609 + $0x20] sm:$0xff]
      %v1544 = vld [vmem:[%s609 + $0x28] sm:$0xff]
      %v1545 = vld [vmem:[%s609 + $0x30] sm:$0xff]
      %v1546 = vld [vmem:[%s609 + $0x38] sm:$0xff]
      %v1547 = vld [vmem:[%s609 + $0x40] sm:$0xff]
      %v1548 = vld [vmem:[%s609 + $0x48] sm:$0xff]
      %v1549 = vld [vmem:[%s609 + $0x50] sm:$0xff]
      %v1550 = vld [vmem:[%s609 + $0x58] sm:$0xff]
      %v1551 = vld [vmem:[%s609 + $0x60] sm:$0xff]
      %v1552 = vld [vmem:[%s609 + $0x68] sm:$0xff]
      %v1553 = vld [vmem:[%s609 + $0x70] sm:$0xff]
      %v1554 = vld [vmem:[%s609 + $0x78] sm:$0xff]
      %v1555 = vld [vmem:[%s609 + $0x80] sm:$0xff]
      %v1556 = vld [vmem:[%s609 + $0x88] sm:$0xff]
      %v1557 = vld [vmem:[%s609 + $0x90] sm:$0xff]
      %v1558 = vld [vmem:[%s609 + $0x98] sm:$0xff]
      %v1559 = vld [vmem:[%s609 + $0xa0] sm:$0xff]
      %v1560 = vld [vmem:[%s609 + $0xa8] sm:$0xff]
      %v1561 = vld [vmem:[%s609 + $0xb0] sm:$0xff]
      %v1562 = vld [vmem:[%s609 + $0xb8] sm:$0xff]
      %v1563 = vld [vmem:[%s609 + $0xc0] sm:$0xff]
      %v1564 = vld [vmem:[%s609 + $0xc8] sm:$0xff]
      %v1565 = vld [vmem:[%s609 + $0xd0] sm:$0xff]
      %v1566 = vld [vmem:[%s609 + $0xd8] sm:$0xff]
      %v1567 = vld [vmem:[%s609 + $0xe0] sm:$0xff]
      %v1568 = vld [vmem:[%s609 + $0xe8] sm:$0xff]
      %v1569 = vld [vmem:[%s609 + $0xf0] sm:$0xff]
      %v1570 = vld [vmem:[%s609 + $0xf8] sm:$0xff]
      %v1571 = vld [vmem:[%s613] sm:$0x3]
      %v1573 = vlaneseq
      %v1574 = vshrl.u32 %v1573, 7
      %v1575 = vsub.s32 0, %v1574
      %v1576 = vrot.slane %v1571, %v1575
      %v1577 = vlaneseq
      %v1578 = vshrl.u32 %v1577, 7
      %v1579 = vsub.s32 1, %v1578
      %v1580 = vrot.slane %v1571, %v1579
      %v1615 = vunpack.c.l.b16 %v1539
      %v1616 = vunpack.c.h.b16 %v1539
      %v1617 = vunpack.c.l.b16 %v1540
      %v1618 = vunpack.c.h.b16 %v1540
      %v1619 = vunpack.c.l.b16 %v1541
      %v1620 = vunpack.c.h.b16 %v1541
      %v1621 = vunpack.c.l.b16 %v1542
      %v1622 = vunpack.c.h.b16 %v1542
      %v1623 = vunpack.c.l.b16 %v1543
      %v1624 = vunpack.c.h.b16 %v1543
      %v1625 = vunpack.c.l.b16 %v1544
      %v1626 = vunpack.c.h.b16 %v1544
      %v1627 = vunpack.c.l.b16 %v1545
      %v1628 = vunpack.c.h.b16 %v1545
      %v1629 = vunpack.c.l.b16 %v1546
      %v1630 = vunpack.c.h.b16 %v1546
      %v1631 = vunpack.c.l.b16 %v1547
      %v1632 = vunpack.c.h.b16 %v1547
      %v1633 = vunpack.c.l.b16 %v1548
      %v1634 = vunpack.c.h.b16 %v1548
      %v1635 = vunpack.c.l.b16 %v1549
      %v1636 = vunpack.c.h.b16 %v1549
      %v1637 = vunpack.c.l.b16 %v1550
      %v1638 = vunpack.c.h.b16 %v1550
      %v1639 = vunpack.c.l.b16 %v1551
      %v1640 = vunpack.c.h.b16 %v1551
      %v1641 = vunpack.c.l.b16 %v1552
      %v1642 = vunpack.c.h.b16 %v1552
      %v1643 = vunpack.c.l.b16 %v1553
      %v1644 = vunpack.c.h.b16 %v1553
      %v1645 = vunpack.c.l.b16 %v1554
      %v1646 = vunpack.c.h.b16 %v1554
      %v1647 = vunpack.c.l.b16 %v1555
      %v1648 = vunpack.c.h.b16 %v1555
      %v1649 = vunpack.c.l.b16 %v1556
      %v1650 = vunpack.c.h.b16 %v1556
      %v1651 = vunpack.c.l.b16 %v1557
      %v1652 = vunpack.c.h.b16 %v1557
      %v1653 = vunpack.c.l.b16 %v1558
      %v1654 = vunpack.c.h.b16 %v1558
      %v1655 = vunpack.c.l.b16 %v1559
      %v1656 = vunpack.c.h.b16 %v1559
      %v1657 = vunpack.c.l.b16 %v1560
      %v1658 = vunpack.c.h.b16 %v1560
      %v1659 = vunpack.c.l.b16 %v1561
      %v1660 = vunpack.c.h.b16 %v1561
      %v1661 = vunpack.c.l.b16 %v1562
      %v1662 = vunpack.c.h.b16 %v1562
      %v1663 = vunpack.c.l.b16 %v1563
      %v1664 = vunpack.c.h.b16 %v1563
      %v1665 = vunpack.c.l.b16 %v1564
      %v1666 = vunpack.c.h.b16 %v1564
      %v1667 = vunpack.c.l.b16 %v1565
      %v1668 = vunpack.c.h.b16 %v1565
      %v1669 = vunpack.c.l.b16 %v1566
      %v1670 = vunpack.c.h.b16 %v1566
      %v1671 = vunpack.c.l.b16 %v1567
      %v1672 = vunpack.c.h.b16 %v1567
      %v1673 = vunpack.c.l.b16 %v1568
      %v1674 = vunpack.c.h.b16 %v1568
      %v1675 = vunpack.c.l.b16 %v1569
      %v1676 = vunpack.c.h.b16 %v1569
      %v1677 = vunpack.c.l.b16 %v1570
      %v1678 = vunpack.c.h.b16 %v1570
      %v1679 = vpack.c.b16 %v1617, %v1615
      %v1680 = vpack.c.b16 %v1618, %v1616
      %v1681 = vpack.c.b16 %v1621, %v1619
      %v1682 = vpack.c.b16 %v1622, %v1620
      %v1683 = vpack.c.b16 %v1625, %v1623
      %v1684 = vpack.c.b16 %v1626, %v1624
      %v1685 = vpack.c.b16 %v1629, %v1627
      %v1686 = vpack.c.b16 %v1630, %v1628
      %v1687 = vpack.c.b16 %v1633, %v1631
      %v1688 = vpack.c.b16 %v1634, %v1632
      %v1689 = vpack.c.b16 %v1637, %v1635
      %v1690 = vpack.c.b16 %v1638, %v1636
      %v1691 = vpack.c.b16 %v1641, %v1639
      %v1692 = vpack.c.b16 %v1642, %v1640
      %v1693 = vpack.c.b16 %v1645, %v1643
      %v1694 = vpack.c.b16 %v1646, %v1644
      %v1695 = vpack.c.b16 %v1649, %v1647
      %v1696 = vpack.c.b16 %v1650, %v1648
      %v1697 = vpack.c.b16 %v1653, %v1651
      %v1698 = vpack.c.b16 %v1654, %v1652
      %v1699 = vpack.c.b16 %v1657, %v1655
      %v1700 = vpack.c.b16 %v1658, %v1656
      %v1701 = vpack.c.b16 %v1661, %v1659
      %v1702 = vpack.c.b16 %v1662, %v1660
      %v1703 = vpack.c.b16 %v1665, %v1663
      %v1704 = vpack.c.b16 %v1666, %v1664
      %v1705 = vpack.c.b16 %v1669, %v1667
      %v1706 = vpack.c.b16 %v1670, %v1668
      %v1707 = vpack.c.b16 %v1673, %v1671
      %v1708 = vpack.c.b16 %v1674, %v1672
      %v1709 = vpack.c.b16 %v1677, %v1675
      %v1710 = vpack.c.b16 %v1678, %v1676
      %1743 = vmatprep.subr.bf16.mxu0 %v1680
      %1744 = vmatpush1.bf16.msra.mxu0 %v1679
      %1745 = vmatprep.subr.bf16.mxu0 %v1682
      %1746 = vmatpush1.bf16.msra.mxu0 %v1681
      %1747 = vmatprep.subr.bf16.mxu0 %v1684
      %1748 = vmatpush1.bf16.msra.mxu0 %v1683
      %1749 = vmatprep.subr.bf16.mxu0 %v1686
      %1750 = vmatpush1.bf16.msra.mxu0 %v1685
      %1751 = vmatprep.subr.bf16.mxu0 %v1688
      %1752 = vmatpush1.bf16.msra.mxu0 %v1687
      %1753 = vmatprep.subr.bf16.mxu0 %v1690
      %1754 = vmatpush1.bf16.msra.mxu0 %v1689
      %1755 = vmatprep.subr.bf16.mxu0 %v1692
      %1756 = vmatpush1.bf16.msra.mxu0 %v1691
      %1757 = vmatprep.subr.bf16.mxu0 %v1694
      %1758 = vmatpush1.bf16.msra.mxu0 %v1693
      %1759 = vmatprep.subr.bf16.mxu0 %v1696
      %1760 = vmatpush1.bf16.msra.mxu0 %v1695
      %1761 = vmatprep.subr.bf16.mxu0 %v1698
      %1762 = vmatpush1.bf16.msra.mxu0 %v1697
      %1763 = vmatprep.subr.bf16.mxu0 %v1700
      %1764 = vmatpush1.bf16.msra.mxu0 %v1699
      %1765 = vmatprep.subr.bf16.mxu0 %v1702
      %1766 = vmatpush1.bf16.msra.mxu0 %v1701
      %1767 = vmatprep.subr.bf16.mxu0 %v1704
      %1768 = vmatpush1.bf16.msra.mxu0 %v1703
      %1769 = vmatprep.subr.bf16.mxu0 %v1706
      %1770 = vmatpush1.bf16.msra.mxu0 %v1705
      %1771 = vmatprep.subr.bf16.mxu0 %v1708
      %1772 = vmatpush1.bf16.msra.mxu0 %v1707
      %1773 = vmatprep.subr.bf16.mxu0 %v1710
      %1774 = vmatpush1.bf16.msra.mxu0 %v1709
      %1775 = vmatprep.mubr.bf16.mxu0 %v1538
      %1776 = vmatmul.mubr.bf16.gmra.mrb[0].mxu0 %v1537
      %v1777 = vpop.f32.mrb[0].mxu0
      %v1778 = vadd.f32 %v1576, %v1777
      %v1779 = vpop.f32.mrb[0].mxu0
      %v1780 = vadd.f32 %v1580, %v1779
      %v1781 = vpop.f32.mrb[0].mxu0
      %v1782 = vadd.f32 %v1576, %v1781
      %v1783 = vpop.f32.mrb[0].mxu0
      %v1784 = vadd.f32 %v1580, %v1783
      %1785 = vdwg.mxu0
      %v1786 = vadd.f32 %v650, %v1778
      %v1787 = vadd.f32 %v651, %v1780
      %v1788 = vadd.f32 %v652, %v1782
      %v1789 = vadd.f32 %v653, %v1784
      %v1790 = vpack.c.bf16 %v1788, %v1786
      %v1791 = vpack.c.bf16 %v1789, %v1787
      %v1792 = vld [vmem:[%s618] sm:$0xff]
      %v1793 = vld [vmem:[%s618 + $0x8] sm:$0xff]
      %v1794 = vld [vmem:[%s618 + $0x10] sm:$0xff]
      %v1795 = vld [vmem:[%s618 + $0x18] sm:$0xff]
      %v1796 = vld [vmem:[%s618 + $0x20] sm:$0xff]
      %v1797 = vld [vmem:[%s618 + $0x28] sm:$0xff]
      %v1798 = vld [vmem:[%s618 + $0x30] sm:$0xff]
      %v1799 = vld [vmem:[%s618 + $0x38] sm:$0xff]
      %v1800 = vld [vmem:[%s618 + $0x40] sm:$0xff]
      %v1801 = vld [vmem:[%s618 + $0x48] sm:$0xff]
      %v1802 = vld [vmem:[%s618 + $0x50] sm:$0xff]
      %v1803 = vld [vmem:[%s618 + $0x58] sm:$0xff]
      %v1804 = vld [vmem:[%s618 + $0x60] sm:$0xff]
      %v1805 = vld [vmem:[%s618 + $0x68] sm:$0xff]
      %v1806 = vld [vmem:[%s618 + $0x70] sm:$0xff]
      %v1807 = vld [vmem:[%s618 + $0x78] sm:$0xff]
      %v1808 = vld [vmem:[%s618 + $0x80] sm:$0xff]
      %v1809 = vld [vmem:[%s618 + $0x88] sm:$0xff]
      %v1810 = vld [vmem:[%s618 + $0x90] sm:$0xff]
      %v1811 = vld [vmem:[%s618 + $0x98] sm:$0xff]
      %v1812 = vld [vmem:[%s618 + $0xa0] sm:$0xff]
      %v1813 = vld [vmem:[%s618 + $0xa8] sm:$0xff]
      %v1814 = vld [vmem:[%s618 + $0xb0] sm:$0xff]
      %v1815 = vld [vmem:[%s618 + $0xb8] sm:$0xff]
      %v1816 = vld [vmem:[%s618 + $0xc0] sm:$0xff]
      %v1817 = vld [vmem:[%s618 + $0xc8] sm:$0xff]
      %v1818 = vld [vmem:[%s618 + $0xd0] sm:$0xff]
      %v1819 = vld [vmem:[%s618 + $0xd8] sm:$0xff]
      %v1820 = vld [vmem:[%s618 + $0xe0] sm:$0xff]
      %v1821 = vld [vmem:[%s618 + $0xe8] sm:$0xff]
      %v1822 = vld [vmem:[%s618 + $0xf0] sm:$0xff]
      %v1823 = vld [vmem:[%s618 + $0xf8] sm:$0xff]
      %v1824 = vld [vmem:[%s618 + $0x100] sm:$0xff]
      %v1825 = vld [vmem:[%s618 + $0x108] sm:$0xff]
      %v1826 = vld [vmem:[%s618 + $0x110] sm:$0xff]
      %v1827 = vld [vmem:[%s618 + $0x118] sm:$0xff]
      %v1828 = vld [vmem:[%s618 + $0x120] sm:$0xff]
      %v1829 = vld [vmem:[%s618 + $0x128] sm:$0xff]
      %v1830 = vld [vmem:[%s618 + $0x130] sm:$0xff]
      %v1831 = vld [vmem:[%s618 + $0x138] sm:$0xff]
      %v1832 = vld [vmem:[%s618 + $0x140] sm:$0xff]
      %v1833 = vld [vmem:[%s618 + $0x148] sm:$0xff]
      %v1834 = vld [vmem:[%s618 + $0x150] sm:$0xff]
      %v1835 = vld [vmem:[%s618 + $0x158] sm:$0xff]
      %v1836 = vld [vmem:[%s618 + $0x160] sm:$0xff]
      %v1837 = vld [vmem:[%s618 + $0x168] sm:$0xff]
      %v1838 = vld [vmem:[%s618 + $0x170] sm:$0xff]
      %v1839 = vld [vmem:[%s618 + $0x178] sm:$0xff]
      %v1840 = vld [vmem:[%s618 + $0x180] sm:$0xff]
      %v1841 = vld [vmem:[%s618 + $0x188] sm:$0xff]
      %v1842 = vld [vmem:[%s618 + $0x190] sm:$0xff]
      %v1843 = vld [vmem:[%s618 + $0x198] sm:$0xff]
      %v1844 = vld [vmem:[%s618 + $0x1a0] sm:$0xff]
      %v1845 = vld [vmem:[%s618 + $0x1a8] sm:$0xff]
      %v1846 = vld [vmem:[%s618 + $0x1b0] sm:$0xff]
      %v1847 = vld [vmem:[%s618 + $0x1b8] sm:$0xff]
      %v1848 = vld [vmem:[%s618 + $0x1c0] sm:$0xff]
      %v1849 = vld [vmem:[%s618 + $0x1c8] sm:$0xff]
      %v1850 = vld [vmem:[%s618 + $0x1d0] sm:$0xff]
      %v1851 = vld [vmem:[%s618 + $0x1d8] sm:$0xff]
      %v1852 = vld [vmem:[%s618 + $0x1e0] sm:$0xff]
      %v1853 = vld [vmem:[%s618 + $0x1e8] sm:$0xff]
      %v1854 = vld [vmem:[%s618 + $0x1f0] sm:$0xff]
      %v1855 = vld [vmem:[%s618 + $0x1f8] sm:$0xff]
      %v1856 = vld [vmem:[%s622] sm:$0xf]
      %v1858 = vlaneseq
      %v1859 = vshrl.u32 %v1858, 7
      %v1860 = vsub.s32 0, %v1859
      %v1861 = vrot.slane %v1856, %v1860
      %v1862 = vlaneseq
      %v1863 = vshrl.u32 %v1862, 7
      %v1864 = vsub.s32 1, %v1863
      %v1865 = vrot.slane %v1856, %v1864
      %v1866 = vlaneseq
      %v1867 = vshrl.u32 %v1866, 7
      %v1868 = vsub.s32 2, %v1867
      %v1869 = vrot.slane %v1856, %v1868
      %v1870 = vlaneseq
      %v1871 = vshrl.u32 %v1870, 7
      %v1872 = vsub.s32 3, %v1871
      %v1873 = vrot.slane %v1856, %v1872
      %v1942 = vunpack.c.l.b16 %v1792
      %v1943 = vunpack.c.h.b16 %v1792
      %v1944 = vunpack.c.l.b16 %v1793
      %v1945 = vunpack.c.h.b16 %v1793
      %v1946 = vunpack.c.l.b16 %v1794
      %v1947 = vunpack.c.h.b16 %v1794
      %v1948 = vunpack.c.l.b16 %v1795
      %v1949 = vunpack.c.h.b16 %v1795
      %v1950 = vunpack.c.l.b16 %v1796
      %v1951 = vunpack.c.h.b16 %v1796
      %v1952 = vunpack.c.l.b16 %v1797
      %v1953 = vunpack.c.h.b16 %v1797
      %v1954 = vunpack.c.l.b16 %v1798
      %v1955 = vunpack.c.h.b16 %v1798
      %v1956 = vunpack.c.l.b16 %v1799
      %v1957 = vunpack.c.h.b16 %v1799
      %v1958 = vunpack.c.l.b16 %v1800
      %v1959 = vunpack.c.h.b16 %v1800
      %v1960 = vunpack.c.l.b16 %v1801
      %v1961 = vunpack.c.h.b16 %v1801
      %v1962 = vunpack.c.l.b16 %v1802
      %v1963 = vunpack.c.h.b16 %v1802
      %v1964 = vunpack.c.l.b16 %v1803
      %v1965 = vunpack.c.h.b16 %v1803
      %v1966 = vunpack.c.l.b16 %v1804
      %v1967 = vunpack.c.h.b16 %v1804
      %v1968 = vunpack.c.l.b16 %v1805
      %v1969 = vunpack.c.h.b16 %v1805
      %v1970 = vunpack.c.l.b16 %v1806
      %v1971 = vunpack.c.h.b16 %v1806
      %v1972 = vunpack.c.l.b16 %v1807
      %v1973 = vunpack.c.h.b16 %v1807
      %v1974 = vunpack.c.l.b16 %v1808
      %v1975 = vunpack.c.h.b16 %v1808
      %v1976 = vunpack.c.l.b16 %v1809
      %v1977 = vunpack.c.h.b16 %v1809
      %v1978 = vunpack.c.l.b16 %v1810
      %v1979 = vunpack.c.h.b16 %v1810
      %v1980 = vunpack.c.l.b16 %v1811
      %v1981 = vunpack.c.h.b16 %v1811
      %v1982 = vunpack.c.l.b16 %v1812
      %v1983 = vunpack.c.h.b16 %v1812
      %v1984 = vunpack.c.l.b16 %v1813
      %v1985 = vunpack.c.h.b16 %v1813
      %v1986 = vunpack.c.l.b16 %v1814
      %v1987 = vunpack.c.h.b16 %v1814
      %v1988 = vunpack.c.l.b16 %v1815
      %v1989 = vunpack.c.h.b16 %v1815
      %v1990 = vunpack.c.l.b16 %v1816
      %v1991 = vunpack.c.h.b16 %v1816
      %v1992 = vunpack.c.l.b16 %v1817
      %v1993 = vunpack.c.h.b16 %v1817
      %v1994 = vunpack.c.l.b16 %v1818
      %v1995 = vunpack.c.h.b16 %v1818
      %v1996 = vunpack.c.l.b16 %v1819
      %v1997 = vunpack.c.h.b16 %v1819
      %v1998 = vunpack.c.l.b16 %v1820
      %v1999 = vunpack.c.h.b16 %v1820
      %v2000 = vunpack.c.l.b16 %v1821
      %v2001 = vunpack.c.h.b16 %v1821
      %v2002 = vunpack.c.l.b16 %v1822
      %v2003 = vunpack.c.h.b16 %v1822
      %v2004 = vunpack.c.l.b16 %v1823
      %v2005 = vunpack.c.h.b16 %v1823
      %v2006 = vunpack.c.l.b16 %v1824
      %v2007 = vunpack.c.h.b16 %v1824
      %v2008 = vunpack.c.l.b16 %v1825
      %v2009 = vunpack.c.h.b16 %v1825
      %v2010 = vunpack.c.l.b16 %v1826
      %v2011 = vunpack.c.h.b16 %v1826
      %v2012 = vunpack.c.l.b16 %v1827
      %v2013 = vunpack.c.h.b16 %v1827
      %v2014 = vunpack.c.l.b16 %v1828
      %v2015 = vunpack.c.h.b16 %v1828
      %v2016 = vunpack.c.l.b16 %v1829
      %v2017 = vunpack.c.h.b16 %v1829
      %v2018 = vunpack.c.l.b16 %v1830
      %v2019 = vunpack.c.h.b16 %v1830
      %v2020 = vunpack.c.l.b16 %v1831
      %v2021 = vunpack.c.h.b16 %v1831
      %v2022 = vunpack.c.l.b16 %v1832
      %v2023 = vunpack.c.h.b16 %v1832
      %v2024 = vunpack.c.l.b16 %v1833
      %v2025 = vunpack.c.h.b16 %v1833
      %v2026 = vunpack.c.l.b16 %v1834
      %v2027 = vunpack.c.h.b16 %v1834
      %v2028 = vunpack.c.l.b16 %v1835
      %v2029 = vunpack.c.h.b16 %v1835
      %v2030 = vunpack.c.l.b16 %v1836
      %v2031 = vunpack.c.h.b16 %v1836
      %v2032 = vunpack.c.l.b16 %v1837
      %v2033 = vunpack.c.h.b16 %v1837
      %v2034 = vunpack.c.l.b16 %v1838
      %v2035 = vunpack.c.h.b16 %v1838
      %v2036 = vunpack.c.l.b16 %v1839
      %v2037 = vunpack.c.h.b16 %v1839
      %v2038 = vunpack.c.l.b16 %v1840
      %v2039 = vunpack.c.h.b16 %v1840
      %v2040 = vunpack.c.l.b16 %v1841
      %v2041 = vunpack.c.h.b16 %v1841
      %v2042 = vunpack.c.l.b16 %v1842
      %v2043 = vunpack.c.h.b16 %v1842
      %v2044 = vunpack.c.l.b16 %v1843
      %v2045 = vunpack.c.h.b16 %v1843
      %v2046 = vunpack.c.l.b16 %v1844
      %v2047 = vunpack.c.h.b16 %v1844
      %v2048 = vunpack.c.l.b16 %v1845
      %v2049 = vunpack.c.h.b16 %v1845
      %v2050 = vunpack.c.l.b16 %v1846
      %v2051 = vunpack.c.h.b16 %v1846
      %v2052 = vunpack.c.l.b16 %v1847
      %v2053 = vunpack.c.h.b16 %v1847
      %v2054 = vunpack.c.l.b16 %v1848
      %v2055 = vunpack.c.h.b16 %v1848
      %v2056 = vunpack.c.l.b16 %v1849
      %v2057 = vunpack.c.h.b16 %v1849
      %v2058 = vunpack.c.l.b16 %v1850
      %v2059 = vunpack.c.h.b16 %v1850
      %v2060 = vunpack.c.l.b16 %v1851
      %v2061 = vunpack.c.h.b16 %v1851
      %v2062 = vunpack.c.l.b16 %v1852
      %v2063 = vunpack.c.h.b16 %v1852
      %v2064 = vunpack.c.l.b16 %v1853
      %v2065 = vunpack.c.h.b16 %v1853
      %v2066 = vunpack.c.l.b16 %v1854
      %v2067 = vunpack.c.h.b16 %v1854
      %v2068 = vunpack.c.l.b16 %v1855
      %v2069 = vunpack.c.h.b16 %v1855
      %v2070 = vpack.c.b16 %v1946, %v1942
      %v2071 = vpack.c.b16 %v1947, %v1943
      %v2072 = vpack.c.b16 %v1948, %v1944
      %v2073 = vpack.c.b16 %v1949, %v1945
      %v2074 = vpack.c.b16 %v1954, %v1950
      %v2075 = vpack.c.b16 %v1955, %v1951
      %v2076 = vpack.c.b16 %v1956, %v1952
      %v2077 = vpack.c.b16 %v1957, %v1953
      %v2078 = vpack.c.b16 %v1962, %v1958
      %v2079 = vpack.c.b16 %v1963, %v1959
      %v2080 = vpack.c.b16 %v1964, %v1960
      %v2081 = vpack.c.b16 %v1965, %v1961
      %v2082 = vpack.c.b16 %v1970, %v1966
      %v2083 = vpack.c.b16 %v1971, %v1967
      %v2084 = vpack.c.b16 %v1972, %v1968
      %v2085 = vpack.c.b16 %v1973, %v1969
      %v2086 = vpack.c.b16 %v1978, %v1974
      %v2087 = vpack.c.b16 %v1979, %v1975
      %v2088 = vpack.c.b16 %v1980, %v1976
      %v2089 = vpack.c.b16 %v1981, %v1977
      %v2090 = vpack.c.b16 %v1986, %v1982
      %v2091 = vpack.c.b16 %v1987, %v1983
      %v2092 = vpack.c.b16 %v1988, %v1984
      %v2093 = vpack.c.b16 %v1989, %v1985
      %v2094 = vpack.c.b16 %v1994, %v1990
      %v2095 = vpack.c.b16 %v1995, %v1991
      %v2096 = vpack.c.b16 %v1996, %v1992
      %v2097 = vpack.c.b16 %v1997, %v1993
      %v2098 = vpack.c.b16 %v2002, %v1998
      %v2099 = vpack.c.b16 %v2003, %v1999
      %v2100 = vpack.c.b16 %v2004, %v2000
      %v2101 = vpack.c.b16 %v2005, %v2001
      %v2102 = vpack.c.b16 %v2010, %v2006
      %v2103 = vpack.c.b16 %v2011, %v2007
      %v2104 = vpack.c.b16 %v2012, %v2008
      %v2105 = vpack.c.b16 %v2013, %v2009
      %v2106 = vpack.c.b16 %v2018, %v2014
      %v2107 = vpack.c.b16 %v2019, %v2015
      %v2108 = vpack.c.b16 %v2020, %v2016
      %v2109 = vpack.c.b16 %v2021, %v2017
      %v2110 = vpack.c.b16 %v2026, %v2022
      %v2111 = vpack.c.b16 %v2027, %v2023
      %v2112 = vpack.c.b16 %v2028, %v2024
      %v2113 = vpack.c.b16 %v2029, %v2025
      %v2114 = vpack.c.b16 %v2034, %v2030
      %v2115 = vpack.c.b16 %v2035, %v2031
      %v2116 = vpack.c.b16 %v2036, %v2032
      %v2117 = vpack.c.b16 %v2037, %v2033
      %v2118 = vpack.c.b16 %v2042, %v2038
      %v2119 = vpack.c.b16 %v2043, %v2039
      %v2120 = vpack.c.b16 %v2044, %v2040
      %v2121 = vpack.c.b16 %v2045, %v2041
      %v2122 = vpack.c.b16 %v2050, %v2046
      %v2123 = vpack.c.b16 %v2051, %v2047
      %v2124 = vpack.c.b16 %v2052, %v2048
      %v2125 = vpack.c.b16 %v2053, %v2049
      %v2126 = vpack.c.b16 %v2058, %v2054
      %v2127 = vpack.c.b16 %v2059, %v2055
      %v2128 = vpack.c.b16 %v2060, %v2056
      %v2129 = vpack.c.b16 %v2061, %v2057
      %v2130 = vpack.c.b16 %v2066, %v2062
      %v2131 = vpack.c.b16 %v2067, %v2063
      %v2132 = vpack.c.b16 %v2068, %v2064
      %v2133 = vpack.c.b16 %v2069, %v2065
      %2198 = vmatprep.subr.bf16.mxu0 %v2071
      %2199 = vmatpush1.bf16.msra.mxu0 %v2070
      %2200 = vmatprep.subr.bf16.mxu0 %v2075
      %2201 = vmatpush1.bf16.msra.mxu0 %v2074
      %2202 = vmatprep.subr.bf16.mxu0 %v2079
      %2203 = vmatpush1.bf16.msra.mxu0 %v2078
      %2204 = vmatprep.subr.bf16.mxu0 %v2083
      %2205 = vmatpush1.bf16.msra.mxu0 %v2082
      %2206 = vmatprep.subr.bf16.mxu0 %v2087
      %2207 = vmatpush1.bf16.msra.mxu0 %v2086
      %2208 = vmatprep.subr.bf16.mxu0 %v2091
      %2209 = vmatpush1.bf16.msra.mxu0 %v2090
      %2210 = vmatprep.subr.bf16.mxu0 %v2095
      %2211 = vmatpush1.bf16.msra.mxu0 %v2094
      %2212 = vmatprep.subr.bf16.mxu0 %v2099
      %2213 = vmatpush1.bf16.msra.mxu0 %v2098
      %2214 = vmatprep.subr.bf16.mxu0 %v2103
      %2215 = vmatpush1.bf16.msra.mxu0 %v2102
      %2216 = vmatprep.subr.bf16.mxu0 %v2107
      %2217 = vmatpush1.bf16.msra.mxu0 %v2106
      %2218 = vmatprep.subr.bf16.mxu0 %v2111
      %2219 = vmatpush1.bf16.msra.mxu0 %v2110
      %2220 = vmatprep.subr.bf16.mxu0 %v2115
      %2221 = vmatpush1.bf16.msra.mxu0 %v2114
      %2222 = vmatprep.subr.bf16.mxu0 %v2119
      %2223 = vmatpush1.bf16.msra.mxu0 %v2118
      %2224 = vmatprep.subr.bf16.mxu0 %v2123
      %2225 = vmatpush1.bf16.msra.mxu0 %v2122
      %2226 = vmatprep.subr.bf16.mxu0 %v2127
      %2227 = vmatpush1.bf16.msra.mxu0 %v2126
      %2228 = vmatprep.subr.bf16.mxu0 %v2131
      %2229 = vmatpush1.bf16.msra.mxu0 %v2130
      %2230 = vmatprep.mubr.bf16.mxu0 %v1791
      %2231 = vmatmul.mubr.bf16.gmra.mrb[0].mxu0 %v1790
      %v2232 = vpop.f32.mrb[0].mxu0
      %v2233 = vadd.f32 %v1861, %v2232
      %v2234 = vpop.f32.mrb[0].mxu0
      %v2235 = vadd.f32 %v1865, %v2234
      %v2236 = vpop.f32.mrb[0].mxu0
      %v2237 = vadd.f32 %v1861, %v2236
      %v2238 = vpop.f32.mrb[0].mxu0
      %v2239 = vadd.f32 %v1865, %v2238
      %2240 = vdwg.mxu0
      %2241 = vmatprep.subr.bf16.mxu0 %v2073
      %2242 = vmatpush1.bf16.msra.mxu0 %v2072
      %2243 = vmatprep.subr.bf16.mxu0 %v2077
      %2244 = vmatpush1.bf16.msra.mxu0 %v2076
      %2245 = vmatprep.subr.bf16.mxu0 %v2081
      %2246 = vmatpush1.bf16.msra.mxu0 %v2080
      %2247 = vmatprep.subr.bf16.mxu0 %v2085
      %2248 = vmatpush1.bf16.msra.mxu0 %v2084
      %2249 = vmatprep.subr.bf16.mxu0 %v2089
      %2250 = vmatpush1.bf16.msra.mxu0 %v2088
      %2251 = vmatprep.subr.bf16.mxu0 %v2093
      %2252 = vmatpush1.bf16.msra.mxu0 %v2092
      %2253 = vmatprep.subr.bf16.mxu0 %v2097
      %2254 = vmatpush1.bf16.msra.mxu0 %v2096
      %2255 = vmatprep.subr.bf16.mxu0 %v2101
      %2256 = vmatpush1.bf16.msra.mxu0 %v2100
      %2257 = vmatprep.subr.bf16.mxu0 %v2105
      %2258 = vmatpush1.bf16.msra.mxu0 %v2104
      %2259 = vmatprep.subr.bf16.mxu0 %v2109
      %2260 = vmatpush1.bf16.msra.mxu0 %v2108
      %2261 = vmatprep.subr.bf16.mxu0 %v2113
      %2262 = vmatpush1.bf16.msra.mxu0 %v2112
      %2263 = vmatprep.subr.bf16.mxu0 %v2117
      %2264 = vmatpush1.bf16.msra.mxu0 %v2116
      %2265 = vmatprep.subr.bf16.mxu0 %v2121
      %2266 = vmatpush1.bf16.msra.mxu0 %v2120
      %2267 = vmatprep.subr.bf16.mxu0 %v2125
      %2268 = vmatpush1.bf16.msra.mxu0 %v2124
      %2269 = vmatprep.subr.bf16.mxu0 %v2129
      %2270 = vmatpush1.bf16.msra.mxu0 %v2128
      %2271 = vmatprep.subr.bf16.mxu0 %v2133
      %2272 = vmatpush1.bf16.msra.mxu0 %v2132
      %2273 = vmatprep.mubr.bf16.mxu0 %v1791
      %2274 = vmatmul.mubr.bf16.gmra.mrb[0].mxu0 %v1790
      %v2275 = vpop.f32.mrb[0].mxu0
      %v2276 = vadd.f32 %v1869, %v2275
      %v2277 = vpop.f32.mrb[0].mxu0
      %v2278 = vadd.f32 %v1873, %v2277
      %v2279 = vpop.f32.mrb[0].mxu0
      %v2280 = vadd.f32 %v1869, %v2279
      %v2281 = vpop.f32.mrb[0].mxu0
      %v2282 = vadd.f32 %v1873, %v2281
      %2283 = vdwg.mxu0
      %v2284 = vmax.f32 %v2233, 0.0
      %v2285 = vmax.f32 %v2235, 0.0
      %v2286 = vmax.f32 %v2276, 0.0
      %v2287 = vmax.f32 %v2278, 0.0
      %v2288 = vmax.f32 %v2237, 0.0
      %v2289 = vmax.f32 %v2239, 0.0
      %v2290 = vmax.f32 %v2280, 0.0
      %v2291 = vmax.f32 %v2282, 0.0
      %v2292 = vpack.c.bf16 %v2288, %v2284
      %v2293 = vpack.c.bf16 %v2289, %v2285
      %v2294 = vpack.c.bf16 %v2290, %v2286
      %v2295 = vpack.c.bf16 %v2291, %v2287
      %v2296 = vld [vmem:[%s627] sm:$0xff]
      %v2297 = vld [vmem:[%s627 + $0x8] sm:$0xff]
      %v2298 = vld [vmem:[%s627 + $0x10] sm:$0xff]
      %v2299 = vld [vmem:[%s627 + $0x18] sm:$0xff]
      %v2300 = vld [vmem:[%s627 + $0x20] sm:$0xff]
      %v2301 = vld [vmem:[%s627 + $0x28] sm:$0xff]
      %v2302 = vld [vmem:[%s627 + $0x30] sm:$0xff]
      %v2303 = vld [vmem:[%s627 + $0x38] sm:$0xff]
      %v2304 = vld [vmem:[%s627 + $0x40] sm:$0xff]
      %v2305 = vld [vmem:[%s627 + $0x48] sm:$0xff]
      %v2306 = vld [vmem:[%s627 + $0x50] sm:$0xff]
      %v2307 = vld [vmem:[%s627 + $0x58] sm:$0xff]
      %v2308 = vld [vmem:[%s627 + $0x60] sm:$0xff]
      %v2309 = vld [vmem:[%s627 + $0x68] sm:$0xff]
      %v2310 = vld [vmem:[%s627 + $0x70] sm:$0xff]
      %v2311 = vld [vmem:[%s627 + $0x78] sm:$0xff]
      %v2312 = vld [vmem:[%s627 + $0x80] sm:$0xff]
      %v2313 = vld [vmem:[%s627 + $0x88] sm:$0xff]
      %v2314 = vld [vmem:[%s627 + $0x90] sm:$0xff]
      %v2315 = vld [vmem:[%s627 + $0x98] sm:$0xff]
      %v2316 = vld [vmem:[%s627 + $0xa0] sm:$0xff]
      %v2317 = vld [vmem:[%s627 + $0xa8] sm:$0xff]
      %v2318 = vld [vmem:[%s627 + $0xb0] sm:$0xff]
      %v2319 = vld [vmem:[%s627 + $0xb8] sm:$0xff]
      %v2320 = vld [vmem:[%s627 + $0xc0] sm:$0xff]
      %v2321 = vld [vmem:[%s627 + $0xc8] sm:$0xff]
      %v2322 = vld [vmem:[%s627 + $0xd0] sm:$0xff]
      %v2323 = vld [vmem:[%s627 + $0xd8] sm:$0xff]
      %v2324 = vld [vmem:[%s627 + $0xe0] sm:$0xff]
      %v2325 = vld [vmem:[%s627 + $0xe8] sm:$0xff]
      %v2326 = vld [vmem:[%s627 + $0xf0] sm:$0xff]
      %v2327 = vld [vmem:[%s627 + $0xf8] sm:$0xff]
      %v2328 = vld [vmem:[%s627 + $0x100] sm:$0xff]
      %v2329 = vld [vmem:[%s627 + $0x108] sm:$0xff]
      %v2330 = vld [vmem:[%s627 + $0x110] sm:$0xff]
      %v2331 = vld [vmem:[%s627 + $0x118] sm:$0xff]
      %v2332 = vld [vmem:[%s627 + $0x120] sm:$0xff]
      %v2333 = vld [vmem:[%s627 + $0x128] sm:$0xff]
      %v2334 = vld [vmem:[%s627 + $0x130] sm:$0xff]
      %v2335 = vld [vmem:[%s627 + $0x138] sm:$0xff]
      %v2336 = vld [vmem:[%s627 + $0x140] sm:$0xff]
      %v2337 = vld [vmem:[%s627 + $0x148] sm:$0xff]
      %v2338 = vld [vmem:[%s627 + $0x150] sm:$0xff]
      %v2339 = vld [vmem:[%s627 + $0x158] sm:$0xff]
      %v2340 = vld [vmem:[%s627 + $0x160] sm:$0xff]
      %v2341 = vld [vmem:[%s627 + $0x168] sm:$0xff]
      %v2342 = vld [vmem:[%s627 + $0x170] sm:$0xff]
      %v2343 = vld [vmem:[%s627 + $0x178] sm:$0xff]
      %v2344 = vld [vmem:[%s627 + $0x180] sm:$0xff]
      %v2345 = vld [vmem:[%s627 + $0x188] sm:$0xff]
      %v2346 = vld [vmem:[%s627 + $0x190] sm:$0xff]
      %v2347 = vld [vmem:[%s627 + $0x198] sm:$0xff]
      %v2348 = vld [vmem:[%s627 + $0x1a0] sm:$0xff]
      %v2349 = vld [vmem:[%s627 + $0x1a8] sm:$0xff]
      %v2350 = vld [vmem:[%s627 + $0x1b0] sm:$0xff]
      %v2351 = vld [vmem:[%s627 + $0x1b8] sm:$0xff]
      %v2352 = vld [vmem:[%s627 + $0x1c0] sm:$0xff]
      %v2353 = vld [vmem:[%s627 + $0x1c8] sm:$0xff]
      %v2354 = vld [vmem:[%s627 + $0x1d0] sm:$0xff]
      %v2355 = vld [vmem:[%s627 + $0x1d8] sm:$0xff]
      %v2356 = vld [vmem:[%s627 + $0x1e0] sm:$0xff]
      %v2357 = vld [vmem:[%s627 + $0x1e8] sm:$0xff]
      %v2358 = vld [vmem:[%s627 + $0x1f0] sm:$0xff]
      %v2359 = vld [vmem:[%s627 + $0x1f8] sm:$0xff]
      %v2360 = vld [vmem:[%s631] sm:$0x3]
      %v2362 = vlaneseq
      %v2363 = vshrl.u32 %v2362, 7
      %v2364 = vsub.s32 0, %v2363
      %v2365 = vrot.slane %v2360, %v2364
      %v2366 = vlaneseq
      %v2367 = vshrl.u32 %v2366, 7
      %v2368 = vsub.s32 1, %v2367
      %v2369 = vrot.slane %v2360, %v2368
      %v2436 = vunpack.c.l.b16 %v2296
      %v2437 = vunpack.c.h.b16 %v2296
      %v2438 = vunpack.c.l.b16 %v2297
      %v2439 = vunpack.c.h.b16 %v2297
      %v2440 = vunpack.c.l.b16 %v2298
      %v2441 = vunpack.c.h.b16 %v2298
      %v2442 = vunpack.c.l.b16 %v2299
      %v2443 = vunpack.c.h.b16 %v2299
      %v2444 = vunpack.c.l.b16 %v2300
      %v2445 = vunpack.c.h.b16 %v2300
      %v2446 = vunpack.c.l.b16 %v2301
      %v2447 = vunpack.c.h.b16 %v2301
      %v2448 = vunpack.c.l.b16 %v2302
      %v2449 = vunpack.c.h.b16 %v2302
      %v2450 = vunpack.c.l.b16 %v2303
      %v2451 = vunpack.c.h.b16 %v2303
      %v2452 = vunpack.c.l.b16 %v2304
      %v2453 = vunpack.c.h.b16 %v2304
      %v2454 = vunpack.c.l.b16 %v2305
      %v2455 = vunpack.c.h.b16 %v2305
      %v2456 = vunpack.c.l.b16 %v2306
      %v2457 = vunpack.c.h.b16 %v2306
      %v2458 = vunpack.c.l.b16 %v2307
      %v2459 = vunpack.c.h.b16 %v2307
      %v2460 = vunpack.c.l.b16 %v2308
      %v2461 = vunpack.c.h.b16 %v2308
      %v2462 = vunpack.c.l.b16 %v2309
      %v2463 = vunpack.c.h.b16 %v2309
      %v2464 = vunpack.c.l.b16 %v2310
      %v2465 = vunpack.c.h.b16 %v2310
      %v2466 = vunpack.c.l.b16 %v2311
      %v2467 = vunpack.c.h.b16 %v2311
      %v2468 = vunpack.c.l.b16 %v2312
      %v2469 = vunpack.c.h.b16 %v2312
      %v2470 = vunpack.c.l.b16 %v2313
      %v2471 = vunpack.c.h.b16 %v2313
      %v2472 = vunpack.c.l.b16 %v2314
      %v2473 = vunpack.c.h.b16 %v2314
      %v2474 = vunpack.c.l.b16 %v2315
      %v2475 = vunpack.c.h.b16 %v2315
      %v2476 = vunpack.c.l.b16 %v2316
      %v2477 = vunpack.c.h.b16 %v2316
      %v2478 = vunpack.c.l.b16 %v2317
      %v2479 = vunpack.c.h.b16 %v2317
      %v2480 = vunpack.c.l.b16 %v2318
      %v2481 = vunpack.c.h.b16 %v2318
      %v2482 = vunpack.c.l.b16 %v2319
      %v2483 = vunpack.c.h.b16 %v2319
      %v2484 = vunpack.c.l.b16 %v2320
      %v2485 = vunpack.c.h.b16 %v2320
      %v2486 = vunpack.c.l.b16 %v2321
      %v2487 = vunpack.c.h.b16 %v2321
      %v2488 = vunpack.c.l.b16 %v2322
      %v2489 = vunpack.c.h.b16 %v2322
      %v2490 = vunpack.c.l.b16 %v2323
      %v2491 = vunpack.c.h.b16 %v2323
      %v2492 = vunpack.c.l.b16 %v2324
      %v2493 = vunpack.c.h.b16 %v2324
      %v2494 = vunpack.c.l.b16 %v2325
      %v2495 = vunpack.c.h.b16 %v2325
      %v2496 = vunpack.c.l.b16 %v2326
      %v2497 = vunpack.c.h.b16 %v2326
      %v2498 = vunpack.c.l.b16 %v2327
      %v2499 = vunpack.c.h.b16 %v2327
      %v2500 = vunpack.c.l.b16 %v2328
      %v2501 = vunpack.c.h.b16 %v2328
      %v2502 = vunpack.c.l.b16 %v2329
      %v2503 = vunpack.c.h.b16 %v2329
      %v2504 = vunpack.c.l.b16 %v2330
      %v2505 = vunpack.c.h.b16 %v2330
      %v2506 = vunpack.c.l.b16 %v2331
      %v2507 = vunpack.c.h.b16 %v2331
      %v2508 = vunpack.c.l.b16 %v2332
      %v2509 = vunpack.c.h.b16 %v2332
      %v2510 = vunpack.c.l.b16 %v2333
      %v2511 = vunpack.c.h.b16 %v2333
      %v2512 = vunpack.c.l.b16 %v2334
      %v2513 = vunpack.c.h.b16 %v2334
      %v2514 = vunpack.c.l.b16 %v2335
      %v2515 = vunpack.c.h.b16 %v2335
      %v2516 = vunpack.c.l.b16 %v2336
      %v2517 = vunpack.c.h.b16 %v2336
      %v2518 = vunpack.c.l.b16 %v2337
      %v2519 = vunpack.c.h.b16 %v2337
      %v2520 = vunpack.c.l.b16 %v2338
      %v2521 = vunpack.c.h.b16 %v2338
      %v2522 = vunpack.c.l.b16 %v2339
      %v2523 = vunpack.c.h.b16 %v2339
      %v2524 = vunpack.c.l.b16 %v2340
      %v2525 = vunpack.c.h.b16 %v2340
      %v2526 = vunpack.c.l.b16 %v2341
      %v2527 = vunpack.c.h.b16 %v2341
      %v2528 = vunpack.c.l.b16 %v2342
      %v2529 = vunpack.c.h.b16 %v2342
      %v2530 = vunpack.c.l.b16 %v2343
      %v2531 = vunpack.c.h.b16 %v2343
      %v2532 = vunpack.c.l.b16 %v2344
      %v2533 = vunpack.c.h.b16 %v2344
      %v2534 = vunpack.c.l.b16 %v2345
      %v2535 = vunpack.c.h.b16 %v2345
      %v2536 = vunpack.c.l.b16 %v2346
      %v2537 = vunpack.c.h.b16 %v2346
      %v2538 = vunpack.c.l.b16 %v2347
      %v2539 = vunpack.c.h.b16 %v2347
      %v2540 = vunpack.c.l.b16 %v2348
      %v2541 = vunpack.c.h.b16 %v2348
      %v2542 = vunpack.c.l.b16 %v2349
      %v2543 = vunpack.c.h.b16 %v2349
      %v2544 = vunpack.c.l.b16 %v2350
      %v2545 = vunpack.c.h.b16 %v2350
      %v2546 = vunpack.c.l.b16 %v2351
      %v2547 = vunpack.c.h.b16 %v2351
      %v2548 = vunpack.c.l.b16 %v2352
      %v2549 = vunpack.c.h.b16 %v2352
      %v2550 = vunpack.c.l.b16 %v2353
      %v2551 = vunpack.c.h.b16 %v2353
      %v2552 = vunpack.c.l.b16 %v2354
      %v2553 = vunpack.c.h.b16 %v2354
      %v2554 = vunpack.c.l.b16 %v2355
      %v2555 = vunpack.c.h.b16 %v2355
      %v2556 = vunpack.c.l.b16 %v2356
      %v2557 = vunpack.c.h.b16 %v2356
      %v2558 = vunpack.c.l.b16 %v2357
      %v2559 = vunpack.c.h.b16 %v2357
      %v2560 = vunpack.c.l.b16 %v2358
      %v2561 = vunpack.c.h.b16 %v2358
      %v2562 = vunpack.c.l.b16 %v2359
      %v2563 = vunpack.c.h.b16 %v2359
      %v2564 = vpack.c.b16 %v2438, %v2436
      %v2565 = vpack.c.b16 %v2439, %v2437
      %v2566 = vpack.c.b16 %v2442, %v2440
      %v2567 = vpack.c.b16 %v2443, %v2441
      %v2568 = vpack.c.b16 %v2446, %v2444
      %v2569 = vpack.c.b16 %v2447, %v2445
      %v2570 = vpack.c.b16 %v2450, %v2448
      %v2571 = vpack.c.b16 %v2451, %v2449
      %v2572 = vpack.c.b16 %v2454, %v2452
      %v2573 = vpack.c.b16 %v2455, %v2453
      %v2574 = vpack.c.b16 %v2458, %v2456
      %v2575 = vpack.c.b16 %v2459, %v2457
      %v2576 = vpack.c.b16 %v2462, %v2460
      %v2577 = vpack.c.b16 %v2463, %v2461
      %v2578 = vpack.c.b16 %v2466, %v2464
      %v2579 = vpack.c.b16 %v2467, %v2465
      %v2580 = vpack.c.b16 %v2470, %v2468
      %v2581 = vpack.c.b16 %v2471, %v2469
      %v2582 = vpack.c.b16 %v2474, %v2472
      %v2583 = vpack.c.b16 %v2475, %v2473
      %v2584 = vpack.c.b16 %v2478, %v2476
      %v2585 = vpack.c.b16 %v2479, %v2477
      %v2586 = vpack.c.b16 %v2482, %v2480
      %v2587 = vpack.c.b16 %v2483, %v2481
      %v2588 = vpack.c.b16 %v2486, %v2484
      %v2589 = vpack.c.b16 %v2487, %v2485
      %v2590 = vpack.c.b16 %v2490, %v2488
      %v2591 = vpack.c.b16 %v2491, %v2489
      %v2592 = vpack.c.b16 %v2494, %v2492
      %v2593 = vpack.c.b16 %v2495, %v2493
      %v2594 = vpack.c.b16 %v2498, %v2496
      %v2595 = vpack.c.b16 %v2499, %v2497
      %v2596 = vpack.c.b16 %v2502, %v2500
      %v2597 = vpack.c.b16 %v2503, %v2501
      %v2598 = vpack.c.b16 %v2506, %v2504
      %v2599 = vpack.c.b16 %v2507, %v2505
      %v2600 = vpack.c.b16 %v2510, %v2508
      %v2601 = vpack.c.b16 %v2511, %v2509
      %v2602 = vpack.c.b16 %v2514, %v2512
      %v2603 = vpack.c.b16 %v2515, %v2513
      %v2604 = vpack.c.b16 %v2518, %v2516
      %v2605 = vpack.c.b16 %v2519, %v2517
      %v2606 = vpack.c.b16 %v2522, %v2520
      %v2607 = vpack.c.b16 %v2523, %v2521
      %v2608 = vpack.c.b16 %v2526, %v2524
      %v2609 = vpack.c.b16 %v2527, %v2525
      %v2610 = vpack.c.b16 %v2530, %v2528
      %v2611 = vpack.c.b16 %v2531, %v2529
      %v2612 = vpack.c.b16 %v2534, %v2532
      %v2613 = vpack.c.b16 %v2535, %v2533
      %v2614 = vpack.c.b16 %v2538, %v2536
      %v2615 = vpack.c.b16 %v2539, %v2537
      %v2616 = vpack.c.b16 %v2542, %v2540
      %v2617 = vpack.c.b16 %v2543, %v2541
      %v2618 = vpack.c.b16 %v2546, %v2544
      %v2619 = vpack.c.b16 %v2547, %v2545
      %v2620 = vpack.c.b16 %v2550, %v2548
      %v2621 = vpack.c.b16 %v2551, %v2549
      %v2622 = vpack.c.b16 %v2554, %v2552
      %v2623 = vpack.c.b16 %v2555, %v2553
      %v2624 = vpack.c.b16 %v2558, %v2556
      %v2625 = vpack.c.b16 %v2559, %v2557
      %v2626 = vpack.c.b16 %v2562, %v2560
      %v2627 = vpack.c.b16 %v2563, %v2561
      %2692 = vmatprep.subr.bf16.mxu0 %v2565
      %2693 = vmatpush1.bf16.msra.mxu0 %v2564
      %2694 = vmatprep.subr.bf16.mxu0 %v2567
      %2695 = vmatpush1.bf16.msra.mxu0 %v2566
      %2696 = vmatprep.subr.bf16.mxu0 %v2569
      %2697 = vmatpush1.bf16.msra.mxu0 %v2568
      %2698 = vmatprep.subr.bf16.mxu0 %v2571
      %2699 = vmatpush1.bf16.msra.mxu0 %v2570
      %2700 = vmatprep.subr.bf16.mxu0 %v2573
      %2701 = vmatpush1.bf16.msra.mxu0 %v2572
      %2702 = vmatprep.subr.bf16.mxu0 %v2575
      %2703 = vmatpush1.bf16.msra.mxu0 %v2574
      %2704 = vmatprep.subr.bf16.mxu0 %v2577
      %2705 = vmatpush1.bf16.msra.mxu0 %v2576
      %2706 = vmatprep.subr.bf16.mxu0 %v2579
      %2707 = vmatpush1.bf16.msra.mxu0 %v2578
      %2708 = vmatprep.subr.bf16.mxu0 %v2581
      %2709 = vmatpush1.bf16.msra.mxu0 %v2580
      %2710 = vmatprep.subr.bf16.mxu0 %v2583
      %2711 = vmatpush1.bf16.msra.mxu0 %v2582
      %2712 = vmatprep.subr.bf16.mxu0 %v2585
      %2713 = vmatpush1.bf16.msra.mxu0 %v2584
      %2714 = vmatprep.subr.bf16.mxu0 %v2587
      %2715 = vmatpush1.bf16.msra.mxu0 %v2586
      %2716 = vmatprep.subr.bf16.mxu0 %v2589
      %2717 = vmatpush1.bf16.msra.mxu0 %v2588
      %2718 = vmatprep.subr.bf16.mxu0 %v2591
      %2719 = vmatpush1.bf16.msra.mxu0 %v2590
      %2720 = vmatprep.subr.bf16.mxu0 %v2593
      %2721 = vmatpush1.bf16.msra.mxu0 %v2592
      %2722 = vmatprep.subr.bf16.mxu0 %v2595
      %2723 = vmatpush1.bf16.msra.mxu0 %v2594
      %2724 = vmatprep.mubr.bf16.mxu0 %v2293
      %2725 = vmatmul.mubr.bf16.gmra.mrb[0].mxu0 %v2292
      %v2726 = vpop.f32.mrb[0].mxu0
      %v2727 = vadd.f32 %v2365, %v2726
      %v2728 = vpop.f32.mrb[0].mxu0
      %v2729 = vadd.f32 %v2369, %v2728
      %v2730 = vpop.f32.mrb[0].mxu0
      %v2731 = vadd.f32 %v2365, %v2730
      %v2732 = vpop.f32.mrb[0].mxu0
      %v2733 = vadd.f32 %v2369, %v2732
      %2734 = vdwg.mxu0
      %2735 = vmatprep.subr.bf16.mxu0 %v2597
      %2736 = vmatpush1.bf16.msra.mxu0 %v2596
      %2737 = vmatprep.subr.bf16.mxu0 %v2599
      %2738 = vmatpush1.bf16.msra.mxu0 %v2598
      %2739 = vmatprep.subr.bf16.mxu0 %v2601
      %2740 = vmatpush1.bf16.msra.mxu0 %v2600
      %2741 = vmatprep.subr.bf16.mxu0 %v2603
      %2742 = vmatpush1.bf16.msra.mxu0 %v2602
      %2743 = vmatprep.subr.bf16.mxu0 %v2605
      %2744 = vmatpush1.bf16.msra.mxu0 %v2604
      %2745 = vmatprep.subr.bf16.mxu0 %v2607
      %2746 = vmatpush1.bf16.msra.mxu0 %v2606
      %2747 = vmatprep.subr.bf16.mxu0 %v2609
      %2748 = vmatpush1.bf16.msra.mxu0 %v2608
      %2749 = vmatprep.subr.bf16.mxu0 %v2611
      %2750 = vmatpush1.bf16.msra.mxu0 %v2610
      %2751 = vmatprep.subr.bf16.mxu0 %v2613
      %2752 = vmatpush1.bf16.msra.mxu0 %v2612
      %2753 = vmatprep.subr.bf16.mxu0 %v2615
      %2754 = vmatpush1.bf16.msra.mxu0 %v2614
      %2755 = vmatprep.subr.bf16.mxu0 %v2617
      %2756 = vmatpush1.bf16.msra.mxu0 %v2616
      %2757 = vmatprep.subr.bf16.mxu0 %v2619
      %2758 = vmatpush1.bf16.msra.mxu0 %v2618
      %2759 = vmatprep.subr.bf16.mxu0 %v2621
      %2760 = vmatpush1.bf16.msra.mxu0 %v2620
      %2761 = vmatprep.subr.bf16.mxu0 %v2623
      %2762 = vmatpush1.bf16.msra.mxu0 %v2622
      %2763 = vmatprep.subr.bf16.mxu0 %v2625
      %2764 = vmatpush1.bf16.msra.mxu0 %v2624
      %2765 = vmatprep.subr.bf16.mxu0 %v2627
      %2766 = vmatpush1.bf16.msra.mxu0 %v2626
      %2767 = vmatprep.mubr.bf16.mxu0 %v2295
      %2768 = vmatmul.mubr.bf16.gmra.mrb[0].mxu0 %v2294
      %v2769 = vpop.f32.mrb[0].mxu0
      %v2770 = vadd.f32 %v2727, %v2769
      %v2771 = vpop.f32.mrb[0].mxu0
      %v2772 = vadd.f32 %v2729, %v2771
      %v2773 = vpop.f32.mrb[0].mxu0
      %v2774 = vadd.f32 %v2731, %v2773
      %v2775 = vpop.f32.mrb[0].mxu0
      %v2776 = vadd.f32 %v2733, %v2775
      %2777 = vdwg.mxu0
      %v2778 = vadd.f32 %v1786, %v2770
      %v2779 = vadd.f32 %v1787, %v2772
      %v2780 = vadd.f32 %v1788, %v2774
      %v2781 = vadd.f32 %v1789, %v2776
      %2782 = vst [vmem:[#allocation2] sm:$0xff] %v2778
      %2783 = vst [vmem:[#allocation2 + $0x8] sm:$0xff] %v2779
      %2784 = vst [vmem:[#allocation2 + $0x10] sm:$0xff] %v2780
      %2785 = vst [vmem:[#allocation2 + $0x18] sm:$0xff] %v2781
      %2786 = vst [vmem:[%s640] sm:$0xff] %v2778
      %2787 = vst [vmem:[%s640 + $0x8] sm:$0xff] %v2779
      %2788 = vst [vmem:[%s640 + $0x10] sm:$0xff] %v2780
      %2789 = vst [vmem:[%s640 + $0x18] sm:$0xff] %v2781
      %p2790 = scmp.lt.s32.totalorder %s28, 1
      %s2791 = scalar_select %p2790, %s28, 1
      %p2792 = scmp.lt.s32.totalorder %s27, 1
      %s2793 = scalar_select %p2792, %s27, 1
      %s2794 = smul.addr %s2793, 4
      %s2795 = smul.addr %s2791, 8
      %s2796 = sadd.s32 %s2794, %s2795
      %s2797 = smul.addr %s2796, 8
      %s2798 = scalar_lea.vmem %s12, %s2797
      // Predicated region
      $region73: #{detr_forward.4} parent=67 // pred_check
        %p2799 = pneg %p367
      $region74: #{detr_forward.4} parent=67 // pred_check_branch
        %2801 = sbr.rel (%p2799) target = $region76
      $region75: #{detr_forward.4} parent=67 // pred_region
        _
      $region76: #{detr_forward.4} parent=67 // pred_fallthru
        _
    $region68: #{detr_forward.4} parent=5 // pred_fallthru
      _
    %p2802 = scmp.le.s32.totalorder 2, %s18
    // Predicated region
    $region77: #{detr_forward.4} parent=5 // pred_check
      %p2803 = pneg %p2802
    $region78: #{detr_forward.4} parent=5 // pred_check_branch
      %2805 = sbr.rel (%p2803) target = $region80
    $region79: #{detr_forward.4} parent=5 // pred_region
      %s2806 = ssub.s32 %s18, 2
      // Predicated region
      $region81: #{detr_forward.4} parent=79 // pred_check
        %p2807 = pneg %p373
      $region82: #{detr_forward.4} parent=79 // pred_check_branch
        %2809 = sbr.rel (%p2807) target = $region84
      $region83: #{detr_forward.4} parent=79 // pred_region
        %p2810 = scmp.lt.s32.totalorder %s30, 1
        %s2811 = scalar_select %p2810, %s30, 1
        %p2812 = scmp.lt.s32.totalorder %s29, 1
        %s2813 = scalar_select %p2812, %s29, 1
        %s2814 = smul.addr %s2813, 4
        %s2815 = smul.addr %s2811, 8
        %s2816 = sadd.s32 %s2814, %s2815
        %s2817 = smul.addr %s2816, 8
        %s2818 = scalar_lea.vmem %s12, %s2817
      $region84: #{detr_forward.4} parent=79 // pred_fallthru
        _
    $region80: #{detr_forward.4} parent=5 // pred_fallthru
      _
  $region6: #{detr_forward.4} parent=0 // loop_footer
    %s22 = sadd.s32 1, %s18
  $region7: #{detr_forward.4} parent=0 // loop_footer_branch
    %17 = sbr.rel target = $region3
  $region8: #{detr_forward.4} parent=0 // loop_exit
    _

// kernel: detr_forward.3
$region0: #{detr_forward.3}
  #allocation0 [shape = 'u32[]', space=smem, size = 0x4, offset = 0x4, fixed_abs, tag = 'smem constant byte address 0x4 - core index']
  #allocation1 [shape = 'u32[144,128]{1,0:T(1,128)}', space=vmem, size = 0x12000, scoped, tag = 'internal scratch']
  %s0 = inlined_call_operand.vmem [shape: bf16[8,768], index: 0, kind: input, shape index: {}]
  %s1 = inlined_call_operand.hbm [shape: bf16[768,2048], index: 1, kind: input, shape index: {}]
  %s2 = inlined_call_operand.hbm [shape: f32[1,2048], index: 2, kind: input, shape index: {}]
  %s3 = inlined_call_operand.hbm [shape: bf16[2048,256], index: 3, kind: input, shape index: {}]
  %s4 = inlined_call_operand.hbm [shape: f32[1,256], index: 4, kind: input, shape index: {}]
  %s5 = inlined_call_operand.vmem [shape: bf16[8,256], index: 5, kind: output, shape index: {}]
  %s6 = sld [smem:[#allocation0]]
  $region46: #{detr_forward.3} parent=0
    _
  %s8 = ssub.s32 1, %s6
  %s9 = scalar_select 0, %s8, %s6
  $region1: #{detr_forward.3} parent=0
    #allocation2 [shape = 'u8[3145728]{0}', space=vmem, size = 0x300000, scoped, tag = 'input window, operand 1, single buffered']
    #allocation3 [shape = 's32[1]{0}', space=sflag, size = 0x4, scoped, tag = 'scoped memory for detr_forward.3']
    #allocation4 [shape = 'u8[8192]{0}', space=vmem, size = 0x2000, scoped, tag = 'input window, operand 2, single buffered']
    #allocation5 [shape = 's32[1]{0}', space=sflag, size = 0x4, scoped, tag = 'scoped memory for detr_forward.3']
    #allocation6 [shape = 'u8[1048576]{0}', space=vmem, size = 0x100000, scoped, tag = 'input window, operand 3, single buffered']
    #allocation7 [shape = 'u8[1024]{0}', space=vmem, size = 0x400, scoped, tag = 'input window, operand 4, single buffered']
    #allocation8 [shape = 's32[1]{0}', space=sflag, size = 0x4, scoped, tag = 'scoped memory for detr_forward.3']
    %10 = vsyncpa [#allocation3], 0
    %11 = vsyncpa [#allocation5], 0
    %12 = vsyncpa [#allocation8], 0
    // Predicated region
    $region2: #{detr_forward.3} parent=1 // pred_check
      _
    $region3: #{detr_forward.3} parent=1 // pred_check_branch
      %14 = sbr.rel (0) target = $region5
    $region4: #{detr_forward.3} parent=1 // pred_region
      _
    $region5: #{detr_forward.3} parent=1 // pred_fallthru
      _
    // Predicated region
    $region6: #{detr_forward.3} parent=1 // pred_check
      _
    $region7: #{detr_forward.3} parent=1 // pred_check_branch
      %16 = sbr.rel (0) target = $region9
    $region8: #{detr_forward.3} parent=1 // pred_region
      %s18 = ssub.s32 98304, 98304
      %19 = vsyncadd [#allocation3], %s18
      %s20 = sshll.u32 [#allocation2], 4
      %s21 = int_to_ptr.vmem [resolvable:$true] %s20
      %26 = dma.hbm_to_vmem [thread:$0]  %s1, 98304, %s21, [#allocation3], 1024, 1024, 64
    $region9: #{detr_forward.3} parent=1 // pred_fallthru
      _
    // Predicated region
    $region10: #{detr_forward.3} parent=1 // pred_check
      _
    $region11: #{detr_forward.3} parent=1 // pred_check_branch
      %28 = sbr.rel (0) target = $region13
    $region12: #{detr_forward.3} parent=1 // pred_region
      %s30 = ssub.s32 256, 256
      %31 = vsyncadd [#allocation5], %s30
      %s33 = sshll.u32 [#allocation4], 4
      %s34 = int_to_ptr.vmem [resolvable:$true] %s33
      %36 = dma.hbm_to_vmem [thread:$0]  %s2, 256, %s34, [#allocation5]
    $region13: #{detr_forward.3} parent=1 // pred_fallthru
      _
    // Predicated region
    $region14: #{detr_forward.3} parent=1 // pred_check
      _
    $region15: #{detr_forward.3} parent=1 // pred_check_branch
      %38 = sbr.rel (0) target = $region17
    $region16: #{detr_forward.3} parent=1 // pred_region
      %s40 = ssub.s32 32768, 32768
      %41 = vsyncadd [#allocation5], %s40
      %s42 = sshll.u32 [#allocation6], 4
      %s43 = int_to_ptr.vmem [resolvable:$true] %s42
      %48 = dma.hbm_to_vmem [thread:$0]  %s3, 32768, %s43, [#allocation5], 128, 128, 8
    $region17: #{detr_forward.3} parent=1 // pred_fallthru
      _
    // Predicated region
    $region18: #{detr_forward.3} parent=1 // pred_check
      _
    $region19: #{detr_forward.3} parent=1 // pred_check_branch
      %50 = sbr.rel (0) target = $region21
    $region20: #{detr_forward.3} parent=1 // pred_region
      %s52 = ssub.s32 32, 32
      %53 = vsyncadd [#allocation8], %s52
      %s55 = sshll.u32 [#allocation7], 4
      %s56 = int_to_ptr.vmem [resolvable:$true] %s55
      %58 = dma.hbm_to_vmem [thread:$0]  %s4, 32, %s56, [#allocation8]
    $region21: #{detr_forward.3} parent=1 // pred_fallthru
      _
    // Predicated region
    $region22: #{detr_forward.3} parent=1 // pred_check
      _
    $region23: #{detr_forward.3} parent=1 // pred_check_branch
      %60 = sbr.rel (0) target = $region25
    $region24: #{detr_forward.3} parent=1 // pred_region
      %61 = dma.done [#allocation3], 98304
    $region25: #{detr_forward.3} parent=1 // pred_fallthru
      _
    // Predicated region
    $region26: #{detr_forward.3} parent=1 // pred_check
      _
    $region27: #{detr_forward.3} parent=1 // pred_check_branch
      %63 = sbr.rel (0) target = $region29
    $region28: #{detr_forward.3} parent=1 // pred_region
      %64 = dma.done [#allocation5], 256
    $region29: #{detr_forward.3} parent=1 // pred_fallthru
      _
    // Predicated region
    $region30: #{detr_forward.3} parent=1 // pred_check
      _
    $region31: #{detr_forward.3} parent=1 // pred_check_branch
      %66 = sbr.rel (0) target = $region33
    $region32: #{detr_forward.3} parent=1 // pred_region
      %67 = dma.done [#allocation5], 32768
    $region33: #{detr_forward.3} parent=1 // pred_fallthru
      _
    // Predicated region
    $region34: #{detr_forward.3} parent=1 // pred_check
      _
    $region35: #{detr_forward.3} parent=1 // pred_check_branch
      %69 = sbr.rel (0) target = $region37
    $region36: #{detr_forward.3} parent=1 // pred_region
      %70 = dma.done [#allocation8], 32
    $region37: #{detr_forward.3} parent=1 // pred_fallthru
      _
    %v71 = vld [vmem:[%s0] sm:$0xff]
    %v72 = vld [vmem:[%s0 + $0x8] sm:$0xff]
    %v73 = vld [vmem:[%s0 + $0x10] sm:$0xff]
    %v74 = vld [vmem:[#allocation2] sm:$0xff]
    %v75 = vld [vmem:[#allocation2 + $0x8] sm:$0xff]
    %v76 = vld [vmem:[#allocation2 + $0x10] sm:$0xff]
    %v77 = vld [vmem:[#allocation2 + $0x18] sm:$0xff]
    %v78 = vld [vmem:[#allocation2 + $0x20] sm:$0xff]
    %v79 = vld [vmem:[#allocation2 + $0x28] sm:$0xff]
    %v80 = vld [vmem:[#allocation2 + $0x30] sm:$0xff]
    %v81 = vld [vmem:[#allocation2 + $0x38] sm:$0xff]
    %v82 = vld [vmem:[#allocation2 + $0x40] sm:$0xff]
    %v83 = vld [vmem:[#allocation2 + $0x48] sm:$0xff]
    %v84 = vld [vmem:[#allocation2 + $0x50] sm:$0xff]
    %v85 = vld [vmem:[#allocation2 + $0x58] sm:$0xff]
    %v86 = vld [vmem:[#allocation2 + $0x60] sm:$0xff]
    %v87 = vld [vmem:[#allocation2 + $0x68] sm:$0xff]
    %v88 = vld [vmem:[#allocation2 + $0x70] sm:$0xff]
    %v89 = vld [vmem:[#allocation2 + $0x78] sm:$0xff]
    %v90 = vld [vmem:[#allocation2 + $0x80] sm:$0xff]
    %v91 = vld [vmem:[#allocation2 + $0x88] sm:$0xff]
    %v92 = vld [vmem:[#allocation2 + $0x90] sm:$0xff]
    %v93 = vld [vmem:[#allocation2 + $0x98] sm:$0xff]
    %v94 = vld [vmem:[#allocation2 + $0xa0] sm:$0xff]
    %v95 = vld [vmem:[#allocation2 + $0xa8] sm:$0xff]
    %v96 = vld [vmem:[#allocation2 + $0xb0] sm:$0xff]
    %v97 = vld [vmem:[#allocation2 + $0xb8] sm:$0xff]
    %v98 = vld [vmem:[#allocation2 + $0xc0] sm:$0xff]
    %v99 = vld [vmem:[#allocation2 + $0xc8] sm:$0xff]
    %v100 = vld [vmem:[#allocation2 + $0xd0] sm:$0xff]
    %v101 = vld [vmem:[#allocation2 + $0xd8] sm:$0xff]
    %v102 = vld [vmem:[#allocation2 + $0xe0] sm:$0xff]
    %v103 = vld [vmem:[#allocation2 + $0xe8] sm:$0xff]
    %v104 = vld [vmem:[#allocation2 + $0xf0] sm:$0xff]
    %v105 = vld [vmem:[#allocation2 + $0xf8] sm:$0xff]
    %v106 = vld [vmem:[#allocation2 + $0x100] sm:$0xff]
    %v107 = vld [vmem:[#allocation2 + $0x108] sm:$0xff]
    %v108 = vld [vmem:[#allocation2 + $0x110] sm:$0xff]
    %v109 = vld [vmem:[#allocation2 + $0x118] sm:$0xff]
    %v110 = vld [vmem:[#allocation2 + $0x120] sm:$0xff]
    %v111 = vld [vmem:[#allocation2 + $0x128] sm:$0xff]
    %v112 = vld [vmem:[#allocation2 + $0x130] sm:$0xff]
    %v113 = vld [vmem:[#allocation2 + $0x138] sm:$0xff]
    %v114 = vld [vmem:[#allocation2 + $0x140] sm:$0xff]
    %v115 = vld [vmem:[#allocation2 + $0x148] sm:$0xff]
    %v116 = vld [vmem:[#allocation2 + $0x150] sm:$0xff]
    %v117 = vld [vmem:[#allocation2 + $0x158] sm:$0xff]
    %v118 = vld [vmem:[#allocation2 + $0x160] sm:$0xff]
    %v119 = vld [vmem:[#allocation2 + $0x168] sm:$0xff]
    %v120 = vld [vmem:[#allocation2 + $0x170] sm:$0xff]
    %v121 = vld [vmem:[#allocation2 + $0x178] sm:$0xff]
    %v122 = vld [vmem:[#allocation2 + $0x180] sm:$0xff]
    %v123 = vld [vmem:[#allocation2 + $0x188] sm:$0xff]
    %v124 = vld [vmem:[#allocation2 + $0x190] sm:$0xff]
    %v125 = vld [vmem:[#allocation2 + $0x198] sm:$0xff]
    %v126 = vld [vmem:[#allocation2 + $0x1a0] sm:$0xff]
    %v127 = vld [vmem:[#allocation2 + $0x1a8] sm:$0xff]
    %v128 = vld [vmem:[#allocation2 + $0x1b0] sm:$0xff]
    %v129 = vld [vmem:[#allocation2 + $0x1b8] sm:$0xff]
    %v130 = vld [vmem:[#allocation2 + $0x1c0] sm:$0xff]
    %v131 = vld [vmem:[#allocation2 + $0x1c8] sm:$0xff]
    %v132 = vld [vmem:[#allocation2 + $0x1d0] sm:$0xff]
    %v133 = vld [vmem:[#allocation2 + $0x1d8] sm:$0xff]
    %v134 = vld [vmem:[#allocation2 + $0x1e0] sm:$0xff]
    %v135 = vld [vmem:[#allocation2 + $0x1e8] sm:$0xff]
    %v136 = vld [vmem:[#allocation2 + $0x1f0] sm:$0xff]
    %v137 = vld [vmem:[#allocation2 + $0x1f8] sm:$0xff]
    %v138 = vld [vmem:[#allocation2 + $0x200] sm:$0xff]
    %v139 = vld [vmem:[#allocation2 + $0x208] sm:$0xff]
    %v140 = vld [vmem:[#allocation2 + $0x210] sm:$0xff]
    %v141 = vld [vmem:[#allocation2 + $0x218] sm:$0xff]
    %v142 = vld [vmem:[#allocation2 + $0x220] sm:$0xff]
    %v143 = vld [vmem:[#allocation2 + $0x228] sm:$0xff]
    %v144 = vld [vmem:[#allocation2 + $0x230] sm:$0xff]
    %v145 = vld [vmem:[#allocation2 + $0x238] sm:$0xff]
    %v146 = vld [vmem:[#allocation2 + $0x240] sm:$0xff]
    %v147 = vld [vmem:[#allocation2 + $0x248] sm:$0xff]
    %v148 = vld [vmem:[#allocation2 + $0x250] sm:$0xff]
    %v149 = vld [vmem:[#allocation2 + $0x258] sm:$0xff]
    %v150 = vld [vmem:[#allocation2 + $0x260] sm:$0xff]
    %v151 = vld [vmem:[#allocation2 + $0x268] sm:$0xff]
    %v152 = vld [vmem:[#allocation2 + $0x270] sm:$0xff]
    %v153 = vld [vmem:[#allocation2 + $0x278] sm:$0xff]
    %v154 = vld [vmem:[#allocation2 + $0x280] sm:$0xff]
    %v155 = vld [vmem:[#allocation2 + $0x288] sm:$0xff]
    %v156 = vld [vmem:[#allocation2 + $0x290] sm:$0xff]
    %v157 = vld [vmem:[#allocation2 + $0x298] sm:$0xff]
    %v158 = vld [vmem:[#allocation2 + $0x2a0] sm:$0xff]
    %v159 = vld [vmem:[#allocation2 + $0x2a8] sm:$0xff]
    %v160 = vld [vmem:[#allocation2 + $0x2b0] sm:$0xff]
    %v161 = vld [vmem:[#allocation2 + $0x2b8] sm:$0xff]
    %v162 = vld [vmem:[#allocation2 + $0x2c0] sm:$0xff]
    %v163 = vld [vmem:[#allocation2 + $0x2c8] sm:$0xff]
    %v164 = vld [vmem:[#allocation2 + $0x2d0] sm:$0xff]
    %v165 = vld [vmem:[#allocation2 + $0x2d8] sm:$0xff]
    %v166 = vld [vmem:[#allocation2 + $0x2e0] sm:$0xff]
    %v167 = vld [vmem:[#allocation2 + $0x2e8] sm:$0xff]
    %v168 = vld [vmem:[#allocation2 + $0x2f0] sm:$0xff]
    %v169 = vld [vmem:[#allocation2 + $0x2f8] sm:$0xff]
    %v170 = vld [vmem:[#allocation2 + $0x300] sm:$0xff]
    %v171 = vld [vmem:[#allocation2 + $0x308] sm:$0xff]
    %v172 = vld [vmem:[#allocation2 + $0x310] sm:$0xff]
    %v173 = vld [vmem:[#allocation2 + $0x318] sm:$0xff]
    %v174 = vld [vmem:[#allocation2 + $0x320] sm:$0xff]
    %v175 = vld [vmem:[#allocation2 + $0x328] sm:$0xff]
    %v176 = vld [vmem:[#allocation2 + $0x330] sm:$0xff]
    %v177 = vld [vmem:[#allocation2 + $0x338] sm:$0xff]
    %v178 = vld [vmem:[#allocation2 + $0x340] sm:$0xff]
    %v179 = vld [vmem:[#allocation2 + $0x348] sm:$0xff]
    %v180 = vld [vmem:[#allocation2 + $0x350] sm:$0xff]
    %v181 = vld [vmem:[#allocation2 + $0x358] sm:$0xff]
    %v182 = vld [vmem:[#allocation2 + $0x360] sm:$0xff]
    %v183 = vld [vmem:[#allocation2 + $0x368] sm:$0xff]
    %v184 = vld [vmem:[#allocation2 + $0x370] sm:$0xff]
    %v185 = vld [vmem:[#allocation2 + $0x378] sm:$0xff]
    %v186 = vld [vmem:[#allocation2 + $0x380] sm:$0xff]
    %v187 = vld [vmem:[#allocation2 + $0x388] sm:$0xff]
    %v188 = vld [vmem:[#allocation2 + $0x390] sm:$0xff]
    %v189 = vld [vmem:[#allocation2 + $0x398] sm:$0xff]
    %v190 = vld [vmem:[#allocation2 + $0x3a0] sm:$0xff]
    %v191 = vld [vmem:[#allocation2 + $0x3a8] sm:$0xff]
    %v192 = vld [vmem:[#allocation2 + $0x3b0] sm:$0xff]
    %v193 = vld [vmem:[#allocation2 + $0x3b8] sm:$0xff]
    %v194 = vld [vmem:[#allocation2 + $0x3c0] sm:$0xff]
    %v195 = vld [vmem:[#allocation2 + $0x3c8] sm:$0xff]
    %v196 = vld [vmem:[#allocation2 + $0x3d0] sm:$0xff]
    %v197 = vld [vmem:[#allocation2 + $0x3d8] sm:$0xff]
    %v198 = vld [vmem:[#allocation2 + $0x3e0] sm:$0xff]
    %v199 = vld [vmem:[#allocation2 + $0x3e8] sm:$0xff]
    %v200 = vld [vmem:[#allocation2 + $0x3f0] sm:$0xff]
    %v201 = vld [vmem:[#allocation2 + $0x3f8] sm:$0xff]
    %v202 = vld [vmem:[#allocation2 + $0x400] sm:$0xff]
    %v203 = vld [vmem:[#allocation2 + $0x408] sm:$0xff]
    %v204 = vld [vmem:[#allocation2 + $0x410] sm:$0xff]
    %v205 = vld [vmem:[#allocation2 + $0x418] sm:$0xff]
    %v206 = vld [vmem:[#allocation2 + $0x420] sm:$0xff]
    %v207 = vld [vmem:[#allocation2 + $0x428] sm:$0xff]
    %v208 = vld [vmem:[#allocation2 + $0x430] sm:$0xff]
    %v209 = vld [vmem:[#allocation2 + $0x438] sm:$0xff]
    %v210 = vld [vmem:[#allocation2 + $0x440] sm:$0xff]
    %v211 = vld [vmem:[#allocation2 + $0x448] sm:$0xff]
    %v212 = vld [vmem:[#allocation2 + $0x450] sm:$0xff]
    %v213 = vld [vmem:[#allocation2 + $0x458] sm:$0xff]
    %v214 = vld [vmem:[#allocation2 + $0x460] sm:$0xff]
    %v215 = vld [vmem:[#allocation2 + $0x468] sm:$0xff]
    %v216 = vld [vmem:[#allocation2 + $0x470] sm:$0xff]
    %v217 = vld [vmem:[#allocation2 + $0x478] sm:$0xff]
    %v218 = vld [vmem:[#allocation2 + $0x480] sm:$0xff]
    %v219 = vld [vmem:[#allocation2 + $0x488] sm:$0xff]
    %v220 = vld [vmem:[#allocation2 + $0x490] sm:$0xff]
    %v221 = vld [vmem:[#allocation2 + $0x498] sm:$0xff]
    %v222 = vld [vmem:[#allocation2 + $0x4a0] sm:$0xff]
    %v223 = vld [vmem:[#allocation2 + $0x4a8] sm:$0xff]
    %v224 = vld [vmem:[#allocation2 + $0x4b0] sm:$0xff]
    %v225 = vld [vmem:[#allocation2 + $0x4b8] sm:$0xff]
    %v226 = vld [vmem:[#allocation2 + $0x4c0] sm:$0xff]
    %v227 = vld [vmem:[#allocation2 + $0x4c8] sm:$0xff]
    %v228 = vld [vmem:[#allocation2 + $0x4d0] sm:$0xff]
    %v229 = vld [vmem:[#allocation2 + $0x4d8] sm:$0xff]
    %v230 = vld [vmem:[#allocation2 + $0x4e0] sm:$0xff]
    %v231 = vld [vmem:[#allocation2 + $0x4e8] sm:$0xff]
    %v232 = vld [vmem:[#allocation2 + $0x4f0] sm:$0xff]
    %v233 = vld [vmem:[#allocation2 + $0x4f8] sm:$0xff]
    %v234 = vld [vmem:[#allocation2 + $0x500] sm:$0xff]
    %v235 = vld [vmem:[#allocation2 + $0x508] sm:$0xff]
    %v236 = vld [vmem:[#allocation2 + $0x510] sm:$0xff]
    %v237 = vld [vmem:[#allocation2 + $0x518] sm:$0xff]
    %v238 = vld [vmem:[#allocation2 + $0x520] sm:$0xff]
    %v239 = vld [vmem:[#allocation2 + $0x528] sm:$0xff]
    %v240 = vld [vmem:[#allocation2 + $0x530] sm:$0xff]
    %v241 = vld [vmem:[#allocation2 + $0x538] sm:$0xff]
    %v242 = vld [vmem:[#allocation2 + $0x540] sm:$0xff]
    %v243 = vld [vmem:[#allocation2 + $0x548] sm:$0xff]
    %v244 = vld [vmem:[#allocation2 + $0x550] sm:$0xff]
    %v245 = vld [vmem:[#allocation2 + $0x558] sm:$0xff]
    %v246 = vld [vmem:[#allocation2 + $0x560] sm:$0xff]
    %v247 = vld [vmem:[#allocation2 + $0x568] sm:$0xff]
    %v248 = vld [vmem:[#allocation2 + $0x570] sm:$0xff]
    %v249 = vld [vmem:[#allocation2 + $0x578] sm:$0xff]
    %v250 = vld [vmem:[#allocation2 + $0x580] sm:$0xff]
    %v251 = vld [vmem:[#allocation2 + $0x588] sm:$0xff]
    %v252 = vld [vmem:[#allocation2 + $0x590] sm:$0xff]
    %v253 = vld [vmem:[#allocation2 + $0x598] sm:$0xff]
    %v254 = vld [vmem:[#allocation2 + $0x5a0] sm:$0xff]
    %v255 = vld [vmem:[#allocation2 + $0x5a8] sm:$0xff]
    %v256 = vld [vmem:[#allocation2 + $0x5b0] sm:$0xff]
    %v257 = vld [vmem:[#allocation2 + $0x5b8] sm:$0xff]
    %v258 = vld [vmem:[#allocation2 + $0x5c0] sm:$0xff]
    %v259 = vld [vmem:[#allocation2 + $0x5c8] sm:$0xff]
    %v260 = vld [vmem:[#allocation2 + $0x5d0] sm:$0xff]
    %v261 = vld [vmem:[#allocation2 + $0x5d8] sm:$0xff]
    %v262 = vld [vmem:[#allocation2 + $0x5e0] sm:$0xff]
    %v263 = vld [vmem:[#allocation2 + $0x5e8] sm:$0xff]
    %v264 = vld [vmem:[#allocation2 + $0x5f0] sm:$0xff]
    %v265 = vld [vmem:[#allocation2 + $0x5f8] sm:$0xff]
    %v266 = vld [vmem:[#allocation2 + $0x600] sm:$0xff]
    %v267 = vld [vmem:[#allocation2 + $0x608] sm:$0xff]
    %v268 = vld [vmem:[#allocation2 + $0x610] sm:$0xff]
    %v269 = vld [vmem:[#allocation2 + $0x618] sm:$0xff]
    %v270 = vld [vmem:[#allocation2 + $0x620] sm:$0xff]
    %v271 = vld [vmem:[#allocation2 + $0x628] sm:$0xff]
    %v272 = vld [vmem:[#allocation2 + $0x630] sm:$0xff]
    %v273 = vld [vmem:[#allocation2 + $0x638] sm:$0xff]
    %v274 = vld [vmem:[#allocation2 + $0x640] sm:$0xff]
    %v275 = vld [vmem:[#allocation2 + $0x648] sm:$0xff]
    %v276 = vld [vmem:[#allocation2 + $0x650] sm:$0xff]
    %v277 = vld [vmem:[#allocation2 + $0x658] sm:$0xff]
    %v278 = vld [vmem:[#allocation2 + $0x660] sm:$0xff]
    %v279 = vld [vmem:[#allocation2 + $0x668] sm:$0xff]
    %v280 = vld [vmem:[#allocation2 + $0x670] sm:$0xff]
    %v281 = vld [vmem:[#allocation2 + $0x678] sm:$0xff]
    %v282 = vld [vmem:[#allocation2 + $0x680] sm:$0xff]
    %v283 = vld [vmem:[#allocation2 + $0x688] sm:$0xff]
    %v284 = vld [vmem:[#allocation2 + $0x690] sm:$0xff]
    %v285 = vld [vmem:[#allocation2 + $0x698] sm:$0xff]
    %v286 = vld [vmem:[#allocation2 + $0x6a0] sm:$0xff]
    %v287 = vld [vmem:[#allocation2 + $0x6a8] sm:$0xff]
    %v288 = vld [vmem:[#allocation2 + $0x6b0] sm:$0xff]
    %v289 = vld [vmem:[#allocation2 + $0x6b8] sm:$0xff]
    %v290 = vld [vmem:[#allocation2 + $0x6c0] sm:$0xff]
    %v291 = vld [vmem:[#allocation2 + $0x6c8] sm:$0xff]
    %v292 = vld [vmem:[#allocation2 + $0x6d0] sm:$0xff]
    %v293 = vld [vmem:[#allocation2 + $0x6d8] sm:$0xff]
    %v294 = vld [vmem:[#allocation2 + $0x6e0] sm:$0xff]
    %v295 = vld [vmem:[#allocation2 + $0x6e8] sm:$0xff]
    %v296 = vld [vmem:[#allocation2 + $0x6f0] sm:$0xff]
    %v297 = vld [vmem:[#allocation2 + $0x6f8] sm:$0xff]
    %v298 = vld [vmem:[#allocation2 + $0x700] sm:$0xff]
    %v299 = vld [vmem:[#allocation2 + $0x708] sm:$0xff]
    %v300 = vld [vmem:[#allocation2 + $0x710] sm:$0xff]
    %v301 = vld [vmem:[#allocation2 + $0x718] sm:$0xff]
    %v302 = vld [vmem:[#allocation2 + $0x720] sm:$0xff]
    %v303 = vld [vmem:[#allocation2 + $0x728] sm:$0xff]
    %v304 = vld [vmem:[#allocation2 + $0x730] sm:$0xff]
    %v305 = vld [vmem:[#allocation2 + $0x738] sm:$0xff]
    %v306 = vld [vmem:[#allocation2 + $0x740] sm:$0xff]
    %v307 = vld [vmem:[#allocation2 + $0x748] sm:$0xff]
    %v308 = vld [vmem:[#allocation2 + $0x750] sm:$0xff]
    %v309 = vld [vmem:[#allocation2 + $0x758] sm:$0xff]
    %v310 = vld [vmem:[#allocation2 + $0x760] sm:$0xff]
    %v311 = vld [vmem:[#allocation2 + $0x768] sm:$0xff]
    %v312 = vld [vmem:[#allocation2 + $0x770] sm:$0xff]
    %v313 = vld [vmem:[#allocation2 + $0x778] sm:$0xff]
    %v314 = vld [vmem:[#allocation2 + $0x780] sm:$0xff]
    %v315 = vld [vmem:[#allocation2 + $0x788] sm:$0xff]
    %v316 = vld [vmem:[#allocation2 + $0x790] sm:$0xff]
    %v317 = vld [vmem:[#allocation2 + $0x798] sm:$0xff]
    %v318 = vld [vmem:[#allocation2 + $0x7a0] sm:$0xff]
    %v319 = vld [vmem:[#allocation2 + $0x7a8] sm:$0xff]
    %v320 = vld [vmem:[#allocation2 + $0x7b0] sm:$0xff]
    %v321 = vld [vmem:[#allocation2 + $0x7b8] sm:$0xff]
    %v322 = vld [vmem:[#allocation2 + $0x7c0] sm:$0xff]
    %v323 = vld [vmem:[#allocation2 + $0x7c8] sm:$0xff]
    %v324 = vld [vmem:[#allocation2 + $0x7d0] sm:$0xff]
    %v325 = vld [vmem:[#allocation2 + $0x7d8] sm:$0xff]
    %v326 = vld [vmem:[#allocation2 + $0x7e0] sm:$0xff]
    %v327 = vld [vmem:[#allocation2 + $0x7e8] sm:$0xff]
    %v328 = vld [vmem:[#allocation2 + $0x7f0] sm:$0xff]
    %v329 = vld [vmem:[#allocation2 + $0x7f8] sm:$0xff]
    %v330 = vld [vmem:[#allocation2 + $0x800] sm:$0xff]
    %v331 = vld [vmem:[#allocation2 + $0x808] sm:$0xff]
    %v332 = vld [vmem:[#allocation2 + $0x810] sm:$0xff]
    %v333 = vld [vmem:[#allocation2 + $0x818] sm:$0xff]
    %v334 = vld [vmem:[#allocation2 + $0x820] sm:$0xff]
    %v335 = vld [vmem:[#allocation2 + $0x828] sm:$0xff]
    %v336 = vld [vmem:[#allocation2 + $0x830] sm:$0xff]
    %v337 = vld [vmem:[#allocation2 + $0x838] sm:$0xff]
    %v338 = vld [vmem:[#allocation2 + $0x840] sm:$0xff]
    %v339 = vld [vmem:[#allocation2 + $0x848] sm:$0xff]
    %v340 = vld [vmem:[#allocation2 + $0x850] sm:$0xff]
    %v341 = vld [vmem:[#allocation2 + $0x858] sm:$0xff]
    %v342 = vld [vmem:[#allocation2 + $0x860] sm:$0xff]
    %v343 = vld [vmem:[#allocation2 + $0x868] sm:$0xff]
    %v344 = vld [vmem:[#allocation2 + $0x870] sm:$0xff]
    %v345 = vld [vmem:[#allocation2 + $0x878] sm:$0xff]
    %v346 = vld [vmem:[#allocation2 + $0x880] sm:$0xff]
    %v347 = vld [vmem:[#allocation2 + $0x888] sm:$0xff]
    %v348 = vld [vmem:[#allocation2 + $0x890] sm:$0xff]
    %v349 = vld [vmem:[#allocation2 + $0x898] sm:$0xff]
    %v350 = vld [vmem:[#allocation2 + $0x8a0] sm:$0xff]
    %v351 = vld [vmem:[#allocation2 + $0x8a8] sm:$0xff]
    %v352 = vld [vmem:[#allocation2 + $0x8b0] sm:$0xff]
    %v353 = vld [vmem:[#allocation2 + $0x8b8] sm:$0xff]
    %v354 = vld [vmem:[#allocation2 + $0x8c0] sm:$0xff]
    %v355 = vld [vmem:[#allocation2 + $0x8c8] sm:$0xff]
    %v356 = vld [vmem:[#allocation2 + $0x8d0] sm:$0xff]
    %v357 = vld [vmem:[#allocation2 + $0x8d8] sm:$0xff]
    %v358 = vld [vmem:[#allocation2 + $0x8e0] sm:$0xff]
    %v359 = vld [vmem:[#allocation2 + $0x8e8] sm:$0xff]
    %v360 = vld [vmem:[#allocation2 + $0x8f0] sm:$0xff]
    %v361 = vld [vmem:[#allocation2 + $0x8f8] sm:$0xff]
    %v362 = vld [vmem:[#allocation2 + $0x900] sm:$0xff]
    %v363 = vld [vmem:[#allocation2 + $0x908] sm:$0xff]
    %v364 = vld [vmem:[#allocation2 + $0x910] sm:$0xff]
    %v365 = vld [vmem:[#allocation2 + $0x918] sm:$0xff]
    %v366 = vld [vmem:[#allocation2 + $0x920] sm:$0xff]
    %v367 = vld [vmem:[#allocation2 + $0x928] sm:$0xff]
    %v368 = vld [vmem:[#allocation2 + $0x930] sm:$0xff]
    %v369 = vld [vmem:[#allocation2 + $0x938] sm:$0xff]
    %v370 = vld [vmem:[#allocation2 + $0x940] sm:$0xff]
    %v371 = vld [vmem:[#allocation2 + $0x948] sm:$0xff]
    %v372 = vld [vmem:[#allocation2 + $0x950] sm:$0xff]
    %v373 = vld [vmem:[#allocation2 + $0x958] sm:$0xff]
    %v374 = vld [vmem:[#allocation2 + $0x960] sm:$0xff]
    %v375 = vld [vmem:[#allocation2 + $0x968] sm:$0xff]
    %v376 = vld [vmem:[#allocation2 + $0x970] sm:$0xff]
    %v377 = vld [vmem:[#allocation2 + $0x978] sm:$0xff]
    %v378 = vld [vmem:[#allocation2 + $0x980] sm:$0xff]
    %v379 = vld [vmem:[#allocation2 + $0x988] sm:$0xff]
    %v380 = vld [vmem:[#allocation2 + $0x990] sm:$0xff]
    %v381 = vld [vmem:[#allocation2 + $0x998] sm:$0xff]
    %v382 = vld [vmem:[#allocation2 + $0x9a0] sm:$0xff]
    %v383 = vld [vmem:[#allocation2 + $0x9a8] sm:$0xff]
    %v384 = vld [vmem:[#allocation2 + $0x9b0] sm:$0xff]
    %v385 = vld [vmem:[#allocation2 + $0x9b8] sm:$0xff]
    %v386 = vld [vmem:[#allocation2 + $0x9c0] sm:$0xff]
    %v387 = vld [vmem:[#allocation2 + $0x9c8] sm:$0xff]
    %v388 = vld [vmem:[#allocation2 + $0x9d0] sm:$0xff]
    %v389 = vld [vmem:[#allocation2 + $0x9d8] sm:$0xff]
    %v390 = vld [vmem:[#allocation2 + $0x9e0] sm:$0xff]
    %v391 = vld [vmem:[#allocation2 + $0x9e8] sm:$0xff]
    %v392 = vld [vmem:[#allocation2 + $0x9f0] sm:$0xff]
    %v393 = vld [vmem:[#allocation2 + $0x9f8] sm:$0xff]
    %v394 = vld [vmem:[#allocation2 + $0xa00] sm:$0xff]
    %v395 = vld [vmem:[#allocation2 + $0xa08] sm:$0xff]
    %v396 = vld [vmem:[#allocation2 + $0xa10] sm:$0xff]
    %v397 = vld [vmem:[#allocation2 + $0xa18] sm:$0xff]
    %v398 = vld [vmem:[#allocation2 + $0xa20] sm:$0xff]
    %v399 = vld [vmem:[#allocation2 + $0xa28] sm:$0xff]
    %v400 = vld [vmem:[#allocation2 + $0xa30] sm:$0xff]
    %v401 = vld [vmem:[#allocation2 + $0xa38] sm:$0xff]
    %v402 = vld [vmem:[#allocation2 + $0xa40] sm:$0xff]
    %v403 = vld [vmem:[#allocation2 + $0xa48] sm:$0xff]
    %v404 = vld [vmem:[#allocation2 + $0xa50] sm:$0xff]
    %v405 = vld [vmem:[#allocation2 + $0xa58] sm:$0xff]
    %v406 = vld [vmem:[#allocation2 + $0xa60] sm:$0xff]
    %v407 = vld [vmem:[#allocation2 + $0xa68] sm:$0xff]
    %v408 = vld [vmem:[#allocation2 + $0xa70] sm:$0xff]
    %v409 = vld [vmem:[#allocation2 + $0xa78] sm:$0xff]
    %v410 = vld [vmem:[#allocation2 + $0xa80] sm:$0xff]
    %v411 = vld [vmem:[#allocation2 + $0xa88] sm:$0xff]
    %v412 = vld [vmem:[#allocation2 + $0xa90] sm:$0xff]
    %v413 = vld [vmem:[#allocation2 + $0xa98] sm:$0xff]
    %v414 = vld [vmem:[#allocation2 + $0xaa0] sm:$0xff]
    %v415 = vld [vmem:[#allocation2 + $0xaa8] sm:$0xff]
    %v416 = vld [vmem:[#allocation2 + $0xab0] sm:$0xff]
    %v417 = vld [vmem:[#allocation2 + $0xab8] sm:$0xff]
    %v418 = vld [vmem:[#allocation2 + $0xac0] sm:$0xff]
    %v419 = vld [vmem:[#allocation2 + $0xac8] sm:$0xff]
    %v420 = vld [vmem:[#allocation2 + $0xad0] sm:$0xff]
    %v421 = vld [vmem:[#allocation2 + $0xad8] sm:$0xff]
    %v422 = vld [vmem:[#allocation2 + $0xae0] sm:$0xff]
    %v423 = vld [vmem:[#allocation2 + $0xae8] sm:$0xff]
    %v424 = vld [vmem:[#allocation2 + $0xaf0] sm:$0xff]
    %v425 = vld [vmem:[#allocation2 + $0xaf8] sm:$0xff]
    %v426 = vld [vmem:[#allocation2 + $0xb00] sm:$0xff]
    %v427 = vld [vmem:[#allocation2 + $0xb08] sm:$0xff]
    %v428 = vld [vmem:[#allocation2 + $0xb10] sm:$0xff]
    %v429 = vld [vmem:[#allocation2 + $0xb18] sm:$0xff]
    %v430 = vld [vmem:[#allocation2 + $0xb20] sm:$0xff]
    %v431 = vld [vmem:[#allocation2 + $0xb28] sm:$0xff]
    %v432 = vld [vmem:[#allocation2 + $0xb30] sm:$0xff]
    %v433 = vld [vmem:[#allocation2 + $0xb38] sm:$0xff]
    %v434 = vld [vmem:[#allocation2 + $0xb40] sm:$0xff]
    %v435 = vld [vmem:[#allocation2 + $0xb48] sm:$0xff]
    %v436 = vld [vmem:[#allocation2 + $0xb50] sm:$0xff]
    %v437 = vld [vmem:[#allocation2 + $0xb58] sm:$0xff]
    %v438 = vld [vmem:[#allocation2 + $0xb60] sm:$0xff]
    %v439 = vld [vmem:[#allocation2 + $0xb68] sm:$0xff]
    %v440 = vld [vmem:[#allocation2 + $0xb70] sm:$0xff]
    %v441 = vld [vmem:[#allocation2 + $0xb78] sm:$0xff]
    %v442 = vld [vmem:[#allocation2 + $0xb80] sm:$0xff]
    %v443 = vld [vmem:[#allocation2 + $0xb88] sm:$0xff]
    %v444 = vld [vmem:[#allocation2 + $0xb90] sm:$0xff]
    %v445 = vld [vmem:[#allocation2 + $0xb98] sm:$0xff]
    %v446 = vld [vmem:[#allocation2 + $0xba0] sm:$0xff]
    %v447 = vld [vmem:[#allocation2 + $0xba8] sm:$0xff]
    %v448 = vld [vmem:[#allocation2 + $0xbb0] sm:$0xff]
    %v449 = vld [vmem:[#allocation2 + $0xbb8] sm:$0xff]
    %v450 = vld [vmem:[#allocation2 + $0xbc0] sm:$0xff]
    %v451 = vld [vmem:[#allocation2 + $0xbc8] sm:$0xff]
    %v452 = vld [vmem:[#allocation2 + $0xbd0] sm:$0xff]
    %v453 = vld [vmem:[#allocation2 + $0xbd8] sm:$0xff]
    %v454 = vld [vmem:[#allocation2 + $0xbe0] sm:$0xff]
    %v455 = vld [vmem:[#allocation2 + $0xbe8] sm:$0xff]
    %v456 = vld [vmem:[#allocation2 + $0xbf0] sm:$0xff]
    %v457 = vld [vmem:[#allocation2 + $0xbf8] sm:$0xff]
    %v458 = vld [vmem:[#allocation2 + $0xc00] sm:$0xff]
    %v459 = vld [vmem:[#allocation2 + $0xc08] sm:$0xff]
    %v460 = vld [vmem:[#allocation2 + $0xc10] sm:$0xff]
    %v461 = vld [vmem:[#allocation2 + $0xc18] sm:$0xff]
    %v462 = vld [vmem:[#allocation2 + $0xc20] sm:$0xff]
    %v463 = vld [vmem:[#allocation2 + $0xc28] sm:$0xff]
    %v464 = vld [vmem:[#allocation2 + $0xc30] sm:$0xff]
    %v465 = vld [vmem:[#allocation2 + $0xc38] sm:$0xff]
    %v466 = vld [vmem:[#allocation2 + $0xc40] sm:$0xff]
    %v467 = vld [vmem:[#allocation2 + $0xc48] sm:$0xff]
    %v468 = vld [vmem:[#allocation2 + $0xc50] sm:$0xff]
    %v469 = vld [vmem:[#allocation2 + $0xc58] sm:$0xff]
    %v470 = vld [vmem:[#allocation2 + $0xc60] sm:$0xff]
    %v471 = vld [vmem:[#allocation2 + $0xc68] sm:$0xff]
    %v472 = vld [vmem:[#allocation2 + $0xc70] sm:$0xff]
    %v473 = vld [vmem:[#allocation2 + $0xc78] sm:$0xff]
    %v474 = vld [vmem:[#allocation2 + $0xc80] sm:$0xff]
    %v475 = vld [vmem:[#allocation2 + $0xc88] sm:$0xff]
    %v476 = vld [vmem:[#allocation2 + $0xc90] sm:$0xff]
    %v477 = vld [vmem:[#allocation2 + $0xc98] sm:$0xff]
    %v478 = vld [vmem:[#allocation2 + $0xca0] sm:$0xff]
    %v479 = vld [vmem:[#allocation2 + $0xca8] sm:$0xff]
    %v480 = vld [vmem:[#allocation2 + $0xcb0] sm:$0xff]
    %v481 = vld [vmem:[#allocation2 + $0xcb8] sm:$0xff]
    %v482 = vld [vmem:[#allocation2 + $0xcc0] sm:$0xff]
    %v483 = vld [vmem:[#allocation2 + $0xcc8] sm:$0xff]
    %v484 = vld [vmem:[#allocation2 + $0xcd0] sm:$0xff]
    %v485 = vld [vmem:[#allocation2 + $0xcd8] sm:$0xff]
    %v486 = vld [vmem:[#allocation2 + $0xce0] sm:$0xff]
    %v487 = vld [vmem:[#allocation2 + $0xce8] sm:$0xff]
    %v488 = vld [vmem:[#allocation2 + $0xcf0] sm:$0xff]
    %v489 = vld [vmem:[#allocation2 + $0xcf8] sm:$0xff]
    %v490 = vld [vmem:[#allocation2 + $0xd00] sm:$0xff]
    %v491 = vld [vmem:[#allocation2 + $0xd08] sm:$0xff]
    %v492 = vld [vmem:[#allocation2 + $0xd10] sm:$0xff]
    %v493 = vld [vmem:[#allocation2 + $0xd18] sm:$0xff]
    %v494 = vld [vmem:[#allocation2 + $0xd20] sm:$0xff]
    %v495 = vld [vmem:[#allocation2 + $0xd28] sm:$0xff]
    %v496 = vld [vmem:[#allocation2 + $0xd30] sm:$0xff]
    %v497 = vld [vmem:[#allocation2 + $0xd38] sm:$0xff]
    %v498 = vld [vmem:[#allocation2 + $0xd40] sm:$0xff]
    %v499 = vld [vmem:[#allocation2 + $0xd48] sm:$0xff]
    %v500 = vld [vmem:[#allocation2 + $0xd50] sm:$0xff]
    %v501 = vld [vmem:[#allocation2 + $0xd58] sm:$0xff]
    %v502 = vld [vmem:[#allocation2 + $0xd60] sm:$0xff]
    %v503 = vld [vmem:[#allocation2 + $0xd68] sm:$0xff]
    %v504 = vld [vmem:[#allocation2 + $0xd70] sm:$0xff]
    %v505 = vld [vmem:[#allocation2 + $0xd78] sm:$0xff]
    %v506 = vld [vmem:[#allocation2 + $0xd80] sm:$0xff]
    %v507 = vld [vmem:[#allocation2 + $0xd88] sm:$0xff]
    %v508 = vld [vmem:[#allocation2 + $0xd90] sm:$0xff]
    %v509 = vld [vmem:[#allocation2 + $0xd98] sm:$0xff]
    %v510 = vld [vmem:[#allocation2 + $0xda0] sm:$0xff]
    %v511 = vld [vmem:[#allocation2 + $0xda8] sm:$0xff]
    %v512 = vld [vmem:[#allocation2 + $0xdb0] sm:$0xff]
    %v513 = vld [vmem:[#allocation2 + $0xdb8] sm:$0xff]
    %v514 = vld [vmem:[#allocation2 + $0xdc0] sm:$0xff]
    %v515 = vld [vmem:[#allocation2 + $0xdc8] sm:$0xff]
    %v516 = vld [vmem:[#allocation2 + $0xdd0] sm:$0xff]
    %v517 = vld [vmem:[#allocation2 + $0xdd8] sm:$0xff]
    %v518 = vld [vmem:[#allocation2 + $0xde0] sm:$0xff]
    %v519 = vld [vmem:[#allocation2 + $0xde8] sm:$0xff]
    %v520 = vld [vmem:[#allocation2 + $0xdf0] sm:$0xff]
    %v521 = vld [vmem:[#allocation2 + $0xdf8] sm:$0xff]
    %v522 = vld [vmem:[#allocation2 + $0xe00] sm:$0xff]
    %v523 = vld [vmem:[#allocation2 + $0xe08] sm:$0xff]
    %v524 = vld [vmem:[#allocation2 + $0xe10] sm:$0xff]
    %v525 = vld [vmem:[#allocation2 + $0xe18] sm:$0xff]
    %v526 = vld [vmem:[#allocation2 + $0xe20] sm:$0xff]
    %v527 = vld [vmem:[#allocation2 + $0xe28] sm:$0xff]
    %v528 = vld [vmem:[#allocation2 + $0xe30] sm:$0xff]
    %v529 = vld [vmem:[#allocation2 + $0xe38] sm:$0xff]
    %v530 = vld [vmem:[#allocation2 + $0xe40] sm:$0xff]
    %v531 = vld [vmem:[#allocation2 + $0xe48] sm:$0xff]
    %v532 = vld [vmem:[#allocation2 + $0xe50] sm:$0xff]
    %v533 = vld [vmem:[#allocation2 + $0xe58] sm:$0xff]
    %v534 = vld [vmem:[#allocation2 + $0xe60] sm:$0xff]
    %v535 = vld [vmem:[#allocation2 + $0xe68] sm:$0xff]
    %v536 = vld [vmem:[#allocation2 + $0xe70] sm:$0xff]
    %v537 = vld [vmem:[#allocation2 + $0xe78] sm:$0xff]
    %v538 = vld [vmem:[#allocation2 + $0xe80] sm:$0xff]
    %v539 = vld [vmem:[#allocation2 + $0xe88] sm:$0xff]
    %v540 = vld [vmem:[#allocation2 + $0xe90] sm:$0xff]
    %v541 = vld [vmem:[#allocation2 + $0xe98] sm:$0xff]
    %v542 = vld [vmem:[#allocation2 + $0xea0] sm:$0xff]
    %v543 = vld [vmem:[#allocation2 + $0xea8] sm:$0xff]
    %v544 = vld [vmem:[#allocation2 + $0xeb0] sm:$0xff]
    %v545 = vld [vmem:[#allocation2 + $0xeb8] sm:$0xff]
    %v546 = vld [vmem:[#allocation2 + $0xec0] sm:$0xff]
    %v547 = vld [vmem:[#allocation2 + $0xec8] sm:$0xff]
    %v548 = vld [vmem:[#allocation2 + $0xed0] sm:$0xff]
    %v549 = vld [vmem:[#allocation2 + $0xed8] sm:$0xff]
    %v550 = vld [vmem:[#allocation2 + $0xee0] sm:$0xff]
    %v551 = vld [vmem:[#allocation2 + $0xee8] sm:$0xff]
    %v552 = vld [vmem:[#allocation2 + $0xef0] sm:$0xff]
    %v553 = vld [vmem:[#allocation2 + $0xef8] sm:$0xff]
    %v554 = vld [vmem:[#allocation2 + $0xf00] sm:$0xff]
    %v555 = vld [vmem:[#allocation2 + $0xf08] sm:$0xff]
    %v556 = vld [vmem:[#allocation2 + $0xf10] sm:$0xff]
    %v557 = vld [vmem:[#allocation2 + $0xf18] sm:$0xff]
    %v558 = vld [vmem:[#allocation2 + $0xf20] sm:$0xff]
    %v559 = vld [vmem:[#allocation2 + $0xf28] sm:$0xff]
    %v560 = vld [vmem:[#allocation2 + $0xf30] sm:$0xff]
    %v561 = vld [vmem:[#allocation2 + $0xf38] sm:$0xff]
    %v562 = vld [vmem:[#allocation2 + $0xf40] sm:$0xff]
    %v563 = vld [vmem:[#allocation2 + $0xf48] sm:$0xff]
    %v564 = vld [vmem:[#allocation2 + $0xf50] sm:$0xff]
    %v565 = vld [vmem:[#allocation2 + $0xf58] sm:$0xff]
    %v566 = vld [vmem:[#allocation2 + $0xf60] sm:$0xff]
    %v567 = vld [vmem:[#allocation2 + $0xf68] sm:$0xff]
    %v568 = vld [vmem:[#allocation2 + $0xf70] sm:$0xff]
    %v569 = vld [vmem:[#allocation2 + $0xf78] sm:$0xff]
    %v570 = vld [vmem:[#allocation2 + $0xf80] sm:$0xff]
    %v571 = vld [vmem:[#allocation2 + $0xf88] sm:$0xff]
    %v572 = vld [vmem:[#allocation2 + $0xf90] sm:$0xff]
    %v573 = vld [vmem:[#allocation2 + $0xf98] sm:$0xff]
    %v574 = vld [vmem:[#allocation2 + $0xfa0] sm:$0xff]
    %v575 = vld [vmem:[#allocation2 + $0xfa8] sm:$0xff]
    %v576 = vld [vmem:[#allocation2 + $0xfb0] sm:$0xff]
    %v577 = vld [vmem:[#allocation2 + $0xfb8] sm:$0xff]
    %v578 = vld [vmem:[#allocation2 + $0xfc0] sm:$0xff]
    %v579 = vld [vmem:[#allocation2 + $0xfc8] sm:$0xff]
    %v580 = vld [vmem:[#allocation2 + $0xfd0] sm:$0xff]
    %v581 = vld [vmem:[#allocation2 + $0xfd8] sm:$0xff]
    %v582 = vld [vmem:[#allocation2 + $0xfe0] sm:$0xff]
    %v583 = vld [vmem:[#allocation2 + $0xfe8] sm:$0xff]
    %v584 = vld [vmem:[#allocation2 + $0xff0] sm:$0xff]
    %v585 = vld [vmem:[#allocation2 + $0xff8] sm:$0xff]
    %v586 = vld [vmem:[#allocation2 + $0x1000] sm:$0xff]
    %v587 = vld [vmem:[#allocation2 + $0x1008] sm:$0xff]
    %v588 = vld [vmem:[#allocation2 + $0x1010] sm:$0xff]
    %v589 = vld [vmem:[#allocation2 + $0x1018] sm:$0xff]
    %v590 = vld [vmem:[#allocation2 + $0x1020] sm:$0xff]
    %v591 = vld [vmem:[#allocation2 + $0x1028] sm:$0xff]
    %v592 = vld [vmem:[#allocation2 + $0x1030] sm:$0xff]
    %v593 = vld [vmem:[#allocation2 + $0x1038] sm:$0xff]
    %v594 = vld [vmem:[#allocation2 + $0x1040] sm:$0xff]
    %v595 = vld [vmem:[#allocation2 + $0x1048] sm:$0xff]
    %v596 = vld [vmem:[#allocation2 + $0x1050] sm:$0xff]
    %v597 = vld [vmem:[#allocation2 + $0x1058] sm:$0xff]
    %v598 = vld [vmem:[#allocation2 + $0x1060] sm:$0xff]
    %v599 = vld [vmem:[#allocation2 + $0x1068] sm:$0xff]
    %v600 = vld [vmem:[#allocation2 + $0x1070] sm:$0xff]
    %v601 = vld [vmem:[#allocation2 + $0x1078] sm:$0xff]
    %v602 = vld [vmem:[#allocation2 + $0x1080] sm:$0xff]
    %v603 = vld [vmem:[#allocation2 + $0x1088] sm:$0xff]
    %v604 = vld [vmem:[#allocation2 + $0x1090] sm:$0xff]
    %v605 = vld [vmem:[#allocation2 + $0x1098] sm:$0xff]
    %v606 = vld [vmem:[#allocation2 + $0x10a0] sm:$0xff]
    %v607 = vld [vmem:[#allocation2 + $0x10a8] sm:$0xff]
    %v608 = vld [vmem:[#allocation2 + $0x10b0] sm:$0xff]
    %v609 = vld [vmem:[#allocation2 + $0x10b8] sm:$0xff]
    %v610 = vld [vmem:[#allocation2 + $0x10c0] sm:$0xff]
    %v611 = vld [vmem:[#allocation2 + $0x10c8] sm:$0xff]
    %v612 = vld [vmem:[#allocation2 + $0x10d0] sm:$0xff]
    %v613 = vld [vmem:[#allocation2 + $0x10d8] sm:$0xff]
    %v614 = vld [vmem:[#allocation2 + $0x10e0] sm:$0xff]
    %v615 = vld [vmem:[#allocation2 + $0x10e8] sm:$0xff]
    %v616 = vld [vmem:[#allocation2 + $0x10f0] sm:$0xff]
    %v617 = vld [vmem:[#allocation2 + $0x10f8] sm:$0xff]
    %v618 = vld [vmem:[#allocation2 + $0x1100] sm:$0xff]
    %v619 = vld [vmem:[#allocation2 + $0x1108] sm:$0xff]
    %v620 = vld [vmem:[#allocation2 + $0x1110] sm:$0xff]
    %v621 = vld [vmem:[#allocation2 + $0x1118] sm:$0xff]
    %v622 = vld [vmem:[#allocation2 + $0x1120] sm:$0xff]
    %v623 = vld [vmem:[#allocation2 + $0x1128] sm:$0xff]
    %v624 = vld [vmem:[#allocation2 + $0x1130] sm:$0xff]
    %v625 = vld [vmem:[#allocation2 + $0x1138] sm:$0xff]
    %v626 = vld [vmem:[#allocation2 + $0x1140] sm:$0xff]
    %v627 = vld [vmem:[#allocation2 + $0x1148] sm:$0xff]
    %v628 = vld [vmem:[#allocation2 + $0x1150] sm:$0xff]
    %v629 = vld [vmem:[#allocation2 + $0x1158] sm:$0xff]
    %v630 = vld [vmem:[#allocation2 + $0x1160] sm:$0xff]
    %v631 = vld [vmem:[#allocation2 + $0x1168] sm:$0xff]
    %v632 = vld [vmem:[#allocation2 + $0x1170] sm:$0xff]
    %v633 = vld [vmem:[#allocation2 + $0x1178] sm:$0xff]
    %v634 = vld [vmem:[#allocation2 + $0x1180] sm:$0xff]
    %v635 = vld [vmem:[#allocation2 + $0x1188] sm:$0xff]
    %v636 = vld [vmem:[#allocation2 + $0x1190] sm:$0xff]
    %v637 = vld [vmem:[#allocation2 + $0x1198] sm:$0xff]
    %v638 = vld [vmem:[#allocation2 + $0x11a0] sm:$0xff]
    %v639 = vld [vmem:[#allocation2 + $0x11a8] sm:$0xff]
    %v640 = vld [vmem:[#allocation2 + $0x11b0] sm:$0xff]
    %v641 = vld [vmem:[#allocation2 + $0x11b8] sm:$0xff]
    %v642 = vld [vmem:[#allocation2 + $0x11c0] sm:$0xff]
    %v643 = vld [vmem:[#allocation2 + $0x11c8] sm:$0xff]
    %v644 = vld [vmem:[#allocation2 + $0x11d0] sm:$0xff]
    %v645 = vld [vmem:[#allocation2 + $0x11d8] sm:$0xff]
    %v646 = vld [vmem:[#allocation2 + $0x11e0] sm:$0xff]
    %v647 = vld [vmem:[#allocation2 + $0x11e8] sm:$0xff]
    %v648 = vld [vmem:[#allocation2 + $0x11f0] sm:$0xff]
    %v649 = vld [vmem:[#allocation2 + $0x11f8] sm:$0xff]
    %v650 = vld [vmem:[#allocation2 + $0x1200] sm:$0xff]
    %v651 = vld [vmem:[#allocation2 + $0x1208] sm:$0xff]
    %v652 = vld [vmem:[#allocation2 + $0x1210] sm:$0xff]
    %v653 = vld [vmem:[#allocation2 + $0x1218] sm:$0xff]
    %v654 = vld [vmem:[#allocation2 + $0x1220] sm:$0xff]
    %v655 = vld [vmem:[#allocation2 + $0x1228] sm:$0xff]
    %v656 = vld [vmem:[#allocation2 + $0x1230] sm:$0xff]
    %v657 = vld [vmem:[#allocation2 + $0x1238] sm:$0xff]
    %v658 = vld [vmem:[#allocation2 + $0x1240] sm:$0xff]
    %v659 = vld [vmem:[#allocation2 + $0x1248] sm:$0xff]
    %v660 = vld [vmem:[#allocation2 + $0x1250] sm:$0xff]
    %v661 = vld [vmem:[#allocation2 + $0x1258] sm:$0xff]
    %v662 = vld [vmem:[#allocation2 + $0x1260] sm:$0xff]
    %v663 = vld [vmem:[#allocation2 + $0x1268] sm:$0xff]
    %v664 = vld [vmem:[#allocation2 + $0x1270] sm:$0xff]
    %v665 = vld [vmem:[#allocation2 + $0x1278] sm:$0xff]
    %v666 = vld [vmem:[#allocation2 + $0x1280] sm:$0xff]
    %v667 = vld [vmem:[#allocation2 + $0x1288] sm:$0xff]
    %v668 = vld [vmem:[#allocation2 + $0x1290] sm:$0xff]
    %v669 = vld [vmem:[#allocation2 + $0x1298] sm:$0xff]
    %v670 = vld [vmem:[#allocation2 + $0x12a0] sm:$0xff]
    %v671 = vld [vmem:[#allocation2 + $0x12a8] sm:$0xff]
    %v672 = vld [vmem:[#allocation2 + $0x12b0] sm:$0xff]
    %v673 = vld [vmem:[#allocation2 + $0x12b8] sm:$0xff]
    %v674 = vld [vmem:[#allocation2 + $0x12c0] sm:$0xff]
    %v675 = vld [vmem:[#allocation2 + $0x12c8] sm:$0xff]
    %v676 = vld [vmem:[#allocation2 + $0x12d0] sm:$0xff]
    %v677 = vld [vmem:[#allocation2 + $0x12d8] sm:$0xff]
    %v678 = vld [vmem:[#allocation2 + $0x12e0] sm:$0xff]
    %v679 = vld [vmem:[#allocation2 + $0x12e8] sm:$0xff]
    %v680 = vld [vmem:[#allocation2 + $0x12f0] sm:$0xff]
    %v681 = vld [vmem:[#allocation2 + $0x12f8] sm:$0xff]
    %v682 = vld [vmem:[#allocation2 + $0x1300] sm:$0xff]
    %v683 = vld [vmem:[#allocation2 + $0x1308] sm:$0xff]
    %v684 = vld [vmem:[#allocation2 + $0x1310] sm:$0xff]
    %v685 = vld [vmem:[#allocation2 + $0x1318] sm:$0xff]
    %v686 = vld [vmem:[#allocation2 + $0x1320] sm:$0xff]
    %v687 = vld [vmem:[#allocation2 + $0x1328] sm:$0xff]
    %v688 = vld [vmem:[#allocation2 + $0x1330] sm:$0xff]
    %v689 = vld [vmem:[#allocation2 + $0x1338] sm:$0xff]
    %v690 = vld [vmem:[#allocation2 + $0x1340] sm:$0xff]
    %v691 = vld [vmem:[#allocation2 + $0x1348] sm:$0xff]
    %v692 = vld [vmem:[#allocation2 + $0x1350] sm:$0xff]
    %v693 = vld [vmem:[#allocation2 + $0x1358] sm:$0xff]
    %v694 = vld [vmem:[#allocation2 + $0x1360] sm:$0xff]
    %v695 = vld [vmem:[#allocation2 + $0x1368] sm:$0xff]
    %v696 = vld [vmem:[#allocation2 + $0x1370] sm:$0xff]
    %v697 = vld [vmem:[#allocation2 + $0x1378] sm:$0xff]
    %v698 = vld [vmem:[#allocation2 + $0x1380] sm:$0xff]
    %v699 = vld [vmem:[#allocation2 + $0x1388] sm:$0xff]
    %v700 = vld [vmem:[#allocation2 + $0x1390] sm:$0xff]
    %v701 = vld [vmem:[#allocation2 + $0x1398] sm:$0xff]
    %v702 = vld [vmem:[#allocation2 + $0x13a0] sm:$0xff]
    %v703 = vld [vmem:[#allocation2 + $0x13a8] sm:$0xff]
    %v704 = vld [vmem:[#allocation2 + $0x13b0] sm:$0xff]
    %v705 = vld [vmem:[#allocation2 + $0x13b8] sm:$0xff]
    %v706 = vld [vmem:[#allocation2 + $0x13c0] sm:$0xff]
    %v707 = vld [vmem:[#allocation2 + $0x13c8] sm:$0xff]
    %v708 = vld [vmem:[#allocation2 + $0x13d0] sm:$0xff]
    %v709 = vld [vmem:[#allocation2 + $0x13d8] sm:$0xff]
    %v710 = vld [vmem:[#allocation2 + $0x13e0] sm:$0xff]
    %v711 = vld [vmem:[#allocation2 + $0x13e8] sm:$0xff]
    %v712 = vld [vmem:[#allocation2 + $0x13f0] sm:$0xff]
    %v713 = vld [vmem:[#allocation2 + $0x13f8] sm:$0xff]
    %v714 = vld [vmem:[#allocation2 + $0x1400] sm:$0xff]
    %v715 = vld [vmem:[#allocation2 + $0x1408] sm:$0xff]
    %v716 = vld [vmem:[#allocation2 + $0x1410] sm:$0xff]
    %v717 = vld [vmem:[#allocation2 + $0x1418] sm:$0xff]
    %v718 = vld [vmem:[#allocation2 + $0x1420] sm:$0xff]
    %v719 = vld [vmem:[#allocation2 + $0x1428] sm:$0xff]
    %v720 = vld [vmem:[#allocation2 + $0x1430] sm:$0xff]
    %v721 = vld [vmem:[#allocation2 + $0x1438] sm:$0xff]
    %v722 = vld [vmem:[#allocation2 + $0x1440] sm:$0xff]
    %v723 = vld [vmem:[#allocation2 + $0x1448] sm:$0xff]
    %v724 = vld [vmem:[#allocation2 + $0x1450] sm:$0xff]
    %v725 = vld [vmem:[#allocation2 + $0x1458] sm:$0xff]
    %v726 = vld [vmem:[#allocation2 + $0x1460] sm:$0xff]
    %v727 = vld [vmem:[#allocation2 + $0x1468] sm:$0xff]
    %v728 = vld [vmem:[#allocation2 + $0x1470] sm:$0xff]
    %v729 = vld [vmem:[#allocation2 + $0x1478] sm:$0xff]
    %v730 = vld [vmem:[#allocation2 + $0x1480] sm:$0xff]
    %v731 = vld [vmem:[#allocation2 + $0x1488] sm:$0xff]
    %v732 = vld [vmem:[#allocation2 + $0x1490] sm:$0xff]
    %v733 = vld [vmem:[#allocation2 + $0x1498] sm:$0xff]
    %v734 = vld [vmem:[#allocation2 + $0x14a0] sm:$0xff]
    %v735 = vld [vmem:[#allocation2 + $0x14a8] sm:$0xff]
    %v736 = vld [vmem:[#allocation2 + $0x14b0] sm:$0xff]
    %v737 = vld [vmem:[#allocation2 + $0x14b8] sm:$0xff]
    %v738 = vld [vmem:[#allocation2 + $0x14c0] sm:$0xff]
    %v739 = vld [vmem:[#allocation2 + $0x14c8] sm:$0xff]
    %v740 = vld [vmem:[#allocation2 + $0x14d0] sm:$0xff]
    %v741 = vld [vmem:[#allocation2 + $0x14d8] sm:$0xff]
    %v742 = vld [vmem:[#allocation2 + $0x14e0] sm:$0xff]
    %v743 = vld [vmem:[#allocation2 + $0x14e8] sm:$0xff]
    %v744 = vld [vmem:[#allocation2 + $0x14f0] sm:$0xff]
    %v745 = vld [vmem:[#allocation2 + $0x14f8] sm:$0xff]
    %v746 = vld [vmem:[#allocation2 + $0x1500] sm:$0xff]
    %v747 = vld [vmem:[#allocation2 + $0x1508] sm:$0xff]
    %v748 = vld [vmem:[#allocation2 + $0x1510] sm:$0xff]
    %v749 = vld [vmem:[#allocation2 + $0x1518] sm:$0xff]
    %v750 = vld [vmem:[#allocation2 + $0x1520] sm:$0xff]
    %v751 = vld [vmem:[#allocation2 + $0x1528] sm:$0xff]
    %v752 = vld [vmem:[#allocation2 + $0x1530] sm:$0xff]
    %v753 = vld [vmem:[#allocation2 + $0x1538] sm:$0xff]
    %v754 = vld [vmem:[#allocation2 + $0x1540] sm:$0xff]
    %v755 = vld [vmem:[#allocation2 + $0x1548] sm:$0xff]
    %v756 = vld [vmem:[#allocation2 + $0x1550] sm:$0xff]
    %v757 = vld [vmem:[#allocation2 + $0x1558] sm:$0xff]
    %v758 = vld [vmem:[#allocation2 + $0x1560] sm:$0xff]
    %v759 = vld [vmem:[#allocation2 + $0x1568] sm:$0xff]
    %v760 = vld [vmem:[#allocation2 + $0x1570] sm:$0xff]
    %v761 = vld [vmem:[#allocation2 + $0x1578] sm:$0xff]
    %v762 = vld [vmem:[#allocation2 + $0x1580] sm:$0xff]
    %v763 = vld [vmem:[#allocation2 + $0x1588] sm:$0xff]
    %v764 = vld [vmem:[#allocation2 + $0x1590] sm:$0xff]
    %v765 = vld [vmem:[#allocation2 + $0x1598] sm:$0xff]
    %v766 = vld [vmem:[#allocation2 + $0x15a0] sm:$0xff]
    %v767 = vld [vmem:[#allocation2 + $0x15a8] sm:$0xff]
    %v768 = vld [vmem:[#allocation2 + $0x15b0] sm:$0xff]
    %v769 = vld [vmem:[#allocation2 + $0x15b8] sm:$0xff]
    %v770 = vld [vmem:[#allocation2 + $0x15c0] sm:$0xff]
    %v771 = vld [vmem:[#allocation2 + $0x15c8] sm:$0xff]
    %v772 = vld [vmem:[#allocation2 + $0x15d0] sm:$0xff]
    %v773 = vld [vmem:[#allocation2 + $0x15d8] sm:$0xff]
    %v774 = vld [vmem:[#allocation2 + $0x15e0] sm:$0xff]
    %v775 = vld [vmem:[#allocation2 + $0x15e8] sm:$0xff]
    %v776 = vld [vmem:[#allocation2 + $0x15f0] sm:$0xff]
    %v777 = vld [vmem:[#allocation2 + $0x15f8] sm:$0xff]
    %v778 = vld [vmem:[#allocation2 + $0x1600] sm:$0xff]
    %v779 = vld [vmem:[#allocation2 + $0x1608] sm:$0xff]
    %v780 = vld [vmem:[#allocation2 + $0x1610] sm:$0xff]
    %v781 = vld [vmem:[#allocation2 + $0x1618] sm:$0xff]
    %v782 = vld [vmem:[#allocation2 + $0x1620] sm:$0xff]
    %v783 = vld [vmem:[#allocation2 + $0x1628] sm:$0xff]
    %v784 = vld [vmem:[#allocation2 + $0x1630] sm:$0xff]
    %v785 = vld [vmem:[#allocation2 + $0x1638] sm:$0xff]
    %v786 = vld [vmem:[#allocation2 + $0x1640] sm:$0xff]
    %v787 = vld [vmem:[#allocation2 + $0x1648] sm:$0xff]
    %v788 = vld [vmem:[#allocation2 + $0x1650] sm:$0xff]
    %v789 = vld [vmem:[#allocation2 + $0x1658] sm:$0xff]
    %v790 = vld [vmem:[#allocation2 + $0x1660] sm:$0xff]
    %v791 = vld [vmem:[#allocation2 + $0x1668] sm:$0xff]
    %v792 = vld [vmem:[#allocation2 + $0x1670] sm:$0xff]
    %v793 = vld [vmem:[#allocation2 + $0x1678] sm:$0xff]
    %v794 = vld [vmem:[#allocation2 + $0x1680] sm:$0xff]
    %v795 = vld [vmem:[#allocation2 + $0x1688] sm:$0xff]
    %v796 = vld [vmem:[#allocation2 + $0x1690] sm:$0xff]
    %v797 = vld [vmem:[#allocation2 + $0x1698] sm:$0xff]
    %v798 = vld [vmem:[#allocation2 + $0x16a0] sm:$0xff]
    %v799 = vld [vmem:[#allocation2 + $0x16a8] sm:$0xff]
    %v800 = vld [vmem:[#allocation2 + $0x16b0] sm:$0xff]
    %v801 = vld [vmem:[#allocation2 + $0x16b8] sm:$0xff]
    %v802 = vld [vmem:[#allocation2 + $0x16c0] sm:$0xff]
    %v803 = vld [vmem:[#allocation2 + $0x16c8] sm:$0xff]
    %v804 = vld [vmem:[#allocation2 + $0x16d0] sm:$0xff]
    %v805 = vld [vmem:[#allocation2 + $0x16d8] sm:$0xff]
    %v806 = vld [vmem:[#allocation2 + $0x16e0] sm:$0xff]
    %v807 = vld [vmem:[#allocation2 + $0x16e8] sm:$0xff]
    %v808 = vld [vmem:[#allocation2 + $0x16f0] sm:$0xff]
    %v809 = vld [vmem:[#allocation2 + $0x16f8] sm:$0xff]
    %v810 = vld [vmem:[#allocation2 + $0x1700] sm:$0xff]
    %v811 = vld [vmem:[#allocation2 + $0x1708] sm:$0xff]
    %v812 = vld [vmem:[#allocation2 + $0x1710] sm:$0xff]
    %v813 = vld [vmem:[#allocation2 + $0x1718] sm:$0xff]
    %v814 = vld [vmem:[#allocation2 + $0x1720] sm:$0xff]
    %v815 = vld [vmem:[#allocation2 + $0x1728] sm:$0xff]
    %v816 = vld [vmem:[#allocation2 + $0x1730] sm:$0xff]
    %v817 = vld [vmem:[#allocation2 + $0x1738] sm:$0xff]
    %v818 = vld [vmem:[#allocation2 + $0x1740] sm:$0xff]
    %v819 = vld [vmem:[#allocation2 + $0x1748] sm:$0xff]
    %v820 = vld [vmem:[#allocation2 + $0x1750] sm:$0xff]
    %v821 = vld [vmem:[#allocation2 + $0x1758] sm:$0xff]
    %v822 = vld [vmem:[#allocation2 + $0x1760] sm:$0xff]
    %v823 = vld [vmem:[#allocation2 + $0x1768] sm:$0xff]
    %v824 = vld [vmem:[#allocation2 + $0x1770] sm:$0xff]
    %v825 = vld [vmem:[#allocation2 + $0x1778] sm:$0xff]
    %v826 = vld [vmem:[#allocation2 + $0x1780] sm:$0xff]
    %v827 = vld [vmem:[#allocation2 + $0x1788] sm:$0xff]
    %v828 = vld [vmem:[#allocation2 + $0x1790] sm:$0xff]
    %v829 = vld [vmem:[#allocation2 + $0x1798] sm:$0xff]
    %v830 = vld [vmem:[#allocation2 + $0x17a0] sm:$0xff]
    %v831 = vld [vmem:[#allocation2 + $0x17a8] sm:$0xff]
    %v832 = vld [vmem:[#allocation2 + $0x17b0] sm:$0xff]
    %v833 = vld [vmem:[#allocation2 + $0x17b8] sm:$0xff]
    %v834 = vld [vmem:[#allocation2 + $0x17c0] sm:$0xff]
    %v835 = vld [vmem:[#allocation2 + $0x17c8] sm:$0xff]
    %v836 = vld [vmem:[#allocation2 + $0x17d0] sm:$0xff]
    %v837 = vld [vmem:[#allocation2 + $0x17d8] sm:$0xff]
    %v838 = vld [vmem:[#allocation2 + $0x17e0] sm:$0xff]
    %v839 = vld [vmem:[#allocation2 + $0x17e8] sm:$0xff]
    %v840 = vld [vmem:[#allocation2 + $0x17f0] sm:$0xff]
    %v841 = vld [vmem:[#allocation2 + $0x17f8] sm:$0xff]
    %v842 = vld [vmem:[#allocation4] sm:$0xff]
    %v843 = vld [vmem:[#allocation4 + $0x8] sm:$0xff]
    %v846 = vlaneseq
    %v847 = vshrl.u32 %v846, 7
    %v848 = vsub.s32 0, %v847
    %v849 = vrot.slane %v842, %v848
    %v850 = vlaneseq
    %v851 = vshrl.u32 %v850, 7
    %v852 = vsub.s32 1, %v851
    %v853 = vrot.slane %v842, %v852
    %v854 = vlaneseq
    %v855 = vshrl.u32 %v854, 7
    %v856 = vsub.s32 2, %v855
    %v857 = vrot.slane %v842, %v856
    %v858 = vlaneseq
    %v859 = vshrl.u32 %v858, 7
    %v860 = vsub.s32 3, %v859
    %v861 = vrot.slane %v842, %v860
    %v862 = vlaneseq
    %v863 = vshrl.u32 %v862, 7
    %v864 = vsub.s32 4, %v863
    %v865 = vrot.slane %v842, %v864
    %v866 = vlaneseq
    %v867 = vshrl.u32 %v866, 7
    %v868 = vsub.s32 5, %v867
    %v869 = vrot.slane %v842, %v868
    %v870 = vlaneseq
    %v871 = vshrl.u32 %v870, 7
    %v872 = vsub.s32 6, %v871
    %v873 = vrot.slane %v842, %v872
    %v874 = vlaneseq
    %v875 = vshrl.u32 %v874, 7
    %v876 = vsub.s32 7, %v875
    %v877 = vrot.slane %v842, %v876
    %v878 = vlaneseq
    %v879 = vshrl.u32 %v878, 7
    %v880 = vsub.s32 0, %v879
    %v881 = vrot.slane %v843, %v880
    %v882 = vlaneseq
    %v883 = vshrl.u32 %v882, 7
    %v884 = vsub.s32 1, %v883
    %v885 = vrot.slane %v843, %v884
    %v886 = vlaneseq
    %v887 = vshrl.u32 %v886, 7
    %v888 = vsub.s32 2, %v887
    %v889 = vrot.slane %v843, %v888
    %v890 = vlaneseq
    %v891 = vshrl.u32 %v890, 7
    %v892 = vsub.s32 3, %v891
    %v893 = vrot.slane %v843, %v892
    %v894 = vlaneseq
    %v895 = vshrl.u32 %v894, 7
    %v896 = vsub.s32 4, %v895
    %v897 = vrot.slane %v843, %v896
    %v898 = vlaneseq
    %v899 = vshrl.u32 %v898, 7
    %v900 = vsub.s32 5, %v899
    %v901 = vrot.slane %v843, %v900
    %v902 = vlaneseq
    %v903 = vshrl.u32 %v902, 7
    %v904 = vsub.s32 6, %v903
    %v905 = vrot.slane %v843, %v904
    %v906 = vlaneseq
    %v907 = vshrl.u32 %v906, 7
    %v908 = vsub.s32 7, %v907
    %v909 = vrot.slane %v843, %v908
    %v929 = vunpack.c.l.b16 %v71
    %v930 = vunpack.c.h.b16 %v71
    %v931 = vunpack.c.l.b16 %v72
    %v932 = vunpack.c.h.b16 %v72
    %v933 = vunpack.c.l.b16 %v73
    %v934 = vunpack.c.h.b16 %v73
    %v935 = vpack.c.b16 %v929, %v929
    %v936 = vpack.c.b16 %v930, %v930
    %v937 = vpack.c.b16 %v931, %v931
    %v938 = vpack.c.b16 %v932, %v932
    %v939 = vpack.c.b16 %v933, %v933
    %v940 = vpack.c.b16 %v934, %v934
    %v1715 = vunpack.c.l.b16 %v74
    %v1716 = vunpack.c.h.b16 %v74
    %v1717 = vunpack.c.l.b16 %v75
    %v1718 = vunpack.c.h.b16 %v75
    %v1719 = vunpack.c.l.b16 %v76
    %v1720 = vunpack.c.h.b16 %v76
    %v1721 = vunpack.c.l.b16 %v77
    %v1722 = vunpack.c.h.b16 %v77
    %v1723 = vunpack.c.l.b16 %v78
    %v1724 = vunpack.c.h.b16 %v78
    %v1725 = vunpack.c.l.b16 %v79
    %v1726 = vunpack.c.h.b16 %v79
    %v1727 = vunpack.c.l.b16 %v80
    %v1728 = vunpack.c.h.b16 %v80
    %v1729 = vunpack.c.l.b16 %v81
    %v1730 = vunpack.c.h.b16 %v81
    %v1731 = vunpack.c.l.b16 %v82
    %v1732 = vunpack.c.h.b16 %v82
    %v1733 = vunpack.c.l.b16 %v83
    %v1734 = vunpack.c.h.b16 %v83
    %v1735 = vunpack.c.l.b16 %v84
    %v1736 = vunpack.c.h.b16 %v84
    %v1737 = vunpack.c.l.b16 %v85
    %v1738 = vunpack.c.h.b16 %v85
    %v1739 = vunpack.c.l.b16 %v86
    %v1740 = vunpack.c.h.b16 %v86
    %v1741 = vunpack.c.l.b16 %v87
    %v1742 = vunpack.c.h.b16 %v87
    %v1743 = vunpack.c.l.b16 %v88
    %v1744 = vunpack.c.h.b16 %v88
    %v1745 = vunpack.c.l.b16 %v89
    %v1746 = vunpack.c.h.b16 %v89
    %v1747 = vunpack.c.l.b16 %v90
    %v1748 = vunpack.c.h.b16 %v90
    %v1749 = vunpack.c.l.b16 %v91
    %v1750 = vunpack.c.h.b16 %v91
    %v1751 = vunpack.c.l.b16 %v92
    %v1752 = vunpack.c.h.b16 %v92
    %v1753 = vunpack.c.l.b16 %v93
    %v1754 = vunpack.c.h.b16 %v93
    %v1755 = vunpack.c.l.b16 %v94
    %v1756 = vunpack.c.h.b16 %v94
    %v1757 = vunpack.c.l.b16 %v95
    %v1758 = vunpack.c.h.b16 %v95
    %v1759 = vunpack.c.l.b16 %v96
    %v1760 = vunpack.c.h.b16 %v96
    %v1761 = vunpack.c.l.b16 %v97
    %v1762 = vunpack.c.h.b16 %v97
    %v1763 = vunpack.c.l.b16 %v98
    %v1764 = vunpack.c.h.b16 %v98
    %v1765 = vunpack.c.l.b16 %v99
    %v1766 = vunpack.c.h.b16 %v99
    %v1767 = vunpack.c.l.b16 %v100
    %v1768 = vunpack.c.h.b16 %v100
    %v1769 = vunpack.c.l.b16 %v101
    %v1770 = vunpack.c.h.b16 %v101
    %v1771 = vunpack.c.l.b16 %v102
    %v1772 = vunpack.c.h.b16 %v102
    %v1773 = vunpack.c.l.b16 %v103
    %v1774 = vunpack.c.h.b16 %v103
    %v1775 = vunpack.c.l.b16 %v104
    %v1776 = vunpack.c.h.b16 %v104
    %v1777 = vunpack.c.l.b16 %v105
    %v1778 = vunpack.c.h.b16 %v105
    %v1779 = vunpack.c.l.b16 %v106
    %v1780 = vunpack.c.h.b16 %v106
    %v1781 = vunpack.c.l.b16 %v107
    %v1782 = vunpack.c.h.b16 %v107
    %v1783 = vunpack.c.l.b16 %v108
    %v1784 = vunpack.c.h.b16 %v108
    %v1785 = vunpack.c.l.b16 %v109
    %v1786 = vunpack.c.h.b16 %v109
    %v1787 = vunpack.c.l.b16 %v110
    %v1788 = vunpack.c.h.b16 %v110
    %v1789 = vunpack.c.l.b16 %v111
    %v1790 = vunpack.c.h.b16 %v111
    %v1791 = vunpack.c.l.b16 %v112
    %v1792 = vunpack.c.h.b16 %v112
    %v1793 = vunpack.c.l.b16 %v113
    %v1794 = vunpack.c.h.b16 %v113
    %v1795 = vunpack.c.l.b16 %v114
    %v1796 = vunpack.c.h.b16 %v114
    %v1797 = vunpack.c.l.b16 %v115
    %v1798 = vunpack.c.h.b16 %v115
    %v1799 = vunpack.c.l.b16 %v116
    %v1800 = vunpack.c.h.b16 %v116
    %v1801 = vunpack.c.l.b16 %v117
    %v1802 = vunpack.c.h.b16 %v117
    %v1803 = vunpack.c.l.b16 %v118
    %v1804 = vunpack.c.h.b16 %v118
    %v1805 = vunpack.c.l.b16 %v119
    %v1806 = vunpack.c.h.b16 %v119
    %v1807 = vunpack.c.l.b16 %v120
    %v1808 = vunpack.c.h.b16 %v120
    %v1809 = vunpack.c.l.b16 %v121
    %v1810 = vunpack.c.h.b16 %v121
    %v1811 = vunpack.c.l.b16 %v122
    %v1812 = vunpack.c.h.b16 %v122
    %v1813 = vunpack.c.l.b16 %v123
    %v1814 = vunpack.c.h.b16 %v123
    %v1815 = vunpack.c.l.b16 %v124
    %v1816 = vunpack.c.h.b16 %v124
    %v1817 = vunpack.c.l.b16 %v125
    %v1818 = vunpack.c.h.b16 %v125
    %v1819 = vunpack.c.l.b16 %v126
    %v1820 = vunpack.c.h.b16 %v126
    %v1821 = vunpack.c.l.b16 %v127
    %v1822 = vunpack.c.h.b16 %v127
    %v1823 = vunpack.c.l.b16 %v128
    %v1824 = vunpack.c.h.b16 %v128
    %v1825 = vunpack.c.l.b16 %v129
    %v1826 = vunpack.c.h.b16 %v129
    %v1827 = vunpack.c.l.b16 %v130
    %v1828 = vunpack.c.h.b16 %v130
    %v1829 = vunpack.c.l.b16 %v131
    %v1830 = vunpack.c.h.b16 %v131
    %v1831 = vunpack.c.l.b16 %v132
    %v1832 = vunpack.c.h.b16 %v132
    %v1833 = vunpack.c.l.b16 %v133
    %v1834 = vunpack.c.h.b16 %v133
    %v1835 = vunpack.c.l.b16 %v134
    %v1836 = vunpack.c.h.b16 %v134
    %v1837 = vunpack.c.l.b16 %v135
    %v1838 = vunpack.c.h.b16 %v135
    %v1839 = vunpack.c.l.b16 %v136
    %v1840 = vunpack.c.h.b16 %v136
    %v1841 = vunpack.c.l.b16 %v137
    %v1842 = vunpack.c.h.b16 %v137
    %v1843 = vunpack.c.l.b16 %v138
    %v1844 = vunpack.c.h.b16 %v138
    %v1845 = vunpack.c.l.b16 %v139
    %v1846 = vunpack.c.h.b16 %v139
    %v1847 = vunpack.c.l.b16 %v140
    %v1848 = vunpack.c.h.b16 %v140
    %v1849 = vunpack.c.l.b16 %v141
    %v1850 = vunpack.c.h.b16 %v141
    %v1851 = vunpack.c.l.b16 %v142
    %v1852 = vunpack.c.h.b16 %v142
    %v1853 = vunpack.c.l.b16 %v143
    %v1854 = vunpack.c.h.b16 %v143
    %v1855 = vunpack.c.l.b16 %v144
    %v1856 = vunpack.c.h.b16 %v144
    %v1857 = vunpack.c.l.b16 %v145
    %v1858 = vunpack.c.h.b16 %v145
    %v1859 = vunpack.c.l.b16 %v146
    %v1860 = vunpack.c.h.b16 %v146
    %v1861 = vunpack.c.l.b16 %v147
    %v1862 = vunpack.c.h.b16 %v147
    %v1863 = vunpack.c.l.b16 %v148
    %v1864 = vunpack.c.h.b16 %v148
    %v1865 = vunpack.c.l.b16 %v149
    %v1866 = vunpack.c.h.b16 %v149
    %v1867 = vunpack.c.l.b16 %v150
    %v1868 = vunpack.c.h.b16 %v150
    %v1869 = vunpack.c.l.b16 %v151
    %v1870 = vunpack.c.h.b16 %v151
    %v1871 = vunpack.c.l.b16 %v152
    %v1872 = vunpack.c.h.b16 %v152
    %v1873 = vunpack.c.l.b16 %v153
    %v1874 = vunpack.c.h.b16 %v153
    %v1875 = vunpack.c.l.b16 %v154
    %v1876 = vunpack.c.h.b16 %v154
    %v1877 = vunpack.c.l.b16 %v155
    %v1878 = vunpack.c.h.b16 %v155
    %v1879 = vunpack.c.l.b16 %v156
    %v1880 = vunpack.c.h.b16 %v156
    %v1881 = vunpack.c.l.b16 %v157
    %v1882 = vunpack.c.h.b16 %v157
    %v1883 = vunpack.c.l.b16 %v158
    %v1884 = vunpack.c.h.b16 %v158
    %v1885 = vunpack.c.l.b16 %v159
    %v1886 = vunpack.c.h.b16 %v159
    %v1887 = vunpack.c.l.b16 %v160
    %v1888 = vunpack.c.h.b16 %v160
    %v1889 = vunpack.c.l.b16 %v161
    %v1890 = vunpack.c.h.b16 %v161
    %v1891 = vunpack.c.l.b16 %v162
    %v1892 = vunpack.c.h.b16 %v162
    %v1893 = vunpack.c.l.b16 %v163
    %v1894 = vunpack.c.h.b16 %v163
    %v1895 = vunpack.c.l.b16 %v164
    %v1896 = vunpack.c.h.b16 %v164
    %v1897 = vunpack.c.l.b16 %v165
    %v1898 = vunpack.c.h.b16 %v165
    %v1899 = vunpack.c.l.b16 %v166
    %v1900 = vunpack.c.h.b16 %v166
    %v1901 = vunpack.c.l.b16 %v167
    %v1902 = vunpack.c.h.b16 %v167
    %v1903 = vunpack.c.l.b16 %v168
    %v1904 = vunpack.c.h.b16 %v168
    %v1905 = vunpack.c.l.b16 %v169
    %v1906 = vunpack.c.h.b16 %v169
    %v1907 = vunpack.c.l.b16 %v170
    %v1908 = vunpack.c.h.b16 %v170
    %v1909 = vunpack.c.l.b16 %v171
    %v1910 = vunpack.c.h.b16 %v171
    %v1911 = vunpack.c.l.b16 %v172
    %v1912 = vunpack.c.h.b16 %v172
    %v1913 = vunpack.c.l.b16 %v173
    %v1914 = vunpack.c.h.b16 %v173
    %v1915 = vunpack.c.l.b16 %v174
    %v1916 = vunpack.c.h.b16 %v174
    %v1917 = vunpack.c.l.b16 %v175
    %v1918 = vunpack.c.h.b16 %v175
    %v1919 = vunpack.c.l.b16 %v176
    %v1920 = vunpack.c.h.b16 %v176
    %v1921 = vunpack.c.l.b16 %v177
    %v1922 = vunpack.c.h.b16 %v177
    %v1923 = vunpack.c.l.b16 %v178
    %v1924 = vunpack.c.h.b16 %v178
    %v1925 = vunpack.c.l.b16 %v179
    %v1926 = vunpack.c.h.b16 %v179
    %v1927 = vunpack.c.l.b16 %v180
    %v1928 = vunpack.c.h.b16 %v180
    %v1929 = vunpack.c.l.b16 %v181
    %v1930 = vunpack.c.h.b16 %v181
    %v1931 = vunpack.c.l.b16 %v182
    %v1932 = vunpack.c.h.b16 %v182
    %v1933 = vunpack.c.l.b16 %v183
    %v1934 = vunpack.c.h.b16 %v183
    %v1935 = vunpack.c.l.b16 %v184
    %v1936 = vunpack.c.h.b16 %v184
    %v1937 = vunpack.c.l.b16 %v185
    %v1938 = vunpack.c.h.b16 %v185
    %v1939 = vunpack.c.l.b16 %v186
    %v1940 = vunpack.c.h.b16 %v186
    %v1941 = vunpack.c.l.b16 %v187
    %v1942 = vunpack.c.h.b16 %v187
    %v1943 = vunpack.c.l.b16 %v188
    %v1944 = vunpack.c.h.b16 %v188
    %v1945 = vunpack.c.l.b16 %v189
    %v1946 = vunpack.c.h.b16 %v189
    %v1947 = vunpack.c.l.b16 %v190
    %v1948 = vunpack.c.h.b16 %v190
    %v1949 = vunpack.c.l.b16 %v191
    %v1950 = vunpack.c.h.b16 %v191
    %v1951 = vunpack.c.l.b16 %v192
    %v1952 = vunpack.c.h.b16 %v192
    %v1953 = vunpack.c.l.b16 %v193
    %v1954 = vunpack.c.h.b16 %v193
    %v1955 = vunpack.c.l.b16 %v194
    %v1956 = vunpack.c.h.b16 %v194
    %v1957 = vunpack.c.l.b16 %v195
    %v1958 = vunpack.c.h.b16 %v195
    %v1959 = vunpack.c.l.b16 %v196
    %v1960 = vunpack.c.h.b16 %v196
    %v1961 = vunpack.c.l.b16 %v197
    %v1962 = vunpack.c.h.b16 %v197
    %v1963 = vunpack.c.l.b16 %v198
    %v1964 = vunpack.c.h.b16 %v198
    %v1965 = vunpack.c.l.b16 %v199
    %v1966 = vunpack.c.h.b16 %v199
    %v1967 = vunpack.c.l.b16 %v200
    %v1968 = vunpack.c.h.b16 %v200
    %v1969 = vunpack.c.l.b16 %v201
    %v1970 = vunpack.c.h.b16 %v201
    %v1971 = vunpack.c.l.b16 %v202
    %v1972 = vunpack.c.h.b16 %v202
    %v1973 = vunpack.c.l.b16 %v203
    %v1974 = vunpack.c.h.b16 %v203
    %v1975 = vunpack.c.l.b16 %v204
    %v1976 = vunpack.c.h.b16 %v204
    %v1977 = vunpack.c.l.b16 %v205
    %v1978 = vunpack.c.h.b16 %v205
    %v1979 = vunpack.c.l.b16 %v206
    %v1980 = vunpack.c.h.b16 %v206
    %v1981 = vunpack.c.l.b16 %v207
    %v1982 = vunpack.c.h.b16 %v207
    %v1983 = vunpack.c.l.b16 %v208
    %v1984 = vunpack.c.h.b16 %v208
    %v1985 = vunpack.c.l.b16 %v209
    %v1986 = vunpack.c.h.b16 %v209
    %v1987 = vunpack.c.l.b16 %v210
    %v1988 = vunpack.c.h.b16 %v210
    %v1989 = vunpack.c.l.b16 %v211
    %v1990 = vunpack.c.h.b16 %v211
    %v1991 = vunpack.c.l.b16 %v212
    %v1992 = vunpack.c.h.b16 %v212
    %v1993 = vunpack.c.l.b16 %v213
    %v1994 = vunpack.c.h.b16 %v213
    %v1995 = vunpack.c.l.b16 %v214
    %v1996 = vunpack.c.h.b16 %v214
    %v1997 = vunpack.c.l.b16 %v215
    %v1998 = vunpack.c.h.b16 %v215
    %v1999 = vunpack.c.l.b16 %v216
    %v2000 = vunpack.c.h.b16 %v216
    %v2001 = vunpack.c.l.b16 %v217
    %v2002 = vunpack.c.h.b16 %v217
    %v2003 = vunpack.c.l.b16 %v218
    %v2004 = vunpack.c.h.b16 %v218
    %v2005 = vunpack.c.l.b16 %v219
    %v2006 = vunpack.c.h.b16 %v219
    %v2007 = vunpack.c.l.b16 %v220
    %v2008 = vunpack.c.h.b16 %v220
    %v2009 = vunpack.c.l.b16 %v221
    %v2010 = vunpack.c.h.b16 %v221
    %v2011 = vunpack.c.l.b16 %v222
    %v2012 = vunpack.c.h.b16 %v222
    %v2013 = vunpack.c.l.b16 %v223
    %v2014 = vunpack.c.h.b16 %v223
    %v2015 = vunpack.c.l.b16 %v224
    %v2016 = vunpack.c.h.b16 %v224
    %v2017 = vunpack.c.l.b16 %v225
    %v2018 = vunpack.c.h.b16 %v225
    %v2019 = vunpack.c.l.b16 %v226
    %v2020 = vunpack.c.h.b16 %v226
    %v2021 = vunpack.c.l.b16 %v227
    %v2022 = vunpack.c.h.b16 %v227
    %v2023 = vunpack.c.l.b16 %v228
    %v2024 = vunpack.c.h.b16 %v228
    %v2025 = vunpack.c.l.b16 %v229
    %v2026 = vunpack.c.h.b16 %v229
    %v2027 = vunpack.c.l.b16 %v230
    %v2028 = vunpack.c.h.b16 %v230
    %v2029 = vunpack.c.l.b16 %v231
    %v2030 = vunpack.c.h.b16 %v231
    %v2031 = vunpack.c.l.b16 %v232
    %v2032 = vunpack.c.h.b16 %v232
    %v2033 = vunpack.c.l.b16 %v233
    %v2034 = vunpack.c.h.b16 %v233
    %v2035 = vunpack.c.l.b16 %v234
    %v2036 = vunpack.c.h.b16 %v234
    %v2037 = vunpack.c.l.b16 %v235
    %v2038 = vunpack.c.h.b16 %v235
    %v2039 = vunpack.c.l.b16 %v236
    %v2040 = vunpack.c.h.b16 %v236
    %v2041 = vunpack.c.l.b16 %v237
    %v2042 = vunpack.c.h.b16 %v237
    %v2043 = vunpack.c.l.b16 %v238
    %v2044 = vunpack.c.h.b16 %v238
    %v2045 = vunpack.c.l.b16 %v239
    %v2046 = vunpack.c.h.b16 %v239
    %v2047 = vunpack.c.l.b16 %v240
    %v2048 = vunpack.c.h.b16 %v240
    %v2049 = vunpack.c.l.b16 %v241
    %v2050 = vunpack.c.h.b16 %v241
    %v2051 = vunpack.c.l.b16 %v242
    %v2052 = vunpack.c.h.b16 %v242
    %v2053 = vunpack.c.l.b16 %v243
    %v2054 = vunpack.c.h.b16 %v243
    %v2055 = vunpack.c.l.b16 %v244
    %v2056 = vunpack.c.h.b16 %v244
    %v2057 = vunpack.c.l.b16 %v245
    %v2058 = vunpack.c.h.b16 %v245
    %v2059 = vunpack.c.l.b16 %v246
    %v2060 = vunpack.c.h.b16 %v246
    %v2061 = vunpack.c.l.b16 %v247
    %v2062 = vunpack.c.h.b16 %v247
    %v2063 = vunpack.c.l.b16 %v248
    %v2064 = vunpack.c.h.b16 %v248
    %v2065 = vunpack.c.l.b16 %v249
    %v2066 = vunpack.c.h.b16 %v249
    %v2067 = vunpack.c.l.b16 %v250
    %v2068 = vunpack.c.h.b16 %v250
    %v2069 = vunpack.c.l.b16 %v251
    %v2070 = vunpack.c.h.b16 %v251
    %v2071 = vunpack.c.l.b16 %v252
    %v2072 = vunpack.c.h.b16 %v252
    %v2073 = vunpack.c.l.b16 %v253
    %v2074 = vunpack.c.h.b16 %v253
    %v2075 = vunpack.c.l.b16 %v254
    %v2076 = vunpack.c.h.b16 %v254
    %v2077 = vunpack.c.l.b16 %v255
    %v2078 = vunpack.c.h.b16 %v255
    %v2079 = vunpack.c.l.b16 %v256
    %v2080 = vunpack.c.h.b16 %v256
    %v2081 = vunpack.c.l.b16 %v257
    %v2082 = vunpack.c.h.b16 %v257
    %v2083 = vunpack.c.l.b16 %v258
    %v2084 = vunpack.c.h.b16 %v258
    %v2085 = vunpack.c.l.b16 %v259
    %v2086 = vunpack.c.h.b16 %v259
    %v2087 = vunpack.c.l.b16 %v260
    %v2088 = vunpack.c.h.b16 %v260
    %v2089 = vunpack.c.l.b16 %v261
    %v2090 = vunpack.c.h.b16 %v261
    %v2091 = vunpack.c.l.b16 %v262
    %v2092 = vunpack.c.h.b16 %v262
    %v2093 = vunpack.c.l.b16 %v263
    %v2094 = vunpack.c.h.b16 %v263
    %v2095 = vunpack.c.l.b16 %v264
    %v2096 = vunpack.c.h.b16 %v264
    %v2097 = vunpack.c.l.b16 %v265
    %v2098 = vunpack.c.h.b16 %v265
    %v2099 = vunpack.c.l.b16 %v266
    %v2100 = vunpack.c.h.b16 %v266
    %v2101 = vunpack.c.l.b16 %v267
    %v2102 = vunpack.c.h.b16 %v267
    %v2103 = vunpack.c.l.b16 %v268
    %v2104 = vunpack.c.h.b16 %v268
    %v2105 = vunpack.c.l.b16 %v269
    %v2106 = vunpack.c.h.b16 %v269
    %v2107 = vunpack.c.l.b16 %v270
    %v2108 = vunpack.c.h.b16 %v270
    %v2109 = vunpack.c.l.b16 %v271
    %v2110 = vunpack.c.h.b16 %v271
    %v2111 = vunpack.c.l.b16 %v272
    %v2112 = vunpack.c.h.b16 %v272
    %v2113 = vunpack.c.l.b16 %v273
    %v2114 = vunpack.c.h.b16 %v273
    %v2115 = vunpack.c.l.b16 %v274
    %v2116 = vunpack.c.h.b16 %v274
    %v2117 = vunpack.c.l.b16 %v275
    %v2118 = vunpack.c.h.b16 %v275
    %v2119 = vunpack.c.l.b16 %v276
    %v2120 = vunpack.c.h.b16 %v276
    %v2121 = vunpack.c.l.b16 %v277
    %v2122 = vunpack.c.h.b16 %v277
    %v2123 = vunpack.c.l.b16 %v278
    %v2124 = vunpack.c.h.b16 %v278
    %v2125 = vunpack.c.l.b16 %v279
    %v2126 = vunpack.c.h.b16 %v279
    %v2127 = vunpack.c.l.b16 %v280
    %v2128 = vunpack.c.h.b16 %v280
    %v2129 = vunpack.c.l.b16 %v281
    %v2130 = vunpack.c.h.b16 %v281
    %v2131 = vunpack.c.l.b16 %v282
    %v2132 = vunpack.c.h.b16 %v282
    %v2133 = vunpack.c.l.b16 %v283
    %v2134 = vunpack.c.h.b16 %v283
    %v2135 = vunpack.c.l.b16 %v284
    %v2136 = vunpack.c.h.b16 %v284
    %v2137 = vunpack.c.l.b16 %v285
    %v2138 = vunpack.c.h.b16 %v285
    %v2139 = vunpack.c.l.b16 %v286
    %v2140 = vunpack.c.h.b16 %v286
    %v2141 = vunpack.c.l.b16 %v287
    %v2142 = vunpack.c.h.b16 %v287
    %v2143 = vunpack.c.l.b16 %v288
    %v2144 = vunpack.c.h.b16 %v288
    %v2145 = vunpack.c.l.b16 %v289
    %v2146 = vunpack.c.h.b16 %v289
    %v2147 = vunpack.c.l.b16 %v290
    %v2148 = vunpack.c.h.b16 %v290
    %v2149 = vunpack.c.l.b16 %v291
    %v2150 = vunpack.c.h.b16 %v291
    %v2151 = vunpack.c.l.b16 %v292
    %v2152 = vunpack.c.h.b16 %v292
    %v2153 = vunpack.c.l.b16 %v293
    %v2154 = vunpack.c.h.b16 %v293
    %v2155 = vunpack.c.l.b16 %v294
    %v2156 = vunpack.c.h.b16 %v294
    %v2157 = vunpack.c.l.b16 %v295
    %v2158 = vunpack.c.h.b16 %v295
    %v2159 = vunpack.c.l.b16 %v296
    %v2160 = vunpack.c.h.b16 %v296
    %v2161 = vunpack.c.l.b16 %v297
    %v2162 = vunpack.c.h.b16 %v297
    %v2163 = vunpack.c.l.b16 %v298
    %v2164 = vunpack.c.h.b16 %v298
    %v2165 = vunpack.c.l.b16 %v299
    %v2166 = vunpack.c.h.b16 %v299
    %v2167 = vunpack.c.l.b16 %v300
    %v2168 = vunpack.c.h.b16 %v300
    %v2169 = vunpack.c.l.b16 %v301
    %v2170 = vunpack.c.h.b16 %v301
    %v2171 = vunpack.c.l.b16 %v302
    %v2172 = vunpack.c.h.b16 %v302
    %v2173 = vunpack.c.l.b16 %v303
    %v2174 = vunpack.c.h.b16 %v303
    %v2175 = vunpack.c.l.b16 %v304
    %v2176 = vunpack.c.h.b16 %v304
    %v2177 = vunpack.c.l.b16 %v305
    %v2178 = vunpack.c.h.b16 %v305
    %v2179 = vunpack.c.l.b16 %v306
    %v2180 = vunpack.c.h.b16 %v306
    %v2181 = vunpack.c.l.b16 %v307
    %v2182 = vunpack.c.h.b16 %v307
    %v2183 = vunpack.c.l.b16 %v308
    %v2184 = vunpack.c.h.b16 %v308
    %v2185 = vunpack.c.l.b16 %v309
    %v2186 = vunpack.c.h.b16 %v309
    %v2187 = vunpack.c.l.b16 %v310
    %v2188 = vunpack.c.h.b16 %v310
    %v2189 = vunpack.c.l.b16 %v311
    %v2190 = vunpack.c.h.b16 %v311
    %v2191 = vunpack.c.l.b16 %v312
    %v2192 = vunpack.c.h.b16 %v312
    %v2193 = vunpack.c.l.b16 %v313
    %v2194 = vunpack.c.h.b16 %v313
    %v2195 = vunpack.c.l.b16 %v314
    %v2196 = vunpack.c.h.b16 %v314
    %v2197 = vunpack.c.l.b16 %v315
    %v2198 = vunpack.c.h.b16 %v315
    %v2199 = vunpack.c.l.b16 %v316
    %v2200 = vunpack.c.h.b16 %v316
    %v2201 = vunpack.c.l.b16 %v317
    %v2202 = vunpack.c.h.b16 %v317
    %v2203 = vunpack.c.l.b16 %v318
    %v2204 = vunpack.c.h.b16 %v318
    %v2205 = vunpack.c.l.b16 %v319
    %v2206 = vunpack.c.h.b16 %v319
    %v2207 = vunpack.c.l.b16 %v320
    %v2208 = vunpack.c.h.b16 %v320
    %v2209 = vunpack.c.l.b16 %v321
    %v2210 = vunpack.c.h.b16 %v321
    %v2211 = vunpack.c.l.b16 %v322
    %v2212 = vunpack.c.h.b16 %v322
    %v2213 = vunpack.c.l.b16 %v323
    %v2214 = vunpack.c.h.b16 %v323
    %v2215 = vunpack.c.l.b16 %v324
    %v2216 = vunpack.c.h.b16 %v324
    %v2217 = vunpack.c.l.b16 %v325
    %v2218 = vunpack.c.h.b16 %v325
    %v2219 = vunpack.c.l.b16 %v326
    %v2220 = vunpack.c.h.b16 %v326
    %v2221 = vunpack.c.l.b16 %v327
    %v2222 = vunpack.c.h.b16 %v327
    %v2223 = vunpack.c.l.b16 %v328
    %v2224 = vunpack.c.h.b16 %v328
    %v2225 = vunpack.c.l.b16 %v329
    %v2226 = vunpack.c.h.b16 %v329
    %v2227 = vunpack.c.l.b16 %v330
    %v2228 = vunpack.c.h.b16 %v330
    %v2229 = vunpack.c.l.b16 %v331
    %v2230 = vunpack.c.h.b16 %v331
    %v2231 = vunpack.c.l.b16 %v332
    %v2232 = vunpack.c.h.b16 %v332
    %v2233 = vunpack.c.l.b16 %v333
    %v2234 = vunpack.c.h.b16 %v333
    %v2235 = vunpack.c.l.b16 %v334
    %v2236 = vunpack.c.h.b16 %v334
    %v2237 = vunpack.c.l.b16 %v335
    %v2238 = vunpack.c.h.b16 %v335
    %v2239 = vunpack.c.l.b16 %v336
    %v2240 = vunpack.c.h.b16 %v336
    %v2241 = vunpack.c.l.b16 %v337
    %v2242 = vunpack.c.h.b16 %v337
    %v2243 = vunpack.c.l.b16 %v338
    %v2244 = vunpack.c.h.b16 %v338
    %v2245 = vunpack.c.l.b16 %v339
    %v2246 = vunpack.c.h.b16 %v339
    %v2247 = vunpack.c.l.b16 %v340
    %v2248 = vunpack.c.h.b16 %v340
    %v2249 = vunpack.c.l.b16 %v341
    %v2250 = vunpack.c.h.b16 %v341
    %v2251 = vunpack.c.l.b16 %v342
    %v2252 = vunpack.c.h.b16 %v342
    %v2253 = vunpack.c.l.b16 %v343
    %v2254 = vunpack.c.h.b16 %v343
    %v2255 = vunpack.c.l.b16 %v344
    %v2256 = vunpack.c.h.b16 %v344
    %v2257 = vunpack.c.l.b16 %v345
    %v2258 = vunpack.c.h.b16 %v345
    %v2259 = vunpack.c.l.b16 %v346
    %v2260 = vunpack.c.h.b16 %v346
    %v2261 = vunpack.c.l.b16 %v347
    %v2262 = vunpack.c.h.b16 %v347
    %v2263 = vunpack.c.l.b16 %v348
    %v2264 = vunpack.c.h.b16 %v348
    %v2265 = vunpack.c.l.b16 %v349
    %v2266 = vunpack.c.h.b16 %v349
    %v2267 = vunpack.c.l.b16 %v350
    %v2268 = vunpack.c.h.b16 %v350
    %v2269 = vunpack.c.l.b16 %v351
    %v2270 = vunpack.c.h.b16 %v351
    %v2271 = vunpack.c.l.b16 %v352
    %v2272 = vunpack.c.h.b16 %v352
    %v2273 = vunpack.c.l.b16 %v353
    %v2274 = vunpack.c.h.b16 %v353
    %v2275 = vunpack.c.l.b16 %v354
    %v2276 = vunpack.c.h.b16 %v354
    %v2277 = vunpack.c.l.b16 %v355
    %v2278 = vunpack.c.h.b16 %v355
    %v2279 = vunpack.c.l.b16 %v356
    %v2280 = vunpack.c.h.b16 %v356
    %v2281 = vunpack.c.l.b16 %v357
    %v2282 = vunpack.c.h.b16 %v357
    %v2283 = vunpack.c.l.b16 %v358
    %v2284 = vunpack.c.h.b16 %v358
    %v2285 = vunpack.c.l.b16 %v359
    %v2286 = vunpack.c.h.b16 %v359
    %v2287 = vunpack.c.l.b16 %v360
    %v2288 = vunpack.c.h.b16 %v360
    %v2289 = vunpack.c.l.b16 %v361
    %v2290 = vunpack.c.h.b16 %v361
    %v2291 = vunpack.c.l.b16 %v362
    %v2292 = vunpack.c.h.b16 %v362
    %v2293 = vunpack.c.l.b16 %v363
    %v2294 = vunpack.c.h.b16 %v363
    %v2295 = vunpack.c.l.b16 %v364
    %v2296 = vunpack.c.h.b16 %v364
    %v2297 = vunpack.c.l.b16 %v365
    %v2298 = vunpack.c.h.b16 %v365
    %v2299 = vunpack.c.l.b16 %v366
    %v2300 = vunpack.c.h.b16 %v366
    %v2301 = vunpack.c.l.b16 %v367
    %v2302 = vunpack.c.h.b16 %v367
    %v2303 = vunpack.c.l.b16 %v368
    %v2304 = vunpack.c.h.b16 %v368
    %v2305 = vunpack.c.l.b16 %v369
    %v2306 = vunpack.c.h.b16 %v369
    %v2307 = vunpack.c.l.b16 %v370
    %v2308 = vunpack.c.h.b16 %v370
    %v2309 = vunpack.c.l.b16 %v371
    %v2310 = vunpack.c.h.b16 %v371
    %v2311 = vunpack.c.l.b16 %v372
    %v2312 = vunpack.c.h.b16 %v372
    %v2313 = vunpack.c.l.b16 %v373
    %v2314 = vunpack.c.h.b16 %v373
    %v2315 = vunpack.c.l.b16 %v374
    %v2316 = vunpack.c.h.b16 %v374
    %v2317 = vunpack.c.l.b16 %v375
    %v2318 = vunpack.c.h.b16 %v375
    %v2319 = vunpack.c.l.b16 %v376
    %v2320 = vunpack.c.h.b16 %v376
    %v2321 = vunpack.c.l.b16 %v377
    %v2322 = vunpack.c.h.b16 %v377
    %v2323 = vunpack.c.l.b16 %v378
    %v2324 = vunpack.c.h.b16 %v378
    %v2325 = vunpack.c.l.b16 %v379
    %v2326 = vunpack.c.h.b16 %v379
    %v2327 = vunpack.c.l.b16 %v380
    %v2328 = vunpack.c.h.b16 %v380
    %v2329 = vunpack.c.l.b16 %v381
    %v2330 = vunpack.c.h.b16 %v381
    %v2331 = vunpack.c.l.b16 %v382
    %v2332 = vunpack.c.h.b16 %v382
    %v2333 = vunpack.c.l.b16 %v383
    %v2334 = vunpack.c.h.b16 %v383
    %v2335 = vunpack.c.l.b16 %v384
    %v2336 = vunpack.c.h.b16 %v384
    %v2337 = vunpack.c.l.b16 %v385
    %v2338 = vunpack.c.h.b16 %v385
    %v2339 = vunpack.c.l.b16 %v386
    %v2340 = vunpack.c.h.b16 %v386
    %v2341 = vunpack.c.l.b16 %v387
    %v2342 = vunpack.c.h.b16 %v387
    %v2343 = vunpack.c.l.b16 %v388
    %v2344 = vunpack.c.h.b16 %v388
    %v2345 = vunpack.c.l.b16 %v389
    %v2346 = vunpack.c.h.b16 %v389
    %v2347 = vunpack.c.l.b16 %v390
    %v2348 = vunpack.c.h.b16 %v390
    %v2349 = vunpack.c.l.b16 %v391
    %v2350 = vunpack.c.h.b16 %v391
    %v2351 = vunpack.c.l.b16 %v392
    %v2352 = vunpack.c.h.b16 %v392
    %v2353 = vunpack.c.l.b16 %v393
    %v2354 = vunpack.c.h.b16 %v393
    %v2355 = vunpack.c.l.b16 %v394
    %v2356 = vunpack.c.h.b16 %v394
    %v2357 = vunpack.c.l.b16 %v395
    %v2358 = vunpack.c.h.b16 %v395
    %v2359 = vunpack.c.l.b16 %v396
    %v2360 = vunpack.c.h.b16 %v396
    %v2361 = vunpack.c.l.b16 %v397
    %v2362 = vunpack.c.h.b16 %v397
    %v2363 = vunpack.c.l.b16 %v398
    %v2364 = vunpack.c.h.b16 %v398
    %v2365 = vunpack.c.l.b16 %v399
    %v2366 = vunpack.c.h.b16 %v399
    %v2367 = vunpack.c.l.b16 %v400
    %v2368 = vunpack.c.h.b16 %v400
    %v2369 = vunpack.c.l.b16 %v401
    %v2370 = vunpack.c.h.b16 %v401
    %v2371 = vunpack.c.l.b16 %v402
    %v2372 = vunpack.c.h.b16 %v402
    %v2373 = vunpack.c.l.b16 %v403
    %v2374 = vunpack.c.h.b16 %v403
    %v2375 = vunpack.c.l.b16 %v404
    %v2376 = vunpack.c.h.b16 %v404
    %v2377 = vunpack.c.l.b16 %v405
    %v2378 = vunpack.c.h.b16 %v405
    %v2379 = vunpack.c.l.b16 %v406
    %v2380 = vunpack.c.h.b16 %v406
    %v2381 = vunpack.c.l.b16 %v407
    %v2382 = vunpack.c.h.b16 %v407
    %v2383 = vunpack.c.l.b16 %v408
    %v2384 = vunpack.c.h.b16 %v408
    %v2385 = vunpack.c.l.b16 %v409
    %v2386 = vunpack.c.h.b16 %v409
    %v2387 = vunpack.c.l.b16 %v410
    %v2388 = vunpack.c.h.b16 %v410
    %v2389 = vunpack.c.l.b16 %v411
    %v2390 = vunpack.c.h.b16 %v411
    %v2391 = vunpack.c.l.b16 %v412
    %v2392 = vunpack.c.h.b16 %v412
    %v2393 = vunpack.c.l.b16 %v413
    %v2394 = vunpack.c.h.b16 %v413
    %v2395 = vunpack.c.l.b16 %v414
    %v2396 = vunpack.c.h.b16 %v414
    %v2397 = vunpack.c.l.b16 %v415
    %v2398 = vunpack.c.h.b16 %v415
    %v2399 = vunpack.c.l.b16 %v416
    %v2400 = vunpack.c.h.b16 %v416
    %v2401 = vunpack.c.l.b16 %v417
    %v2402 = vunpack.c.h.b16 %v417
    %v2403 = vunpack.c.l.b16 %v418
    %v2404 = vunpack.c.h.b16 %v418
    %v2405 = vunpack.c.l.b16 %v419
    %v2406 = vunpack.c.h.b16 %v419
    %v2407 = vunpack.c.l.b16 %v420
    %v2408 = vunpack.c.h.b16 %v420
    %v2409 = vunpack.c.l.b16 %v421
    %v2410 = vunpack.c.h.b16 %v421
    %v2411 = vunpack.c.l.b16 %v422
    %v2412 = vunpack.c.h.b16 %v422
    %v2413 = vunpack.c.l.b16 %v423
    %v2414 = vunpack.c.h.b16 %v423
    %v2415 = vunpack.c.l.b16 %v424
    %v2416 = vunpack.c.h.b16 %v424
    %v2417 = vunpack.c.l.b16 %v425
    %v2418 = vunpack.c.h.b16 %v425
    %v2419 = vunpack.c.l.b16 %v426
    %v2420 = vunpack.c.h.b16 %v426
    %v2421 = vunpack.c.l.b16 %v427
    %v2422 = vunpack.c.h.b16 %v427
    %v2423 = vunpack.c.l.b16 %v428
    %v2424 = vunpack.c.h.b16 %v428
    %v2425 = vunpack.c.l.b16 %v429
    %v2426 = vunpack.c.h.b16 %v429
    %v2427 = vunpack.c.l.b16 %v430
    %v2428 = vunpack.c.h.b16 %v430
    %v2429 = vunpack.c.l.b16 %v431
    %v2430 = vunpack.c.h.b16 %v431
    %v2431 = vunpack.c.l.b16 %v432
    %v2432 = vunpack.c.h.b16 %v432
    %v2433 = vunpack.c.l.b16 %v433
    %v2434 = vunpack.c.h.b16 %v433
    %v2435 = vunpack.c.l.b16 %v434
    %v2436 = vunpack.c.h.b16 %v434
    %v2437 = vunpack.c.l.b16 %v435
    %v2438 = vunpack.c.h.b16 %v435
    %v2439 = vunpack.c.l.b16 %v436
    %v2440 = vunpack.c.h.b16 %v436
    %v2441 = vunpack.c.l.b16 %v437
    %v2442 = vunpack.c.h.b16 %v437
    %v2443 = vunpack.c.l.b16 %v438
    %v2444 = vunpack.c.h.b16 %v438
    %v2445 = vunpack.c.l.b16 %v439
    %v2446 = vunpack.c.h.b16 %v439
    %v2447 = vunpack.c.l.b16 %v440
    %v2448 = vunpack.c.h.b16 %v440
    %v2449 = vunpack.c.l.b16 %v441
    %v2450 = vunpack.c.h.b16 %v441
    %v2451 = vunpack.c.l.b16 %v442
    %v2452 = vunpack.c.h.b16 %v442
    %v2453 = vunpack.c.l.b16 %v443
    %v2454 = vunpack.c.h.b16 %v443
    %v2455 = vunpack.c.l.b16 %v444
    %v2456 = vunpack.c.h.b16 %v444
    %v2457 = vunpack.c.l.b16 %v445
    %v2458 = vunpack.c.h.b16 %v445
    %v2459 = vunpack.c.l.b16 %v446
    %v2460 = vunpack.c.h.b16 %v446
    %v2461 = vunpack.c.l.b16 %v447
    %v2462 = vunpack.c.h.b16 %v447
    %v2463 = vunpack.c.l.b16 %v448
    %v2464 = vunpack.c.h.b16 %v448
    %v2465 = vunpack.c.l.b16 %v449
    %v2466 = vunpack.c.h.b16 %v449
    %v2467 = vunpack.c.l.b16 %v450
    %v2468 = vunpack.c.h.b16 %v450
    %v2469 = vunpack.c.l.b16 %v451
    %v2470 = vunpack.c.h.b16 %v451
    %v2471 = vunpack.c.l.b16 %v452
    %v2472 = vunpack.c.h.b16 %v452
    %v2473 = vunpack.c.l.b16 %v453
    %v2474 = vunpack.c.h.b16 %v453
    %v2475 = vunpack.c.l.b16 %v454
    %v2476 = vunpack.c.h.b16 %v454
    %v2477 = vunpack.c.l.b16 %v455
    %v2478 = vunpack.c.h.b16 %v455
    %v2479 = vunpack.c.l.b16 %v456
    %v2480 = vunpack.c.h.b16 %v456
    %v2481 = vunpack.c.l.b16 %v457
    %v2482 = vunpack.c.h.b16 %v457
    %v2483 = vunpack.c.l.b16 %v458
    %v2484 = vunpack.c.h.b16 %v458
    %v2485 = vunpack.c.l.b16 %v459
    %v2486 = vunpack.c.h.b16 %v459
    %v2487 = vunpack.c.l.b16 %v460
    %v2488 = vunpack.c.h.b16 %v460
    %v2489 = vunpack.c.l.b16 %v461
    %v2490 = vunpack.c.h.b16 %v461
    %v2491 = vunpack.c.l.b16 %v462
    %v2492 = vunpack.c.h.b16 %v462
    %v2493 = vunpack.c.l.b16 %v463
    %v2494 = vunpack.c.h.b16 %v463
    %v2495 = vunpack.c.l.b16 %v464
    %v2496 = vunpack.c.h.b16 %v464
    %v2497 = vunpack.c.l.b16 %v465
    %v2498 = vunpack.c.h.b16 %v465
    %v2499 = vunpack.c.l.b16 %v466
    %v2500 = vunpack.c.h.b16 %v466
    %v2501 = vunpack.c.l.b16 %v467
    %v2502 = vunpack.c.h.b16 %v467
    %v2503 = vunpack.c.l.b16 %v468
    %v2504 = vunpack.c.h.b16 %v468
    %v2505 = vunpack.c.l.b16 %v469
    %v2506 = vunpack.c.h.b16 %v469
    %v2507 = vunpack.c.l.b16 %v470
    %v2508 = vunpack.c.h.b16 %v470
    %v2509 = vunpack.c.l.b16 %v471
    %v2510 = vunpack.c.h.b16 %v471
    %v2511 = vunpack.c.l.b16 %v472
    %v2512 = vunpack.c.h.b16 %v472
    %v2513 = vunpack.c.l.b16 %v473
    %v2514 = vunpack.c.h.b16 %v473
    %v2515 = vunpack.c.l.b16 %v474
    %v2516 = vunpack.c.h.b16 %v474
    %v2517 = vunpack.c.l.b16 %v475
    %v2518 = vunpack.c.h.b16 %v475
    %v2519 = vunpack.c.l.b16 %v476
    %v2520 = vunpack.c.h.b16 %v476
    %v2521 = vunpack.c.l.b16 %v477
    %v2522 = vunpack.c.h.b16 %v477
    %v2523 = vunpack.c.l.b16 %v478
    %v2524 = vunpack.c.h.b16 %v478
    %v2525 = vunpack.c.l.b16 %v479
    %v2526 = vunpack.c.h.b16 %v479
    %v2527 = vunpack.c.l.b16 %v480
    %v2528 = vunpack.c.h.b16 %v480
    %v2529 = vunpack.c.l.b16 %v481
    %v2530 = vunpack.c.h.b16 %v481
    %v2531 = vunpack.c.l.b16 %v482
    %v2532 = vunpack.c.h.b16 %v482
    %v2533 = vunpack.c.l.b16 %v483
    %v2534 = vunpack.c.h.b16 %v483
    %v2535 = vunpack.c.l.b16 %v484
    %v2536 = vunpack.c.h.b16 %v484
    %v2537 = vunpack.c.l.b16 %v485
    %v2538 = vunpack.c.h.b16 %v485
    %v2539 = vunpack.c.l.b16 %v486
    %v2540 = vunpack.c.h.b16 %v486
    %v2541 = vunpack.c.l.b16 %v487
    %v2542 = vunpack.c.h.b16 %v487
    %v2543 = vunpack.c.l.b16 %v488
    %v2544 = vunpack.c.h.b16 %v488
    %v2545 = vunpack.c.l.b16 %v489
    %v2546 = vunpack.c.h.b16 %v489
    %v2547 = vunpack.c.l.b16 %v490
    %v2548 = vunpack.c.h.b16 %v490
    %v2549 = vunpack.c.l.b16 %v491
    %v2550 = vunpack.c.h.b16 %v491
    %v2551 = vunpack.c.l.b16 %v492
    %v2552 = vunpack.c.h.b16 %v492
    %v2553 = vunpack.c.l.b16 %v493
    %v2554 = vunpack.c.h.b16 %v493
    %v2555 = vunpack.c.l.b16 %v494
    %v2556 = vunpack.c.h.b16 %v494
    %v2557 = vunpack.c.l.b16 %v495
    %v2558 = vunpack.c.h.b16 %v495
    %v2559 = vunpack.c.l.b16 %v496
    %v2560 = vunpack.c.h.b16 %v496
    %v2561 = vunpack.c.l.b16 %v497
    %v2562 = vunpack.c.h.b16 %v497
    %v2563 = vunpack.c.l.b16 %v498
    %v2564 = vunpack.c.h.b16 %v498
    %v2565 = vunpack.c.l.b16 %v499
    %v2566 = vunpack.c.h.b16 %v499
    %v2567 = vunpack.c.l.b16 %v500
    %v2568 = vunpack.c.h.b16 %v500
    %v2569 = vunpack.c.l.b16 %v501
    %v2570 = vunpack.c.h.b16 %v501
    %v2571 = vunpack.c.l.b16 %v502
    %v2572 = vunpack.c.h.b16 %v502
    %v2573 = vunpack.c.l.b16 %v503
    %v2574 = vunpack.c.h.b16 %v503
    %v2575 = vunpack.c.l.b16 %v504
    %v2576 = vunpack.c.h.b16 %v504
    %v2577 = vunpack.c.l.b16 %v505
    %v2578 = vunpack.c.h.b16 %v505
    %v2579 = vunpack.c.l.b16 %v506
    %v2580 = vunpack.c.h.b16 %v506
    %v2581 = vunpack.c.l.b16 %v507
    %v2582 = vunpack.c.h.b16 %v507
    %v2583 = vunpack.c.l.b16 %v508
    %v2584 = vunpack.c.h.b16 %v508
    %v2585 = vunpack.c.l.b16 %v509
    %v2586 = vunpack.c.h.b16 %v509
    %v2587 = vunpack.c.l.b16 %v510
    %v2588 = vunpack.c.h.b16 %v510
    %v2589 = vunpack.c.l.b16 %v511
    %v2590 = vunpack.c.h.b16 %v511
    %v2591 = vunpack.c.l.b16 %v512
    %v2592 = vunpack.c.h.b16 %v512
    %v2593 = vunpack.c.l.b16 %v513
    %v2594 = vunpack.c.h.b16 %v513
    %v2595 = vunpack.c.l.b16 %v514
    %v2596 = vunpack.c.h.b16 %v514
    %v2597 = vunpack.c.l.b16 %v515
    %v2598 = vunpack.c.h.b16 %v515
    %v2599 = vunpack.c.l.b16 %v516
    %v2600 = vunpack.c.h.b16 %v516
    %v2601 = vunpack.c.l.b16 %v517
    %v2602 = vunpack.c.h.b16 %v517
    %v2603 = vunpack.c.l.b16 %v518
    %v2604 = vunpack.c.h.b16 %v518
    %v2605 = vunpack.c.l.b16 %v519
    %v2606 = vunpack.c.h.b16 %v519
    %v2607 = vunpack.c.l.b16 %v520
    %v2608 = vunpack.c.h.b16 %v520
    %v2609 = vunpack.c.l.b16 %v521
    %v2610 = vunpack.c.h.b16 %v521
    %v2611 = vunpack.c.l.b16 %v522
    %v2612 = vunpack.c.h.b16 %v522
    %v2613 = vunpack.c.l.b16 %v523
    %v2614 = vunpack.c.h.b16 %v523
    %v2615 = vunpack.c.l.b16 %v524
    %v2616 = vunpack.c.h.b16 %v524
    %v2617 = vunpack.c.l.b16 %v525
    %v2618 = vunpack.c.h.b16 %v525
    %v2619 = vunpack.c.l.b16 %v526
    %v2620 = vunpack.c.h.b16 %v526
    %v2621 = vunpack.c.l.b16 %v527
    %v2622 = vunpack.c.h.b16 %v527
    %v2623 = vunpack.c.l.b16 %v528
    %v2624 = vunpack.c.h.b16 %v528
    %v2625 = vunpack.c.l.b16 %v529
    %v2626 = vunpack.c.h.b16 %v529
    %v2627 = vunpack.c.l.b16 %v530
    %v2628 = vunpack.c.h.b16 %v530
    %v2629 = vunpack.c.l.b16 %v531
    %v2630 = vunpack.c.h.b16 %v531
    %v2631 = vunpack.c.l.b16 %v532
    %v2632 = vunpack.c.h.b16 %v532
    %v2633 = vunpack.c.l.b16 %v533
    %v2634 = vunpack.c.h.b16 %v533
    %v2635 = vunpack.c.l.b16 %v534
    %v2636 = vunpack.c.h.b16 %v534
    %v2637 = vunpack.c.l.b16 %v535
    %v2638 = vunpack.c.h.b16 %v535
    %v2639 = vunpack.c.l.b16 %v536
    %v2640 = vunpack.c.h.b16 %v536
    %v2641 = vunpack.c.l.b16 %v537
    %v2642 = vunpack.c.h.b16 %v537
    %v2643 = vunpack.c.l.b16 %v538
    %v2644 = vunpack.c.h.b16 %v538
    %v2645 = vunpack.c.l.b16 %v539
    %v2646 = vunpack.c.h.b16 %v539
    %v2647 = vunpack.c.l.b16 %v540
    %v2648 = vunpack.c.h.b16 %v540
    %v2649 = vunpack.c.l.b16 %v541
    %v2650 = vunpack.c.h.b16 %v541
    %v2651 = vunpack.c.l.b16 %v542
    %v2652 = vunpack.c.h.b16 %v542
    %v2653 = vunpack.c.l.b16 %v543
    %v2654 = vunpack.c.h.b16 %v543
    %v2655 = vunpack.c.l.b16 %v544
    %v2656 = vunpack.c.h.b16 %v544
    %v2657 = vunpack.c.l.b16 %v545
    %v2658 = vunpack.c.h.b16 %v545
    %v2659 = vunpack.c.l.b16 %v546
    %v2660 = vunpack.c.h.b16 %v546
    %v2661 = vunpack.c.l.b16 %v547
    %v2662 = vunpack.c.h.b16 %v547
    %v2663 = vunpack.c.l.b16 %v548
    %v2664 = vunpack.c.h.b16 %v548
    %v2665 = vunpack.c.l.b16 %v549
    %v2666 = vunpack.c.h.b16 %v549
    %v2667 = vunpack.c.l.b16 %v550
    %v2668 = vunpack.c.h.b16 %v550
    %v2669 = vunpack.c.l.b16 %v551
    %v2670 = vunpack.c.h.b16 %v551
    %v2671 = vunpack.c.l.b16 %v552
    %v2672 = vunpack.c.h.b16 %v552
    %v2673 = vunpack.c.l.b16 %v553
    %v2674 = vunpack.c.h.b16 %v553
    %v2675 = vunpack.c.l.b16 %v554
    %v2676 = vunpack.c.h.b16 %v554
    %v2677 = vunpack.c.l.b16 %v555
    %v2678 = vunpack.c.h.b16 %v555
    %v2679 = vunpack.c.l.b16 %v556
    %v2680 = vunpack.c.h.b16 %v556
    %v2681 = vunpack.c.l.b16 %v557
    %v2682 = vunpack.c.h.b16 %v557
    %v2683 = vunpack.c.l.b16 %v558
    %v2684 = vunpack.c.h.b16 %v558
    %v2685 = vunpack.c.l.b16 %v559
    %v2686 = vunpack.c.h.b16 %v559
    %v2687 = vunpack.c.l.b16 %v560
    %v2688 = vunpack.c.h.b16 %v560
    %v2689 = vunpack.c.l.b16 %v561
    %v2690 = vunpack.c.h.b16 %v561
    %v2691 = vunpack.c.l.b16 %v562
    %v2692 = vunpack.c.h.b16 %v562
    %v2693 = vunpack.c.l.b16 %v563
    %v2694 = vunpack.c.h.b16 %v563
    %v2695 = vunpack.c.l.b16 %v564
    %v2696 = vunpack.c.h.b16 %v564
    %v2697 = vunpack.c.l.b16 %v565
    %v2698 = vunpack.c.h.b16 %v565
    %v2699 = vunpack.c.l.b16 %v566
    %v2700 = vunpack.c.h.b16 %v566
    %v2701 = vunpack.c.l.b16 %v567
    %v2702 = vunpack.c.h.b16 %v567
    %v2703 = vunpack.c.l.b16 %v568
    %v2704 = vunpack.c.h.b16 %v568
    %v2705 = vunpack.c.l.b16 %v569
    %v2706 = vunpack.c.h.b16 %v569
    %v2707 = vunpack.c.l.b16 %v570
    %v2708 = vunpack.c.h.b16 %v570
    %v2709 = vunpack.c.l.b16 %v571
    %v2710 = vunpack.c.h.b16 %v571
    %v2711 = vunpack.c.l.b16 %v572
    %v2712 = vunpack.c.h.b16 %v572
    %v2713 = vunpack.c.l.b16 %v573
    %v2714 = vunpack.c.h.b16 %v573
    %v2715 = vunpack.c.l.b16 %v574
    %v2716 = vunpack.c.h.b16 %v574
    %v2717 = vunpack.c.l.b16 %v575
    %v2718 = vunpack.c.h.b16 %v575
    %v2719 = vunpack.c.l.b16 %v576
    %v2720 = vunpack.c.h.b16 %v576
    %v2721 = vunpack.c.l.b16 %v577
    %v2722 = vunpack.c.h.b16 %v577
    %v2723 = vunpack.c.l.b16 %v578
    %v2724 = vunpack.c.h.b16 %v578
    %v2725 = vunpack.c.l.b16 %v579
    %v2726 = vunpack.c.h.b16 %v579
    %v2727 = vunpack.c.l.b16 %v580
    %v2728 = vunpack.c.h.b16 %v580
    %v2729 = vunpack.c.l.b16 %v581
    %v2730 = vunpack.c.h.b16 %v581
    %v2731 = vunpack.c.l.b16 %v582
    %v2732 = vunpack.c.h.b16 %v582
    %v2733 = vunpack.c.l.b16 %v583
    %v2734 = vunpack.c.h.b16 %v583
    %v2735 = vunpack.c.l.b16 %v584
    %v2736 = vunpack.c.h.b16 %v584
    %v2737 = vunpack.c.l.b16 %v585
    %v2738 = vunpack.c.h.b16 %v585
    %v2739 = vunpack.c.l.b16 %v586
    %v2740 = vunpack.c.h.b16 %v586
    %v2741 = vunpack.c.l.b16 %v587
    %v2742 = vunpack.c.h.b16 %v587
    %v2743 = vunpack.c.l.b16 %v588
    %v2744 = vunpack.c.h.b16 %v588
    %v2745 = vunpack.c.l.b16 %v589
    %v2746 = vunpack.c.h.b16 %v589
    %v2747 = vunpack.c.l.b16 %v590
    %v2748 = vunpack.c.h.b16 %v590
    %v2749 = vunpack.c.l.b16 %v591
    %v2750 = vunpack.c.h.b16 %v591
    %v2751 = vunpack.c.l.b16 %v592
    %v2752 = vunpack.c.h.b16 %v592
    %v2753 = vunpack.c.l.b16 %v593
    %v2754 = vunpack.c.h.b16 %v593
    %v2755 = vunpack.c.l.b16 %v594
    %v2756 = vunpack.c.h.b16 %v594
    %v2757 = vunpack.c.l.b16 %v595
    %v2758 = vunpack.c.h.b16 %v595
    %v2759 = vunpack.c.l.b16 %v596
    %v2760 = vunpack.c.h.b16 %v596
    %v2761 = vunpack.c.l.b16 %v597
    %v2762 = vunpack.c.h.b16 %v597
    %v2763 = vunpack.c.l.b16 %v598
    %v2764 = vunpack.c.h.b16 %v598
    %v2765 = vunpack.c.l.b16 %v599
    %v2766 = vunpack.c.h.b16 %v599
    %v2767 = vunpack.c.l.b16 %v600
    %v2768 = vunpack.c.h.b16 %v600
    %v2769 = vunpack.c.l.b16 %v601
    %v2770 = vunpack.c.h.b16 %v601
    %v2771 = vunpack.c.l.b16 %v602
    %v2772 = vunpack.c.h.b16 %v602
    %v2773 = vunpack.c.l.b16 %v603
    %v2774 = vunpack.c.h.b16 %v603
    %v2775 = vunpack.c.l.b16 %v604
    %v2776 = vunpack.c.h.b16 %v604
    %v2777 = vunpack.c.l.b16 %v605
    %v2778 = vunpack.c.h.b16 %v605
    %v2779 = vunpack.c.l.b16 %v606
    %v2780 = vunpack.c.h.b16 %v606
    %v2781 = vunpack.c.l.b16 %v607
    %v2782 = vunpack.c.h.b16 %v607
    %v2783 = vunpack.c.l.b16 %v608
    %v2784 = vunpack.c.h.b16 %v608
    %v2785 = vunpack.c.l.b16 %v609
    %v2786 = vunpack.c.h.b16 %v609
    %v2787 = vunpack.c.l.b16 %v610
    %v2788 = vunpack.c.h.b16 %v610
    %v2789 = vunpack.c.l.b16 %v611
    %v2790 = vunpack.c.h.b16 %v611
    %v2791 = vunpack.c.l.b16 %v612
    %v2792 = vunpack.c.h.b16 %v612
    %v2793 = vunpack.c.l.b16 %v613
    %v2794 = vunpack.c.h.b16 %v613
    %v2795 = vunpack.c.l.b16 %v614
    %v2796 = vunpack.c.h.b16 %v614
    %v2797 = vunpack.c.l.b16 %v615
    %v2798 = vunpack.c.h.b16 %v615
    %v2799 = vunpack.c.l.b16 %v616
    %v2800 = vunpack.c.h.b16 %v616
    %v2801 = vunpack.c.l.b16 %v617
    %v2802 = vunpack.c.h.b16 %v617
    %v2803 = vunpack.c.l.b16 %v618
    %v2804 = vunpack.c.h.b16 %v618
    %v2805 = vunpack.c.l.b16 %v619
    %v2806 = vunpack.c.h.b16 %v619
    %v2807 = vunpack.c.l.b16 %v620
    %v2808 = vunpack.c.h.b16 %v620
    %v2809 = vunpack.c.l.b16 %v621
    %v2810 = vunpack.c.h.b16 %v621
    %v2811 = vunpack.c.l.b16 %v622
    %v2812 = vunpack.c.h.b16 %v622
    %v2813 = vunpack.c.l.b16 %v623
    %v2814 = vunpack.c.h.b16 %v623
    %v2815 = vunpack.c.l.b16 %v624
    %v2816 = vunpack.c.h.b16 %v624
    %v2817 = vunpack.c.l.b16 %v625
    %v2818 = vunpack.c.h.b16 %v625
    %v2819 = vunpack.c.l.b16 %v626
    %v2820 = vunpack.c.h.b16 %v626
    %v2821 = vunpack.c.l.b16 %v627
    %v2822 = vunpack.c.h.b16 %v627
    %v2823 = vunpack.c.l.b16 %v628
    %v2824 = vunpack.c.h.b16 %v628
    %v2825 = vunpack.c.l.b16 %v629
    %v2826 = vunpack.c.h.b16 %v629
    %v2827 = vunpack.c.l.b16 %v630
    %v2828 = vunpack.c.h.b16 %v630
    %v2829 = vunpack.c.l.b16 %v631
    %v2830 = vunpack.c.h.b16 %v631
    %v2831 = vunpack.c.l.b16 %v632
    %v2832 = vunpack.c.h.b16 %v632
    %v2833 = vunpack.c.l.b16 %v633
    %v2834 = vunpack.c.h.b16 %v633
    %v2835 = vunpack.c.l.b16 %v634
    %v2836 = vunpack.c.h.b16 %v634
    %v2837 = vunpack.c.l.b16 %v635
    %v2838 = vunpack.c.h.b16 %v635
    %v2839 = vunpack.c.l.b16 %v636
    %v2840 = vunpack.c.h.b16 %v636
    %v2841 = vunpack.c.l.b16 %v637
    %v2842 = vunpack.c.h.b16 %v637
    %v2843 = vunpack.c.l.b16 %v638
    %v2844 = vunpack.c.h.b16 %v638
    %v2845 = vunpack.c.l.b16 %v639
    %v2846 = vunpack.c.h.b16 %v639
    %v2847 = vunpack.c.l.b16 %v640
    %v2848 = vunpack.c.h.b16 %v640
    %v2849 = vunpack.c.l.b16 %v641
    %v2850 = vunpack.c.h.b16 %v641
    %v2851 = vunpack.c.l.b16 %v642
    %v2852 = vunpack.c.h.b16 %v642
    %v2853 = vunpack.c.l.b16 %v643
    %v2854 = vunpack.c.h.b16 %v643
    %v2855 = vunpack.c.l.b16 %v644
    %v2856 = vunpack.c.h.b16 %v644
    %v2857 = vunpack.c.l.b16 %v645
    %v2858 = vunpack.c.h.b16 %v645
    %v2859 = vunpack.c.l.b16 %v646
    %v2860 = vunpack.c.h.b16 %v646
    %v2861 = vunpack.c.l.b16 %v647
    %v2862 = vunpack.c.h.b16 %v647
    %v2863 = vunpack.c.l.b16 %v648
    %v2864 = vunpack.c.h.b16 %v648
    %v2865 = vunpack.c.l.b16 %v649
    %v2866 = vunpack.c.h.b16 %v649
    %v2867 = vunpack.c.l.b16 %v650
    %v2868 = vunpack.c.h.b16 %v650
    %v2869 = vunpack.c.l.b16 %v651
    %v2870 = vunpack.c.h.b16 %v651
    %v2871 = vunpack.c.l.b16 %v652
    %v2872 = vunpack.c.h.b16 %v652
    %v2873 = vunpack.c.l.b16 %v653
    %v2874 = vunpack.c.h.b16 %v653
    %v2875 = vunpack.c.l.b16 %v654
    %v2876 = vunpack.c.h.b16 %v654
    %v2877 = vunpack.c.l.b16 %v655
    %v2878 = vunpack.c.h.b16 %v655
    %v2879 = vunpack.c.l.b16 %v656
    %v2880 = vunpack.c.h.b16 %v656
    %v2881 = vunpack.c.l.b16 %v657
    %v2882 = vunpack.c.h.b16 %v657
    %v2883 = vunpack.c.l.b16 %v658
    %v2884 = vunpack.c.h.b16 %v658
    %v2885 = vunpack.c.l.b16 %v659
    %v2886 = vunpack.c.h.b16 %v659
    %v2887 = vunpack.c.l.b16 %v660
    %v2888 = vunpack.c.h.b16 %v660
    %v2889 = vunpack.c.l.b16 %v661
    %v2890 = vunpack.c.h.b16 %v661
    %v2891 = vunpack.c.l.b16 %v662
    %v2892 = vunpack.c.h.b16 %v662
    %v2893 = vunpack.c.l.b16 %v663
    %v2894 = vunpack.c.h.b16 %v663
    %v2895 = vunpack.c.l.b16 %v664
    %v2896 = vunpack.c.h.b16 %v664
    %v2897 = vunpack.c.l.b16 %v665
    %v2898 = vunpack.c.h.b16 %v665
    %v2899 = vunpack.c.l.b16 %v666
    %v2900 = vunpack.c.h.b16 %v666
    %v2901 = vunpack.c.l.b16 %v667
    %v2902 = vunpack.c.h.b16 %v667
    %v2903 = vunpack.c.l.b16 %v668
    %v2904 = vunpack.c.h.b16 %v668
    %v2905 = vunpack.c.l.b16 %v669
    %v2906 = vunpack.c.h.b16 %v669
    %v2907 = vunpack.c.l.b16 %v670
    %v2908 = vunpack.c.h.b16 %v670
    %v2909 = vunpack.c.l.b16 %v671
    %v2910 = vunpack.c.h.b16 %v671
    %v2911 = vunpack.c.l.b16 %v672
    %v2912 = vunpack.c.h.b16 %v672
    %v2913 = vunpack.c.l.b16 %v673
    %v2914 = vunpack.c.h.b16 %v673
    %v2915 = vunpack.c.l.b16 %v674
    %v2916 = vunpack.c.h.b16 %v674
    %v2917 = vunpack.c.l.b16 %v675
    %v2918 = vunpack.c.h.b16 %v675
    %v2919 = vunpack.c.l.b16 %v676
    %v2920 = vunpack.c.h.b16 %v676
    %v2921 = vunpack.c.l.b16 %v677
    %v2922 = vunpack.c.h.b16 %v677
    %v2923 = vunpack.c.l.b16 %v678
    %v2924 = vunpack.c.h.b16 %v678
    %v2925 = vunpack.c.l.b16 %v679
    %v2926 = vunpack.c.h.b16 %v679
    %v2927 = vunpack.c.l.b16 %v680
    %v2928 = vunpack.c.h.b16 %v680
    %v2929 = vunpack.c.l.b16 %v681
    %v2930 = vunpack.c.h.b16 %v681
    %v2931 = vunpack.c.l.b16 %v682
    %v2932 = vunpack.c.h.b16 %v682
    %v2933 = vunpack.c.l.b16 %v683
    %v2934 = vunpack.c.h.b16 %v683
    %v2935 = vunpack.c.l.b16 %v684
    %v2936 = vunpack.c.h.b16 %v684
    %v2937 = vunpack.c.l.b16 %v685
    %v2938 = vunpack.c.h.b16 %v685
    %v2939 = vunpack.c.l.b16 %v686
    %v2940 = vunpack.c.h.b16 %v686
    %v2941 = vunpack.c.l.b16 %v687
    %v2942 = vunpack.c.h.b16 %v687
    %v2943 = vunpack.c.l.b16 %v688
    %v2944 = vunpack.c.h.b16 %v688
    %v2945 = vunpack.c.l.b16 %v689
    %v2946 = vunpack.c.h.b16 %v689
    %v2947 = vunpack.c.l.b16 %v690
    %v2948 = vunpack.c.h.b16 %v690
    %v2949 = vunpack.c.l.b16 %v691
    %v2950 = vunpack.c.h.b16 %v691
    %v2951 = vunpack.c.l.b16 %v692
    %v2952 = vunpack.c.h.b16 %v692
    %v2953 = vunpack.c.l.b16 %v693
    %v2954 = vunpack.c.h.b16 %v693
    %v2955 = vunpack.c.l.b16 %v694
    %v2956 = vunpack.c.h.b16 %v694
    %v2957 = vunpack.c.l.b16 %v695
    %v2958 = vunpack.c.h.b16 %v695
    %v2959 = vunpack.c.l.b16 %v696
    %v2960 = vunpack.c.h.b16 %v696
    %v2961 = vunpack.c.l.b16 %v697
    %v2962 = vunpack.c.h.b16 %v697
    %v2963 = vunpack.c.l.b16 %v698
    %v2964 = vunpack.c.h.b16 %v698
    %v2965 = vunpack.c.l.b16 %v699
    %v2966 = vunpack.c.h.b16 %v699
    %v2967 = vunpack.c.l.b16 %v700
    %v2968 = vunpack.c.h.b16 %v700
    %v2969 = vunpack.c.l.b16 %v701
    %v2970 = vunpack.c.h.b16 %v701
    %v2971 = vunpack.c.l.b16 %v702
    %v2972 = vunpack.c.h.b16 %v702
    %v2973 = vunpack.c.l.b16 %v703
    %v2974 = vunpack.c.h.b16 %v703
    %v2975 = vunpack.c.l.b16 %v704
    %v2976 = vunpack.c.h.b16 %v704
    %v2977 = vunpack.c.l.b16 %v705
    %v2978 = vunpack.c.h.b16 %v705
    %v2979 = vunpack.c.l.b16 %v706
    %v2980 = vunpack.c.h.b16 %v706
    %v2981 = vunpack.c.l.b16 %v707
    %v2982 = vunpack.c.h.b16 %v707
    %v2983 = vunpack.c.l.b16 %v708
    %v2984 = vunpack.c.h.b16 %v708
    %v2985 = vunpack.c.l.b16 %v709
    %v2986 = vunpack.c.h.b16 %v709
    %v2987 = vunpack.c.l.b16 %v710
    %v2988 = vunpack.c.h.b16 %v710
    %v2989 = vunpack.c.l.b16 %v711
    %v2990 = vunpack.c.h.b16 %v711
    %v2991 = vunpack.c.l.b16 %v712
    %v2992 = vunpack.c.h.b16 %v712
    %v2993 = vunpack.c.l.b16 %v713
    %v2994 = vunpack.c.h.b16 %v713
    %v2995 = vunpack.c.l.b16 %v714
    %v2996 = vunpack.c.h.b16 %v714
    %v2997 = vunpack.c.l.b16 %v715
    %v2998 = vunpack.c.h.b16 %v715
    %v2999 = vunpack.c.l.b16 %v716
    %v3000 = vunpack.c.h.b16 %v716
    %v3001 = vunpack.c.l.b16 %v717
    %v3002 = vunpack.c.h.b16 %v717
    %v3003 = vunpack.c.l.b16 %v718
    %v3004 = vunpack.c.h.b16 %v718
    %v3005 = vunpack.c.l.b16 %v719
    %v3006 = vunpack.c.h.b16 %v719
    %v3007 = vunpack.c.l.b16 %v720
    %v3008 = vunpack.c.h.b16 %v720
    %v3009 = vunpack.c.l.b16 %v721
    %v3010 = vunpack.c.h.b16 %v721
    %v3011 = vunpack.c.l.b16 %v722
    %v3012 = vunpack.c.h.b16 %v722
    %v3013 = vunpack.c.l.b16 %v723
    %v3014 = vunpack.c.h.b16 %v723
    %v3015 = vunpack.c.l.b16 %v724
    %v3016 = vunpack.c.h.b16 %v724
    %v3017 = vunpack.c.l.b16 %v725
    %v3018 = vunpack.c.h.b16 %v725
    %v3019 = vunpack.c.l.b16 %v726
    %v3020 = vunpack.c.h.b16 %v726
    %v3021 = vunpack.c.l.b16 %v727
    %v3022 = vunpack.c.h.b16 %v727
    %v3023 = vunpack.c.l.b16 %v728
    %v3024 = vunpack.c.h.b16 %v728
    %v3025 = vunpack.c.l.b16 %v729
    %v3026 = vunpack.c.h.b16 %v729
    %v3027 = vunpack.c.l.b16 %v730
    %v3028 = vunpack.c.h.b16 %v730
    %v3029 = vunpack.c.l.b16 %v731
    %v3030 = vunpack.c.h.b16 %v731
    %v3031 = vunpack.c.l.b16 %v732
    %v3032 = vunpack.c.h.b16 %v732
    %v3033 = vunpack.c.l.b16 %v733
    %v3034 = vunpack.c.h.b16 %v733
    %v3035 = vunpack.c.l.b16 %v734
    %v3036 = vunpack.c.h.b16 %v734
    %v3037 = vunpack.c.l.b16 %v735
    %v3038 = vunpack.c.h.b16 %v735
    %v3039 = vunpack.c.l.b16 %v736
    %v3040 = vunpack.c.h.b16 %v736
    %v3041 = vunpack.c.l.b16 %v737
    %v3042 = vunpack.c.h.b16 %v737
    %v3043 = vunpack.c.l.b16 %v738
    %v3044 = vunpack.c.h.b16 %v738
    %v3045 = vunpack.c.l.b16 %v739
    %v3046 = vunpack.c.h.b16 %v739
    %v3047 = vunpack.c.l.b16 %v740
    %v3048 = vunpack.c.h.b16 %v740
    %v3049 = vunpack.c.l.b16 %v741
    %v3050 = vunpack.c.h.b16 %v741
    %v3051 = vunpack.c.l.b16 %v742
    %v3052 = vunpack.c.h.b16 %v742
    %v3053 = vunpack.c.l.b16 %v743
    %v3054 = vunpack.c.h.b16 %v743
    %v3055 = vunpack.c.l.b16 %v744
    %v3056 = vunpack.c.h.b16 %v744
    %v3057 = vunpack.c.l.b16 %v745
    %v3058 = vunpack.c.h.b16 %v745
    %v3059 = vunpack.c.l.b16 %v746
    %v3060 = vunpack.c.h.b16 %v746
    %v3061 = vunpack.c.l.b16 %v747
    %v3062 = vunpack.c.h.b16 %v747
    %v3063 = vunpack.c.l.b16 %v748
    %v3064 = vunpack.c.h.b16 %v748
    %v3065 = vunpack.c.l.b16 %v749
    %v3066 = vunpack.c.h.b16 %v749
    %v3067 = vunpack.c.l.b16 %v750
    %v3068 = vunpack.c.h.b16 %v750
    %v3069 = vunpack.c.l.b16 %v751
    %v3070 = vunpack.c.h.b16 %v751
    %v3071 = vunpack.c.l.b16 %v752
    %v3072 = vunpack.c.h.b16 %v752
    %v3073 = vunpack.c.l.b16 %v753
    %v3074 = vunpack.c.h.b16 %v753
    %v3075 = vunpack.c.l.b16 %v754
    %v3076 = vunpack.c.h.b16 %v754
    %v3077 = vunpack.c.l.b16 %v755
    %v3078 = vunpack.c.h.b16 %v755
    %v3079 = vunpack.c.l.b16 %v756
    %v3080 = vunpack.c.h.b16 %v756
    %v3081 = vunpack.c.l.b16 %v757
    %v3082 = vunpack.c.h.b16 %v757
    %v3083 = vunpack.c.l.b16 %v758
    %v3084 = vunpack.c.h.b16 %v758
    %v3085 = vunpack.c.l.b16 %v759
    %v3086 = vunpack.c.h.b16 %v759
    %v3087 = vunpack.c.l.b16 %v760
    %v3088 = vunpack.c.h.b16 %v760
    %v3089 = vunpack.c.l.b16 %v761
    %v3090 = vunpack.c.h.b16 %v761
    %v3091 = vunpack.c.l.b16 %v762
    %v3092 = vunpack.c.h.b16 %v762
    %v3093 = vunpack.c.l.b16 %v763
    %v3094 = vunpack.c.h.b16 %v763
    %v3095 = vunpack.c.l.b16 %v764
    %v3096 = vunpack.c.h.b16 %v764
    %v3097 = vunpack.c.l.b16 %v765
    %v3098 = vunpack.c.h.b16 %v765
    %v3099 = vunpack.c.l.b16 %v766
    %v3100 = vunpack.c.h.b16 %v766
    %v3101 = vunpack.c.l.b16 %v767
    %v3102 = vunpack.c.h.b16 %v767
    %v3103 = vunpack.c.l.b16 %v768
    %v3104 = vunpack.c.h.b16 %v768
    %v3105 = vunpack.c.l.b16 %v769
    %v3106 = vunpack.c.h.b16 %v769
    %v3107 = vunpack.c.l.b16 %v770
    %v3108 = vunpack.c.h.b16 %v770
    %v3109 = vunpack.c.l.b16 %v771
    %v3110 = vunpack.c.h.b16 %v771
    %v3111 = vunpack.c.l.b16 %v772
    %v3112 = vunpack.c.h.b16 %v772
    %v3113 = vunpack.c.l.b16 %v773
    %v3114 = vunpack.c.h.b16 %v773
    %v3115 = vunpack.c.l.b16 %v774
    %v3116 = vunpack.c.h.b16 %v774
    %v3117 = vunpack.c.l.b16 %v775
    %v3118 = vunpack.c.h.b16 %v775
    %v3119 = vunpack.c.l.b16 %v776
    %v3120 = vunpack.c.h.b16 %v776
    %v3121 = vunpack.c.l.b16 %v777
    %v3122 = vunpack.c.h.b16 %v777
    %v3123 = vunpack.c.l.b16 %v778
    %v3124 = vunpack.c.h.b16 %v778
    %v3125 = vunpack.c.l.b16 %v779
    %v3126 = vunpack.c.h.b16 %v779
    %v3127 = vunpack.c.l.b16 %v780
    %v3128 = vunpack.c.h.b16 %v780
    %v3129 = vunpack.c.l.b16 %v781
    %v3130 = vunpack.c.h.b16 %v781
    %v3131 = vunpack.c.l.b16 %v782
    %v3132 = vunpack.c.h.b16 %v782
    %v3133 = vunpack.c.l.b16 %v783
    %v3134 = vunpack.c.h.b16 %v783
    %v3135 = vunpack.c.l.b16 %v784
    %v3136 = vunpack.c.h.b16 %v784
    %v3137 = vunpack.c.l.b16 %v785
    %v3138 = vunpack.c.h.b16 %v785
    %v3139 = vunpack.c.l.b16 %v786
    %v3140 = vunpack.c.h.b16 %v786
    %v3141 = vunpack.c.l.b16 %v787
    %v3142 = vunpack.c.h.b16 %v787
    %v3143 = vunpack.c.l.b16 %v788
    %v3144 = vunpack.c.h.b16 %v788
    %v3145 = vunpack.c.l.b16 %v789
    %v3146 = vunpack.c.h.b16 %v789
    %v3147 = vunpack.c.l.b16 %v790
    %v3148 = vunpack.c.h.b16 %v790
    %v3149 = vunpack.c.l.b16 %v791
    %v3150 = vunpack.c.h.b16 %v791
    %v3151 = vunpack.c.l.b16 %v792
    %v3152 = vunpack.c.h.b16 %v792
    %v3153 = vunpack.c.l.b16 %v793
    %v3154 = vunpack.c.h.b16 %v793
    %v3155 = vunpack.c.l.b16 %v794
    %v3156 = vunpack.c.h.b16 %v794
    %v3157 = vunpack.c.l.b16 %v795
    %v3158 = vunpack.c.h.b16 %v795
    %v3159 = vunpack.c.l.b16 %v796
    %v3160 = vunpack.c.h.b16 %v796
    %v3161 = vunpack.c.l.b16 %v797
    %v3162 = vunpack.c.h.b16 %v797
    %v3163 = vunpack.c.l.b16 %v798
    %v3164 = vunpack.c.h.b16 %v798
    %v3165 = vunpack.c.l.b16 %v799
    %v3166 = vunpack.c.h.b16 %v799
    %v3167 = vunpack.c.l.b16 %v800
    %v3168 = vunpack.c.h.b16 %v800
    %v3169 = vunpack.c.l.b16 %v801
    %v3170 = vunpack.c.h.b16 %v801
    %v3171 = vunpack.c.l.b16 %v802
    %v3172 = vunpack.c.h.b16 %v802
    %v3173 = vunpack.c.l.b16 %v803
    %v3174 = vunpack.c.h.b16 %v803
    %v3175 = vunpack.c.l.b16 %v804
    %v3176 = vunpack.c.h.b16 %v804
    %v3177 = vunpack.c.l.b16 %v805
    %v3178 = vunpack.c.h.b16 %v805
    %v3179 = vunpack.c.l.b16 %v806
    %v3180 = vunpack.c.h.b16 %v806
    %v3181 = vunpack.c.l.b16 %v807
    %v3182 = vunpack.c.h.b16 %v807
    %v3183 = vunpack.c.l.b16 %v808
    %v3184 = vunpack.c.h.b16 %v808
    %v3185 = vunpack.c.l.b16 %v809
    %v3186 = vunpack.c.h.b16 %v809
    %v3187 = vunpack.c.l.b16 %v810
    %v3188 = vunpack.c.h.b16 %v810
    %v3189 = vunpack.c.l.b16 %v811
    %v3190 = vunpack.c.h.b16 %v811
    %v3191 = vunpack.c.l.b16 %v812
    %v3192 = vunpack.c.h.b16 %v812
    %v3193 = vunpack.c.l.b16 %v813
    %v3194 = vunpack.c.h.b16 %v813
    %v3195 = vunpack.c.l.b16 %v814
    %v3196 = vunpack.c.h.b16 %v814
    %v3197 = vunpack.c.l.b16 %v815
    %v3198 = vunpack.c.h.b16 %v815
    %v3199 = vunpack.c.l.b16 %v816
    %v3200 = vunpack.c.h.b16 %v816
    %v3201 = vunpack.c.l.b16 %v817
    %v3202 = vunpack.c.h.b16 %v817
    %v3203 = vunpack.c.l.b16 %v818
    %v3204 = vunpack.c.h.b16 %v818
    %v3205 = vunpack.c.l.b16 %v819
    %v3206 = vunpack.c.h.b16 %v819
    %v3207 = vunpack.c.l.b16 %v820
    %v3208 = vunpack.c.h.b16 %v820
    %v3209 = vunpack.c.l.b16 %v821
    %v3210 = vunpack.c.h.b16 %v821
    %v3211 = vunpack.c.l.b16 %v822
    %v3212 = vunpack.c.h.b16 %v822
    %v3213 = vunpack.c.l.b16 %v823
    %v3214 = vunpack.c.h.b16 %v823
    %v3215 = vunpack.c.l.b16 %v824
    %v3216 = vunpack.c.h.b16 %v824
    %v3217 = vunpack.c.l.b16 %v825
    %v3218 = vunpack.c.h.b16 %v825
    %v3219 = vunpack.c.l.b16 %v826
    %v3220 = vunpack.c.h.b16 %v826
    %v3221 = vunpack.c.l.b16 %v827
    %v3222 = vunpack.c.h.b16 %v827
    %v3223 = vunpack.c.l.b16 %v828
    %v3224 = vunpack.c.h.b16 %v828
    %v3225 = vunpack.c.l.b16 %v829
    %v3226 = vunpack.c.h.b16 %v829
    %v3227 = vunpack.c.l.b16 %v830
    %v3228 = vunpack.c.h.b16 %v830
    %v3229 = vunpack.c.l.b16 %v831
    %v3230 = vunpack.c.h.b16 %v831
    %v3231 = vunpack.c.l.b16 %v832
    %v3232 = vunpack.c.h.b16 %v832
    %v3233 = vunpack.c.l.b16 %v833
    %v3234 = vunpack.c.h.b16 %v833
    %v3235 = vunpack.c.l.b16 %v834
    %v3236 = vunpack.c.h.b16 %v834
    %v3237 = vunpack.c.l.b16 %v835
    %v3238 = vunpack.c.h.b16 %v835
    %v3239 = vunpack.c.l.b16 %v836
    %v3240 = vunpack.c.h.b16 %v836
    %v3241 = vunpack.c.l.b16 %v837
    %v3242 = vunpack.c.h.b16 %v837
    %v3243 = vunpack.c.l.b16 %v838
    %v3244 = vunpack.c.h.b16 %v838
    %v3245 = vunpack.c.l.b16 %v839
    %v3246 = vunpack.c.h.b16 %v839
    %v3247 = vunpack.c.l.b16 %v840
    %v3248 = vunpack.c.h.b16 %v840
    %v3249 = vunpack.c.l.b16 %v841
    %v3250 = vunpack.c.h.b16 %v841
    %v3251 = vpack.c.b16 %v1731, %v1715
    %v3252 = vpack.c.b16 %v1732, %v1716
    %v3253 = vpack.c.b16 %v1733, %v1717
    %v3254 = vpack.c.b16 %v1734, %v1718
    %v3255 = vpack.c.b16 %v1735, %v1719
    %v3256 = vpack.c.b16 %v1736, %v1720
    %v3257 = vpack.c.b16 %v1737, %v1721
    %v3258 = vpack.c.b16 %v1738, %v1722
    %v3259 = vpack.c.b16 %v1739, %v1723
    %v3260 = vpack.c.b16 %v1740, %v1724
    %v3261 = vpack.c.b16 %v1741, %v1725
    %v3262 = vpack.c.b16 %v1742, %v1726
    %v3263 = vpack.c.b16 %v1743, %v1727
    %v3264 = vpack.c.b16 %v1744, %v1728
    %v3265 = vpack.c.b16 %v1745, %v1729
    %v3266 = vpack.c.b16 %v1746, %v1730
    %v3267 = vpack.c.b16 %v1763, %v1747
    %v3268 = vpack.c.b16 %v1764, %v1748
    %v3269 = vpack.c.b16 %v1765, %v1749
    %v3270 = vpack.c.b16 %v1766, %v1750
    %v3271 = vpack.c.b16 %v1767, %v1751
    %v3272 = vpack.c.b16 %v1768, %v1752
    %v3273 = vpack.c.b16 %v1769, %v1753
    %v3274 = vpack.c.b16 %v1770, %v1754
    %v3275 = vpack.c.b16 %v1771, %v1755
    %v3276 = vpack.c.b16 %v1772, %v1756
    %v3277 = vpack.c.b16 %v1773, %v1757
    %v3278 = vpack.c.b16 %v1774, %v1758
    %v3279 = vpack.c.b16 %v1775, %v1759
    %v3280 = vpack.c.b16 %v1776, %v1760
    %v3281 = vpack.c.b16 %v1777, %v1761
    %v3282 = vpack.c.b16 %v1778, %v1762
    %v3283 = vpack.c.b16 %v1795, %v1779
    %v3284 = vpack.c.b16 %v1796, %v1780
    %v3285 = vpack.c.b16 %v1797, %v1781
    %v3286 = vpack.c.b16 %v1798, %v1782
    %v3287 = vpack.c.b16 %v1799, %v1783
    %v3288 = vpack.c.b16 %v1800, %v1784
    %v3289 = vpack.c.b16 %v1801, %v1785
    %v3290 = vpack.c.b16 %v1802, %v1786
    %v3291 = vpack.c.b16 %v1803, %v1787
    %v3292 = vpack.c.b16 %v1804, %v1788
    %v3293 = vpack.c.b16 %v1805, %v1789
    %v3294 = vpack.c.b16 %v1806, %v1790
    %v3295 = vpack.c.b16 %v1807, %v1791
    %v3296 = vpack.c.b16 %v1808, %v1792
    %v3297 = vpack.c.b16 %v1809, %v1793
    %v3298 = vpack.c.b16 %v1810, %v1794
    %v3299 = vpack.c.b16 %v1827, %v1811
    %v3300 = vpack.c.b16 %v1828, %v1812
    %v3301 = vpack.c.b16 %v1829, %v1813
    %v3302 = vpack.c.b16 %v1830, %v1814
    %v3303 = vpack.c.b16 %v1831, %v1815
    %v3304 = vpack.c.b16 %v1832, %v1816
    %v3305 = vpack.c.b16 %v1833, %v1817
    %v3306 = vpack.c.b16 %v1834, %v1818
    %v3307 = vpack.c.b16 %v1835, %v1819
    %v3308 = vpack.c.b16 %v1836, %v1820
    %v3309 = vpack.c.b16 %v1837, %v1821
    %v3310 = vpack.c.b16 %v1838, %v1822
    %v3311 = vpack.c.b16 %v1839, %v1823
    %v3312 = vpack.c.b16 %v1840, %v1824
    %v3313 = vpack.c.b16 %v1841, %v1825
    %v3314 = vpack.c.b16 %v1842, %v1826
    %v3315 = vpack.c.b16 %v1859, %v1843
    %v3316 = vpack.c.b16 %v1860, %v1844
    %v3317 = vpack.c.b16 %v1861, %v1845
    %v3318 = vpack.c.b16 %v1862, %v1846
    %v3319 = vpack.c.b16 %v1863, %v1847
    %v3320 = vpack.c.b16 %v1864, %v1848
    %v3321 = vpack.c.b16 %v1865, %v1849
    %v3322 = vpack.c.b16 %v1866, %v1850
    %v3323 = vpack.c.b16 %v1867, %v1851
    %v3324 = vpack.c.b16 %v1868, %v1852
    %v3325 = vpack.c.b16 %v1869, %v1853
    %v3326 = vpack.c.b16 %v1870, %v1854
    %v3327 = vpack.c.b16 %v1871, %v1855
    %v3328 = vpack.c.b16 %v1872, %v1856
    %v3329 = vpack.c.b16 %v1873, %v1857
    %v3330 = vpack.c.b16 %v1874, %v1858
    %v3331 = vpack.c.b16 %v1891, %v1875
    %v3332 = vpack.c.b16 %v1892, %v1876
    %v3333 = vpack.c.b16 %v1893, %v1877
    %v3334 = vpack.c.b16 %v1894, %v1878
    %v3335 = vpack.c.b16 %v1895, %v1879
    %v3336 = vpack.c.b16 %v1896, %v1880
    %v3337 = vpack.c.b16 %v1897, %v1881
    %v3338 = vpack.c.b16 %v1898, %v1882
    %v3339 = vpack.c.b16 %v1899, %v1883
    %v3340 = vpack.c.b16 %v1900, %v1884
    %v3341 = vpack.c.b16 %v1901, %v1885
    %v3342 = vpack.c.b16 %v1902, %v1886
    %v3343 = vpack.c.b16 %v1903, %v1887
    %v3344 = vpack.c.b16 %v1904, %v1888
    %v3345 = vpack.c.b16 %v1905, %v1889
    %v3346 = vpack.c.b16 %v1906, %v1890
    %v3347 = vpack.c.b16 %v1923, %v1907
    %v3348 = vpack.c.b16 %v1924, %v1908
    %v3349 = vpack.c.b16 %v1925, %v1909
    %v3350 = vpack.c.b16 %v1926, %v1910
    %v3351 = vpack.c.b16 %v1927, %v1911
    %v3352 = vpack.c.b16 %v1928, %v1912
    %v3353 = vpack.c.b16 %v1929, %v1913
    %v3354 = vpack.c.b16 %v1930, %v1914
    %v3355 = vpack.c.b16 %v1931, %v1915
    %v3356 = vpack.c.b16 %v1932, %v1916
    %v3357 = vpack.c.b16 %v1933, %v1917
    %v3358 = vpack.c.b16 %v1934, %v1918
    %v3359 = vpack.c.b16 %v1935, %v1919
    %v3360 = vpack.c.b16 %v1936, %v1920
    %v3361 = vpack.c.b16 %v1937, %v1921
    %v3362 = vpack.c.b16 %v1938, %v1922
    %v3363 = vpack.c.b16 %v1955, %v1939
    %v3364 = vpack.c.b16 %v1956, %v1940
    %v3365 = vpack.c.b16 %v1957, %v1941
    %v3366 = vpack.c.b16 %v1958, %v1942
    %v3367 = vpack.c.b16 %v1959, %v1943
    %v3368 = vpack.c.b16 %v1960, %v1944
    %v3369 = vpack.c.b16 %v1961, %v1945
    %v3370 = vpack.c.b16 %v1962, %v1946
    %v3371 = vpack.c.b16 %v1963, %v1947
    %v3372 = vpack.c.b16 %v1964, %v1948
    %v3373 = vpack.c.b16 %v1965, %v1949
    %v3374 = vpack.c.b16 %v1966, %v1950
    %v3375 = vpack.c.b16 %v1967, %v1951
    %v3376 = vpack.c.b16 %v1968, %v1952
    %v3377 = vpack.c.b16 %v1969, %v1953
    %v3378 = vpack.c.b16 %v1970, %v1954
    %v3379 = vpack.c.b16 %v1987, %v1971
    %v3380 = vpack.c.b16 %v1988, %v1972
    %v3381 = vpack.c.b16 %v1989, %v1973
    %v3382 = vpack.c.b16 %v1990, %v1974
    %v3383 = vpack.c.b16 %v1991, %v1975
    %v3384 = vpack.c.b16 %v1992, %v1976
    %v3385 = vpack.c.b16 %v1993, %v1977
    %v3386 = vpack.c.b16 %v1994, %v1978
    %v3387 = vpack.c.b16 %v1995, %v1979
    %v3388 = vpack.c.b16 %v1996, %v1980
    %v3389 = vpack.c.b16 %v1997, %v1981
    %v3390 = vpack.c.b16 %v1998, %v1982
    %v3391 = vpack.c.b16 %v1999, %v1983
    %v3392 = vpack.c.b16 %v2000, %v1984
    %v3393 = vpack.c.b16 %v2001, %v1985
    %v3394 = vpack.c.b16 %v2002, %v1986
    %v3395 = vpack.c.b16 %v2019, %v2003
    %v3396 = vpack.c.b16 %v2020, %v2004
    %v3397 = vpack.c.b16 %v2021, %v2005
    %v3398 = vpack.c.b16 %v2022, %v2006
    %v3399 = vpack.c.b16 %v2023, %v2007
    %v3400 = vpack.c.b16 %v2024, %v2008
    %v3401 = vpack.c.b16 %v2025, %v2009
    %v3402 = vpack.c.b16 %v2026, %v2010
    %v3403 = vpack.c.b16 %v2027, %v2011
    %v3404 = vpack.c.b16 %v2028, %v2012
    %v3405 = vpack.c.b16 %v2029, %v2013
    %v3406 = vpack.c.b16 %v2030, %v2014
    %v3407 = vpack.c.b16 %v2031, %v2015
    %v3408 = vpack.c.b16 %v2032, %v2016
    %v3409 = vpack.c.b16 %v2033, %v2017
    %v3410 = vpack.c.b16 %v2034, %v2018
    %v3411 = vpack.c.b16 %v2051, %v2035
    %v3412 = vpack.c.b16 %v2052, %v2036
    %v3413 = vpack.c.b16 %v2053, %v2037
    %v3414 = vpack.c.b16 %v2054, %v2038
    %v3415 = vpack.c.b16 %v2055, %v2039
    %v3416 = vpack.c.b16 %v2056, %v2040
    %v3417 = vpack.c.b16 %v2057, %v2041
    %v3418 = vpack.c.b16 %v2058, %v2042
    %v3419 = vpack.c.b16 %v2059, %v2043
    %v3420 = vpack.c.b16 %v2060, %v2044
    %v3421 = vpack.c.b16 %v2061, %v2045
    %v3422 = vpack.c.b16 %v2062, %v2046
    %v3423 = vpack.c.b16 %v2063, %v2047
    %v3424 = vpack.c.b16 %v2064, %v2048
    %v3425 = vpack.c.b16 %v2065, %v2049
    %v3426 = vpack.c.b16 %v2066, %v2050
    %v3427 = vpack.c.b16 %v2083, %v2067
    %v3428 = vpack.c.b16 %v2084, %v2068
    %v3429 = vpack.c.b16 %v2085, %v2069
    %v3430 = vpack.c.b16 %v2086, %v2070
    %v3431 = vpack.c.b16 %v2087, %v2071
    %v3432 = vpack.c.b16 %v2088, %v2072
    %v3433 = vpack.c.b16 %v2089, %v2073
    %v3434 = vpack.c.b16 %v2090, %v2074
    %v3435 = vpack.c.b16 %v2091, %v2075
    %v3436 = vpack.c.b16 %v2092, %v2076
    %v3437 = vpack.c.b16 %v2093, %v2077
    %v3438 = vpack.c.b16 %v2094, %v2078
    %v3439 = vpack.c.b16 %v2095, %v2079
    %v3440 = vpack.c.b16 %v2096, %v2080
    %v3441 = vpack.c.b16 %v2097, %v2081
    %v3442 = vpack.c.b16 %v2098, %v2082
    %v3443 = vpack.c.b16 %v2115, %v2099
    %v3444 = vpack.c.b16 %v2116, %v2100
    %v3445 = vpack.c.b16 %v2117, %v2101
    %v3446 = vpack.c.b16 %v2118, %v2102
    %v3447 = vpack.c.b16 %v2119, %v2103
    %v3448 = vpack.c.b16 %v2120, %v2104
    %v3449 = vpack.c.b16 %v2121, %v2105
    %v3450 = vpack.c.b16 %v2122, %v2106
    %v3451 = vpack.c.b16 %v2123, %v2107
    %v3452 = vpack.c.b16 %v2124, %v2108
    %v3453 = vpack.c.b16 %v2125, %v2109
    %v3454 = vpack.c.b16 %v2126, %v2110
    %v3455 = vpack.c.b16 %v2127, %v2111
    %v3456 = vpack.c.b16 %v2128, %v2112
    %v3457 = vpack.c.b16 %v2129, %v2113
    %v3458 = vpack.c.b16 %v2130, %v2114
    %v3459 = vpack.c.b16 %v2147, %v2131
    %v3460 = vpack.c.b16 %v2148, %v2132
    %v3461 = vpack.c.b16 %v2149, %v2133
    %v3462 = vpack.c.b16 %v2150, %v2134
    %v3463 = vpack.c.b16 %v2151, %v2135
    %v3464 = vpack.c.b16 %v2152, %v2136
    %v3465 = vpack.c.b16 %v2153, %v2137
    %v3466 = vpack.c.b16 %v2154, %v2138
    %v3467 = vpack.c.b16 %v2155, %v2139
    %v3468 = vpack.c.b16 %v2156, %v2140
    %v3469 = vpack.c.b16 %v2157, %v2141
    %v3470 = vpack.c.b16 %v2158, %v2142
    %v3471 = vpack.c.b16 %v2159, %v2143
    %v3472 = vpack.c.b16 %v2160, %v2144
    %v3473 = vpack.c.b16 %v2161, %v2145
    %v3474 = vpack.c.b16 %v2162, %v2146
    %v3475 = vpack.c.b16 %v2179, %v2163
    %v3476 = vpack.c.b16 %v2180, %v2164
    %v3477 = vpack.c.b16 %v2181, %v2165
    %v3478 = vpack.c.b16 %v2182, %v2166
    %v3479 = vpack.c.b16 %v2183, %v2167
    %v3480 = vpack.c.b16 %v2184, %v2168
    %v3481 = vpack.c.b16 %v2185, %v2169
    %v3482 = vpack.c.b16 %v2186, %v2170
    %v3483 = vpack.c.b16 %v2187, %v2171
    %v3484 = vpack.c.b16 %v2188, %v2172
    %v3485 = vpack.c.b16 %v2189, %v2173
    %v3486 = vpack.c.b16 %v2190, %v2174
    %v3487 = vpack.c.b16 %v2191, %v2175
    %v3488 = vpack.c.b16 %v2192, %v2176
    %v3489 = vpack.c.b16 %v2193, %v2177
    %v3490 = vpack.c.b16 %v2194, %v2178
    %v3491 = vpack.c.b16 %v2211, %v2195
    %v3492 = vpack.c.b16 %v2212, %v2196
    %v3493 = vpack.c.b16 %v2213, %v2197
    %v3494 = vpack.c.b16 %v2214, %v2198
    %v3495 = vpack.c.b16 %v2215, %v2199
    %v3496 = vpack.c.b16 %v2216, %v2200
    %v3497 = vpack.c.b16 %v2217, %v2201
    %v3498 = vpack.c.b16 %v2218, %v2202
    %v3499 = vpack.c.b16 %v2219, %v2203
    %v3500 = vpack.c.b16 %v2220, %v2204
    %v3501 = vpack.c.b16 %v2221, %v2205
    %v3502 = vpack.c.b16 %v2222, %v2206
    %v3503 = vpack.c.b16 %v2223, %v2207
    %v3504 = vpack.c.b16 %v2224, %v2208
    %v3505 = vpack.c.b16 %v2225, %v2209
    %v3506 = vpack.c.b16 %v2226, %v2210
    %v3507 = vpack.c.b16 %v2243, %v2227
    %v3508 = vpack.c.b16 %v2244, %v2228
    %v3509 = vpack.c.b16 %v2245, %v2229
    %v3510 = vpack.c.b16 %v2246, %v2230
    %v3511 = vpack.c.b16 %v2247, %v2231
    %v3512 = vpack.c.b16 %v2248, %v2232
    %v3513 = vpack.c.b16 %v2249, %v2233
    %v3514 = vpack.c.b16 %v2250, %v2234
    %v3515 = vpack.c.b16 %v2251, %v2235
    %v3516 = vpack.c.b16 %v2252, %v2236
    %v3517 = vpack.c.b16 %v2253, %v2237
    %v3518 = vpack.c.b16 %v2254, %v2238
    %v3519 = vpack.c.b16 %v2255, %v2239
    %v3520 = vpack.c.b16 %v2256, %v2240
    %v3521 = vpack.c.b16 %v2257, %v2241
    %v3522 = vpack.c.b16 %v2258, %v2242
    %v3523 = vpack.c.b16 %v2275, %v2259
    %v3524 = vpack.c.b16 %v2276, %v2260
    %v3525 = vpack.c.b16 %v2277, %v2261
    %v3526 = vpack.c.b16 %v2278, %v2262
    %v3527 = vpack.c.b16 %v2279, %v2263
    %v3528 = vpack.c.b16 %v2280, %v2264
    %v3529 = vpack.c.b16 %v2281, %v2265
    %v3530 = vpack.c.b16 %v2282, %v2266
    %v3531 = vpack.c.b16 %v2283, %v2267
    %v3532 = vpack.c.b16 %v2284, %v2268
    %v3533 = vpack.c.b16 %v2285, %v2269
    %v3534 = vpack.c.b16 %v2286, %v2270
    %v3535 = vpack.c.b16 %v2287, %v2271
    %v3536 = vpack.c.b16 %v2288, %v2272
    %v3537 = vpack.c.b16 %v2289, %v2273
    %v3538 = vpack.c.b16 %v2290, %v2274
    %v3539 = vpack.c.b16 %v2307, %v2291
    %v3540 = vpack.c.b16 %v2308, %v2292
    %v3541 = vpack.c.b16 %v2309, %v2293
    %v3542 = vpack.c.b16 %v2310, %v2294
    %v3543 = vpack.c.b16 %v2311, %v2295
    %v3544 = vpack.c.b16 %v2312, %v2296
    %v3545 = vpack.c.b16 %v2313, %v2297
    %v3546 = vpack.c.b16 %v2314, %v2298
    %v3547 = vpack.c.b16 %v2315, %v2299
    %v3548 = vpack.c.b16 %v2316, %v2300
    %v3549 = vpack.c.b16 %v2317, %v2301
    %v3550 = vpack.c.b16 %v2318, %v2302
    %v3551 = vpack.c.b16 %v2319, %v2303
    %v3552 = vpack.c.b16 %v2320, %v2304
    %v3553 = vpack.c.b16 %v2321, %v2305
    %v3554 = vpack.c.b16 %v2322, %v2306
    %v3555 = vpack.c.b16 %v2339, %v2323
    %v3556 = vpack.c.b16 %v2340, %v2324
    %v3557 = vpack.c.b16 %v2341, %v2325
    %v3558 = vpack.c.b16 %v2342, %v2326
    %v3559 = vpack.c.b16 %v2343, %v2327
    %v3560 = vpack.c.b16 %v2344, %v2328
    %v3561 = vpack.c.b16 %v2345, %v2329
    %v3562 = vpack.c.b16 %v2346, %v2330
    %v3563 = vpack.c.b16 %v2347, %v2331
    %v3564 = vpack.c.b16 %v2348, %v2332
    %v3565 = vpack.c.b16 %v2349, %v2333
    %v3566 = vpack.c.b16 %v2350, %v2334
    %v3567 = vpack.c.b16 %v2351, %v2335
    %v3568 = vpack.c.b16 %v2352, %v2336
    %v3569 = vpack.c.b16 %v2353, %v2337
    %v3570 = vpack.c.b16 %v2354, %v2338
    %v3571 = vpack.c.b16 %v2371, %v2355
    %v3572 = vpack.c.b16 %v2372, %v2356
    %v3573 = vpack.c.b16 %v2373, %v2357
    %v3574 = vpack.c.b16 %v2374, %v2358
    %v3575 = vpack.c.b16 %v2375, %v2359
    %v3576 = vpack.c.b16 %v2376, %v2360
    %v3577 = vpack.c.b16 %v2377, %v2361
    %v3578 = vpack.c.b16 %v2378, %v2362
    %v3579 = vpack.c.b16 %v2379, %v2363
    %v3580 = vpack.c.b16 %v2380, %v2364
    %v3581 = vpack.c.b16 %v2381, %v2365
    %v3582 = vpack.c.b16 %v2382, %v2366
    %v3583 = vpack.c.b16 %v2383, %v2367
    %v3584 = vpack.c.b16 %v2384, %v2368
    %v3585 = vpack.c.b16 %v2385, %v2369
    %v3586 = vpack.c.b16 %v2386, %v2370
    %v3587 = vpack.c.b16 %v2403, %v2387
    %v3588 = vpack.c.b16 %v2404, %v2388
    %v3589 = vpack.c.b16 %v2405, %v2389
    %v3590 = vpack.c.b16 %v2406, %v2390
    %v3591 = vpack.c.b16 %v2407, %v2391
    %v3592 = vpack.c.b16 %v2408, %v2392
    %v3593 = vpack.c.b16 %v2409, %v2393
    %v3594 = vpack.c.b16 %v2410, %v2394
    %v3595 = vpack.c.b16 %v2411, %v2395
    %v3596 = vpack.c.b16 %v2412, %v2396
    %v3597 = vpack.c.b16 %v2413, %v2397
    %v3598 = vpack.c.b16 %v2414, %v2398
    %v3599 = vpack.c.b16 %v2415, %v2399
    %v3600 = vpack.c.b16 %v2416, %v2400
    %v3601 = vpack.c.b16 %v2417, %v2401
    %v3602 = vpack.c.b16 %v2418, %v2402
    %v3603 = vpack.c.b16 %v2435, %v2419
    %v3604 = vpack.c.b16 %v2436, %v2420
    %v3605 = vpack.c.b16 %v2437, %v2421
    %v3606 = vpack.c.b16 %v2438, %v2422
    %v3607 = vpack.c.b16 %v2439, %v2423
    %v3608 = vpack.c.b16 %v2440, %v2424
    %v3609 = vpack.c.b16 %v2441, %v2425
    %v3610 = vpack.c.b16 %v2442, %v2426
    %v3611 = vpack.c.b16 %v2443, %v2427
    %v3612 = vpack.c.b16 %v2444, %v2428
    %v3613 = vpack.c.b16 %v2445, %v2429
    %v3614 = vpack.c.b16 %v2446, %v2430
    %v3615 = vpack.c.b16 %v2447, %v2431
    %v3616 = vpack.c.b16 %v2448, %v2432
    %v3617 = vpack.c.b16 %v2449, %v2433
    %v3618 = vpack.c.b16 %v2450, %v2434
    %v3619 = vpack.c.b16 %v2467, %v2451
    %v3620 = vpack.c.b16 %v2468, %v2452
    %v3621 = vpack.c.b16 %v2469, %v2453
    %v3622 = vpack.c.b16 %v2470, %v2454
    %v3623 = vpack.c.b16 %v2471, %v2455
    %v3624 = vpack.c.b16 %v2472, %v2456
    %v3625 = vpack.c.b16 %v2473, %v2457
    %v3626 = vpack.c.b16 %v2474, %v2458
    %v3627 = vpack.c.b16 %v2475, %v2459
    %v3628 = vpack.c.b16 %v2476, %v2460
    %v3629 = vpack.c.b16 %v2477, %v2461
    %v3630 = vpack.c.b16 %v2478, %v2462
    %v3631 = vpack.c.b16 %v2479, %v2463
    %v3632 = vpack.c.b16 %v2480, %v2464
    %v3633 = vpack.c.b16 %v2481, %v2465
    %v3634 = vpack.c.b16 %v2482, %v2466
    %v3635 = vpack.c.b16 %v2499, %v2483
    %v3636 = vpack.c.b16 %v2500, %v2484
    %v3637 = vpack.c.b16 %v2501, %v2485
    %v3638 = vpack.c.b16 %v2502, %v2486
    %v3639 = vpack.c.b16 %v2503, %v2487
    %v3640 = vpack.c.b16 %v2504, %v2488
    %v3641 = vpack.c.b16 %v2505, %v2489
    %v3642 = vpack.c.b16 %v2506, %v2490
    %v3643 = vpack.c.b16 %v2507, %v2491
    %v3644 = vpack.c.b16 %v2508, %v2492
    %v3645 = vpack.c.b16 %v2509, %v2493
    %v3646 = vpack.c.b16 %v2510, %v2494
    %v3647 = vpack.c.b16 %v2511, %v2495
    %v3648 = vpack.c.b16 %v2512, %v2496
    %v3649 = vpack.c.b16 %v2513, %v2497
    %v3650 = vpack.c.b16 %v2514, %v2498
    %v3651 = vpack.c.b16 %v2531, %v2515
    %v3652 = vpack.c.b16 %v2532, %v2516
    %v3653 = vpack.c.b16 %v2533, %v2517
    %v3654 = vpack.c.b16 %v2534, %v2518
    %v3655 = vpack.c.b16 %v2535, %v2519
    %v3656 = vpack.c.b16 %v2536, %v2520
    %v3657 = vpack.c.b16 %v2537, %v2521
    %v3658 = vpack.c.b16 %v2538, %v2522
    %v3659 = vpack.c.b16 %v2539, %v2523
    %v3660 = vpack.c.b16 %v2540, %v2524
    %v3661 = vpack.c.b16 %v2541, %v2525
    %v3662 = vpack.c.b16 %v2542, %v2526
    %v3663 = vpack.c.b16 %v2543, %v2527
    %v3664 = vpack.c.b16 %v2544, %v2528
    %v3665 = vpack.c.b16 %v2545, %v2529
    %v3666 = vpack.c.b16 %v2546, %v2530
    %v3667 = vpack.c.b16 %v2563, %v2547
    %v3668 = vpack.c.b16 %v2564, %v2548
    %v3669 = vpack.c.b16 %v2565, %v2549
    %v3670 = vpack.c.b16 %v2566, %v2550
    %v3671 = vpack.c.b16 %v2567, %v2551
    %v3672 = vpack.c.b16 %v2568, %v2552
    %v3673 = vpack.c.b16 %v2569, %v2553
    %v3674 = vpack.c.b16 %v2570, %v2554
    %v3675 = vpack.c.b16 %v2571, %v2555
    %v3676 = vpack.c.b16 %v2572, %v2556
    %v3677 = vpack.c.b16 %v2573, %v2557
    %v3678 = vpack.c.b16 %v2574, %v2558
    %v3679 = vpack.c.b16 %v2575, %v2559
    %v3680 = vpack.c.b16 %v2576, %v2560
    %v3681 = vpack.c.b16 %v2577, %v2561
    %v3682 = vpack.c.b16 %v2578, %v2562
    %v3683 = vpack.c.b16 %v2595, %v2579
    %v3684 = vpack.c.b16 %v2596, %v2580
    %v3685 = vpack.c.b16 %v2597, %v2581
    %v3686 = vpack.c.b16 %v2598, %v2582
    %v3687 = vpack.c.b16 %v2599, %v2583
    %v3688 = vpack.c.b16 %v2600, %v2584
    %v3689 = vpack.c.b16 %v2601, %v2585
    %v3690 = vpack.c.b16 %v2602, %v2586
    %v3691 = vpack.c.b16 %v2603, %v2587
    %v3692 = vpack.c.b16 %v2604, %v2588
    %v3693 = vpack.c.b16 %v2605, %v2589
    %v3694 = vpack.c.b16 %v2606, %v2590
    %v3695 = vpack.c.b16 %v2607, %v2591
    %v3696 = vpack.c.b16 %v2608, %v2592
    %v3697 = vpack.c.b16 %v2609, %v2593
    %v3698 = vpack.c.b16 %v2610, %v2594
    %v3699 = vpack.c.b16 %v2627, %v2611
    %v3700 = vpack.c.b16 %v2628, %v2612
    %v3701 = vpack.c.b16 %v2629, %v2613
    %v3702 = vpack.c.b16 %v2630, %v2614
    %v3703 = vpack.c.b16 %v2631, %v2615
    %v3704 = vpack.c.b16 %v2632, %v2616
    %v3705 = vpack.c.b16 %v2633, %v2617
    %v3706 = vpack.c.b16 %v2634, %v2618
    %v3707 = vpack.c.b16 %v2635, %v2619
    %v3708 = vpack.c.b16 %v2636, %v2620
    %v3709 = vpack.c.b16 %v2637, %v2621
    %v3710 = vpack.c.b16 %v2638, %v2622
    %v3711 = vpack.c.b16 %v2639, %v2623
    %v3712 = vpack.c.b16 %v2640, %v2624
    %v3713 = vpack.c.b16 %v2641, %v2625
    %v3714 = vpack.c.b16 %v2642, %v2626
    %v3715 = vpack.c.b16 %v2659, %v2643
    %v3716 = vpack.c.b16 %v2660, %v2644
    %v3717 = vpack.c.b16 %v2661, %v2645
    %v3718 = vpack.c.b16 %v2662, %v2646
    %v3719 = vpack.c.b16 %v2663, %v2647
    %v3720 = vpack.c.b16 %v2664, %v2648
    %v3721 = vpack.c.b16 %v2665, %v2649
    %v3722 = vpack.c.b16 %v2666, %v2650
    %v3723 = vpack.c.b16 %v2667, %v2651
    %v3724 = vpack.c.b16 %v2668, %v2652
    %v3725 = vpack.c.b16 %v2669, %v2653
    %v3726 = vpack.c.b16 %v2670, %v2654
    %v3727 = vpack.c.b16 %v2671, %v2655
    %v3728 = vpack.c.b16 %v2672, %v2656
    %v3729 = vpack.c.b16 %v2673, %v2657
    %v3730 = vpack.c.b16 %v2674, %v2658
    %v3731 = vpack.c.b16 %v2691, %v2675
    %v3732 = vpack.c.b16 %v2692, %v2676
    %v3733 = vpack.c.b16 %v2693, %v2677
    %v3734 = vpack.c.b16 %v2694, %v2678
    %v3735 = vpack.c.b16 %v2695, %v2679
    %v3736 = vpack.c.b16 %v2696, %v2680
    %v3737 = vpack.c.b16 %v2697, %v2681
    %v3738 = vpack.c.b16 %v2698, %v2682
    %v3739 = vpack.c.b16 %v2699, %v2683
    %v3740 = vpack.c.b16 %v2700, %v2684
    %v3741 = vpack.c.b16 %v2701, %v2685
    %v3742 = vpack.c.b16 %v2702, %v2686
    %v3743 = vpack.c.b16 %v2703, %v2687
    %v3744 = vpack.c.b16 %v2704, %v2688
    %v3745 = vpack.c.b16 %v2705, %v2689
    %v3746 = vpack.c.b16 %v2706, %v2690
    %v3747 = vpack.c.b16 %v2723, %v2707
    %v3748 = vpack.c.b16 %v2724, %v2708
    %v3749 = vpack.c.b16 %v2725, %v2709
    %v3750 = vpack.c.b16 %v2726, %v2710
    %v3751 = vpack.c.b16 %v2727, %v2711
    %v3752 = vpack.c.b16 %v2728, %v2712
    %v3753 = vpack.c.b16 %v2729, %v2713
    %v3754 = vpack.c.b16 %v2730, %v2714
    %v3755 = vpack.c.b16 %v2731, %v2715
    %v3756 = vpack.c.b16 %v2732, %v2716
    %v3757 = vpack.c.b16 %v2733, %v2717
    %v3758 = vpack.c.b16 %v2734, %v2718
    %v3759 = vpack.c.b16 %v2735, %v2719
    %v3760 = vpack.c.b16 %v2736, %v2720
    %v3761 = vpack.c.b16 %v2737, %v2721
    %v3762 = vpack.c.b16 %v2738, %v2722
    %v3763 = vpack.c.b16 %v2755, %v2739
    %v3764 = vpack.c.b16 %v2756, %v2740
    %v3765 = vpack.c.b16 %v2757, %v2741
    %v3766 = vpack.c.b16 %v2758, %v2742
    %v3767 = vpack.c.b16 %v2759, %v2743
    %v3768 = vpack.c.b16 %v2760, %v2744
    %v3769 = vpack.c.b16 %v2761, %v2745
    %v3770 = vpack.c.b16 %v2762, %v2746
    %v3771 = vpack.c.b16 %v2763, %v2747
    %v3772 = vpack.c.b16 %v2764, %v2748
    %v3773 = vpack.c.b16 %v2765, %v2749
    %v3774 = vpack.c.b16 %v2766, %v2750
    %v3775 = vpack.c.b16 %v2767, %v2751
    %v3776 = vpack.c.b16 %v2768, %v2752
    %v3777 = vpack.c.b16 %v2769, %v2753
    %v3778 = vpack.c.b16 %v2770, %v2754
    %v3779 = vpack.c.b16 %v2787, %v2771
    %v3780 = vpack.c.b16 %v2788, %v2772
    %v3781 = vpack.c.b16 %v2789, %v2773
    %v3782 = vpack.c.b16 %v2790, %v2774
    %v3783 = vpack.c.b16 %v2791, %v2775
    %v3784 = vpack.c.b16 %v2792, %v2776
    %v3785 = vpack.c.b16 %v2793, %v2777
    %v3786 = vpack.c.b16 %v2794, %v2778
    %v3787 = vpack.c.b16 %v2795, %v2779
    %v3788 = vpack.c.b16 %v2796, %v2780
    %v3789 = vpack.c.b16 %v2797, %v2781
    %v3790 = vpack.c.b16 %v2798, %v2782
    %v3791 = vpack.c.b16 %v2799, %v2783
    %v3792 = vpack.c.b16 %v2800, %v2784
    %v3793 = vpack.c.b16 %v2801, %v2785
    %v3794 = vpack.c.b16 %v2802, %v2786
    %v3795 = vpack.c.b16 %v2819, %v2803
    %v3796 = vpack.c.b16 %v2820, %v2804
    %v3797 = vpack.c.b16 %v2821, %v2805
    %v3798 = vpack.c.b16 %v2822, %v2806
    %v3799 = vpack.c.b16 %v2823, %v2807
    %v3800 = vpack.c.b16 %v2824, %v2808
    %v3801 = vpack.c.b16 %v2825, %v2809
    %v3802 = vpack.c.b16 %v2826, %v2810
    %v3803 = vpack.c.b16 %v2827, %v2811
    %v3804 = vpack.c.b16 %v2828, %v2812
    %v3805 = vpack.c.b16 %v2829, %v2813
    %v3806 = vpack.c.b16 %v2830, %v2814
    %v3807 = vpack.c.b16 %v2831, %v2815
    %v3808 = vpack.c.b16 %v2832, %v2816
    %v3809 = vpack.c.b16 %v2833, %v2817
    %v3810 = vpack.c.b16 %v2834, %v2818
    %v3811 = vpack.c.b16 %v2851, %v2835
    %v3812 = vpack.c.b16 %v2852, %v2836
    %v3813 = vpack.c.b16 %v2853, %v2837
    %v3814 = vpack.c.b16 %v2854, %v2838
    %v3815 = vpack.c.b16 %v2855, %v2839
    %v3816 = vpack.c.b16 %v2856, %v2840
    %v3817 = vpack.c.b16 %v2857, %v2841
    %v3818 = vpack.c.b16 %v2858, %v2842
    %v3819 = vpack.c.b16 %v2859, %v2843
    %v3820 = vpack.c.b16 %v2860, %v2844
    %v3821 = vpack.c.b16 %v2861, %v2845
    %v3822 = vpack.c.b16 %v2862, %v2846
    %v3823 = vpack.c.b16 %v2863, %v2847
    %v3824 = vpack.c.b16 %v2864, %v2848
    %v3825 = vpack.c.b16 %v2865, %v2849
    %v3826 = vpack.c.b16 %v2866, %v2850
    %v3827 = vpack.c.b16 %v2883, %v2867
    %v3828 = vpack.c.b16 %v2884, %v2868
    %v3829 = vpack.c.b16 %v2885, %v2869
    %v3830 = vpack.c.b16 %v2886, %v2870
    %v3831 = vpack.c.b16 %v2887, %v2871
    %v3832 = vpack.c.b16 %v2888, %v2872
    %v3833 = vpack.c.b16 %v2889, %v2873
    %v3834 = vpack.c.b16 %v2890, %v2874
    %v3835 = vpack.c.b16 %v2891, %v2875
    %v3836 = vpack.c.b16 %v2892, %v2876
    %v3837 = vpack.c.b16 %v2893, %v2877
    %v3838 = vpack.c.b16 %v2894, %v2878
    %v3839 = vpack.c.b16 %v2895, %v2879
    %v3840 = vpack.c.b16 %v2896, %v2880
    %v3841 = vpack.c.b16 %v2897, %v2881
    %v3842 = vpack.c.b16 %v2898, %v2882
    %v3843 = vpack.c.b16 %v2915, %v2899
    %v3844 = vpack.c.b16 %v2916, %v2900
    %v3845 = vpack.c.b16 %v2917, %v2901
    %v3846 = vpack.c.b16 %v2918, %v2902
    %v3847 = vpack.c.b16 %v2919, %v2903
    %v3848 = vpack.c.b16 %v2920, %v2904
    %v3849 = vpack.c.b16 %v2921, %v2905
    %v3850 = vpack.c.b16 %v2922, %v2906
    %v3851 = vpack.c.b16 %v2923, %v2907
    %v3852 = vpack.c.b16 %v2924, %v2908
    %v3853 = vpack.c.b16 %v2925, %v2909
    %v3854 = vpack.c.b16 %v2926, %v2910
    %v3855 = vpack.c.b16 %v2927, %v2911
    %v3856 = vpack.c.b16 %v2928, %v2912
    %v3857 = vpack.c.b16 %v2929, %v2913
    %v3858 = vpack.c.b16 %v2930, %v2914
    %v3859 = vpack.c.b16 %v2947, %v2931
    %v3860 = vpack.c.b16 %v2948, %v2932
    %v3861 = vpack.c.b16 %v2949, %v2933
    %v3862 = vpack.c.b16 %v2950, %v2934
    %v3863 = vpack.c.b16 %v2951, %v2935
    %v3864 = vpack.c.b16 %v2952, %v2936
    %v3865 = vpack.c.b16 %v2953, %v2937
    %v3866 = vpack.c.b16 %v2954, %v2938
    %v3867 = vpack.c.b16 %v2955, %v2939
    %v3868 = vpack.c.b16 %v2956, %v2940
    %v3869 = vpack.c.b16 %v2957, %v2941
    %v3870 = vpack.c.b16 %v2958, %v2942
    %v3871 = vpack.c.b16 %v2959, %v2943
    %v3872 = vpack.c.b16 %v2960, %v2944
    %v3873 = vpack.c.b16 %v2961, %v2945
    %v3874 = vpack.c.b16 %v2962, %v2946
    %v3875 = vpack.c.b16 %v2979, %v2963
    %v3876 = vpack.c.b16 %v2980, %v2964
    %v3877 = vpack.c.b16 %v2981, %v2965
    %v3878 = vpack.c.b16 %v2982, %v2966
    %v3879 = vpack.c.b16 %v2983, %v2967
    %v3880 = vpack.c.b16 %v2984, %v2968
    %v3881 = vpack.c.b16 %v2985, %v2969
    %v3882 = vpack.c.b16 %v2986, %v2970
    %v3883 = vpack.c.b16 %v2987, %v2971
    %v3884 = vpack.c.b16 %v2988, %v2972
    %v3885 = vpack.c.b16 %v2989, %v2973
    %v3886 = vpack.c.b16 %v2990, %v2974
    %v3887 = vpack.c.b16 %v2991, %v2975
    %v3888 = vpack.c.b16 %v2992, %v2976
    %v3889 = vpack.c.b16 %v2993, %v2977
    %v3890 = vpack.c.b16 %v2994, %v2978
    %v3891 = vpack.c.b16 %v3011, %v2995
    %v3892 = vpack.c.b16 %v3012, %v2996
    %v3893 = vpack.c.b16 %v3013, %v2997
    %v3894 = vpack.c.b16 %v3014, %v2998
    %v3895 = vpack.c.b16 %v3015, %v2999
    %v3896 = vpack.c.b16 %v3016, %v3000
    %v3897 = vpack.c.b16 %v3017, %v3001
    %v3898 = vpack.c.b16 %v3018, %v3002
    %v3899 = vpack.c.b16 %v3019, %v3003
    %v3900 = vpack.c.b16 %v3020, %v3004
    %v3901 = vpack.c.b16 %v3021, %v3005
    %v3902 = vpack.c.b16 %v3022, %v3006
    %v3903 = vpack.c.b16 %v3023, %v3007
    %v3904 = vpack.c.b16 %v3024, %v3008
    %v3905 = vpack.c.b16 %v3025, %v3009
    %v3906 = vpack.c.b16 %v3026, %v3010
    %v3907 = vpack.c.b16 %v3043, %v3027
    %v3908 = vpack.c.b16 %v3044, %v3028
    %v3909 = vpack.c.b16 %v3045, %v3029
    %v3910 = vpack.c.b16 %v3046, %v3030
    %v3911 = vpack.c.b16 %v3047, %v3031
    %v3912 = vpack.c.b16 %v3048, %v3032
    %v3913 = vpack.c.b16 %v3049, %v3033
    %v3914 = vpack.c.b16 %v3050, %v3034
    %v3915 = vpack.c.b16 %v3051, %v3035
    %v3916 = vpack.c.b16 %v3052, %v3036
    %v3917 = vpack.c.b16 %v3053, %v3037
    %v3918 = vpack.c.b16 %v3054, %v3038
    %v3919 = vpack.c.b16 %v3055, %v3039
    %v3920 = vpack.c.b16 %v3056, %v3040
    %v3921 = vpack.c.b16 %v3057, %v3041
    %v3922 = vpack.c.b16 %v3058, %v3042
    %v3923 = vpack.c.b16 %v3075, %v3059
    %v3924 = vpack.c.b16 %v3076, %v3060
    %v3925 = vpack.c.b16 %v3077, %v3061
    %v3926 = vpack.c.b16 %v3078, %v3062
    %v3927 = vpack.c.b16 %v3079, %v3063
    %v3928 = vpack.c.b16 %v3080, %v3064
    %v3929 = vpack.c.b16 %v3081, %v3065
    %v3930 = vpack.c.b16 %v3082, %v3066
    %v3931 = vpack.c.b16 %v3083, %v3067
    %v3932 = vpack.c.b16 %v3084, %v3068
    %v3933 = vpack.c.b16 %v3085, %v3069
    %v3934 = vpack.c.b16 %v3086, %v3070
    %v3935 = vpack.c.b16 %v3087, %v3071
    %v3936 = vpack.c.b16 %v3088, %v3072
    %v3937 = vpack.c.b16 %v3089, %v3073
    %v3938 = vpack.c.b16 %v3090, %v3074
    %v3939 = vpack.c.b16 %v3107, %v3091
    %v3940 = vpack.c.b16 %v3108, %v3092
    %v3941 = vpack.c.b16 %v3109, %v3093
    %v3942 = vpack.c.b16 %v3110, %v3094
    %v3943 = vpack.c.b16 %v3111, %v3095
    %v3944 = vpack.c.b16 %v3112, %v3096
    %v3945 = vpack.c.b16 %v3113, %v3097
    %v3946 = vpack.c.b16 %v3114, %v3098
    %v3947 = vpack.c.b16 %v3115, %v3099
    %v3948 = vpack.c.b16 %v3116, %v3100
    %v3949 = vpack.c.b16 %v3117, %v3101
    %v3950 = vpack.c.b16 %v3118, %v3102
    %v3951 = vpack.c.b16 %v3119, %v3103
    %v3952 = vpack.c.b16 %v3120, %v3104
    %v3953 = vpack.c.b16 %v3121, %v3105
    %v3954 = vpack.c.b16 %v3122, %v3106
    %v3955 = vpack.c.b16 %v3139, %v3123
    %v3956 = vpack.c.b16 %v3140, %v3124
    %v3957 = vpack.c.b16 %v3141, %v3125
    %v3958 = vpack.c.b16 %v3142, %v3126
    %v3959 = vpack.c.b16 %v3143, %v3127
    %v3960 = vpack.c.b16 %v3144, %v3128
    %v3961 = vpack.c.b16 %v3145, %v3129
    %v3962 = vpack.c.b16 %v3146, %v3130
    %v3963 = vpack.c.b16 %v3147, %v3131
    %v3964 = vpack.c.b16 %v3148, %v3132
    %v3965 = vpack.c.b16 %v3149, %v3133
    %v3966 = vpack.c.b16 %v3150, %v3134
    %v3967 = vpack.c.b16 %v3151, %v3135
    %v3968 = vpack.c.b16 %v3152, %v3136
    %v3969 = vpack.c.b16 %v3153, %v3137
    %v3970 = vpack.c.b16 %v3154, %v3138
    %v3971 = vpack.c.b16 %v3171, %v3155
    %v3972 = vpack.c.b16 %v3172, %v3156
    %v3973 = vpack.c.b16 %v3173, %v3157
    %v3974 = vpack.c.b16 %v3174, %v3158
    %v3975 = vpack.c.b16 %v3175, %v3159
    %v3976 = vpack.c.b16 %v3176, %v3160
    %v3977 = vpack.c.b16 %v3177, %v3161
    %v3978 = vpack.c.b16 %v3178, %v3162
    %v3979 = vpack.c.b16 %v3179, %v3163
    %v3980 = vpack.c.b16 %v3180, %v3164
    %v3981 = vpack.c.b16 %v3181, %v3165
    %v3982 = vpack.c.b16 %v3182, %v3166
    %v3983 = vpack.c.b16 %v3183, %v3167
    %v3984 = vpack.c.b16 %v3184, %v3168
    %v3985 = vpack.c.b16 %v3185, %v3169
    %v3986 = vpack.c.b16 %v3186, %v3170
    %v3987 = vpack.c.b16 %v3203, %v3187
    %v3988 = vpack.c.b16 %v3204, %v3188
    %v3989 = vpack.c.b16 %v3205, %v3189
    %v3990 = vpack.c.b16 %v3206, %v3190
    %v3991 = vpack.c.b16 %v3207, %v3191
    %v3992 = vpack.c.b16 %v3208, %v3192
    %v3993 = vpack.c.b16 %v3209, %v3193
    %v3994 = vpack.c.b16 %v3210, %v3194
    %v3995 = vpack.c.b16 %v3211, %v3195
    %v3996 = vpack.c.b16 %v3212, %v3196
    %v3997 = vpack.c.b16 %v3213, %v3197
    %v3998 = vpack.c.b16 %v3214, %v3198
    %v3999 = vpack.c.b16 %v3215, %v3199
    %v4000 = vpack.c.b16 %v3216, %v3200
    %v4001 = vpack.c.b16 %v3217, %v3201
    %v4002 = vpack.c.b16 %v3218, %v3202
    %v4003 = vpack.c.b16 %v3235, %v3219
    %v4004 = vpack.c.b16 %v3236, %v3220
    %v4005 = vpack.c.b16 %v3237, %v3221
    %v4006 = vpack.c.b16 %v3238, %v3222
    %v4007 = vpack.c.b16 %v3239, %v3223
    %v4008 = vpack.c.b16 %v3240, %v3224
    %v4009 = vpack.c.b16 %v3241, %v3225
    %v4010 = vpack.c.b16 %v3242, %v3226
    %v4011 = vpack.c.b16 %v3243, %v3227
    %v4012 = vpack.c.b16 %v3244, %v3228
    %v4013 = vpack.c.b16 %v3245, %v3229
    %v4014 = vpack.c.b16 %v3246, %v3230
    %v4015 = vpack.c.b16 %v3247, %v3231
    %v4016 = vpack.c.b16 %v3248, %v3232
    %v4017 = vpack.c.b16 %v3249, %v3233
    %v4018 = vpack.c.b16 %v3250, %v3234
    %4787 = vmatprep.subr.bf16.mxu0 %v3252
    %4788 = vmatpush1.bf16.msra.mxu0 %v3251
    %4789 = vmatprep.subr.bf16.mxu0 %v3268
    %4790 = vmatpush1.bf16.msra.mxu0 %v3267
    %4791 = vmatprep.subr.bf16.mxu0 %v3284
    %4792 = vmatpush1.bf16.msra.mxu0 %v3283
    %4793 = vmatprep.subr.bf16.mxu0 %v3300
    %4794 = vmatpush1.bf16.msra.mxu0 %v3299
    %4795 = vmatprep.subr.bf16.mxu0 %v3316
    %4796 = vmatpush1.bf16.msra.mxu0 %v3315
    %4797 = vmatprep.subr.bf16.mxu0 %v3332
    %4798 = vmatpush1.bf16.msra.mxu0 %v3331
    %4799 = vmatprep.subr.bf16.mxu0 %v3348
    %4800 = vmatpush1.bf16.msra.mxu0 %v3347
    %4801 = vmatprep.subr.bf16.mxu0 %v3364
    %4802 = vmatpush1.bf16.msra.mxu0 %v3363
    %4803 = vmatprep.subr.bf16.mxu0 %v3380
    %4804 = vmatpush1.bf16.msra.mxu0 %v3379
    %4805 = vmatprep.subr.bf16.mxu0 %v3396
    %4806 = vmatpush1.bf16.msra.mxu0 %v3395
    %4807 = vmatprep.subr.bf16.mxu0 %v3412
    %4808 = vmatpush1.bf16.msra.mxu0 %v3411
    %4809 = vmatprep.subr.bf16.mxu0 %v3428
    %4810 = vmatpush1.bf16.msra.mxu0 %v3427
    %4811 = vmatprep.subr.bf16.mxu0 %v3444
    %4812 = vmatpush1.bf16.msra.mxu0 %v3443
    %4813 = vmatprep.subr.bf16.mxu0 %v3460
    %4814 = vmatpush1.bf16.msra.mxu0 %v3459
    %4815 = vmatprep.subr.bf16.mxu0 %v3476
    %4816 = vmatpush1.bf16.msra.mxu0 %v3475
    %4817 = vmatprep.subr.bf16.mxu0 %v3492
    %4818 = vmatpush1.bf16.msra.mxu0 %v3491
    %4819 = vmatprep.mubr.bf16.mxu0 %v936
    %4820 = vmatmul.mubr.bf16.gmra.mrb[0].mxu0 %v935
    %v4821 = vpop.f32.mrb[0].mxu0
    %v4822 = vadd.f32 %v849, %v4821
    %v4823 = vpop.f32.mrb[0].mxu0
    %v4824 = vadd.f32 %v853, %v4823
    %v4825 = vpop.f32.mrb[0].mxu0
    %v4826 = vpop.f32.mrb[0].mxu0
    %4827 = vdwg.mxu0
    %4828 = vmatprep.subr.bf16.mxu0 %v3508
    %4829 = vmatpush1.bf16.msra.mxu0 %v3507
    %4830 = vmatprep.subr.bf16.mxu0 %v3524
    %4831 = vmatpush1.bf16.msra.mxu0 %v3523
    %4832 = vmatprep.subr.bf16.mxu0 %v3540
    %4833 = vmatpush1.bf16.msra.mxu0 %v3539
    %4834 = vmatprep.subr.bf16.mxu0 %v3556
    %4835 = vmatpush1.bf16.msra.mxu0 %v3555
    %4836 = vmatprep.subr.bf16.mxu0 %v3572
    %4837 = vmatpush1.bf16.msra.mxu0 %v3571
    %4838 = vmatprep.subr.bf16.mxu0 %v3588
    %4839 = vmatpush1.bf16.msra.mxu0 %v3587
    %4840 = vmatprep.subr.bf16.mxu0 %v3604
    %4841 = vmatpush1.bf16.msra.mxu0 %v3603
    %4842 = vmatprep.subr.bf16.mxu0 %v3620
    %4843 = vmatpush1.bf16.msra.mxu0 %v3619
    %4844 = vmatprep.subr.bf16.mxu0 %v3636
    %4845 = vmatpush1.bf16.msra.mxu0 %v3635
    %4846 = vmatprep.subr.bf16.mxu0 %v3652
    %4847 = vmatpush1.bf16.msra.mxu0 %v3651
    %4848 = vmatprep.subr.bf16.mxu0 %v3668
    %4849 = vmatpush1.bf16.msra.mxu0 %v3667
    %4850 = vmatprep.subr.bf16.mxu0 %v3684
    %4851 = vmatpush1.bf16.msra.mxu0 %v3683
    %4852 = vmatprep.subr.bf16.mxu0 %v3700
    %4853 = vmatpush1.bf16.msra.mxu0 %v3699
    %4854 = vmatprep.subr.bf16.mxu0 %v3716
    %4855 = vmatpush1.bf16.msra.mxu0 %v3715
    %4856 = vmatprep.subr.bf16.mxu0 %v3732
    %4857 = vmatpush1.bf16.msra.mxu0 %v3731
    %4858 = vmatprep.subr.bf16.mxu0 %v3748
    %4859 = vmatpush1.bf16.msra.mxu0 %v3747
    %4860 = vmatprep.mubr.bf16.mxu0 %v938
    %4861 = vmatmul.mubr.bf16.gmra.mrb[0].mxu0 %v937
    %v4862 = vpop.f32.mrb[0].mxu0
    %v4863 = vadd.f32 %v4822, %v4862
    %v4864 = vpop.f32.mrb[0].mxu0
    %v4865 = vadd.f32 %v4824, %v4864
    %v4866 = vpop.f32.mrb[0].mxu0
    %v4867 = vpop.f32.mrb[0].mxu0
    %4868 = vdwg.mxu0
    %4869 = vmatprep.subr.bf16.mxu0 %v3764
    %4870 = vmatpush1.bf16.msra.mxu0 %v3763
    %4871 = vmatprep.subr.bf16.mxu0 %v3780
    %4872 = vmatpush1.bf16.msra.mxu0 %v3779
    %4873 = vmatprep.subr.bf16.mxu0 %v3796
    %4874 = vmatpush1.bf16.msra.mxu0 %v3795
    %4875 = vmatprep.subr.bf16.mxu0 %v3812
    %4876 = vmatpush1.bf16.msra.mxu0 %v3811
    %4877 = vmatprep.subr.bf16.mxu0 %v3828
    %4878 = vmatpush1.bf16.msra.mxu0 %v3827
    %4879 = vmatprep.subr.bf16.mxu0 %v3844
    %4880 = vmatpush1.bf16.msra.mxu0 %v3843
    %4881 = vmatprep.subr.bf16.mxu0 %v3860
    %4882 = vmatpush1.bf16.msra.mxu0 %v3859
    %4883 = vmatprep.subr.bf16.mxu0 %v3876
    %4884 = vmatpush1.bf16.msra.mxu0 %v3875
    %4885 = vmatprep.subr.bf16.mxu0 %v3892
    %4886 = vmatpush1.bf16.msra.mxu0 %v3891
    %4887 = vmatprep.subr.bf16.mxu0 %v3908
    %4888 = vmatpush1.bf16.msra.mxu0 %v3907
    %4889 = vmatprep.subr.bf16.mxu0 %v3924
    %4890 = vmatpush1.bf16.msra.mxu0 %v3923
    %4891 = vmatprep.subr.bf16.mxu0 %v3940
    %4892 = vmatpush1.bf16.msra.mxu0 %v3939
    %4893 = vmatprep.subr.bf16.mxu0 %v3956
    %4894 = vmatpush1.bf16.msra.mxu0 %v3955
    %4895 = vmatprep.subr.bf16.mxu0 %v3972
    %4896 = vmatpush1.bf16.msra.mxu0 %v3971
    %4897 = vmatprep.subr.bf16.mxu0 %v3988
    %4898 = vmatpush1.bf16.msra.mxu0 %v3987
    %4899 = vmatprep.subr.bf16.mxu0 %v4004
    %4900 = vmatpush1.bf16.msra.mxu0 %v4003
    %4901 = vmatprep.mubr.bf16.mxu0 %v940
    %4902 = vmatmul.mubr.bf16.gmra.mrb[0].mxu0 %v939
    %v4903 = vpop.f32.mrb[0].mxu0
    %v4904 = vadd.f32 %v4863, %v4903
    %v4905 = vpop.f32.mrb[0].mxu0
    %v4906 = vadd.f32 %v4865, %v4905
    %v4907 = vpop.f32.mrb[0].mxu0
    %v4908 = vpop.f32.mrb[0].mxu0
    %4909 = vdwg.mxu0
    %4910 = vmatprep.subr.bf16.mxu0 %v3254
    %4911 = vmatpush1.bf16.msra.mxu0 %v3253
    %4912 = vmatprep.subr.bf16.mxu0 %v3270
    %4913 = vmatpush1.bf16.msra.mxu0 %v3269
    %4914 = vmatprep.subr.bf16.mxu0 %v3286
    %4915 = vmatpush1.bf16.msra.mxu0 %v3285
    %4916 = vmatprep.subr.bf16.mxu0 %v3302
    %4917 = vmatpush1.bf16.msra.mxu0 %v3301
    %4918 = vmatprep.subr.bf16.mxu0 %v3318
    %4919 = vmatpush1.bf16.msra.mxu0 %v3317
    %4920 = vmatprep.subr.bf16.mxu0 %v3334
    %4921 = vmatpush1.bf16.msra.mxu0 %v3333
    %4922 = vmatprep.subr.bf16.mxu0 %v3350
    %4923 = vmatpush1.bf16.msra.mxu0 %v3349
    %4924 = vmatprep.subr.bf16.mxu0 %v3366
    %4925 = vmatpush1.bf16.msra.mxu0 %v3365
    %4926 = vmatprep.subr.bf16.mxu0 %v3382
    %4927 = vmatpush1.bf16.msra.mxu0 %v3381
    %4928 = vmatprep.subr.bf16.mxu0 %v3398
    %4929 = vmatpush1.bf16.msra.mxu0 %v3397
    %4930 = vmatprep.subr.bf16.mxu0 %v3414
    %4931 = vmatpush1.bf16.msra.mxu0 %v3413
    %4932 = vmatprep.subr.bf16.mxu0 %v3430
    %4933 = vmatpush1.bf16.msra.mxu0 %v3429
    %4934 = vmatprep.subr.bf16.mxu0 %v3446
    %4935 = vmatpush1.bf16.msra.mxu0 %v3445
    %4936 = vmatprep.subr.bf16.mxu0 %v3462
    %4937 = vmatpush1.bf16.msra.mxu0 %v3461
    %4938 = vmatprep.subr.bf16.mxu0 %v3478
    %4939 = vmatpush1.bf16.msra.mxu0 %v3477
    %4940 = vmatprep.subr.bf16.mxu0 %v3494
    %4941 = vmatpush1.bf16.msra.mxu0 %v3493
    %4942 = vmatprep.mubr.bf16.mxu0 %v936
    %4943 = vmatmul.mubr.bf16.gmra.mrb[0].mxu0 %v935
    %v4944 = vpop.f32.mrb[0].mxu0
    %v4945 = vadd.f32 %v857, %v4944
    %v4946 = vpop.f32.mrb[0].mxu0
    %v4947 = vadd.f32 %v861, %v4946
    %v4948 = vpop.f32.mrb[0].mxu0
    %v4949 = vpop.f32.mrb[0].mxu0
    %4950 = vdwg.mxu0
    %4951 = vmatprep.subr.bf16.mxu0 %v3510
    %4952 = vmatpush1.bf16.msra.mxu0 %v3509
    %4953 = vmatprep.subr.bf16.mxu0 %v3526
    %4954 = vmatpush1.bf16.msra.mxu0 %v3525
    %4955 = vmatprep.subr.bf16.mxu0 %v3542
    %4956 = vmatpush1.bf16.msra.mxu0 %v3541
    %4957 = vmatprep.subr.bf16.mxu0 %v3558
    %4958 = vmatpush1.bf16.msra.mxu0 %v3557
    %4959 = vmatprep.subr.bf16.mxu0 %v3574
    %4960 = vmatpush1.bf16.msra.mxu0 %v3573
    %4961 = vmatprep.subr.bf16.mxu0 %v3590
    %4962 = vmatpush1.bf16.msra.mxu0 %v3589
    %4963 = vmatprep.subr.bf16.mxu0 %v3606
    %4964 = vmatpush1.bf16.msra.mxu0 %v3605
    %4965 = vmatprep.subr.bf16.mxu0 %v3622
    %4966 = vmatpush1.bf16.msra.mxu0 %v3621
    %4967 = vmatprep.subr.bf16.mxu0 %v3638
    %4968 = vmatpush1.bf16.msra.mxu0 %v3637
    %4969 = vmatprep.subr.bf16.mxu0 %v3654
    %4970 = vmatpush1.bf16.msra.mxu0 %v3653
    %4971 = vmatprep.subr.bf16.mxu0 %v3670
    %4972 = vmatpush1.bf16.msra.mxu0 %v3669
    %4973 = vmatprep.subr.bf16.mxu0 %v3686
    %4974 = vmatpush1.bf16.msra.mxu0 %v3685
    %4975 = vmatprep.subr.bf16.mxu0 %v3702
    %4976 = vmatpush1.bf16.msra.mxu0 %v3701
    %4977 = vmatprep.subr.bf16.mxu0 %v3718
    %4978 = vmatpush1.bf16.msra.mxu0 %v3717
    %4979 = vmatprep.subr.bf16.mxu0 %v3734
    %4980 = vmatpush1.bf16.msra.mxu0 %v3733
    %4981 = vmatprep.subr.bf16.mxu0 %v3750
    %4982 = vmatpush1.bf16.msra.mxu0 %v3749
    %4983 = vmatprep.mubr.bf16.mxu0 %v938
    %4984 = vmatmul.mubr.bf16.gmra.mrb[0].mxu0 %v937
    %v4985 = vpop.f32.mrb[0].mxu0
    %v4986 = vadd.f32 %v4945, %v4985
    %v4987 = vpop.f32.mrb[0].mxu0
    %v4988 = vadd.f32 %v4947, %v4987
    %v4989 = vpop.f32.mrb[0].mxu0
    %v4990 = vpop.f32.mrb[0].mxu0
    %4991 = vdwg.mxu0
    %4992 = vmatprep.subr.bf16.mxu0 %v3766
    %4993 = vmatpush1.bf16.msra.mxu0 %v3765
    %4994 = vmatprep.subr.bf16.mxu0 %v3782
    %4995 = vmatpush1.bf16.msra.mxu0 %v3781
    %4996 = vmatprep.subr.bf16.mxu0 %v3798
    %4997 = vmatpush1.bf16.msra.mxu0 %v3797
    %4998 = vmatprep.subr.bf16.mxu0 %v3814
    %4999 = vmatpush1.bf16.msra.mxu0 %v3813
    %5000 = vmatprep.subr.bf16.mxu0 %v3830
    %5001 = vmatpush1.bf16.msra.mxu0 %v3829
    %5002 = vmatprep.subr.bf16.mxu0 %v3846
    %5003 = vmatpush1.bf16.msra.mxu0 %v3845
    %5004 = vmatprep.subr.bf16.mxu0 %v3862
    %5005 = vmatpush1.bf16.msra.mxu0 %v3861
    %5006 = vmatprep.subr.bf16.mxu0 %v3878
    %5007 = vmatpush1.bf16.msra.mxu0 %v3877
    %5008 = vmatprep.subr.bf16.mxu0 %v3894
    %5009 = vmatpush1.bf16.msra.mxu0 %v3893
    %5010 = vmatprep.subr.bf16.mxu0 %v3910
    %5011 = vmatpush1.bf16.msra.mxu0 %v3909
    %5012 = vmatprep.subr.bf16.mxu0 %v3926
    %5013 = vmatpush1.bf16.msra.mxu0 %v3925
    %5014 = vmatprep.subr.bf16.mxu0 %v3942
    %5015 = vmatpush1.bf16.msra.mxu0 %v3941
    %5016 = vmatprep.subr.bf16.mxu0 %v3958
    %5017 = vmatpush1.bf16.msra.mxu0 %v3957
    %5018 = vmatprep.subr.bf16.mxu0 %v3974
    %5019 = vmatpush1.bf16.msra.mxu0 %v3973
    %5020 = vmatprep.subr.bf16.mxu0 %v3990
    %5021 = vmatpush1.bf16.msra.mxu0 %v3989
    %5022 = vmatprep.subr.bf16.mxu0 %v4006
    %5023 = vmatpush1.bf16.msra.mxu0 %v4005
    %5024 = vmatprep.mubr.bf16.mxu0 %v940
    %5025 = vmatmul.mubr.bf16.gmra.mrb[0].mxu0 %v939
    %v5026 = vpop.f32.mrb[0].mxu0
    %v5027 = vadd.f32 %v4986, %v5026
    %v5028 = vpop.f32.mrb[0].mxu0
    %v5029 = vadd.f32 %v4988, %v5028
    %v5030 = vpop.f32.mrb[0].mxu0
    %v5031 = vpop.f32.mrb[0].mxu0
    %5032 = vdwg.mxu0
    %5033 = vmatprep.subr.bf16.mxu0 %v3256
    %5034 = vmatpush1.bf16.msra.mxu0 %v3255
    %5035 = vmatprep.subr.bf16.mxu0 %v3272
    %5036 = vmatpush1.bf16.msra.mxu0 %v3271
    %5037 = vmatprep.subr.bf16.mxu0 %v3288
    %5038 = vmatpush1.bf16.msra.mxu0 %v3287
    %5039 = vmatprep.subr.bf16.mxu0 %v3304
    %5040 = vmatpush1.bf16.msra.mxu0 %v3303
    %5041 = vmatprep.subr.bf16.mxu0 %v3320
    %5042 = vmatpush1.bf16.msra.mxu0 %v3319
    %5043 = vmatprep.subr.bf16.mxu0 %v3336
    %5044 = vmatpush1.bf16.msra.mxu0 %v3335
    %5045 = vmatprep.subr.bf16.mxu0 %v3352
    %5046 = vmatpush1.bf16.msra.mxu0 %v3351
    %5047 = vmatprep.subr.bf16.mxu0 %v3368
    %5048 = vmatpush1.bf16.msra.mxu0 %v3367
    %5049 = vmatprep.subr.bf16.mxu0 %v3384
    %5050 = vmatpush1.bf16.msra.mxu0 %v3383
    %5051 = vmatprep.subr.bf16.mxu0 %v3400
    %5052 = vmatpush1.bf16.msra.mxu0 %v3399
    %5053 = vmatprep.subr.bf16.mxu0 %v3416
    %5054 = vmatpush1.bf16.msra.mxu0 %v3415
    %5055 = vmatprep.subr.bf16.mxu0 %v3432
    %5056 = vmatpush1.bf16.msra.mxu0 %v3431
    %5057 = vmatprep.subr.bf16.mxu0 %v3448
    %5058 = vmatpush1.bf16.msra.mxu0 %v3447
    %5059 = vmatprep.subr.bf16.mxu0 %v3464
    %5060 = vmatpush1.bf16.msra.mxu0 %v3463
    %5061 = vmatprep.subr.bf16.mxu0 %v3480
    %5062 = vmatpush1.bf16.msra.mxu0 %v3479
    %5063 = vmatprep.subr.bf16.mxu0 %v3496
    %5064 = vmatpush1.bf16.msra.mxu0 %v3495
    %5065 = vmatprep.mubr.bf16.mxu0 %v936
    %5066 = vmatmul.mubr.bf16.gmra.mrb[0].mxu0 %v935
    %v5067 = vpop.f32.mrb[0].mxu0
    %v5068 = vadd.f32 %v865, %v5067
    %v5069 = vpop.f32.mrb[0].mxu0
    %v5070 = vadd.f32 %v869, %v5069
    %v5071 = vpop.f32.mrb[0].mxu0
    %v5072 = vpop.f32.mrb[0].mxu0
    %5073 = vdwg.mxu0
    %5074 = vmatprep.subr.bf16.mxu0 %v3512
    %5075 = vmatpush1.bf16.msra.mxu0 %v3511
    %5076 = vmatprep.subr.bf16.mxu0 %v3528
    %5077 = vmatpush1.bf16.msra.mxu0 %v3527
    %5078 = vmatprep.subr.bf16.mxu0 %v3544
    %5079 = vmatpush1.bf16.msra.mxu0 %v3543
    %5080 = vmatprep.subr.bf16.mxu0 %v3560
    %5081 = vmatpush1.bf16.msra.mxu0 %v3559
    %5082 = vmatprep.subr.bf16.mxu0 %v3576
    %5083 = vmatpush1.bf16.msra.mxu0 %v3575
    %5084 = vmatprep.subr.bf16.mxu0 %v3592
    %5085 = vmatpush1.bf16.msra.mxu0 %v3591
    %5086 = vmatprep.subr.bf16.mxu0 %v3608
    %5087 = vmatpush1.bf16.msra.mxu0 %v3607
    %5088 = vmatprep.subr.bf16.mxu0 %v3624
    %5089 = vmatpush1.bf16.msra.mxu0 %v3623
    %5090 = vmatprep.subr.bf16.mxu0 %v3640
    %5091 = vmatpush1.bf16.msra.mxu0 %v3639
    %5092 = vmatprep.subr.bf16.mxu0 %v3656
    %5093 = vmatpush1.bf16.msra.mxu0 %v3655
    %5094 = vmatprep.subr.bf16.mxu0 %v3672
    %5095 = vmatpush1.bf16.msra.mxu0 %v3671
    %5096 = vmatprep.subr.bf16.mxu0 %v3688
    %5097 = vmatpush1.bf16.msra.mxu0 %v3687
    %5098 = vmatprep.subr.bf16.mxu0 %v3704
    %5099 = vmatpush1.bf16.msra.mxu0 %v3703
    %5100 = vmatprep.subr.bf16.mxu0 %v3720
    %5101 = vmatpush1.bf16.msra.mxu0 %v3719
    %5102 = vmatprep.subr.bf16.mxu0 %v3736
    %5103 = vmatpush1.bf16.msra.mxu0 %v3735
    %5104 = vmatprep.subr.bf16.mxu0 %v3752
    %5105 = vmatpush1.bf16.msra.mxu0 %v3751
    %5106 = vmatprep.mubr.bf16.mxu0 %v938
    %5107 = vmatmul.mubr.bf16.gmra.mrb[0].mxu0 %v937
    %v5108 = vpop.f32.mrb[0].mxu0
    %v5109 = vadd.f32 %v5068, %v5108
    %v5110 = vpop.f32.mrb[0].mxu0
    %v5111 = vadd.f32 %v5070, %v5110
    %v5112 = vpop.f32.mrb[0].mxu0
    %v5113 = vpop.f32.mrb[0].mxu0
    %5114 = vdwg.mxu0
    %5115 = vmatprep.subr.bf16.mxu0 %v3768
    %5116 = vmatpush1.bf16.msra.mxu0 %v3767
    %5117 = vmatprep.subr.bf16.mxu0 %v3784
    %5118 = vmatpush1.bf16.msra.mxu0 %v3783
    %5119 = vmatprep.subr.bf16.mxu0 %v3800
    %5120 = vmatpush1.bf16.msra.mxu0 %v3799
    %5121 = vmatprep.subr.bf16.mxu0 %v3816
    %5122 = vmatpush1.bf16.msra.mxu0 %v3815
    %5123 = vmatprep.subr.bf16.mxu0 %v3832
    %5124 = vmatpush1.bf16.msra.mxu0 %v3831
    %5125 = vmatprep.subr.bf16.mxu0 %v3848
    %5126 = vmatpush1.bf16.msra.mxu0 %v3847
    %5127 = vmatprep.subr.bf16.mxu0 %v3864
    %5128 = vmatpush1.bf16.msra.mxu0 %v3863
    %5129 = vmatprep.subr.bf16.mxu0 %v3880
    %5130 = vmatpush1.bf16.msra.mxu0 %v3879
    %5131 = vmatprep.subr.bf16.mxu0 %v3896
    %5132 = vmatpush1.bf16.msra.mxu0 %v3895
    %5133 = vmatprep.subr.bf16.mxu0 %v3912
    %5134 = vmatpush1.bf16.msra.mxu0 %v3911
    %5135 = vmatprep.subr.bf16.mxu0 %v3928
    %5136 = vmatpush1.bf16.msra.mxu0 %v3927
    %5137 = vmatprep.subr.bf16.mxu0 %v3944
    %5138 = vmatpush1.bf16.msra.mxu0 %v3943
    %5139 = vmatprep.subr.bf16.mxu0 %v3960
    %5140 = vmatpush1.bf16.msra.mxu0 %v3959
    %5141 = vmatprep.subr.bf16.mxu0 %v3976
    %5142 = vmatpush1.bf16.msra.mxu0 %v3975
    %5143 = vmatprep.subr.bf16.mxu0 %v3992
    %5144 = vmatpush1.bf16.msra.mxu0 %v3991
    %5145 = vmatprep.subr.bf16.mxu0 %v4008
    %5146 = vmatpush1.bf16.msra.mxu0 %v4007
    %5147 = vmatprep.mubr.bf16.mxu0 %v940
    %5148 = vmatmul.mubr.bf16.gmra.mrb[0].mxu0 %v939
    %v5149 = vpop.f32.mrb[0].mxu0
    %v5150 = vadd.f32 %v5109, %v5149
    %v5151 = vpop.f32.mrb[0].mxu0
    %v5152 = vadd.f32 %v5111, %v5151
    %v5153 = vpop.f32.mrb[0].mxu0
    %v5154 = vpop.f32.mrb[0].mxu0
    %5155 = vdwg.mxu0
    %5156 = vmatprep.subr.bf16.mxu0 %v3258
    %5157 = vmatpush1.bf16.msra.mxu0 %v3257
    %5158 = vmatprep.subr.bf16.mxu0 %v3274
    %5159 = vmatpush1.bf16.msra.mxu0 %v3273
    %5160 = vmatprep.subr.bf16.mxu0 %v3290
    %5161 = vmatpush1.bf16.msra.mxu0 %v3289
    %5162 = vmatprep.subr.bf16.mxu0 %v3306
    %5163 = vmatpush1.bf16.msra.mxu0 %v3305
    %5164 = vmatprep.subr.bf16.mxu0 %v3322
    %5165 = vmatpush1.bf16.msra.mxu0 %v3321
    %5166 = vmatprep.subr.bf16.mxu0 %v3338
    %5167 = vmatpush1.bf16.msra.mxu0 %v3337
    %5168 = vmatprep.subr.bf16.mxu0 %v3354
    %5169 = vmatpush1.bf16.msra.mxu0 %v3353
    %5170 = vmatprep.subr.bf16.mxu0 %v3370
    %5171 = vmatpush1.bf16.msra.mxu0 %v3369
    %5172 = vmatprep.subr.bf16.mxu0 %v3386
    %5173 = vmatpush1.bf16.msra.mxu0 %v3385
    %5174 = vmatprep.subr.bf16.mxu0 %v3402
    %5175 = vmatpush1.bf16.msra.mxu0 %v3401
    %5176 = vmatprep.subr.bf16.mxu0 %v3418
    %5177 = vmatpush1.bf16.msra.mxu0 %v3417
    %5178 = vmatprep.subr.bf16.mxu0 %v3434
    %5179 = vmatpush1.bf16.msra.mxu0 %v3433
    %5180 = vmatprep.subr.bf16.mxu0 %v3450
    %5181 = vmatpush1.bf16.msra.mxu0 %v3449
    %5182 = vmatprep.subr.bf16.mxu0 %v3466
    %5183 = vmatpush1.bf16.msra.mxu0 %v3465
    %5184 = vmatprep.subr.bf16.mxu0 %v3482
    %5185 = vmatpush1.bf16.msra.mxu0 %v3481
    %5186 = vmatprep.subr.bf16.mxu0 %v3498
    %5187 = vmatpush1.bf16.msra.mxu0 %v3497
    %5188 = vmatprep.mubr.bf16.mxu0 %v936
    %5189 = vmatmul.mubr.bf16.gmra.mrb[0].mxu0 %v935
    %v5190 = vpop.f32.mrb[0].mxu0
    %v5191 = vadd.f32 %v873, %v5190
    %v5192 = vpop.f32.mrb[0].mxu0
    %v5193 = vadd.f32 %v877, %v5192
    %v5194 = vpop.f32.mrb[0].mxu0
    %v5195 = vpop.f32.mrb[0].mxu0
    %5196 = vdwg.mxu0
    %5197 = vmatprep.subr.bf16.mxu0 %v3514
    %5198 = vmatpush1.bf16.msra.mxu0 %v3513
    %5199 = vmatprep.subr.bf16.mxu0 %v3530
    %5200 = vmatpush1.bf16.msra.mxu0 %v3529
    %5201 = vmatprep.subr.bf16.mxu0 %v3546
    %5202 = vmatpush1.bf16.msra.mxu0 %v3545
    %5203 = vmatprep.subr.bf16.mxu0 %v3562
    %5204 = vmatpush1.bf16.msra.mxu0 %v3561
    %5205 = vmatprep.subr.bf16.mxu0 %v3578
    %5206 = vmatpush1.bf16.msra.mxu0 %v3577
    %5207 = vmatprep.subr.bf16.mxu0 %v3594
    %5208 = vmatpush1.bf16.msra.mxu0 %v3593
    %5209 = vmatprep.subr.bf16.mxu0 %v3610
    %5210 = vmatpush1.bf16.msra.mxu0 %v3609
    %5211 = vmatprep.subr.bf16.mxu0 %v3626
    %5212 = vmatpush1.bf16.msra.mxu0 %v3625
    %5213 = vmatprep.subr.bf16.mxu0 %v3642
    %5214 = vmatpush1.bf16.msra.mxu0 %v3641
    %5215 = vmatprep.subr.bf16.mxu0 %v3658
    %5216 = vmatpush1.bf16.msra.mxu0 %v3657
    %5217 = vmatprep.subr.bf16.mxu0 %v3674
    %5218 = vmatpush1.bf16.msra.mxu0 %v3673
    %5219 = vmatprep.subr.bf16.mxu0 %v3690
    %5220 = vmatpush1.bf16.msra.mxu0 %v3689
    %5221 = vmatprep.subr.bf16.mxu0 %v3706
    %5222 = vmatpush1.bf16.msra.mxu0 %v3705
    %5223 = vmatprep.subr.bf16.mxu0 %v3722
    %5224 = vmatpush1.bf16.msra.mxu0 %v3721
    %5225 = vmatprep.subr.bf16.mxu0 %v3738
    %5226 = vmatpush1.bf16.msra.mxu0 %v3737
    %5227 = vmatprep.subr.bf16.mxu0 %v3754
    %5228 = vmatpush1.bf16.msra.mxu0 %v3753
    %5229 = vmatprep.mubr.bf16.mxu0 %v938
    %5230 = vmatmul.mubr.bf16.gmra.mrb[0].mxu0 %v937
    %v5231 = vpop.f32.mrb[0].mxu0
    %v5232 = vadd.f32 %v5191, %v5231
    %v5233 = vpop.f32.mrb[0].mxu0
    %v5234 = vadd.f32 %v5193, %v5233
    %v5235 = vpop.f32.mrb[0].mxu0
    %v5236 = vpop.f32.mrb[0].mxu0
    %5237 = vdwg.mxu0
    %5238 = vmatprep.subr.bf16.mxu0 %v3770
    %5239 = vmatpush1.bf16.msra.mxu0 %v3769
    %5240 = vmatprep.subr.bf16.mxu0 %v3786
    %5241 = vmatpush1.bf16.msra.mxu0 %v3785
    %5242 = vmatprep.subr.bf16.mxu0 %v3802
    %5243 = vmatpush1.bf16.msra.mxu0 %v3801
    %5244 = vmatprep.subr.bf16.mxu0 %v3818
    %5245 = vmatpush1.bf16.msra.mxu0 %v3817
    %5246 = vmatprep.subr.bf16.mxu0 %v3834
    %5247 = vmatpush1.bf16.msra.mxu0 %v3833
    %5248 = vmatprep.subr.bf16.mxu0 %v3850
    %5249 = vmatpush1.bf16.msra.mxu0 %v3849
    %5250 = vmatprep.subr.bf16.mxu0 %v3866
    %5251 = vmatpush1.bf16.msra.mxu0 %v3865
    %5252 = vmatprep.subr.bf16.mxu0 %v3882
    %5253 = vmatpush1.bf16.msra.mxu0 %v3881
    %5254 = vmatprep.subr.bf16.mxu0 %v3898
    %5255 = vmatpush1.bf16.msra.mxu0 %v3897
    %5256 = vmatprep.subr.bf16.mxu0 %v3914
    %5257 = vmatpush1.bf16.msra.mxu0 %v3913
    %5258 = vmatprep.subr.bf16.mxu0 %v3930
    %5259 = vmatpush1.bf16.msra.mxu0 %v3929
    %5260 = vmatprep.subr.bf16.mxu0 %v3946
    %5261 = vmatpush1.bf16.msra.mxu0 %v3945
    %5262 = vmatprep.subr.bf16.mxu0 %v3962
    %5263 = vmatpush1.bf16.msra.mxu0 %v3961
    %5264 = vmatprep.subr.bf16.mxu0 %v3978
    %5265 = vmatpush1.bf16.msra.mxu0 %v3977
    %5266 = vmatprep.subr.bf16.mxu0 %v3994
    %5267 = vmatpush1.bf16.msra.mxu0 %v3993
    %5268 = vmatprep.subr.bf16.mxu0 %v4010
    %5269 = vmatpush1.bf16.msra.mxu0 %v4009
    %5270 = vmatprep.mubr.bf16.mxu0 %v940
    %5271 = vmatmul.mubr.bf16.gmra.mrb[0].mxu0 %v939
    %v5272 = vpop.f32.mrb[0].mxu0
    %v5273 = vadd.f32 %v5232, %v5272
    %v5274 = vpop.f32.mrb[0].mxu0
    %v5275 = vadd.f32 %v5234, %v5274
    %v5276 = vpop.f32.mrb[0].mxu0
    %v5277 = vpop.f32.mrb[0].mxu0
    %5278 = vdwg.mxu0
    %5279 = vmatprep.subr.bf16.mxu0 %v3260
    %5280 = vmatpush1.bf16.msra.mxu0 %v3259
    %5281 = vmatprep.subr.bf16.mxu0 %v3276
    %5282 = vmatpush1.bf16.msra.mxu0 %v3275
    %5283 = vmatprep.subr.bf16.mxu0 %v3292
    %5284 = vmatpush1.bf16.msra.mxu0 %v3291
    %5285 = vmatprep.subr.bf16.mxu0 %v3308
    %5286 = vmatpush1.bf16.msra.mxu0 %v3307
    %5287 = vmatprep.subr.bf16.mxu0 %v3324
    %5288 = vmatpush1.bf16.msra.mxu0 %v3323
    %5289 = vmatprep.subr.bf16.mxu0 %v3340
    %5290 = vmatpush1.bf16.msra.mxu0 %v3339
    %5291 = vmatprep.subr.bf16.mxu0 %v3356
    %5292 = vmatpush1.bf16.msra.mxu0 %v3355
    %5293 = vmatprep.subr.bf16.mxu0 %v3372
    %5294 = vmatpush1.bf16.msra.mxu0 %v3371
    %5295 = vmatprep.subr.bf16.mxu0 %v3388
    %5296 = vmatpush1.bf16.msra.mxu0 %v3387
    %5297 = vmatprep.subr.bf16.mxu0 %v3404
    %5298 = vmatpush1.bf16.msra.mxu0 %v3403
    %5299 = vmatprep.subr.bf16.mxu0 %v3420
    %5300 = vmatpush1.bf16.msra.mxu0 %v3419
    %5301 = vmatprep.subr.bf16.mxu0 %v3436
    %5302 = vmatpush1.bf16.msra.mxu0 %v3435
    %5303 = vmatprep.subr.bf16.mxu0 %v3452
    %5304 = vmatpush1.bf16.msra.mxu0 %v3451
    %5305 = vmatprep.subr.bf16.mxu0 %v3468
    %5306 = vmatpush1.bf16.msra.mxu0 %v3467
    %5307 = vmatprep.subr.bf16.mxu0 %v3484
    %5308 = vmatpush1.bf16.msra.mxu0 %v3483
    %5309 = vmatprep.subr.bf16.mxu0 %v3500
    %5310 = vmatpush1.bf16.msra.mxu0 %v3499
    %5311 = vmatprep.mubr.bf16.mxu0 %v936
    %5312 = vmatmul.mubr.bf16.gmra.mrb[0].mxu0 %v935
    %v5313 = vpop.f32.mrb[0].mxu0
    %v5314 = vadd.f32 %v881, %v5313
    %v5315 = vpop.f32.mrb[0].mxu0
    %v5316 = vadd.f32 %v885, %v5315
    %v5317 = vpop.f32.mrb[0].mxu0
    %v5318 = vpop.f32.mrb[0].mxu0
    %5319 = vdwg.mxu0
    %5320 = vmatprep.subr.bf16.mxu0 %v3516
    %5321 = vmatpush1.bf16.msra.mxu0 %v3515
    %5322 = vmatprep.subr.bf16.mxu0 %v3532
    %5323 = vmatpush1.bf16.msra.mxu0 %v3531
    %5324 = vmatprep.subr.bf16.mxu0 %v3548
    %5325 = vmatpush1.bf16.msra.mxu0 %v3547
    %5326 = vmatprep.subr.bf16.mxu0 %v3564
    %5327 = vmatpush1.bf16.msra.mxu0 %v3563
    %5328 = vmatprep.subr.bf16.mxu0 %v3580
    %5329 = vmatpush1.bf16.msra.mxu0 %v3579
    %5330 = vmatprep.subr.bf16.mxu0 %v3596
    %5331 = vmatpush1.bf16.msra.mxu0 %v3595
    %5332 = vmatprep.subr.bf16.mxu0 %v3612
    %5333 = vmatpush1.bf16.msra.mxu0 %v3611
    %5334 = vmatprep.subr.bf16.mxu0 %v3628
    %5335 = vmatpush1.bf16.msra.mxu0 %v3627
    %5336 = vmatprep.subr.bf16.mxu0 %v3644
    %5337 = vmatpush1.bf16.msra.mxu0 %v3643
    %5338 = vmatprep.subr.bf16.mxu0 %v3660
    %5339 = vmatpush1.bf16.msra.mxu0 %v3659
    %5340 = vmatprep.subr.bf16.mxu0 %v3676
    %5341 = vmatpush1.bf16.msra.mxu0 %v3675
    %5342 = vmatprep.subr.bf16.mxu0 %v3692
    %5343 = vmatpush1.bf16.msra.mxu0 %v3691
    %5344 = vmatprep.subr.bf16.mxu0 %v3708
    %5345 = vmatpush1.bf16.msra.mxu0 %v3707
    %5346 = vmatprep.subr.bf16.mxu0 %v3724
    %5347 = vmatpush1.bf16.msra.mxu0 %v3723
    %5348 = vmatprep.subr.bf16.mxu0 %v3740
    %5349 = vmatpush1.bf16.msra.mxu0 %v3739
    %5350 = vmatprep.subr.bf16.mxu0 %v3756
    %5351 = vmatpush1.bf16.msra.mxu0 %v3755
    %5352 = vmatprep.mubr.bf16.mxu0 %v938
    %5353 = vmatmul.mubr.bf16.gmra.mrb[0].mxu0 %v937
    %v5354 = vpop.f32.mrb[0].mxu0
    %v5355 = vadd.f32 %v5314, %v5354
    %v5356 = vpop.f32.mrb[0].mxu0
    %v5357 = vadd.f32 %v5316, %v5356
    %v5358 = vpop.f32.mrb[0].mxu0
    %v5359 = vpop.f32.mrb[0].mxu0
    %5360 = vdwg.mxu0
    %5361 = vmatprep.subr.bf16.mxu0 %v3772
    %5362 = vmatpush1.bf16.msra.mxu0 %v3771
    %5363 = vmatprep.subr.bf16.mxu0 %v3788
    %5364 = vmatpush1.bf16.msra.mxu0 %v3787
    %5365 = vmatprep.subr.bf16.mxu0 %v3804
    %5366 = vmatpush1.bf16.msra.mxu0 %v3803
    %5367 = vmatprep.subr.bf16.mxu0 %v3820
    %5368 = vmatpush1.bf16.msra.mxu0 %v3819
    %5369 = vmatprep.subr.bf16.mxu0 %v3836
    %5370 = vmatpush1.bf16.msra.mxu0 %v3835
    %5371 = vmatprep.subr.bf16.mxu0 %v3852
    %5372 = vmatpush1.bf16.msra.mxu0 %v3851
    %5373 = vmatprep.subr.bf16.mxu0 %v3868
    %5374 = vmatpush1.bf16.msra.mxu0 %v3867
    %5375 = vmatprep.subr.bf16.mxu0 %v3884
    %5376 = vmatpush1.bf16.msra.mxu0 %v3883
    %5377 = vmatprep.subr.bf16.mxu0 %v3900
    %5378 = vmatpush1.bf16.msra.mxu0 %v3899
    %5379 = vmatprep.subr.bf16.mxu0 %v3916
    %5380 = vmatpush1.bf16.msra.mxu0 %v3915
    %5381 = vmatprep.subr.bf16.mxu0 %v3932
    %5382 = vmatpush1.bf16.msra.mxu0 %v3931
    %5383 = vmatprep.subr.bf16.mxu0 %v3948
    %5384 = vmatpush1.bf16.msra.mxu0 %v3947
    %5385 = vmatprep.subr.bf16.mxu0 %v3964
    %5386 = vmatpush1.bf16.msra.mxu0 %v3963
    %5387 = vmatprep.subr.bf16.mxu0 %v3980
    %5388 = vmatpush1.bf16.msra.mxu0 %v3979
    %5389 = vmatprep.subr.bf16.mxu0 %v3996
    %5390 = vmatpush1.bf16.msra.mxu0 %v3995
    %5391 = vmatprep.subr.bf16.mxu0 %v4012
    %5392 = vmatpush1.bf16.msra.mxu0 %v4011
    %5393 = vmatprep.mubr.bf16.mxu0 %v940
    %5394 = vmatmul.mubr.bf16.gmra.mrb[0].mxu0 %v939
    %v5395 = vpop.f32.mrb[0].mxu0
    %v5396 = vadd.f32 %v5355, %v5395
    %v5397 = vpop.f32.mrb[0].mxu0
    %v5398 = vadd.f32 %v5357, %v5397
    %v5399 = vpop.f32.mrb[0].mxu0
    %v5400 = vpop.f32.mrb[0].mxu0
    %5401 = vdwg.mxu0
    %5402 = vmatprep.subr.bf16.mxu0 %v3262
    %5403 = vmatpush1.bf16.msra.mxu0 %v3261
    %5404 = vmatprep.subr.bf16.mxu0 %v3278
    %5405 = vmatpush1.bf16.msra.mxu0 %v3277
    %5406 = vmatprep.subr.bf16.mxu0 %v3294
    %5407 = vmatpush1.bf16.msra.mxu0 %v3293
    %5408 = vmatprep.subr.bf16.mxu0 %v3310
    %5409 = vmatpush1.bf16.msra.mxu0 %v3309
    %5410 = vmatprep.subr.bf16.mxu0 %v3326
    %5411 = vmatpush1.bf16.msra.mxu0 %v3325
    %5412 = vmatprep.subr.bf16.mxu0 %v3342
    %5413 = vmatpush1.bf16.msra.mxu0 %v3341
    %5414 = vmatprep.subr.bf16.mxu0 %v3358
    %5415 = vmatpush1.bf16.msra.mxu0 %v3357
    %5416 = vmatprep.subr.bf16.mxu0 %v3374
    %5417 = vmatpush1.bf16.msra.mxu0 %v3373
    %5418 = vmatprep.subr.bf16.mxu0 %v3390
    %5419 = vmatpush1.bf16.msra.mxu0 %v3389
    %5420 = vmatprep.subr.bf16.mxu0 %v3406
    %5421 = vmatpush1.bf16.msra.mxu0 %v3405
    %5422 = vmatprep.subr.bf16.mxu0 %v3422
    %5423 = vmatpush1.bf16.msra.mxu0 %v3421
    %5424 = vmatprep.subr.bf16.mxu0 %v3438
    %5425 = vmatpush1.bf16.msra.mxu0 %v3437
    %5426 = vmatprep.subr.bf16.mxu0 %v3454
    %5427 = vmatpush1.bf16.msra.mxu0 %v3453
    %5428 = vmatprep.subr.bf16.mxu0 %v3470
    %5429 = vmatpush1.bf16.msra.mxu0 %v3469
    %5430 = vmatprep.subr.bf16.mxu0 %v3486
    %5431 = vmatpush1.bf16.msra.mxu0 %v3485
    %5432 = vmatprep.subr.bf16.mxu0 %v3502
    %5433 = vmatpush1.bf16.msra.mxu0 %v3501
    %5434 = vmatprep.mubr.bf16.mxu0 %v936
    %5435 = vmatmul.mubr.bf16.gmra.mrb[0].mxu0 %v935
    %v5436 = vpop.f32.mrb[0].mxu0
    %v5437 = vadd.f32 %v889, %v5436
    %v5438 = vpop.f32.mrb[0].mxu0
    %v5439 = vadd.f32 %v893, %v5438
    %v5440 = vpop.f32.mrb[0].mxu0
    %v5441 = vpop.f32.mrb[0].mxu0
    %5442 = vdwg.mxu0
    %5443 = vmatprep.subr.bf16.mxu0 %v3518
    %5444 = vmatpush1.bf16.msra.mxu0 %v3517
    %5445 = vmatprep.subr.bf16.mxu0 %v3534
    %5446 = vmatpush1.bf16.msra.mxu0 %v3533
    %5447 = vmatprep.subr.bf16.mxu0 %v3550
    %5448 = vmatpush1.bf16.msra.mxu0 %v3549
    %5449 = vmatprep.subr.bf16.mxu0 %v3566
    %5450 = vmatpush1.bf16.msra.mxu0 %v3565
    %5451 = vmatprep.subr.bf16.mxu0 %v3582
    %5452 = vmatpush1.bf16.msra.mxu0 %v3581
    %5453 = vmatprep.subr.bf16.mxu0 %v3598
    %5454 = vmatpush1.bf16.msra.mxu0 %v3597
    %5455 = vmatprep.subr.bf16.mxu0 %v3614
    %5456 = vmatpush1.bf16.msra.mxu0 %v3613
    %5457 = vmatprep.subr.bf16.mxu0 %v3630
    %5458 = vmatpush1.bf16.msra.mxu0 %v3629
    %5459 = vmatprep.subr.bf16.mxu0 %v3646
    %5460 = vmatpush1.bf16.msra.mxu0 %v3645
    %5461 = vmatprep.subr.bf16.mxu0 %v3662
    %5462 = vmatpush1.bf16.msra.mxu0 %v3661
    %5463 = vmatprep.subr.bf16.mxu0 %v3678
    %5464 = vmatpush1.bf16.msra.mxu0 %v3677
    %5465 = vmatprep.subr.bf16.mxu0 %v3694
    %5466 = vmatpush1.bf16.msra.mxu0 %v3693
    %5467 = vmatprep.subr.bf16.mxu0 %v3710
    %5468 = vmatpush1.bf16.msra.mxu0 %v3709
    %5469 = vmatprep.subr.bf16.mxu0 %v3726
    %5470 = vmatpush1.bf16.msra.mxu0 %v3725
    %5471 = vmatprep.subr.bf16.mxu0 %v3742
    %5472 = vmatpush1.bf16.msra.mxu0 %v3741
    %5473 = vmatprep.subr.bf16.mxu0 %v3758
    %5474 = vmatpush1.bf16.msra.mxu0 %v3757
    %5475 = vmatprep.mubr.bf16.mxu0 %v938
    %5476 = vmatmul.mubr.bf16.gmra.mrb[0].mxu0 %v937
    %v5477 = vpop.f32.mrb[0].mxu0
    %v5478 = vadd.f32 %v5437, %v5477
    %v5479 = vpop.f32.mrb[0].mxu0
    %v5480 = vadd.f32 %v5439, %v5479
    %v5481 = vpop.f32.mrb[0].mxu0
    %v5482 = vpop.f32.mrb[0].mxu0
    %5483 = vdwg.mxu0
    %5484 = vmatprep.subr.bf16.mxu0 %v3774
    %5485 = vmatpush1.bf16.msra.mxu0 %v3773
    %5486 = vmatprep.subr.bf16.mxu0 %v3790
    %5487 = vmatpush1.bf16.msra.mxu0 %v3789
    %5488 = vmatprep.subr.bf16.mxu0 %v3806
    %5489 = vmatpush1.bf16.msra.mxu0 %v3805
    %5490 = vmatprep.subr.bf16.mxu0 %v3822
    %5491 = vmatpush1.bf16.msra.mxu0 %v3821
    %5492 = vmatprep.subr.bf16.mxu0 %v3838
    %5493 = vmatpush1.bf16.msra.mxu0 %v3837
    %5494 = vmatprep.subr.bf16.mxu0 %v3854
    %5495 = vmatpush1.bf16.msra.mxu0 %v3853
    %5496 = vmatprep.subr.bf16.mxu0 %v3870
    %5497 = vmatpush1.bf16.msra.mxu0 %v3869
    %5498 = vmatprep.subr.bf16.mxu0 %v3886
    %5499 = vmatpush1.bf16.msra.mxu0 %v3885
    %5500 = vmatprep.subr.bf16.mxu0 %v3902
    %5501 = vmatpush1.bf16.msra.mxu0 %v3901
    %5502 = vmatprep.subr.bf16.mxu0 %v3918
    %5503 = vmatpush1.bf16.msra.mxu0 %v3917
    %5504 = vmatprep.subr.bf16.mxu0 %v3934
    %5505 = vmatpush1.bf16.msra.mxu0 %v3933
    %5506 = vmatprep.subr.bf16.mxu0 %v3950
    %5507 = vmatpush1.bf16.msra.mxu0 %v3949
    %5508 = vmatprep.subr.bf16.mxu0 %v3966
    %5509 = vmatpush1.bf16.msra.mxu0 %v3965
    %5510 = vmatprep.subr.bf16.mxu0 %v3982
    %5511 = vmatpush1.bf16.msra.mxu0 %v3981
    %5512 = vmatprep.subr.bf16.mxu0 %v3998
    %5513 = vmatpush1.bf16.msra.mxu0 %v3997
    %5514 = vmatprep.subr.bf16.mxu0 %v4014
    %5515 = vmatpush1.bf16.msra.mxu0 %v4013
    %5516 = vmatprep.mubr.bf16.mxu0 %v940
    %5517 = vmatmul.mubr.bf16.gmra.mrb[0].mxu0 %v939
    %v5518 = vpop.f32.mrb[0].mxu0
    %v5519 = vadd.f32 %v5478, %v5518
    %v5520 = vpop.f32.mrb[0].mxu0
    %v5521 = vadd.f32 %v5480, %v5520
    %v5522 = vpop.f32.mrb[0].mxu0
    %v5523 = vpop.f32.mrb[0].mxu0
    %5524 = vdwg.mxu0
    %5525 = vmatprep.subr.bf16.mxu0 %v3264
    %5526 = vmatpush1.bf16.msra.mxu0 %v3263
    %5527 = vmatprep.subr.bf16.mxu0 %v3280
    %5528 = vmatpush1.bf16.msra.mxu0 %v3279
    %5529 = vmatprep.subr.bf16.mxu0 %v3296
    %5530 = vmatpush1.bf16.msra.mxu0 %v3295
    %5531 = vmatprep.subr.bf16.mxu0 %v3312
    %5532 = vmatpush1.bf16.msra.mxu0 %v3311
    %5533 = vmatprep.subr.bf16.mxu0 %v3328
    %5534 = vmatpush1.bf16.msra.mxu0 %v3327
    %5535 = vmatprep.subr.bf16.mxu0 %v3344
    %5536 = vmatpush1.bf16.msra.mxu0 %v3343
    %5537 = vmatprep.subr.bf16.mxu0 %v3360
    %5538 = vmatpush1.bf16.msra.mxu0 %v3359
    %5539 = vmatprep.subr.bf16.mxu0 %v3376
    %5540 = vmatpush1.bf16.msra.mxu0 %v3375
    %5541 = vmatprep.subr.bf16.mxu0 %v3392
    %5542 = vmatpush1.bf16.msra.mxu0 %v3391
    %5543 = vmatprep.subr.bf16.mxu0 %v3408
    %5544 = vmatpush1.bf16.msra.mxu0 %v3407
    %5545 = vmatprep.subr.bf16.mxu0 %v3424
    %5546 = vmatpush1.bf16.msra.mxu0 %v3423
    %5547 = vmatprep.subr.bf16.mxu0 %v3440
    %5548 = vmatpush1.bf16.msra.mxu0 %v3439
    %5549 = vmatprep.subr.bf16.mxu0 %v3456
    %5550 = vmatpush1.bf16.msra.mxu0 %v3455
    %5551 = vmatprep.subr.bf16.mxu0 %v3472
    %5552 = vmatpush1.bf16.msra.mxu0 %v3471
    %5553 = vmatprep.subr.bf16.mxu0 %v3488
    %5554 = vmatpush1.bf16.msra.mxu0 %v3487
    %5555 = vmatprep.subr.bf16.mxu0 %v3504
    %5556 = vmatpush1.bf16.msra.mxu0 %v3503
    %5557 = vmatprep.mubr.bf16.mxu0 %v936
    %5558 = vmatmul.mubr.bf16.gmra.mrb[0].mxu0 %v935
    %v5559 = vpop.f32.mrb[0].mxu0
    %v5560 = vadd.f32 %v897, %v5559
    %v5561 = vpop.f32.mrb[0].mxu0
    %v5562 = vadd.f32 %v901, %v5561
    %v5563 = vpop.f32.mrb[0].mxu0
    %v5564 = vpop.f32.mrb[0].mxu0
    %5565 = vdwg.mxu0
    %5566 = vmatprep.subr.bf16.mxu0 %v3520
    %5567 = vmatpush1.bf16.msra.mxu0 %v3519
    %5568 = vmatprep.subr.bf16.mxu0 %v3536
    %5569 = vmatpush1.bf16.msra.mxu0 %v3535
    %5570 = vmatprep.subr.bf16.mxu0 %v3552
    %5571 = vmatpush1.bf16.msra.mxu0 %v3551
    %5572 = vmatprep.subr.bf16.mxu0 %v3568
    %5573 = vmatpush1.bf16.msra.mxu0 %v3567
    %5574 = vmatprep.subr.bf16.mxu0 %v3584
    %5575 = vmatpush1.bf16.msra.mxu0 %v3583
    %5576 = vmatprep.subr.bf16.mxu0 %v3600
    %5577 = vmatpush1.bf16.msra.mxu0 %v3599
    %5578 = vmatprep.subr.bf16.mxu0 %v3616
    %5579 = vmatpush1.bf16.msra.mxu0 %v3615
    %5580 = vmatprep.subr.bf16.mxu0 %v3632
    %5581 = vmatpush1.bf16.msra.mxu0 %v3631
    %5582 = vmatprep.subr.bf16.mxu0 %v3648
    %5583 = vmatpush1.bf16.msra.mxu0 %v3647
    %5584 = vmatprep.subr.bf16.mxu0 %v3664
    %5585 = vmatpush1.bf16.msra.mxu0 %v3663
    %5586 = vmatprep.subr.bf16.mxu0 %v3680
    %5587 = vmatpush1.bf16.msra.mxu0 %v3679
    %5588 = vmatprep.subr.bf16.mxu0 %v3696
    %5589 = vmatpush1.bf16.msra.mxu0 %v3695
    %5590 = vmatprep.subr.bf16.mxu0 %v3712
    %5591 = vmatpush1.bf16.msra.mxu0 %v3711
    %5592 = vmatprep.subr.bf16.mxu0 %v3728
    %5593 = vmatpush1.bf16.msra.mxu0 %v3727
    %5594 = vmatprep.subr.bf16.mxu0 %v3744
    %5595 = vmatpush1.bf16.msra.mxu0 %v3743
    %5596 = vmatprep.subr.bf16.mxu0 %v3760
    %5597 = vmatpush1.bf16.msra.mxu0 %v3759
    %5598 = vmatprep.mubr.bf16.mxu0 %v938
    %5599 = vmatmul.mubr.bf16.gmra.mrb[0].mxu0 %v937
    %v5600 = vpop.f32.mrb[0].mxu0
    %v5601 = vadd.f32 %v5560, %v5600
    %v5602 = vpop.f32.mrb[0].mxu0
    %v5603 = vadd.f32 %v5562, %v5602
    %v5604 = vpop.f32.mrb[0].mxu0
    %v5605 = vpop.f32.mrb[0].mxu0
    %5606 = vdwg.mxu0
    %5607 = vmatprep.subr.bf16.mxu0 %v3776
    %5608 = vmatpush1.bf16.msra.mxu0 %v3775
    %5609 = vmatprep.subr.bf16.mxu0 %v3792
    %5610 = vmatpush1.bf16.msra.mxu0 %v3791
    %5611 = vmatprep.subr.bf16.mxu0 %v3808
    %5612 = vmatpush1.bf16.msra.mxu0 %v3807
    %5613 = vmatprep.subr.bf16.mxu0 %v3824
    %5614 = vmatpush1.bf16.msra.mxu0 %v3823
    %5615 = vmatprep.subr.bf16.mxu0 %v3840
    %5616 = vmatpush1.bf16.msra.mxu0 %v3839
    %5617 = vmatprep.subr.bf16.mxu0 %v3856
    %5618 = vmatpush1.bf16.msra.mxu0 %v3855
    %5619 = vmatprep.subr.bf16.mxu0 %v3872
    %5620 = vmatpush1.bf16.msra.mxu0 %v3871
    %5621 = vmatprep.subr.bf16.mxu0 %v3888
    %5622 = vmatpush1.bf16.msra.mxu0 %v3887
    %5623 = vmatprep.subr.bf16.mxu0 %v3904
    %5624 = vmatpush1.bf16.msra.mxu0 %v3903
    %5625 = vmatprep.subr.bf16.mxu0 %v3920
    %5626 = vmatpush1.bf16.msra.mxu0 %v3919
    %5627 = vmatprep.subr.bf16.mxu0 %v3936
    %5628 = vmatpush1.bf16.msra.mxu0 %v3935
    %5629 = vmatprep.subr.bf16.mxu0 %v3952
    %5630 = vmatpush1.bf16.msra.mxu0 %v3951
    %5631 = vmatprep.subr.bf16.mxu0 %v3968
    %5632 = vmatpush1.bf16.msra.mxu0 %v3967
    %5633 = vmatprep.subr.bf16.mxu0 %v3984
    %5634 = vmatpush1.bf16.msra.mxu0 %v3983
    %5635 = vmatprep.subr.bf16.mxu0 %v4000
    %5636 = vmatpush1.bf16.msra.mxu0 %v3999
    %5637 = vmatprep.subr.bf16.mxu0 %v4016
    %5638 = vmatpush1.bf16.msra.mxu0 %v4015
    %5639 = vmatprep.mubr.bf16.mxu0 %v940
    %5640 = vmatmul.mubr.bf16.gmra.mrb[0].mxu0 %v939
    %v5641 = vpop.f32.mrb[0].mxu0
    %v5642 = vadd.f32 %v5601, %v5641
    %v5643 = vpop.f32.mrb[0].mxu0
    %v5644 = vadd.f32 %v5603, %v5643
    %v5645 = vpop.f32.mrb[0].mxu0
    %v5646 = vpop.f32.mrb[0].mxu0
    %5647 = vdwg.mxu0
    %5648 = vmatprep.subr.bf16.mxu0 %v3266
    %5649 = vmatpush1.bf16.msra.mxu0 %v3265
    %5650 = vmatprep.subr.bf16.mxu0 %v3282
    %5651 = vmatpush1.bf16.msra.mxu0 %v3281
    %5652 = vmatprep.subr.bf16.mxu0 %v3298
    %5653 = vmatpush1.bf16.msra.mxu0 %v3297
    %5654 = vmatprep.subr.bf16.mxu0 %v3314
    %5655 = vmatpush1.bf16.msra.mxu0 %v3313
    %5656 = vmatprep.subr.bf16.mxu0 %v3330
    %5657 = vmatpush1.bf16.msra.mxu0 %v3329
    %5658 = vmatprep.subr.bf16.mxu0 %v3346
    %5659 = vmatpush1.bf16.msra.mxu0 %v3345
    %5660 = vmatprep.subr.bf16.mxu0 %v3362
    %5661 = vmatpush1.bf16.msra.mxu0 %v3361
    %5662 = vmatprep.subr.bf16.mxu0 %v3378
    %5663 = vmatpush1.bf16.msra.mxu0 %v3377
    %5664 = vmatprep.subr.bf16.mxu0 %v3394
    %5665 = vmatpush1.bf16.msra.mxu0 %v3393
    %5666 = vmatprep.subr.bf16.mxu0 %v3410
    %5667 = vmatpush1.bf16.msra.mxu0 %v3409
    %5668 = vmatprep.subr.bf16.mxu0 %v3426
    %5669 = vmatpush1.bf16.msra.mxu0 %v3425
    %5670 = vmatprep.subr.bf16.mxu0 %v3442
    %5671 = vmatpush1.bf16.msra.mxu0 %v3441
    %5672 = vmatprep.subr.bf16.mxu0 %v3458
    %5673 = vmatpush1.bf16.msra.mxu0 %v3457
    %5674 = vmatprep.subr.bf16.mxu0 %v3474
    %5675 = vmatpush1.bf16.msra.mxu0 %v3473
    %5676 = vmatprep.subr.bf16.mxu0 %v3490
    %5677 = vmatpush1.bf16.msra.mxu0 %v3489
    %5678 = vmatprep.subr.bf16.mxu0 %v3506
    %5679 = vmatpush1.bf16.msra.mxu0 %v3505
    %5680 = vmatprep.mubr.bf16.mxu0 %v936
    %5681 = vmatmul.mubr.bf16.gmra.mrb[0].mxu0 %v935
    %v5682 = vpop.f32.mrb[0].mxu0
    %v5683 = vadd.f32 %v905, %v5682
    %v5684 = vpop.f32.mrb[0].mxu0
    %v5685 = vadd.f32 %v909, %v5684
    %v5686 = vpop.f32.mrb[0].mxu0
    %v5687 = vpop.f32.mrb[0].mxu0
    %5688 = vdwg.mxu0
    %5689 = vmatprep.subr.bf16.mxu0 %v3522
    %5690 = vmatpush1.bf16.msra.mxu0 %v3521
    %5691 = vmatprep.subr.bf16.mxu0 %v3538
    %5692 = vmatpush1.bf16.msra.mxu0 %v3537
    %5693 = vmatprep.subr.bf16.mxu0 %v3554
    %5694 = vmatpush1.bf16.msra.mxu0 %v3553
    %5695 = vmatprep.subr.bf16.mxu0 %v3570
    %5696 = vmatpush1.bf16.msra.mxu0 %v3569
    %5697 = vmatprep.subr.bf16.mxu0 %v3586
    %5698 = vmatpush1.bf16.msra.mxu0 %v3585
    %5699 = vmatprep.subr.bf16.mxu0 %v3602
    %5700 = vmatpush1.bf16.msra.mxu0 %v3601
    %5701 = vmatprep.subr.bf16.mxu0 %v3618
    %5702 = vmatpush1.bf16.msra.mxu0 %v3617
    %5703 = vmatprep.subr.bf16.mxu0 %v3634
    %5704 = vmatpush1.bf16.msra.mxu0 %v3633
    %5705 = vmatprep.subr.bf16.mxu0 %v3650
    %5706 = vmatpush1.bf16.msra.mxu0 %v3649
    %5707 = vmatprep.subr.bf16.mxu0 %v3666
    %5708 = vmatpush1.bf16.msra.mxu0 %v3665
    %5709 = vmatprep.subr.bf16.mxu0 %v3682
    %5710 = vmatpush1.bf16.msra.mxu0 %v3681
    %5711 = vmatprep.subr.bf16.mxu0 %v3698
    %5712 = vmatpush1.bf16.msra.mxu0 %v3697
    %5713 = vmatprep.subr.bf16.mxu0 %v3714
    %5714 = vmatpush1.bf16.msra.mxu0 %v3713
    %5715 = vmatprep.subr.bf16.mxu0 %v3730
    %5716 = vmatpush1.bf16.msra.mxu0 %v3729
    %5717 = vmatprep.subr.bf16.mxu0 %v3746
    %5718 = vmatpush1.bf16.msra.mxu0 %v3745
    %5719 = vmatprep.subr.bf16.mxu0 %v3762
    %5720 = vmatpush1.bf16.msra.mxu0 %v3761
    %5721 = vmatprep.mubr.bf16.mxu0 %v938
    %5722 = vmatmul.mubr.bf16.gmra.mrb[0].mxu0 %v937
    %v5723 = vpop.f32.mrb[0].mxu0
    %v5724 = vadd.f32 %v5683, %v5723
    %v5725 = vpop.f32.mrb[0].mxu0
    %v5726 = vadd.f32 %v5685, %v5725
    %v5727 = vpop.f32.mrb[0].mxu0
    %v5728 = vpop.f32.mrb[0].mxu0
    %5729 = vdwg.mxu0
    %5730 = vmatprep.subr.bf16.mxu0 %v3778
    %5731 = vmatpush1.bf16.msra.mxu0 %v3777
    %5732 = vmatprep.subr.bf16.mxu0 %v3794
    %5733 = vmatpush1.bf16.msra.mxu0 %v3793
    %5734 = vmatprep.subr.bf16.mxu0 %v3810
    %5735 = vmatpush1.bf16.msra.mxu0 %v3809
    %5736 = vmatprep.subr.bf16.mxu0 %v3826
    %5737 = vmatpush1.bf16.msra.mxu0 %v3825
    %5738 = vmatprep.subr.bf16.mxu0 %v3842
    %5739 = vmatpush1.bf16.msra.mxu0 %v3841
    %5740 = vmatprep.subr.bf16.mxu0 %v3858
    %5741 = vmatpush1.bf16.msra.mxu0 %v3857
    %5742 = vmatprep.subr.bf16.mxu0 %v3874
    %5743 = vmatpush1.bf16.msra.mxu0 %v3873
    %5744 = vmatprep.subr.bf16.mxu0 %v3890
    %5745 = vmatpush1.bf16.msra.mxu0 %v3889
    %5746 = vmatprep.subr.bf16.mxu0 %v3906
    %5747 = vmatpush1.bf16.msra.mxu0 %v3905
    %5748 = vmatprep.subr.bf16.mxu0 %v3922
    %5749 = vmatpush1.bf16.msra.mxu0 %v3921
    %5750 = vmatprep.subr.bf16.mxu0 %v3938
    %5751 = vmatpush1.bf16.msra.mxu0 %v3937
    %5752 = vmatprep.subr.bf16.mxu0 %v3954
    %5753 = vmatpush1.bf16.msra.mxu0 %v3953
    %5754 = vmatprep.subr.bf16.mxu0 %v3970
    %5755 = vmatpush1.bf16.msra.mxu0 %v3969
    %5756 = vmatprep.subr.bf16.mxu0 %v3986
    %5757 = vmatpush1.bf16.msra.mxu0 %v3985
    %5758 = vmatprep.subr.bf16.mxu0 %v4002
    %5759 = vmatpush1.bf16.msra.mxu0 %v4001
    %5760 = vmatprep.subr.bf16.mxu0 %v4018
    %5761 = vmatpush1.bf16.msra.mxu0 %v4017
    %5762 = vmatprep.mubr.bf16.mxu0 %v940
    %5763 = vmatmul.mubr.bf16.gmra.mrb[0].mxu0 %v939
    %v5764 = vpop.f32.mrb[0].mxu0
    %v5765 = vadd.f32 %v5724, %v5764
    %v5766 = vpop.f32.mrb[0].mxu0
    %v5767 = vadd.f32 %v5726, %v5766
    %v5768 = vpop.f32.mrb[0].mxu0
    %v5769 = vpop.f32.mrb[0].mxu0
    %5770 = vdwg.mxu0
    %v5771 = vmax.f32 %v4904, 0.0
    %v5772 = vmax.f32 %v4906, 0.0
    %v5773 = vmax.f32 %v5027, 0.0
    %v5774 = vmax.f32 %v5029, 0.0
    %v5775 = vmax.f32 %v5150, 0.0
    %v5776 = vmax.f32 %v5152, 0.0
    %v5777 = vmax.f32 %v5273, 0.0
    %v5778 = vmax.f32 %v5275, 0.0
    %v5779 = vmax.f32 %v5396, 0.0
    %v5780 = vmax.f32 %v5398, 0.0
    %v5781 = vmax.f32 %v5519, 0.0
    %v5782 = vmax.f32 %v5521, 0.0
    %v5783 = vmax.f32 %v5642, 0.0
    %v5784 = vmax.f32 %v5644, 0.0
    %v5785 = vmax.f32 %v5765, 0.0
    %v5786 = vmax.f32 %v5767, 0.0
    %v5787 = vpack.c.bf16 %v5771, %v5771
    %v5788 = vpack.c.bf16 %v5772, %v5772
    %v5789 = vpack.c.bf16 %v5773, %v5773
    %v5790 = vpack.c.bf16 %v5774, %v5774
    %v5791 = vpack.c.bf16 %v5775, %v5775
    %v5792 = vpack.c.bf16 %v5776, %v5776
    %v5793 = vpack.c.bf16 %v5777, %v5777
    %v5794 = vpack.c.bf16 %v5778, %v5778
    %v5795 = vpack.c.bf16 %v5779, %v5779
    %v5796 = vpack.c.bf16 %v5780, %v5780
    %v5797 = vpack.c.bf16 %v5781, %v5781
    %v5798 = vpack.c.bf16 %v5782, %v5782
    %v5799 = vpack.c.bf16 %v5783, %v5783
    %v5800 = vpack.c.bf16 %v5784, %v5784
    %v5801 = vpack.c.bf16 %v5785, %v5785
    %v5802 = vpack.c.bf16 %v5786, %v5786
    %v5803 = vld [vmem:[#allocation6] sm:$0xff]
    %v5804 = vld [vmem:[#allocation6 + $0x8] sm:$0xff]
    %v5805 = vld [vmem:[#allocation6 + $0x10] sm:$0xff]
    %v5806 = vld [vmem:[#allocation6 + $0x18] sm:$0xff]
    %v5807 = vld [vmem:[#allocation6 + $0x20] sm:$0xff]
    %v5808 = vld [vmem:[#allocation6 + $0x28] sm:$0xff]
    %v5809 = vld [vmem:[#allocation6 + $0x30] sm:$0xff]
    %v5810 = vld [vmem:[#allocation6 + $0x38] sm:$0xff]
    %v5811 = vld [vmem:[#allocation6 + $0x40] sm:$0xff]
    %v5812 = vld [vmem:[#allocation6 + $0x48] sm:$0xff]
    %v5813 = vld [vmem:[#allocation6 + $0x50] sm:$0xff]
    %v5814 = vld [vmem:[#allocation6 + $0x58] sm:$0xff]
    %v5815 = vld [vmem:[#allocation6 + $0x60] sm:$0xff]
    %v5816 = vld [vmem:[#allocation6 + $0x68] sm:$0xff]
    %v5817 = vld [vmem:[#allocation6 + $0x70] sm:$0xff]
    %v5818 = vld [vmem:[#allocation6 + $0x78] sm:$0xff]
    %v5819 = vld [vmem:[#allocation6 + $0x80] sm:$0xff]
    %v5820 = vld [vmem:[#allocation6 + $0x88] sm:$0xff]
    %v5821 = vld [vmem:[#allocation6 + $0x90] sm:$0xff]
    %v5822 = vld [vmem:[#allocation6 + $0x98] sm:$0xff]
    %v5823 = vld [vmem:[#allocation6 + $0xa0] sm:$0xff]
    %v5824 = vld [vmem:[#allocation6 + $0xa8] sm:$0xff]
    %v5825 = vld [vmem:[#allocation6 + $0xb0] sm:$0xff]
    %v5826 = vld [vmem:[#allocation6 + $0xb8] sm:$0xff]
    %v5827 = vld [vmem:[#allocation6 + $0xc0] sm:$0xff]
    %v5828 = vld [vmem:[#allocation6 + $0xc8] sm:$0xff]
    %v5829 = vld [vmem:[#allocation6 + $0xd0] sm:$0xff]
    %v5830 = vld [vmem:[#allocation6 + $0xd8] sm:$0xff]
    %v5831 = vld [vmem:[#allocation6 + $0xe0] sm:$0xff]
    %v5832 = vld [vmem:[#allocation6 + $0xe8] sm:$0xff]
    %v5833 = vld [vmem:[#allocation6 + $0xf0] sm:$0xff]
    %v5834 = vld [vmem:[#allocation6 + $0xf8] sm:$0xff]
    %v5835 = vld [vmem:[#allocation6 + $0x100] sm:$0xff]
    %v5836 = vld [vmem:[#allocation6 + $0x108] sm:$0xff]
    %v5837 = vld [vmem:[#allocation6 + $0x110] sm:$0xff]
    %v5838 = vld [vmem:[#allocation6 + $0x118] sm:$0xff]
    %v5839 = vld [vmem:[#allocation6 + $0x120] sm:$0xff]
    %v5840 = vld [vmem:[#allocation6 + $0x128] sm:$0xff]
    %v5841 = vld [vmem:[#allocation6 + $0x130] sm:$0xff]
    %v5842 = vld [vmem:[#allocation6 + $0x138] sm:$0xff]
    %v5843 = vld [vmem:[#allocation6 + $0x140] sm:$0xff]
    %v5844 = vld [vmem:[#allocation6 + $0x148] sm:$0xff]
    %v5845 = vld [vmem:[#allocation6 + $0x150] sm:$0xff]
    %v5846 = vld [vmem:[#allocation6 + $0x158] sm:$0xff]
    %v5847 = vld [vmem:[#allocation6 + $0x160] sm:$0xff]
    %v5848 = vld [vmem:[#allocation6 + $0x168] sm:$0xff]
    %v5849 = vld [vmem:[#allocation6 + $0x170] sm:$0xff]
    %v5850 = vld [vmem:[#allocation6 + $0x178] sm:$0xff]
    %v5851 = vld [vmem:[#allocation6 + $0x180] sm:$0xff]
    %v5852 = vld [vmem:[#allocation6 + $0x188] sm:$0xff]
    %v5853 = vld [vmem:[#allocation6 + $0x190] sm:$0xff]
    %v5854 = vld [vmem:[#allocation6 + $0x198] sm:$0xff]
    %v5855 = vld [vmem:[#allocation6 + $0x1a0] sm:$0xff]
    %v5856 = vld [vmem:[#allocation6 + $0x1a8] sm:$0xff]
    %v5857 = vld [vmem:[#allocation6 + $0x1b0] sm:$0xff]
    %v5858 = vld [vmem:[#allocation6 + $0x1b8] sm:$0xff]
    %v5859 = vld [vmem:[#allocation6 + $0x1c0] sm:$0xff]
    %v5860 = vld [vmem:[#allocation6 + $0x1c8] sm:$0xff]
    %v5861 = vld [vmem:[#allocation6 + $0x1d0] sm:$0xff]
    %v5862 = vld [vmem:[#allocation6 + $0x1d8] sm:$0xff]
    %v5863 = vld [vmem:[#allocation6 + $0x1e0] sm:$0xff]
    %v5864 = vld [vmem:[#allocation6 + $0x1e8] sm:$0xff]
    %v5865 = vld [vmem:[#allocation6 + $0x1f0] sm:$0xff]
    %v5866 = vld [vmem:[#allocation6 + $0x1f8] sm:$0xff]
    %v5867 = vld [vmem:[#allocation6 + $0x200] sm:$0xff]
    %v5868 = vld [vmem:[#allocation6 + $0x208] sm:$0xff]
    %v5869 = vld [vmem:[#allocation6 + $0x210] sm:$0xff]
    %v5870 = vld [vmem:[#allocation6 + $0x218] sm:$0xff]
    %v5871 = vld [vmem:[#allocation6 + $0x220] sm:$0xff]
    %v5872 = vld [vmem:[#allocation6 + $0x228] sm:$0xff]
    %v5873 = vld [vmem:[#allocation6 + $0x230] sm:$0xff]
    %v5874 = vld [vmem:[#allocation6 + $0x238] sm:$0xff]
    %v5875 = vld [vmem:[#allocation6 + $0x240] sm:$0xff]
    %v5876 = vld [vmem:[#allocation6 + $0x248] sm:$0xff]
    %v5877 = vld [vmem:[#allocation6 + $0x250] sm:$0xff]
    %v5878 = vld [vmem:[#allocation6 + $0x258] sm:$0xff]
    %v5879 = vld [vmem:[#allocation6 + $0x260] sm:$0xff]
    %v5880 = vld [vmem:[#allocation6 + $0x268] sm:$0xff]
    %v5881 = vld [vmem:[#allocation6 + $0x270] sm:$0xff]
    %v5882 = vld [vmem:[#allocation6 + $0x278] sm:$0xff]
    %v5883 = vld [vmem:[#allocation6 + $0x280] sm:$0xff]
    %v5884 = vld [vmem:[#allocation6 + $0x288] sm:$0xff]
    %v5885 = vld [vmem:[#allocation6 + $0x290] sm:$0xff]
    %v5886 = vld [vmem:[#allocation6 + $0x298] sm:$0xff]
    %v5887 = vld [vmem:[#allocation6 + $0x2a0] sm:$0xff]
    %v5888 = vld [vmem:[#allocation6 + $0x2a8] sm:$0xff]
    %v5889 = vld [vmem:[#allocation6 + $0x2b0] sm:$0xff]
    %v5890 = vld [vmem:[#allocation6 + $0x2b8] sm:$0xff]
    %v5891 = vld [vmem:[#allocation6 + $0x2c0] sm:$0xff]
    %v5892 = vld [vmem:[#allocation6 + $0x2c8] sm:$0xff]
    %v5893 = vld [vmem:[#allocation6 + $0x2d0] sm:$0xff]
    %v5894 = vld [vmem:[#allocation6 + $0x2d8] sm:$0xff]
    %v5895 = vld [vmem:[#allocation6 + $0x2e0] sm:$0xff]
    %v5896 = vld [vmem:[#allocation6 + $0x2e8] sm:$0xff]
    %v5897 = vld [vmem:[#allocation6 + $0x2f0] sm:$0xff]
    %v5898 = vld [vmem:[#allocation6 + $0x2f8] sm:$0xff]
    %v5899 = vld [vmem:[#allocation6 + $0x300] sm:$0xff]
    %v5900 = vld [vmem:[#allocation6 + $0x308] sm:$0xff]
    %v5901 = vld [vmem:[#allocation6 + $0x310] sm:$0xff]
    %v5902 = vld [vmem:[#allocation6 + $0x318] sm:$0xff]
    %v5903 = vld [vmem:[#allocation6 + $0x320] sm:$0xff]
    %v5904 = vld [vmem:[#allocation6 + $0x328] sm:$0xff]
    %v5905 = vld [vmem:[#allocation6 + $0x330] sm:$0xff]
    %v5906 = vld [vmem:[#allocation6 + $0x338] sm:$0xff]
    %v5907 = vld [vmem:[#allocation6 + $0x340] sm:$0xff]
    %v5908 = vld [vmem:[#allocation6 + $0x348] sm:$0xff]
    %v5909 = vld [vmem:[#allocation6 + $0x350] sm:$0xff]
    %v5910 = vld [vmem:[#allocation6 + $0x358] sm:$0xff]
    %v5911 = vld [vmem:[#allocation6 + $0x360] sm:$0xff]
    %v5912 = vld [vmem:[#allocation6 + $0x368] sm:$0xff]
    %v5913 = vld [vmem:[#allocation6 + $0x370] sm:$0xff]
    %v5914 = vld [vmem:[#allocation6 + $0x378] sm:$0xff]
    %v5915 = vld [vmem:[#allocation6 + $0x380] sm:$0xff]
    %v5916 = vld [vmem:[#allocation6 + $0x388] sm:$0xff]
    %v5917 = vld [vmem:[#allocation6 + $0x390] sm:$0xff]
    %v5918 = vld [vmem:[#allocation6 + $0x398] sm:$0xff]
    %v5919 = vld [vmem:[#allocation6 + $0x3a0] sm:$0xff]
    %v5920 = vld [vmem:[#allocation6 + $0x3a8] sm:$0xff]
    %v5921 = vld [vmem:[#allocation6 + $0x3b0] sm:$0xff]
    %v5922 = vld [vmem:[#allocation6 + $0x3b8] sm:$0xff]
    %v5923 = vld [vmem:[#allocation6 + $0x3c0] sm:$0xff]
    %v5924 = vld [vmem:[#allocation6 + $0x3c8] sm:$0xff]
    %v5925 = vld [vmem:[#allocation6 + $0x3d0] sm:$0xff]
    %v5926 = vld [vmem:[#allocation6 + $0x3d8] sm:$0xff]
    %v5927 = vld [vmem:[#allocation6 + $0x3e0] sm:$0xff]
    %v5928 = vld [vmem:[#allocation6 + $0x3e8] sm:$0xff]
    %v5929 = vld [vmem:[#allocation6 + $0x3f0] sm:$0xff]
    %v5930 = vld [vmem:[#allocation6 + $0x3f8] sm:$0xff]
    %v5931 = vld [vmem:[#allocation6 + $0x400] sm:$0xff]
    %v5932 = vld [vmem:[#allocation6 + $0x408] sm:$0xff]
    %v5933 = vld [vmem:[#allocation6 + $0x410] sm:$0xff]
    %v5934 = vld [vmem:[#allocation6 + $0x418] sm:$0xff]
    %v5935 = vld [vmem:[#allocation6 + $0x420] sm:$0xff]
    %v5936 = vld [vmem:[#allocation6 + $0x428] sm:$0xff]
    %v5937 = vld [vmem:[#allocation6 + $0x430] sm:$0xff]
    %v5938 = vld [vmem:[#allocation6 + $0x438] sm:$0xff]
    %v5939 = vld [vmem:[#allocation6 + $0x440] sm:$0xff]
    %v5940 = vld [vmem:[#allocation6 + $0x448] sm:$0xff]
    %v5941 = vld [vmem:[#allocation6 + $0x450] sm:$0xff]
    %v5942 = vld [vmem:[#allocation6 + $0x458] sm:$0xff]
    %v5943 = vld [vmem:[#allocation6 + $0x460] sm:$0xff]
    %v5944 = vld [vmem:[#allocation6 + $0x468] sm:$0xff]
    %v5945 = vld [vmem:[#allocation6 + $0x470] sm:$0xff]
    %v5946 = vld [vmem:[#allocation6 + $0x478] sm:$0xff]
    %v5947 = vld [vmem:[#allocation6 + $0x480] sm:$0xff]
    %v5948 = vld [vmem:[#allocation6 + $0x488] sm:$0xff]
    %v5949 = vld [vmem:[#allocation6 + $0x490] sm:$0xff]
    %v5950 = vld [vmem:[#allocation6 + $0x498] sm:$0xff]
    %v5951 = vld [vmem:[#allocation6 + $0x4a0] sm:$0xff]
    %v5952 = vld [vmem:[#allocation6 + $0x4a8] sm:$0xff]
    %v5953 = vld [vmem:[#allocation6 + $0x4b0] sm:$0xff]
    %v5954 = vld [vmem:[#allocation6 + $0x4b8] sm:$0xff]
    %v5955 = vld [vmem:[#allocation6 + $0x4c0] sm:$0xff]
    %v5956 = vld [vmem:[#allocation6 + $0x4c8] sm:$0xff]
    %v5957 = vld [vmem:[#allocation6 + $0x4d0] sm:$0xff]
    %v5958 = vld [vmem:[#allocation6 + $0x4d8] sm:$0xff]
    %v5959 = vld [vmem:[#allocation6 + $0x4e0] sm:$0xff]
    %v5960 = vld [vmem:[#allocation6 + $0x4e8] sm:$0xff]
    %v5961 = vld [vmem:[#allocation6 + $0x4f0] sm:$0xff]
    %v5962 = vld [vmem:[#allocation6 + $0x4f8] sm:$0xff]
    %v5963 = vld [vmem:[#allocation6 + $0x500] sm:$0xff]
    %v5964 = vld [vmem:[#allocation6 + $0x508] sm:$0xff]
    %v5965 = vld [vmem:[#allocation6 + $0x510] sm:$0xff]
    %v5966 = vld [vmem:[#allocation6 + $0x518] sm:$0xff]
    %v5967 = vld [vmem:[#allocation6 + $0x520] sm:$0xff]
    %v5968 = vld [vmem:[#allocation6 + $0x528] sm:$0xff]
    %v5969 = vld [vmem:[#allocation6 + $0x530] sm:$0xff]
    %v5970 = vld [vmem:[#allocation6 + $0x538] sm:$0xff]
    %v5971 = vld [vmem:[#allocation6 + $0x540] sm:$0xff]
    %v5972 = vld [vmem:[#allocation6 + $0x548] sm:$0xff]
    %v5973 = vld [vmem:[#allocation6 + $0x550] sm:$0xff]
    %v5974 = vld [vmem:[#allocation6 + $0x558] sm:$0xff]
    %v5975 = vld [vmem:[#allocation6 + $0x560] sm:$0xff]
    %v5976 = vld [vmem:[#allocation6 + $0x568] sm:$0xff]
    %v5977 = vld [vmem:[#allocation6 + $0x570] sm:$0xff]
    %v5978 = vld [vmem:[#allocation6 + $0x578] sm:$0xff]
    %v5979 = vld [vmem:[#allocation6 + $0x580] sm:$0xff]
    %v5980 = vld [vmem:[#allocation6 + $0x588] sm:$0xff]
    %v5981 = vld [vmem:[#allocation6 + $0x590] sm:$0xff]
    %v5982 = vld [vmem:[#allocation6 + $0x598] sm:$0xff]
    %v5983 = vld [vmem:[#allocation6 + $0x5a0] sm:$0xff]
    %v5984 = vld [vmem:[#allocation6 + $0x5a8] sm:$0xff]
    %v5985 = vld [vmem:[#allocation6 + $0x5b0] sm:$0xff]
    %v5986 = vld [vmem:[#allocation6 + $0x5b8] sm:$0xff]
    %v5987 = vld [vmem:[#allocation6 + $0x5c0] sm:$0xff]
    %v5988 = vld [vmem:[#allocation6 + $0x5c8] sm:$0xff]
    %v5989 = vld [vmem:[#allocation6 + $0x5d0] sm:$0xff]
    %v5990 = vld [vmem:[#allocation6 + $0x5d8] sm:$0xff]
    %v5991 = vld [vmem:[#allocation6 + $0x5e0] sm:$0xff]
    %v5992 = vld [vmem:[#allocation6 + $0x5e8] sm:$0xff]
    %v5993 = vld [vmem:[#allocation6 + $0x5f0] sm:$0xff]
    %v5994 = vld [vmem:[#allocation6 + $0x5f8] sm:$0xff]
    %v5995 = vld [vmem:[#allocation6 + $0x600] sm:$0xff]
    %v5996 = vld [vmem:[#allocation6 + $0x608] sm:$0xff]
    %v5997 = vld [vmem:[#allocation6 + $0x610] sm:$0xff]
    %v5998 = vld [vmem:[#allocation6 + $0x618] sm:$0xff]
    %v5999 = vld [vmem:[#allocation6 + $0x620] sm:$0xff]
    %v6000 = vld [vmem:[#allocation6 + $0x628] sm:$0xff]
    %v6001 = vld [vmem:[#allocation6 + $0x630] sm:$0xff]
    %v6002 = vld [vmem:[#allocation6 + $0x638] sm:$0xff]
    %v6003 = vld [vmem:[#allocation6 + $0x640] sm:$0xff]
    %v6004 = vld [vmem:[#allocation6 + $0x648] sm:$0xff]
    %v6005 = vld [vmem:[#allocation6 + $0x650] sm:$0xff]
    %v6006 = vld [vmem:[#allocation6 + $0x658] sm:$0xff]
    %v6007 = vld [vmem:[#allocation6 + $0x660] sm:$0xff]
    %v6008 = vld [vmem:[#allocation6 + $0x668] sm:$0xff]
    %v6009 = vld [vmem:[#allocation6 + $0x670] sm:$0xff]
    %v6010 = vld [vmem:[#allocation6 + $0x678] sm:$0xff]
    %v6011 = vld [vmem:[#allocation6 + $0x680] sm:$0xff]
    %v6012 = vld [vmem:[#allocation6 + $0x688] sm:$0xff]
    %v6013 = vld [vmem:[#allocation6 + $0x690] sm:$0xff]
    %v6014 = vld [vmem:[#allocation6 + $0x698] sm:$0xff]
    %v6015 = vld [vmem:[#allocation6 + $0x6a0] sm:$0xff]
    %v6016 = vld [vmem:[#allocation6 + $0x6a8] sm:$0xff]
    %v6017 = vld [vmem:[#allocation6 + $0x6b0] sm:$0xff]
    %v6018 = vld [vmem:[#allocation6 + $0x6b8] sm:$0xff]
    %v6019 = vld [vmem:[#allocation6 + $0x6c0] sm:$0xff]
    %v6020 = vld [vmem:[#allocation6 + $0x6c8] sm:$0xff]
    %v6021 = vld [vmem:[#allocation6 + $0x6d0] sm:$0xff]
    %v6022 = vld [vmem:[#allocation6 + $0x6d8] sm:$0xff]
    %v6023 = vld [vmem:[#allocation6 + $0x6e0] sm:$0xff]
    %v6024 = vld [vmem:[#allocation6 + $0x6e8] sm:$0xff]
    %v6025 = vld [vmem:[#allocation6 + $0x6f0] sm:$0xff]
    %v6026 = vld [vmem:[#allocation6 + $0x6f8] sm:$0xff]
    %v6027 = vld [vmem:[#allocation6 + $0x700] sm:$0xff]
    %v6028 = vld [vmem:[#allocation6 + $0x708] sm:$0xff]
    %v6029 = vld [vmem:[#allocation6 + $0x710] sm:$0xff]
    %v6030 = vld [vmem:[#allocation6 + $0x718] sm:$0xff]
    %v6031 = vld [vmem:[#allocation6 + $0x720] sm:$0xff]
    %v6032 = vld [vmem:[#allocation6 + $0x728] sm:$0xff]
    %v6033 = vld [vmem:[#allocation6 + $0x730] sm:$0xff]
    %v6034 = vld [vmem:[#allocation6 + $0x738] sm:$0xff]
    %v6035 = vld [vmem:[#allocation6 + $0x740] sm:$0xff]
    %v6036 = vld [vmem:[#allocation6 + $0x748] sm:$0xff]
    %v6037 = vld [vmem:[#allocation6 + $0x750] sm:$0xff]
    %v6038 = vld [vmem:[#allocation6 + $0x758] sm:$0xff]
    %v6039 = vld [vmem:[#allocation6 + $0x760] sm:$0xff]
    %v6040 = vld [vmem:[#allocation6 + $0x768] sm:$0xff]
    %v6041 = vld [vmem:[#allocation6 + $0x770] sm:$0xff]
    %v6042 = vld [vmem:[#allocation6 + $0x778] sm:$0xff]
    %v6043 = vld [vmem:[#allocation6 + $0x780] sm:$0xff]
    %v6044 = vld [vmem:[#allocation6 + $0x788] sm:$0xff]
    %v6045 = vld [vmem:[#allocation6 + $0x790] sm:$0xff]
    %v6046 = vld [vmem:[#allocation6 + $0x798] sm:$0xff]
    %v6047 = vld [vmem:[#allocation6 + $0x7a0] sm:$0xff]
    %v6048 = vld [vmem:[#allocation6 + $0x7a8] sm:$0xff]
    %v6049 = vld [vmem:[#allocation6 + $0x7b0] sm:$0xff]
    %v6050 = vld [vmem:[#allocation6 + $0x7b8] sm:$0xff]
    %v6051 = vld [vmem:[#allocation6 + $0x7c0] sm:$0xff]
    %v6052 = vld [vmem:[#allocation6 + $0x7c8] sm:$0xff]
    %v6053 = vld [vmem:[#allocation6 + $0x7d0] sm:$0xff]
    %v6054 = vld [vmem:[#allocation6 + $0x7d8] sm:$0xff]
    %v6055 = vld [vmem:[#allocation6 + $0x7e0] sm:$0xff]
    %v6056 = vld [vmem:[#allocation6 + $0x7e8] sm:$0xff]
    %v6057 = vld [vmem:[#allocation6 + $0x7f0] sm:$0xff]
    %v6058 = vld [vmem:[#allocation6 + $0x7f8] sm:$0xff]
    %v6059 = vld [vmem:[#allocation7] sm:$0x3]
    %v6061 = vlaneseq
    %v6062 = vshrl.u32 %v6061, 7
    %v6063 = vsub.s32 0, %v6062
    %v6064 = vrot.slane %v6059, %v6063
    %v6065 = vlaneseq
    %v6066 = vshrl.u32 %v6065, 7
    %v6067 = vsub.s32 1, %v6066
    %v6068 = vrot.slane %v6059, %v6067
    %v6327 = vunpack.c.l.b16 %v5803
    %v6328 = vunpack.c.h.b16 %v5803
    %v6329 = vunpack.c.l.b16 %v5804
    %v6330 = vunpack.c.h.b16 %v5804
    %v6331 = vunpack.c.l.b16 %v5805
    %v6332 = vunpack.c.h.b16 %v5805
    %v6333 = vunpack.c.l.b16 %v5806
    %v6334 = vunpack.c.h.b16 %v5806
    %v6335 = vunpack.c.l.b16 %v5807
    %v6336 = vunpack.c.h.b16 %v5807
    %v6337 = vunpack.c.l.b16 %v5808
    %v6338 = vunpack.c.h.b16 %v5808
    %v6339 = vunpack.c.l.b16 %v5809
    %v6340 = vunpack.c.h.b16 %v5809
    %v6341 = vunpack.c.l.b16 %v5810
    %v6342 = vunpack.c.h.b16 %v5810
    %v6343 = vunpack.c.l.b16 %v5811
    %v6344 = vunpack.c.h.b16 %v5811
    %v6345 = vunpack.c.l.b16 %v5812
    %v6346 = vunpack.c.h.b16 %v5812
    %v6347 = vunpack.c.l.b16 %v5813
    %v6348 = vunpack.c.h.b16 %v5813
    %v6349 = vunpack.c.l.b16 %v5814
    %v6350 = vunpack.c.h.b16 %v5814
    %v6351 = vunpack.c.l.b16 %v5815
    %v6352 = vunpack.c.h.b16 %v5815
    %v6353 = vunpack.c.l.b16 %v5816
    %v6354 = vunpack.c.h.b16 %v5816
    %v6355 = vunpack.c.l.b16 %v5817
    %v6356 = vunpack.c.h.b16 %v5817
    %v6357 = vunpack.c.l.b16 %v5818
    %v6358 = vunpack.c.h.b16 %v5818
    %v6359 = vunpack.c.l.b16 %v5819
    %v6360 = vunpack.c.h.b16 %v5819
    %v6361 = vunpack.c.l.b16 %v5820
    %v6362 = vunpack.c.h.b16 %v5820
    %v6363 = vunpack.c.l.b16 %v5821
    %v6364 = vunpack.c.h.b16 %v5821
    %v6365 = vunpack.c.l.b16 %v5822
    %v6366 = vunpack.c.h.b16 %v5822
    %v6367 = vunpack.c.l.b16 %v5823
    %v6368 = vunpack.c.h.b16 %v5823
    %v6369 = vunpack.c.l.b16 %v5824
    %v6370 = vunpack.c.h.b16 %v5824
    %v6371 = vunpack.c.l.b16 %v5825
    %v6372 = vunpack.c.h.b16 %v5825
    %v6373 = vunpack.c.l.b16 %v5826
    %v6374 = vunpack.c.h.b16 %v5826
    %v6375 = vunpack.c.l.b16 %v5827
    %v6376 = vunpack.c.h.b16 %v5827
    %v6377 = vunpack.c.l.b16 %v5828
    %v6378 = vunpack.c.h.b16 %v5828
    %v6379 = vunpack.c.l.b16 %v5829
    %v6380 = vunpack.c.h.b16 %v5829
    %v6381 = vunpack.c.l.b16 %v5830
    %v6382 = vunpack.c.h.b16 %v5830
    %v6383 = vunpack.c.l.b16 %v5831
    %v6384 = vunpack.c.h.b16 %v5831
    %v6385 = vunpack.c.l.b16 %v5832
    %v6386 = vunpack.c.h.b16 %v5832
    %v6387 = vunpack.c.l.b16 %v5833
    %v6388 = vunpack.c.h.b16 %v5833
    %v6389 = vunpack.c.l.b16 %v5834
    %v6390 = vunpack.c.h.b16 %v5834
    %v6391 = vunpack.c.l.b16 %v5835
    %v6392 = vunpack.c.h.b16 %v5835
    %v6393 = vunpack.c.l.b16 %v5836
    %v6394 = vunpack.c.h.b16 %v5836
    %v6395 = vunpack.c.l.b16 %v5837
    %v6396 = vunpack.c.h.b16 %v5837
    %v6397 = vunpack.c.l.b16 %v5838
    %v6398 = vunpack.c.h.b16 %v5838
    %v6399 = vunpack.c.l.b16 %v5839
    %v6400 = vunpack.c.h.b16 %v5839
    %v6401 = vunpack.c.l.b16 %v5840
    %v6402 = vunpack.c.h.b16 %v5840
    %v6403 = vunpack.c.l.b16 %v5841
    %v6404 = vunpack.c.h.b16 %v5841
    %v6405 = vunpack.c.l.b16 %v5842
    %v6406 = vunpack.c.h.b16 %v5842
    %v6407 = vunpack.c.l.b16 %v5843
    %v6408 = vunpack.c.h.b16 %v5843
    %v6409 = vunpack.c.l.b16 %v5844
    %v6410 = vunpack.c.h.b16 %v5844
    %v6411 = vunpack.c.l.b16 %v5845
    %v6412 = vunpack.c.h.b16 %v5845
    %v6413 = vunpack.c.l.b16 %v5846
    %v6414 = vunpack.c.h.b16 %v5846
    %v6415 = vunpack.c.l.b16 %v5847
    %v6416 = vunpack.c.h.b16 %v5847
    %v6417 = vunpack.c.l.b16 %v5848
    %v6418 = vunpack.c.h.b16 %v5848
    %v6419 = vunpack.c.l.b16 %v5849
    %v6420 = vunpack.c.h.b16 %v5849
    %v6421 = vunpack.c.l.b16 %v5850
    %v6422 = vunpack.c.h.b16 %v5850
    %v6423 = vunpack.c.l.b16 %v5851
    %v6424 = vunpack.c.h.b16 %v5851
    %v6425 = vunpack.c.l.b16 %v5852
    %v6426 = vunpack.c.h.b16 %v5852
    %v6427 = vunpack.c.l.b16 %v5853
    %v6428 = vunpack.c.h.b16 %v5853
    %v6429 = vunpack.c.l.b16 %v5854
    %v6430 = vunpack.c.h.b16 %v5854
    %v6431 = vunpack.c.l.b16 %v5855
    %v6432 = vunpack.c.h.b16 %v5855
    %v6433 = vunpack.c.l.b16 %v5856
    %v6434 = vunpack.c.h.b16 %v5856
    %v6435 = vunpack.c.l.b16 %v5857
    %v6436 = vunpack.c.h.b16 %v5857
    %v6437 = vunpack.c.l.b16 %v5858
    %v6438 = vunpack.c.h.b16 %v5858
    %v6439 = vunpack.c.l.b16 %v5859
    %v6440 = vunpack.c.h.b16 %v5859
    %v6441 = vunpack.c.l.b16 %v5860
    %v6442 = vunpack.c.h.b16 %v5860
    %v6443 = vunpack.c.l.b16 %v5861
    %v6444 = vunpack.c.h.b16 %v5861
    %v6445 = vunpack.c.l.b16 %v5862
    %v6446 = vunpack.c.h.b16 %v5862
    %v6447 = vunpack.c.l.b16 %v5863
    %v6448 = vunpack.c.h.b16 %v5863
    %v6449 = vunpack.c.l.b16 %v5864
    %v6450 = vunpack.c.h.b16 %v5864
    %v6451 = vunpack.c.l.b16 %v5865
    %v6452 = vunpack.c.h.b16 %v5865
    %v6453 = vunpack.c.l.b16 %v5866
    %v6454 = vunpack.c.h.b16 %v5866
    %v6455 = vunpack.c.l.b16 %v5867
    %v6456 = vunpack.c.h.b16 %v5867
    %v6457 = vunpack.c.l.b16 %v5868
    %v6458 = vunpack.c.h.b16 %v5868
    %v6459 = vunpack.c.l.b16 %v5869
    %v6460 = vunpack.c.h.b16 %v5869
    %v6461 = vunpack.c.l.b16 %v5870
    %v6462 = vunpack.c.h.b16 %v5870
    %v6463 = vunpack.c.l.b16 %v5871
    %v6464 = vunpack.c.h.b16 %v5871
    %v6465 = vunpack.c.l.b16 %v5872
    %v6466 = vunpack.c.h.b16 %v5872
    %v6467 = vunpack.c.l.b16 %v5873
    %v6468 = vunpack.c.h.b16 %v5873
    %v6469 = vunpack.c.l.b16 %v5874
    %v6470 = vunpack.c.h.b16 %v5874
    %v6471 = vunpack.c.l.b16 %v5875
    %v6472 = vunpack.c.h.b16 %v5875
    %v6473 = vunpack.c.l.b16 %v5876
    %v6474 = vunpack.c.h.b16 %v5876
    %v6475 = vunpack.c.l.b16 %v5877
    %v6476 = vunpack.c.h.b16 %v5877
    %v6477 = vunpack.c.l.b16 %v5878
    %v6478 = vunpack.c.h.b16 %v5878
    %v6479 = vunpack.c.l.b16 %v5879
    %v6480 = vunpack.c.h.b16 %v5879
    %v6481 = vunpack.c.l.b16 %v5880
    %v6482 = vunpack.c.h.b16 %v5880
    %v6483 = vunpack.c.l.b16 %v5881
    %v6484 = vunpack.c.h.b16 %v5881
    %v6485 = vunpack.c.l.b16 %v5882
    %v6486 = vunpack.c.h.b16 %v5882
    %v6487 = vunpack.c.l.b16 %v5883
    %v6488 = vunpack.c.h.b16 %v5883
    %v6489 = vunpack.c.l.b16 %v5884
    %v6490 = vunpack.c.h.b16 %v5884
    %v6491 = vunpack.c.l.b16 %v5885
    %v6492 = vunpack.c.h.b16 %v5885
    %v6493 = vunpack.c.l.b16 %v5886
    %v6494 = vunpack.c.h.b16 %v5886
    %v6495 = vunpack.c.l.b16 %v5887
    %v6496 = vunpack.c.h.b16 %v5887
    %v6497 = vunpack.c.l.b16 %v5888
    %v6498 = vunpack.c.h.b16 %v5888
    %v6499 = vunpack.c.l.b16 %v5889
    %v6500 = vunpack.c.h.b16 %v5889
    %v6501 = vunpack.c.l.b16 %v5890
    %v6502 = vunpack.c.h.b16 %v5890
    %v6503 = vunpack.c.l.b16 %v5891
    %v6504 = vunpack.c.h.b16 %v5891
    %v6505 = vunpack.c.l.b16 %v5892
    %v6506 = vunpack.c.h.b16 %v5892
    %v6507 = vunpack.c.l.b16 %v5893
    %v6508 = vunpack.c.h.b16 %v5893
    %v6509 = vunpack.c.l.b16 %v5894
    %v6510 = vunpack.c.h.b16 %v5894
    %v6511 = vunpack.c.l.b16 %v5895
    %v6512 = vunpack.c.h.b16 %v5895
    %v6513 = vunpack.c.l.b16 %v5896
    %v6514 = vunpack.c.h.b16 %v5896
    %v6515 = vunpack.c.l.b16 %v5897
    %v6516 = vunpack.c.h.b16 %v5897
    %v6517 = vunpack.c.l.b16 %v5898
    %v6518 = vunpack.c.h.b16 %v5898
    %v6519 = vunpack.c.l.b16 %v5899
    %v6520 = vunpack.c.h.b16 %v5899
    %v6521 = vunpack.c.l.b16 %v5900
    %v6522 = vunpack.c.h.b16 %v5900
    %v6523 = vunpack.c.l.b16 %v5901
    %v6524 = vunpack.c.h.b16 %v5901
    %v6525 = vunpack.c.l.b16 %v5902
    %v6526 = vunpack.c.h.b16 %v5902
    %v6527 = vunpack.c.l.b16 %v5903
    %v6528 = vunpack.c.h.b16 %v5903
    %v6529 = vunpack.c.l.b16 %v5904
    %v6530 = vunpack.c.h.b16 %v5904
    %v6531 = vunpack.c.l.b16 %v5905
    %v6532 = vunpack.c.h.b16 %v5905
    %v6533 = vunpack.c.l.b16 %v5906
    %v6534 = vunpack.c.h.b16 %v5906
    %v6535 = vunpack.c.l.b16 %v5907
    %v6536 = vunpack.c.h.b16 %v5907
    %v6537 = vunpack.c.l.b16 %v5908
    %v6538 = vunpack.c.h.b16 %v5908
    %v6539 = vunpack.c.l.b16 %v5909
    %v6540 = vunpack.c.h.b16 %v5909
    %v6541 = vunpack.c.l.b16 %v5910
    %v6542 = vunpack.c.h.b16 %v5910
    %v6543 = vunpack.c.l.b16 %v5911
    %v6544 = vunpack.c.h.b16 %v5911
    %v6545 = vunpack.c.l.b16 %v5912
    %v6546 = vunpack.c.h.b16 %v5912
    %v6547 = vunpack.c.l.b16 %v5913
    %v6548 = vunpack.c.h.b16 %v5913
    %v6549 = vunpack.c.l.b16 %v5914
    %v6550 = vunpack.c.h.b16 %v5914
    %v6551 = vunpack.c.l.b16 %v5915
    %v6552 = vunpack.c.h.b16 %v5915
    %v6553 = vunpack.c.l.b16 %v5916
    %v6554 = vunpack.c.h.b16 %v5916
    %v6555 = vunpack.c.l.b16 %v5917
    %v6556 = vunpack.c.h.b16 %v5917
    %v6557 = vunpack.c.l.b16 %v5918
    %v6558 = vunpack.c.h.b16 %v5918
    %v6559 = vunpack.c.l.b16 %v5919
    %v6560 = vunpack.c.h.b16 %v5919
    %v6561 = vunpack.c.l.b16 %v5920
    %v6562 = vunpack.c.h.b16 %v5920
    %v6563 = vunpack.c.l.b16 %v5921
    %v6564 = vunpack.c.h.b16 %v5921
    %v6565 = vunpack.c.l.b16 %v5922
    %v6566 = vunpack.c.h.b16 %v5922
    %v6567 = vunpack.c.l.b16 %v5923
    %v6568 = vunpack.c.h.b16 %v5923
    %v6569 = vunpack.c.l.b16 %v5924
    %v6570 = vunpack.c.h.b16 %v5924
    %v6571 = vunpack.c.l.b16 %v5925
    %v6572 = vunpack.c.h.b16 %v5925
    %v6573 = vunpack.c.l.b16 %v5926
    %v6574 = vunpack.c.h.b16 %v5926
    %v6575 = vunpack.c.l.b16 %v5927
    %v6576 = vunpack.c.h.b16 %v5927
    %v6577 = vunpack.c.l.b16 %v5928
    %v6578 = vunpack.c.h.b16 %v5928
    %v6579 = vunpack.c.l.b16 %v5929
    %v6580 = vunpack.c.h.b16 %v5929
    %v6581 = vunpack.c.l.b16 %v5930
    %v6582 = vunpack.c.h.b16 %v5930
    %v6583 = vunpack.c.l.b16 %v5931
    %v6584 = vunpack.c.h.b16 %v5931
    %v6585 = vunpack.c.l.b16 %v5932
    %v6586 = vunpack.c.h.b16 %v5932
    %v6587 = vunpack.c.l.b16 %v5933
    %v6588 = vunpack.c.h.b16 %v5933
    %v6589 = vunpack.c.l.b16 %v5934
    %v6590 = vunpack.c.h.b16 %v5934
    %v6591 = vunpack.c.l.b16 %v5935
    %v6592 = vunpack.c.h.b16 %v5935
    %v6593 = vunpack.c.l.b16 %v5936
    %v6594 = vunpack.c.h.b16 %v5936
    %v6595 = vunpack.c.l.b16 %v5937
    %v6596 = vunpack.c.h.b16 %v5937
    %v6597 = vunpack.c.l.b16 %v5938
    %v6598 = vunpack.c.h.b16 %v5938
    %v6599 = vunpack.c.l.b16 %v5939
    %v6600 = vunpack.c.h.b16 %v5939
    %v6601 = vunpack.c.l.b16 %v5940
    %v6602 = vunpack.c.h.b16 %v5940
    %v6603 = vunpack.c.l.b16 %v5941
    %v6604 = vunpack.c.h.b16 %v5941
    %v6605 = vunpack.c.l.b16 %v5942
    %v6606 = vunpack.c.h.b16 %v5942
    %v6607 = vunpack.c.l.b16 %v5943
    %v6608 = vunpack.c.h.b16 %v5943
    %v6609 = vunpack.c.l.b16 %v5944
    %v6610 = vunpack.c.h.b16 %v5944
    %v6611 = vunpack.c.l.b16 %v5945
    %v6612 = vunpack.c.h.b16 %v5945
    %v6613 = vunpack.c.l.b16 %v5946
    %v6614 = vunpack.c.h.b16 %v5946
    %v6615 = vunpack.c.l.b16 %v5947
    %v6616 = vunpack.c.h.b16 %v5947
    %v6617 = vunpack.c.l.b16 %v5948
    %v6618 = vunpack.c.h.b16 %v5948
    %v6619 = vunpack.c.l.b16 %v5949
    %v6620 = vunpack.c.h.b16 %v5949
    %v6621 = vunpack.c.l.b16 %v5950
    %v6622 = vunpack.c.h.b16 %v5950
    %v6623 = vunpack.c.l.b16 %v5951
    %v6624 = vunpack.c.h.b16 %v5951
    %v6625 = vunpack.c.l.b16 %v5952
    %v6626 = vunpack.c.h.b16 %v5952
    %v6627 = vunpack.c.l.b16 %v5953
    %v6628 = vunpack.c.h.b16 %v5953
    %v6629 = vunpack.c.l.b16 %v5954
    %v6630 = vunpack.c.h.b16 %v5954
    %v6631 = vunpack.c.l.b16 %v5955
    %v6632 = vunpack.c.h.b16 %v5955
    %v6633 = vunpack.c.l.b16 %v5956
    %v6634 = vunpack.c.h.b16 %v5956
    %v6635 = vunpack.c.l.b16 %v5957
    %v6636 = vunpack.c.h.b16 %v5957
    %v6637 = vunpack.c.l.b16 %v5958
    %v6638 = vunpack.c.h.b16 %v5958
    %v6639 = vunpack.c.l.b16 %v5959
    %v6640 = vunpack.c.h.b16 %v5959
    %v6641 = vunpack.c.l.b16 %v5960
    %v6642 = vunpack.c.h.b16 %v5960
    %v6643 = vunpack.c.l.b16 %v5961
    %v6644 = vunpack.c.h.b16 %v5961
    %v6645 = vunpack.c.l.b16 %v5962
    %v6646 = vunpack.c.h.b16 %v5962
    %v6647 = vunpack.c.l.b16 %v5963
    %v6648 = vunpack.c.h.b16 %v5963
    %v6649 = vunpack.c.l.b16 %v5964
    %v6650 = vunpack.c.h.b16 %v5964
    %v6651 = vunpack.c.l.b16 %v5965
    %v6652 = vunpack.c.h.b16 %v5965
    %v6653 = vunpack.c.l.b16 %v5966
    %v6654 = vunpack.c.h.b16 %v5966
    %v6655 = vunpack.c.l.b16 %v5967
    %v6656 = vunpack.c.h.b16 %v5967
    %v6657 = vunpack.c.l.b16 %v5968
    %v6658 = vunpack.c.h.b16 %v5968
    %v6659 = vunpack.c.l.b16 %v5969
    %v6660 = vunpack.c.h.b16 %v5969
    %v6661 = vunpack.c.l.b16 %v5970
    %v6662 = vunpack.c.h.b16 %v5970
    %v6663 = vunpack.c.l.b16 %v5971
    %v6664 = vunpack.c.h.b16 %v5971
    %v6665 = vunpack.c.l.b16 %v5972
    %v6666 = vunpack.c.h.b16 %v5972
    %v6667 = vunpack.c.l.b16 %v5973
    %v6668 = vunpack.c.h.b16 %v5973
    %v6669 = vunpack.c.l.b16 %v5974
    %v6670 = vunpack.c.h.b16 %v5974
    %v6671 = vunpack.c.l.b16 %v5975
    %v6672 = vunpack.c.h.b16 %v5975
    %v6673 = vunpack.c.l.b16 %v5976
    %v6674 = vunpack.c.h.b16 %v5976
    %v6675 = vunpack.c.l.b16 %v5977
    %v6676 = vunpack.c.h.b16 %v5977
    %v6677 = vunpack.c.l.b16 %v5978
    %v6678 = vunpack.c.h.b16 %v5978
    %v6679 = vunpack.c.l.b16 %v5979
    %v6680 = vunpack.c.h.b16 %v5979
    %v6681 = vunpack.c.l.b16 %v5980
    %v6682 = vunpack.c.h.b16 %v5980
    %v6683 = vunpack.c.l.b16 %v5981
    %v6684 = vunpack.c.h.b16 %v5981
    %v6685 = vunpack.c.l.b16 %v5982
    %v6686 = vunpack.c.h.b16 %v5982
    %v6687 = vunpack.c.l.b16 %v5983
    %v6688 = vunpack.c.h.b16 %v5983
    %v6689 = vunpack.c.l.b16 %v5984
    %v6690 = vunpack.c.h.b16 %v5984
    %v6691 = vunpack.c.l.b16 %v5985
    %v6692 = vunpack.c.h.b16 %v5985
    %v6693 = vunpack.c.l.b16 %v5986
    %v6694 = vunpack.c.h.b16 %v5986
    %v6695 = vunpack.c.l.b16 %v5987
    %v6696 = vunpack.c.h.b16 %v5987
    %v6697 = vunpack.c.l.b16 %v5988
    %v6698 = vunpack.c.h.b16 %v5988
    %v6699 = vunpack.c.l.b16 %v5989
    %v6700 = vunpack.c.h.b16 %v5989
    %v6701 = vunpack.c.l.b16 %v5990
    %v6702 = vunpack.c.h.b16 %v5990
    %v6703 = vunpack.c.l.b16 %v5991
    %v6704 = vunpack.c.h.b16 %v5991
    %v6705 = vunpack.c.l.b16 %v5992
    %v6706 = vunpack.c.h.b16 %v5992
    %v6707 = vunpack.c.l.b16 %v5993
    %v6708 = vunpack.c.h.b16 %v5993
    %v6709 = vunpack.c.l.b16 %v5994
    %v6710 = vunpack.c.h.b16 %v5994
    %v6711 = vunpack.c.l.b16 %v5995
    %v6712 = vunpack.c.h.b16 %v5995
    %v6713 = vunpack.c.l.b16 %v5996
    %v6714 = vunpack.c.h.b16 %v5996
    %v6715 = vunpack.c.l.b16 %v5997
    %v6716 = vunpack.c.h.b16 %v5997
    %v6717 = vunpack.c.l.b16 %v5998
    %v6718 = vunpack.c.h.b16 %v5998
    %v6719 = vunpack.c.l.b16 %v5999
    %v6720 = vunpack.c.h.b16 %v5999
    %v6721 = vunpack.c.l.b16 %v6000
    %v6722 = vunpack.c.h.b16 %v6000
    %v6723 = vunpack.c.l.b16 %v6001
    %v6724 = vunpack.c.h.b16 %v6001
    %v6725 = vunpack.c.l.b16 %v6002
    %v6726 = vunpack.c.h.b16 %v6002
    %v6727 = vunpack.c.l.b16 %v6003
    %v6728 = vunpack.c.h.b16 %v6003
    %v6729 = vunpack.c.l.b16 %v6004
    %v6730 = vunpack.c.h.b16 %v6004
    %v6731 = vunpack.c.l.b16 %v6005
    %v6732 = vunpack.c.h.b16 %v6005
    %v6733 = vunpack.c.l.b16 %v6006
    %v6734 = vunpack.c.h.b16 %v6006
    %v6735 = vunpack.c.l.b16 %v6007
    %v6736 = vunpack.c.h.b16 %v6007
    %v6737 = vunpack.c.l.b16 %v6008
    %v6738 = vunpack.c.h.b16 %v6008
    %v6739 = vunpack.c.l.b16 %v6009
    %v6740 = vunpack.c.h.b16 %v6009
    %v6741 = vunpack.c.l.b16 %v6010
    %v6742 = vunpack.c.h.b16 %v6010
    %v6743 = vunpack.c.l.b16 %v6011
    %v6744 = vunpack.c.h.b16 %v6011
    %v6745 = vunpack.c.l.b16 %v6012
    %v6746 = vunpack.c.h.b16 %v6012
    %v6747 = vunpack.c.l.b16 %v6013
    %v6748 = vunpack.c.h.b16 %v6013
    %v6749 = vunpack.c.l.b16 %v6014
    %v6750 = vunpack.c.h.b16 %v6014
    %v6751 = vunpack.c.l.b16 %v6015
    %v6752 = vunpack.c.h.b16 %v6015
    %v6753 = vunpack.c.l.b16 %v6016
    %v6754 = vunpack.c.h.b16 %v6016
    %v6755 = vunpack.c.l.b16 %v6017
    %v6756 = vunpack.c.h.b16 %v6017
    %v6757 = vunpack.c.l.b16 %v6018
    %v6758 = vunpack.c.h.b16 %v6018
    %v6759 = vunpack.c.l.b16 %v6019
    %v6760 = vunpack.c.h.b16 %v6019
    %v6761 = vunpack.c.l.b16 %v6020
    %v6762 = vunpack.c.h.b16 %v6020
    %v6763 = vunpack.c.l.b16 %v6021
    %v6764 = vunpack.c.h.b16 %v6021
    %v6765 = vunpack.c.l.b16 %v6022
    %v6766 = vunpack.c.h.b16 %v6022
    %v6767 = vunpack.c.l.b16 %v6023
    %v6768 = vunpack.c.h.b16 %v6023
    %v6769 = vunpack.c.l.b16 %v6024
    %v6770 = vunpack.c.h.b16 %v6024
    %v6771 = vunpack.c.l.b16 %v6025
    %v6772 = vunpack.c.h.b16 %v6025
    %v6773 = vunpack.c.l.b16 %v6026
    %v6774 = vunpack.c.h.b16 %v6026
    %v6775 = vunpack.c.l.b16 %v6027
    %v6776 = vunpack.c.h.b16 %v6027
    %v6777 = vunpack.c.l.b16 %v6028
    %v6778 = vunpack.c.h.b16 %v6028
    %v6779 = vunpack.c.l.b16 %v6029
    %v6780 = vunpack.c.h.b16 %v6029
    %v6781 = vunpack.c.l.b16 %v6030
    %v6782 = vunpack.c.h.b16 %v6030
    %v6783 = vunpack.c.l.b16 %v6031
    %v6784 = vunpack.c.h.b16 %v6031
    %v6785 = vunpack.c.l.b16 %v6032
    %v6786 = vunpack.c.h.b16 %v6032
    %v6787 = vunpack.c.l.b16 %v6033
    %v6788 = vunpack.c.h.b16 %v6033
    %v6789 = vunpack.c.l.b16 %v6034
    %v6790 = vunpack.c.h.b16 %v6034
    %v6791 = vunpack.c.l.b16 %v6035
    %v6792 = vunpack.c.h.b16 %v6035
    %v6793 = vunpack.c.l.b16 %v6036
    %v6794 = vunpack.c.h.b16 %v6036
    %v6795 = vunpack.c.l.b16 %v6037
    %v6796 = vunpack.c.h.b16 %v6037
    %v6797 = vunpack.c.l.b16 %v6038
    %v6798 = vunpack.c.h.b16 %v6038
    %v6799 = vunpack.c.l.b16 %v6039
    %v6800 = vunpack.c.h.b16 %v6039
    %v6801 = vunpack.c.l.b16 %v6040
    %v6802 = vunpack.c.h.b16 %v6040
    %v6803 = vunpack.c.l.b16 %v6041
    %v6804 = vunpack.c.h.b16 %v6041
    %v6805 = vunpack.c.l.b16 %v6042
    %v6806 = vunpack.c.h.b16 %v6042
    %v6807 = vunpack.c.l.b16 %v6043
    %v6808 = vunpack.c.h.b16 %v6043
    %v6809 = vunpack.c.l.b16 %v6044
    %v6810 = vunpack.c.h.b16 %v6044
    %v6811 = vunpack.c.l.b16 %v6045
    %v6812 = vunpack.c.h.b16 %v6045
    %v6813 = vunpack.c.l.b16 %v6046
    %v6814 = vunpack.c.h.b16 %v6046
    %v6815 = vunpack.c.l.b16 %v6047
    %v6816 = vunpack.c.h.b16 %v6047
    %v6817 = vunpack.c.l.b16 %v6048
    %v6818 = vunpack.c.h.b16 %v6048
    %v6819 = vunpack.c.l.b16 %v6049
    %v6820 = vunpack.c.h.b16 %v6049
    %v6821 = vunpack.c.l.b16 %v6050
    %v6822 = vunpack.c.h.b16 %v6050
    %v6823 = vunpack.c.l.b16 %v6051
    %v6824 = vunpack.c.h.b16 %v6051
    %v6825 = vunpack.c.l.b16 %v6052
    %v6826 = vunpack.c.h.b16 %v6052
    %v6827 = vunpack.c.l.b16 %v6053
    %v6828 = vunpack.c.h.b16 %v6053
    %v6829 = vunpack.c.l.b16 %v6054
    %v6830 = vunpack.c.h.b16 %v6054
    %v6831 = vunpack.c.l.b16 %v6055
    %v6832 = vunpack.c.h.b16 %v6055
    %v6833 = vunpack.c.l.b16 %v6056
    %v6834 = vunpack.c.h.b16 %v6056
    %v6835 = vunpack.c.l.b16 %v6057
    %v6836 = vunpack.c.h.b16 %v6057
    %v6837 = vunpack.c.l.b16 %v6058
    %v6838 = vunpack.c.h.b16 %v6058
    %v6839 = vpack.c.b16 %v6329, %v6327
    %v6840 = vpack.c.b16 %v6330, %v6328
    %v6841 = vpack.c.b16 %v6333, %v6331
    %v6842 = vpack.c.b16 %v6334, %v6332
    %v6843 = vpack.c.b16 %v6337, %v6335
    %v6844 = vpack.c.b16 %v6338, %v6336
    %v6845 = vpack.c.b16 %v6341, %v6339
    %v6846 = vpack.c.b16 %v6342, %v6340
    %v6847 = vpack.c.b16 %v6345, %v6343
    %v6848 = vpack.c.b16 %v6346, %v6344
    %v6849 = vpack.c.b16 %v6349, %v6347
    %v6850 = vpack.c.b16 %v6350, %v6348
    %v6851 = vpack.c.b16 %v6353, %v6351
    %v6852 = vpack.c.b16 %v6354, %v6352
    %v6853 = vpack.c.b16 %v6357, %v6355
    %v6854 = vpack.c.b16 %v6358, %v6356
    %v6855 = vpack.c.b16 %v6361, %v6359
    %v6856 = vpack.c.b16 %v6362, %v6360
    %v6857 = vpack.c.b16 %v6365, %v6363
    %v6858 = vpack.c.b16 %v6366, %v6364
    %v6859 = vpack.c.b16 %v6369, %v6367
    %v6860 = vpack.c.b16 %v6370, %v6368
    %v6861 = vpack.c.b16 %v6373, %v6371
    %v6862 = vpack.c.b16 %v6374, %v6372
    %v6863 = vpack.c.b16 %v6377, %v6375
    %v6864 = vpack.c.b16 %v6378, %v6376
    %v6865 = vpack.c.b16 %v6381, %v6379
    %v6866 = vpack.c.b16 %v6382, %v6380
    %v6867 = vpack.c.b16 %v6385, %v6383
    %v6868 = vpack.c.b16 %v6386, %v6384
    %v6869 = vpack.c.b16 %v6389, %v6387
    %v6870 = vpack.c.b16 %v6390, %v6388
    %v6871 = vpack.c.b16 %v6393, %v6391
    %v6872 = vpack.c.b16 %v6394, %v6392
    %v6873 = vpack.c.b16 %v6397, %v6395
    %v6874 = vpack.c.b16 %v6398, %v6396
    %v6875 = vpack.c.b16 %v6401, %v6399
    %v6876 = vpack.c.b16 %v6402, %v6400
    %v6877 = vpack.c.b16 %v6405, %v6403
    %v6878 = vpack.c.b16 %v6406, %v6404
    %v6879 = vpack.c.b16 %v6409, %v6407
    %v6880 = vpack.c.b16 %v6410, %v6408
    %v6881 = vpack.c.b16 %v6413, %v6411
    %v6882 = vpack.c.b16 %v6414, %v6412
    %v6883 = vpack.c.b16 %v6417, %v6415
    %v6884 = vpack.c.b16 %v6418, %v6416
    %v6885 = vpack.c.b16 %v6421, %v6419
    %v6886 = vpack.c.b16 %v6422, %v6420
    %v6887 = vpack.c.b16 %v6425, %v6423
    %v6888 = vpack.c.b16 %v6426, %v6424
    %v6889 = vpack.c.b16 %v6429, %v6427
    %v6890 = vpack.c.b16 %v6430, %v6428
    %v6891 = vpack.c.b16 %v6433, %v6431
    %v6892 = vpack.c.b16 %v6434, %v6432
    %v6893 = vpack.c.b16 %v6437, %v6435
    %v6894 = vpack.c.b16 %v6438, %v6436
    %v6895 = vpack.c.b16 %v6441, %v6439
    %v6896 = vpack.c.b16 %v6442, %v6440
    %v6897 = vpack.c.b16 %v6445, %v6443
    %v6898 = vpack.c.b16 %v6446, %v6444
    %v6899 = vpack.c.b16 %v6449, %v6447
    %v6900 = vpack.c.b16 %v6450, %v6448
    %v6901 = vpack.c.b16 %v6453, %v6451
    %v6902 = vpack.c.b16 %v6454, %v6452
    %v6903 = vpack.c.b16 %v6457, %v6455
    %v6904 = vpack.c.b16 %v6458, %v6456
    %v6905 = vpack.c.b16 %v6461, %v6459
    %v6906 = vpack.c.b16 %v6462, %v6460
    %v6907 = vpack.c.b16 %v6465, %v6463
    %v6908 = vpack.c.b16 %v6466, %v6464
    %v6909 = vpack.c.b16 %v6469, %v6467
    %v6910 = vpack.c.b16 %v6470, %v6468
    %v6911 = vpack.c.b16 %v6473, %v6471
    %v6912 = vpack.c.b16 %v6474, %v6472
    %v6913 = vpack.c.b16 %v6477, %v6475
    %v6914 = vpack.c.b16 %v6478, %v6476
    %v6915 = vpack.c.b16 %v6481, %v6479
    %v6916 = vpack.c.b16 %v6482, %v6480
    %v6917 = vpack.c.b16 %v6485, %v6483
    %v6918 = vpack.c.b16 %v6486, %v6484
    %v6919 = vpack.c.b16 %v6489, %v6487
    %v6920 = vpack.c.b16 %v6490, %v6488
    %v6921 = vpack.c.b16 %v6493, %v6491
    %v6922 = vpack.c.b16 %v6494, %v6492
    %v6923 = vpack.c.b16 %v6497, %v6495
    %v6924 = vpack.c.b16 %v6498, %v6496
    %v6925 = vpack.c.b16 %v6501, %v6499
    %v6926 = vpack.c.b16 %v6502, %v6500
    %v6927 = vpack.c.b16 %v6505, %v6503
    %v6928 = vpack.c.b16 %v6506, %v6504
    %v6929 = vpack.c.b16 %v6509, %v6507
    %v6930 = vpack.c.b16 %v6510, %v6508
    %v6931 = vpack.c.b16 %v6513, %v6511
    %v6932 = vpack.c.b16 %v6514, %v6512
    %v6933 = vpack.c.b16 %v6517, %v6515
    %v6934 = vpack.c.b16 %v6518, %v6516
    %v6935 = vpack.c.b16 %v6521, %v6519
    %v6936 = vpack.c.b16 %v6522, %v6520
    %v6937 = vpack.c.b16 %v6525, %v6523
    %v6938 = vpack.c.b16 %v6526, %v6524
    %v6939 = vpack.c.b16 %v6529, %v6527
    %v6940 = vpack.c.b16 %v6530, %v6528
    %v6941 = vpack.c.b16 %v6533, %v6531
    %v6942 = vpack.c.b16 %v6534, %v6532
    %v6943 = vpack.c.b16 %v6537, %v6535
    %v6944 = vpack.c.b16 %v6538, %v6536
    %v6945 = vpack.c.b16 %v6541, %v6539
    %v6946 = vpack.c.b16 %v6542, %v6540
    %v6947 = vpack.c.b16 %v6545, %v6543
    %v6948 = vpack.c.b16 %v6546, %v6544
    %v6949 = vpack.c.b16 %v6549, %v6547
    %v6950 = vpack.c.b16 %v6550, %v6548
    %v6951 = vpack.c.b16 %v6553, %v6551
    %v6952 = vpack.c.b16 %v6554, %v6552
    %v6953 = vpack.c.b16 %v6557, %v6555
    %v6954 = vpack.c.b16 %v6558, %v6556
    %v6955 = vpack.c.b16 %v6561, %v6559
    %v6956 = vpack.c.b16 %v6562, %v6560
    %v6957 = vpack.c.b16 %v6565, %v6563
    %v6958 = vpack.c.b16 %v6566, %v6564
    %v6959 = vpack.c.b16 %v6569, %v6567
    %v6960 = vpack.c.b16 %v6570, %v6568
    %v6961 = vpack.c.b16 %v6573, %v6571
    %v6962 = vpack.c.b16 %v6574, %v6572
    %v6963 = vpack.c.b16 %v6577, %v6575
    %v6964 = vpack.c.b16 %v6578, %v6576
    %v6965 = vpack.c.b16 %v6581, %v6579
    %v6966 = vpack.c.b16 %v6582, %v6580
    %v6967 = vpack.c.b16 %v6585, %v6583
    %v6968 = vpack.c.b16 %v6586, %v6584
    %v6969 = vpack.c.b16 %v6589, %v6587
    %v6970 = vpack.c.b16 %v6590, %v6588
    %v6971 = vpack.c.b16 %v6593, %v6591
    %v6972 = vpack.c.b16 %v6594, %v6592
    %v6973 = vpack.c.b16 %v6597, %v6595
    %v6974 = vpack.c.b16 %v6598, %v6596
    %v6975 = vpack.c.b16 %v6601, %v6599
    %v6976 = vpack.c.b16 %v6602, %v6600
    %v6977 = vpack.c.b16 %v6605, %v6603
    %v6978 = vpack.c.b16 %v6606, %v6604
    %v6979 = vpack.c.b16 %v6609, %v6607
    %v6980 = vpack.c.b16 %v6610, %v6608
    %v6981 = vpack.c.b16 %v6613, %v6611
    %v6982 = vpack.c.b16 %v6614, %v6612
    %v6983 = vpack.c.b16 %v6617, %v6615
    %v6984 = vpack.c.b16 %v6618, %v6616
    %v6985 = vpack.c.b16 %v6621, %v6619
    %v6986 = vpack.c.b16 %v6622, %v6620
    %v6987 = vpack.c.b16 %v6625, %v6623
    %v6988 = vpack.c.b16 %v6626, %v6624
    %v6989 = vpack.c.b16 %v6629, %v6627
    %v6990 = vpack.c.b16 %v6630, %v6628
    %v6991 = vpack.c.b16 %v6633, %v6631
    %v6992 = vpack.c.b16 %v6634, %v6632
    %v6993 = vpack.c.b16 %v6637, %v6635
    %v6994 = vpack.c.b16 %v6638, %v6636
    %v6995 = vpack.c.b16 %v6641, %v6639
    %v6996 = vpack.c.b16 %v6642, %v6640
    %v6997 = vpack.c.b16 %v6645, %v6643
    %v6998 = vpack.c.b16 %v6646, %v6644
    %v6999 = vpack.c.b16 %v6649, %v6647
    %v7000 = vpack.c.b16 %v6650, %v6648
    %v7001 = vpack.c.b16 %v6653, %v6651
    %v7002 = vpack.c.b16 %v6654, %v6652
    %v7003 = vpack.c.b16 %v6657, %v6655
    %v7004 = vpack.c.b16 %v6658, %v6656
    %v7005 = vpack.c.b16 %v6661, %v6659
    %v7006 = vpack.c.b16 %v6662, %v6660
    %v7007 = vpack.c.b16 %v6665, %v6663
    %v7008 = vpack.c.b16 %v6666, %v6664
    %v7009 = vpack.c.b16 %v6669, %v6667
    %v7010 = vpack.c.b16 %v6670, %v6668
    %v7011 = vpack.c.b16 %v6673, %v6671
    %v7012 = vpack.c.b16 %v6674, %v6672
    %v7013 = vpack.c.b16 %v6677, %v6675
    %v7014 = vpack.c.b16 %v6678, %v6676
    %v7015 = vpack.c.b16 %v6681, %v6679
    %v7016 = vpack.c.b16 %v6682, %v6680
    %v7017 = vpack.c.b16 %v6685, %v6683
    %v7018 = vpack.c.b16 %v6686, %v6684
    %v7019 = vpack.c.b16 %v6689, %v6687
    %v7020 = vpack.c.b16 %v6690, %v6688
    %v7021 = vpack.c.b16 %v6693, %v6691
    %v7022 = vpack.c.b16 %v6694, %v6692
    %v7023 = vpack.c.b16 %v6697, %v6695
    %v7024 = vpack.c.b16 %v6698, %v6696
    %v7025 = vpack.c.b16 %v6701, %v6699
    %v7026 = vpack.c.b16 %v6702, %v6700
    %v7027 = vpack.c.b16 %v6705, %v6703
    %v7028 = vpack.c.b16 %v6706, %v6704
    %v7029 = vpack.c.b16 %v6709, %v6707
    %v7030 = vpack.c.b16 %v6710, %v6708
    %v7031 = vpack.c.b16 %v6713, %v6711
    %v7032 = vpack.c.b16 %v6714, %v6712
    %v7033 = vpack.c.b16 %v6717, %v6715
    %v7034 = vpack.c.b16 %v6718, %v6716
    %v7035 = vpack.c.b16 %v6721, %v6719
    %v7036 = vpack.c.b16 %v6722, %v6720
    %v7037 = vpack.c.b16 %v6725, %v6723
    %v7038 = vpack.c.b16 %v6726, %v6724
    %v7039 = vpack.c.b16 %v6729, %v6727
    %v7040 = vpack.c.b16 %v6730, %v6728
    %v7041 = vpack.c.b16 %v6733, %v6731
    %v7042 = vpack.c.b16 %v6734, %v6732
    %v7043 = vpack.c.b16 %v6737, %v6735
    %v7044 = vpack.c.b16 %v6738, %v6736
    %v7045 = vpack.c.b16 %v6741, %v6739
    %v7046 = vpack.c.b16 %v6742, %v6740
    %v7047 = vpack.c.b16 %v6745, %v6743
    %v7048 = vpack.c.b16 %v6746, %v6744
    %v7049 = vpack.c.b16 %v6749, %v6747
    %v7050 = vpack.c.b16 %v6750, %v6748
    %v7051 = vpack.c.b16 %v6753, %v6751
    %v7052 = vpack.c.b16 %v6754, %v6752
    %v7053 = vpack.c.b16 %v6757, %v6755
    %v7054 = vpack.c.b16 %v6758, %v6756
    %v7055 = vpack.c.b16 %v6761, %v6759
    %v7056 = vpack.c.b16 %v6762, %v6760
    %v7057 = vpack.c.b16 %v6765, %v6763
    %v7058 = vpack.c.b16 %v6766, %v6764
    %v7059 = vpack.c.b16 %v6769, %v6767
    %v7060 = vpack.c.b16 %v6770, %v6768
    %v7061 = vpack.c.b16 %v6773, %v6771
    %v7062 = vpack.c.b16 %v6774, %v6772
    %v7063 = vpack.c.b16 %v6777, %v6775
    %v7064 = vpack.c.b16 %v6778, %v6776
    %v7065 = vpack.c.b16 %v6781, %v6779
    %v7066 = vpack.c.b16 %v6782, %v6780
    %v7067 = vpack.c.b16 %v6785, %v6783
    %v7068 = vpack.c.b16 %v6786, %v6784
    %v7069 = vpack.c.b16 %v6789, %v6787
    %v7070 = vpack.c.b16 %v6790, %v6788
    %v7071 = vpack.c.b16 %v6793, %v6791
    %v7072 = vpack.c.b16 %v6794, %v6792
    %v7073 = vpack.c.b16 %v6797, %v6795
    %v7074 = vpack.c.b16 %v6798, %v6796
    %v7075 = vpack.c.b16 %v6801, %v6799
    %v7076 = vpack.c.b16 %v6802, %v6800
    %v7077 = vpack.c.b16 %v6805, %v6803
    %v7078 = vpack.c.b16 %v6806, %v6804
    %v7079 = vpack.c.b16 %v6809, %v6807
    %v7080 = vpack.c.b16 %v6810, %v6808
    %v7081 = vpack.c.b16 %v6813, %v6811
    %v7082 = vpack.c.b16 %v6814, %v6812
    %v7083 = vpack.c.b16 %v6817, %v6815
    %v7084 = vpack.c.b16 %v6818, %v6816
    %v7085 = vpack.c.b16 %v6821, %v6819
    %v7086 = vpack.c.b16 %v6822, %v6820
    %v7087 = vpack.c.b16 %v6825, %v6823
    %v7088 = vpack.c.b16 %v6826, %v6824
    %v7089 = vpack.c.b16 %v6829, %v6827
    %v7090 = vpack.c.b16 %v6830, %v6828
    %v7091 = vpack.c.b16 %v6833, %v6831
    %v7092 = vpack.c.b16 %v6834, %v6832
    %v7093 = vpack.c.b16 %v6837, %v6835
    %v7094 = vpack.c.b16 %v6838, %v6836
    %7351 = vmatprep.subr.bf16.mxu0 %v6840
    %7352 = vmatpush1.bf16.msra.mxu0 %v6839
    %7353 = vmatprep.subr.bf16.mxu0 %v6842
    %7354 = vmatpush1.bf16.msra.mxu0 %v6841
    %7355 = vmatprep.subr.bf16.mxu0 %v6844
    %7356 = vmatpush1.bf16.msra.mxu0 %v6843
    %7357 = vmatprep.subr.bf16.mxu0 %v6846
    %7358 = vmatpush1.bf16.msra.mxu0 %v6845
    %7359 = vmatprep.subr.bf16.mxu0 %v6848
    %7360 = vmatpush1.bf16.msra.mxu0 %v6847
    %7361 = vmatprep.subr.bf16.mxu0 %v6850
    %7362 = vmatpush1.bf16.msra.mxu0 %v6849
    %7363 = vmatprep.subr.bf16.mxu0 %v6852
    %7364 = vmatpush1.bf16.msra.mxu0 %v6851
    %7365 = vmatprep.subr.bf16.mxu0 %v6854
    %7366 = vmatpush1.bf16.msra.mxu0 %v6853
    %7367 = vmatprep.subr.bf16.mxu0 %v6856
    %7368 = vmatpush1.bf16.msra.mxu0 %v6855
    %7369 = vmatprep.subr.bf16.mxu0 %v6858
    %7370 = vmatpush1.bf16.msra.mxu0 %v6857
    %7371 = vmatprep.subr.bf16.mxu0 %v6860
    %7372 = vmatpush1.bf16.msra.mxu0 %v6859
    %7373 = vmatprep.subr.bf16.mxu0 %v6862
    %7374 = vmatpush1.bf16.msra.mxu0 %v6861
    %7375 = vmatprep.subr.bf16.mxu0 %v6864
    %7376 = vmatpush1.bf16.msra.mxu0 %v6863
    %7377 = vmatprep.subr.bf16.mxu0 %v6866
    %7378 = vmatpush1.bf16.msra.mxu0 %v6865
    %7379 = vmatprep.subr.bf16.mxu0 %v6868
    %7380 = vmatpush1.bf16.msra.mxu0 %v6867
    %7381 = vmatprep.subr.bf16.mxu0 %v6870
    %7382 = vmatpush1.bf16.msra.mxu0 %v6869
    %7383 = vmatprep.mubr.bf16.mxu0 %v5788
    %7384 = vmatmul.mubr.bf16.gmra.mrb[0].mxu0 %v5787
    %v7385 = vpop.f32.mrb[0].mxu0
    %v7386 = vadd.f32 %v6064, %v7385
    %v7387 = vpop.f32.mrb[0].mxu0
    %v7388 = vadd.f32 %v6068, %v7387
    %v7389 = vpop.f32.mrb[0].mxu0
    %v7390 = vpop.f32.mrb[0].mxu0
    %7391 = vdwg.mxu0
    %7392 = vmatprep.subr.bf16.mxu0 %v6872
    %7393 = vmatpush1.bf16.msra.mxu0 %v6871
    %7394 = vmatprep.subr.bf16.mxu0 %v6874
    %7395 = vmatpush1.bf16.msra.mxu0 %v6873
    %7396 = vmatprep.subr.bf16.mxu0 %v6876
    %7397 = vmatpush1.bf16.msra.mxu0 %v6875
    %7398 = vmatprep.subr.bf16.mxu0 %v6878
    %7399 = vmatpush1.bf16.msra.mxu0 %v6877
    %7400 = vmatprep.subr.bf16.mxu0 %v6880
    %7401 = vmatpush1.bf16.msra.mxu0 %v6879
    %7402 = vmatprep.subr.bf16.mxu0 %v6882
    %7403 = vmatpush1.bf16.msra.mxu0 %v6881
    %7404 = vmatprep.subr.bf16.mxu0 %v6884
    %7405 = vmatpush1.bf16.msra.mxu0 %v6883
    %7406 = vmatprep.subr.bf16.mxu0 %v6886
    %7407 = vmatpush1.bf16.msra.mxu0 %v6885
    %7408 = vmatprep.subr.bf16.mxu0 %v6888
    %7409 = vmatpush1.bf16.msra.mxu0 %v6887
    %7410 = vmatprep.subr.bf16.mxu0 %v6890
    %7411 = vmatpush1.bf16.msra.mxu0 %v6889
    %7412 = vmatprep.subr.bf16.mxu0 %v6892
    %7413 = vmatpush1.bf16.msra.mxu0 %v6891
    %7414 = vmatprep.subr.bf16.mxu0 %v6894
    %7415 = vmatpush1.bf16.msra.mxu0 %v6893
    %7416 = vmatprep.subr.bf16.mxu0 %v6896
    %7417 = vmatpush1.bf16.msra.mxu0 %v6895
    %7418 = vmatprep.subr.bf16.mxu0 %v6898
    %7419 = vmatpush1.bf16.msra.mxu0 %v6897
    %7420 = vmatprep.subr.bf16.mxu0 %v6900
    %7421 = vmatpush1.bf16.msra.mxu0 %v6899
    %7422 = vmatprep.subr.bf16.mxu0 %v6902
    %7423 = vmatpush1.bf16.msra.mxu0 %v6901
    %7424 = vmatprep.mubr.bf16.mxu0 %v5790
    %7425 = vmatmul.mubr.bf16.gmra.mrb[0].mxu0 %v5789
    %v7426 = vpop.f32.mrb[0].mxu0
    %v7427 = vadd.f32 %v7386, %v7426
    %v7428 = vpop.f32.mrb[0].mxu0
    %v7429 = vadd.f32 %v7388, %v7428
    %v7430 = vpop.f32.mrb[0].mxu0
    %v7431 = vpop.f32.mrb[0].mxu0
    %7432 = vdwg.mxu0
    %7433 = vmatprep.subr.bf16.mxu0 %v6904
    %7434 = vmatpush1.bf16.msra.mxu0 %v6903
    %7435 = vmatprep.subr.bf16.mxu0 %v6906
    %7436 = vmatpush1.bf16.msra.mxu0 %v6905
    %7437 = vmatprep.subr.bf16.mxu0 %v6908
    %7438 = vmatpush1.bf16.msra.mxu0 %v6907
    %7439 = vmatprep.subr.bf16.mxu0 %v6910
    %7440 = vmatpush1.bf16.msra.mxu0 %v6909
    %7441 = vmatprep.subr.bf16.mxu0 %v6912
    %7442 = vmatpush1.bf16.msra.mxu0 %v6911
    %7443 = vmatprep.subr.bf16.mxu0 %v6914
    %7444 = vmatpush1.bf16.msra.mxu0 %v6913
    %7445 = vmatprep.subr.bf16.mxu0 %v6916
    %7446 = vmatpush1.bf16.msra.mxu0 %v6915
    %7447 = vmatprep.subr.bf16.mxu0 %v6918
    %7448 = vmatpush1.bf16.msra.mxu0 %v6917
    %7449 = vmatprep.subr.bf16.mxu0 %v6920
    %7450 = vmatpush1.bf16.msra.mxu0 %v6919
    %7451 = vmatprep.subr.bf16.mxu0 %v6922
    %7452 = vmatpush1.bf16.msra.mxu0 %v6921
    %7453 = vmatprep.subr.bf16.mxu0 %v6924
    %7454 = vmatpush1.bf16.msra.mxu0 %v6923
    %7455 = vmatprep.subr.bf16.mxu0 %v6926
    %7456 = vmatpush1.bf16.msra.mxu0 %v6925
    %7457 = vmatprep.subr.bf16.mxu0 %v6928
    %7458 = vmatpush1.bf16.msra.mxu0 %v6927
    %7459 = vmatprep.subr.bf16.mxu0 %v6930
    %7460 = vmatpush1.bf16.msra.mxu0 %v6929
    %7461 = vmatprep.subr.bf16.mxu0 %v6932
    %7462 = vmatpush1.bf16.msra.mxu0 %v6931
    %7463 = vmatprep.subr.bf16.mxu0 %v6934
    %7464 = vmatpush1.bf16.msra.mxu0 %v6933
    %7465 = vmatprep.mubr.bf16.mxu0 %v5792
    %7466 = vmatmul.mubr.bf16.gmra.mrb[0].mxu0 %v5791
    %v7467 = vpop.f32.mrb[0].mxu0
    %v7468 = vadd.f32 %v7427, %v7467
    %v7469 = vpop.f32.mrb[0].mxu0
    %v7470 = vadd.f32 %v7429, %v7469
    %v7471 = vpop.f32.mrb[0].mxu0
    %v7472 = vpop.f32.mrb[0].mxu0
    %7473 = vdwg.mxu0
    %7474 = vmatprep.subr.bf16.mxu0 %v6936
    %7475 = vmatpush1.bf16.msra.mxu0 %v6935
    %7476 = vmatprep.subr.bf16.mxu0 %v6938
    %7477 = vmatpush1.bf16.msra.mxu0 %v6937
    %7478 = vmatprep.subr.bf16.mxu0 %v6940
    %7479 = vmatpush1.bf16.msra.mxu0 %v6939
    %7480 = vmatprep.subr.bf16.mxu0 %v6942
    %7481 = vmatpush1.bf16.msra.mxu0 %v6941
    %7482 = vmatprep.subr.bf16.mxu0 %v6944
    %7483 = vmatpush1.bf16.msra.mxu0 %v6943
    %7484 = vmatprep.subr.bf16.mxu0 %v6946
    %7485 = vmatpush1.bf16.msra.mxu0 %v6945
    %7486 = vmatprep.subr.bf16.mxu0 %v6948
    %7487 = vmatpush1.bf16.msra.mxu0 %v6947
    %7488 = vmatprep.subr.bf16.mxu0 %v6950
    %7489 = vmatpush1.bf16.msra.mxu0 %v6949
    %7490 = vmatprep.subr.bf16.mxu0 %v6952
    %7491 = vmatpush1.bf16.msra.mxu0 %v6951
    %7492 = vmatprep.subr.bf16.mxu0 %v6954
    %7493 = vmatpush1.bf16.msra.mxu0 %v6953
    %7494 = vmatprep.subr.bf16.mxu0 %v6956
    %7495 = vmatpush1.bf16.msra.mxu0 %v6955
    %7496 = vmatprep.subr.bf16.mxu0 %v6958
    %7497 = vmatpush1.bf16.msra.mxu0 %v6957
    %7498 = vmatprep.subr.bf16.mxu0 %v6960
    %7499 = vmatpush1.bf16.msra.mxu0 %v6959
    %7500 = vmatprep.subr.bf16.mxu0 %v6962
    %7501 = vmatpush1.bf16.msra.mxu0 %v6961
    %7502 = vmatprep.subr.bf16.mxu0 %v6964
    %7503 = vmatpush1.bf16.msra.mxu0 %v6963
    %7504 = vmatprep.subr.bf16.mxu0 %v6966
    %7505 = vmatpush1.bf16.msra.mxu0 %v6965
    %7506 = vmatprep.mubr.bf16.mxu0 %v5794
    %7507 = vmatmul.mubr.bf16.gmra.mrb[0].mxu0 %v5793
    %v7508 = vpop.f32.mrb[0].mxu0
    %v7509 = vadd.f32 %v7468, %v7508
    %v7510 = vpop.f32.mrb[0].mxu0
    %v7511 = vadd.f32 %v7470, %v7510
    %v7512 = vpop.f32.mrb[0].mxu0
    %v7513 = vpop.f32.mrb[0].mxu0
    %7514 = vdwg.mxu0
    %7515 = vmatprep.subr.bf16.mxu0 %v6968
    %7516 = vmatpush1.bf16.msra.mxu0 %v6967
    %7517 = vmatprep.subr.bf16.mxu0 %v6970
    %7518 = vmatpush1.bf16.msra.mxu0 %v6969
    %7519 = vmatprep.subr.bf16.mxu0 %v6972
    %7520 = vmatpush1.bf16.msra.mxu0 %v6971
    %7521 = vmatprep.subr.bf16.mxu0 %v6974
    %7522 = vmatpush1.bf16.msra.mxu0 %v6973
    %7523 = vmatprep.subr.bf16.mxu0 %v6976
    %7524 = vmatpush1.bf16.msra.mxu0 %v6975
    %7525 = vmatprep.subr.bf16.mxu0 %v6978
    %7526 = vmatpush1.bf16.msra.mxu0 %v6977
    %7527 = vmatprep.subr.bf16.mxu0 %v6980
    %7528 = vmatpush1.bf16.msra.mxu0 %v6979
    %7529 = vmatprep.subr.bf16.mxu0 %v6982
    %7530 = vmatpush1.bf16.msra.mxu0 %v6981
    %7531 = vmatprep.subr.bf16.mxu0 %v6984
    %7532 = vmatpush1.bf16.msra.mxu0 %v6983
    %7533 = vmatprep.subr.bf16.mxu0 %v6986
    %7534 = vmatpush1.bf16.msra.mxu0 %v6985
    %7535 = vmatprep.subr.bf16.mxu0 %v6988
    %7536 = vmatpush1.bf16.msra.mxu0 %v6987
    %7537 = vmatprep.subr.bf16.mxu0 %v6990
    %7538 = vmatpush1.bf16.msra.mxu0 %v6989
    %7539 = vmatprep.subr.bf16.mxu0 %v6992
    %7540 = vmatpush1.bf16.msra.mxu0 %v6991
    %7541 = vmatprep.subr.bf16.mxu0 %v6994
    %7542 = vmatpush1.bf16.msra.mxu0 %v6993
    %7543 = vmatprep.subr.bf16.mxu0 %v6996
    %7544 = vmatpush1.bf16.msra.mxu0 %v6995
    %7545 = vmatprep.subr.bf16.mxu0 %v6998
    %7546 = vmatpush1.bf16.msra.mxu0 %v6997
    %7547 = vmatprep.mubr.bf16.mxu0 %v5796
    %7548 = vmatmul.mubr.bf16.gmra.mrb[0].mxu0 %v5795
    %v7549 = vpop.f32.mrb[0].mxu0
    %v7550 = vadd.f32 %v7509, %v7549
    %v7551 = vpop.f32.mrb[0].mxu0
    %v7552 = vadd.f32 %v7511, %v7551
    %v7553 = vpop.f32.mrb[0].mxu0
    %v7554 = vpop.f32.mrb[0].mxu0
    %7555 = vdwg.mxu0
    %7556 = vmatprep.subr.bf16.mxu0 %v7000
    %7557 = vmatpush1.bf16.msra.mxu0 %v6999
    %7558 = vmatprep.subr.bf16.mxu0 %v7002
    %7559 = vmatpush1.bf16.msra.mxu0 %v7001
    %7560 = vmatprep.subr.bf16.mxu0 %v7004
    %7561 = vmatpush1.bf16.msra.mxu0 %v7003
    %7562 = vmatprep.subr.bf16.mxu0 %v7006
    %7563 = vmatpush1.bf16.msra.mxu0 %v7005
    %7564 = vmatprep.subr.bf16.mxu0 %v7008
    %7565 = vmatpush1.bf16.msra.mxu0 %v7007
    %7566 = vmatprep.subr.bf16.mxu0 %v7010
    %7567 = vmatpush1.bf16.msra.mxu0 %v7009
    %7568 = vmatprep.subr.bf16.mxu0 %v7012
    %7569 = vmatpush1.bf16.msra.mxu0 %v7011
    %7570 = vmatprep.subr.bf16.mxu0 %v7014
    %7571 = vmatpush1.bf16.msra.mxu0 %v7013
    %7572 = vmatprep.subr.bf16.mxu0 %v7016
    %7573 = vmatpush1.bf16.msra.mxu0 %v7015
    %7574 = vmatprep.subr.bf16.mxu0 %v7018
    %7575 = vmatpush1.bf16.msra.mxu0 %v7017
    %7576 = vmatprep.subr.bf16.mxu0 %v7020
    %7577 = vmatpush1.bf16.msra.mxu0 %v7019
    %7578 = vmatprep.subr.bf16.mxu0 %v7022
    %7579 = vmatpush1.bf16.msra.mxu0 %v7021
    %7580 = vmatprep.subr.bf16.mxu0 %v7024
    %7581 = vmatpush1.bf16.msra.mxu0 %v7023
    %7582 = vmatprep.subr.bf16.mxu0 %v7026
    %7583 = vmatpush1.bf16.msra.mxu0 %v7025
    %7584 = vmatprep.subr.bf16.mxu0 %v7028
    %7585 = vmatpush1.bf16.msra.mxu0 %v7027
    %7586 = vmatprep.subr.bf16.mxu0 %v7030
    %7587 = vmatpush1.bf16.msra.mxu0 %v7029
    %7588 = vmatprep.mubr.bf16.mxu0 %v5798
    %7589 = vmatmul.mubr.bf16.gmra.mrb[0].mxu0 %v5797
    %v7590 = vpop.f32.mrb[0].mxu0
    %v7591 = vadd.f32 %v7550, %v7590
    %v7592 = vpop.f32.mrb[0].mxu0
    %v7593 = vadd.f32 %v7552, %v7592
    %v7594 = vpop.f32.mrb[0].mxu0
    %v7595 = vpop.f32.mrb[0].mxu0
    %7596 = vdwg.mxu0
    %7597 = vmatprep.subr.bf16.mxu0 %v7032
    %7598 = vmatpush1.bf16.msra.mxu0 %v7031
    %7599 = vmatprep.subr.bf16.mxu0 %v7034
    %7600 = vmatpush1.bf16.msra.mxu0 %v7033
    %7601 = vmatprep.subr.bf16.mxu0 %v7036
    %7602 = vmatpush1.bf16.msra.mxu0 %v7035
    %7603 = vmatprep.subr.bf16.mxu0 %v7038
    %7604 = vmatpush1.bf16.msra.mxu0 %v7037
    %7605 = vmatprep.subr.bf16.mxu0 %v7040
    %7606 = vmatpush1.bf16.msra.mxu0 %v7039
    %7607 = vmatprep.subr.bf16.mxu0 %v7042
    %7608 = vmatpush1.bf16.msra.mxu0 %v7041
    %7609 = vmatprep.subr.bf16.mxu0 %v7044
    %7610 = vmatpush1.bf16.msra.mxu0 %v7043
    %7611 = vmatprep.subr.bf16.mxu0 %v7046
    %7612 = vmatpush1.bf16.msra.mxu0 %v7045
    %7613 = vmatprep.subr.bf16.mxu0 %v7048
    %7614 = vmatpush1.bf16.msra.mxu0 %v7047
    %7615 = vmatprep.subr.bf16.mxu0 %v7050
    %7616 = vmatpush1.bf16.msra.mxu0 %v7049
    %7617 = vmatprep.subr.bf16.mxu0 %v7052
    %7618 = vmatpush1.bf16.msra.mxu0 %v7051
    %7619 = vmatprep.subr.bf16.mxu0 %v7054
    %7620 = vmatpush1.bf16.msra.mxu0 %v7053
    %7621 = vmatprep.subr.bf16.mxu0 %v7056
    %7622 = vmatpush1.bf16.msra.mxu0 %v7055
    %7623 = vmatprep.subr.bf16.mxu0 %v7058
    %7624 = vmatpush1.bf16.msra.mxu0 %v7057
    %7625 = vmatprep.subr.bf16.mxu0 %v7060
    %7626 = vmatpush1.bf16.msra.mxu0 %v7059
    %7627 = vmatprep.subr.bf16.mxu0 %v7062
    %7628 = vmatpush1.bf16.msra.mxu0 %v7061
    %7629 = vmatprep.mubr.bf16.mxu0 %v5800
    %7630 = vmatmul.mubr.bf16.gmra.mrb[0].mxu0 %v5799
    %v7631 = vpop.f32.mrb[0].mxu0
    %v7632 = vadd.f32 %v7591, %v7631
    %v7633 = vpop.f32.mrb[0].mxu0
    %v7634 = vadd.f32 %v7593, %v7633
    %v7635 = vpop.f32.mrb[0].mxu0
    %v7636 = vpop.f32.mrb[0].mxu0
    %7637 = vdwg.mxu0
    %7638 = vmatprep.subr.bf16.mxu0 %v7064
    %7639 = vmatpush1.bf16.msra.mxu0 %v7063
    %7640 = vmatprep.subr.bf16.mxu0 %v7066
    %7641 = vmatpush1.bf16.msra.mxu0 %v7065
    %7642 = vmatprep.subr.bf16.mxu0 %v7068
    %7643 = vmatpush1.bf16.msra.mxu0 %v7067
    %7644 = vmatprep.subr.bf16.mxu0 %v7070
    %7645 = vmatpush1.bf16.msra.mxu0 %v7069
    %7646 = vmatprep.subr.bf16.mxu0 %v7072
    %7647 = vmatpush1.bf16.msra.mxu0 %v7071
    %7648 = vmatprep.subr.bf16.mxu0 %v7074
    %7649 = vmatpush1.bf16.msra.mxu0 %v7073
    %7650 = vmatprep.subr.bf16.mxu0 %v7076
    %7651 = vmatpush1.bf16.msra.mxu0 %v7075
    %7652 = vmatprep.subr.bf16.mxu0 %v7078
    %7653 = vmatpush1.bf16.msra.mxu0 %v7077
    %7654 = vmatprep.subr.bf16.mxu0 %v7080
    %7655 = vmatpush1.bf16.msra.mxu0 %v7079
    %7656 = vmatprep.subr.bf16.mxu0 %v7082
    %7657 = vmatpush1.bf16.msra.mxu0 %v7081
    %7658 = vmatprep.subr.bf16.mxu0 %v7084
    %7659 = vmatpush1.bf16.msra.mxu0 %v7083
    %7660 = vmatprep.subr.bf16.mxu0 %v7086
    %7661 = vmatpush1.bf16.msra.mxu0 %v7085
    %7662 = vmatprep.subr.bf16.mxu0 %v7088
    %7663 = vmatpush1.bf16.msra.mxu0 %v7087
    %7664 = vmatprep.subr.bf16.mxu0 %v7090
    %7665 = vmatpush1.bf16.msra.mxu0 %v7089
    %7666 = vmatprep.subr.bf16.mxu0 %v7092
    %7667 = vmatpush1.bf16.msra.mxu0 %v7091
    %7668 = vmatprep.subr.bf16.mxu0 %v7094
    %7669 = vmatpush1.bf16.msra.mxu0 %v7093
    %7670 = vmatprep.mubr.bf16.mxu0 %v5802
    %7671 = vmatmul.mubr.bf16.gmra.mrb[0].mxu0 %v5801
    %v7672 = vpop.f32.mrb[0].mxu0
    %v7673 = vadd.f32 %v7632, %v7672
    %v7674 = vpop.f32.mrb[0].mxu0
    %v7675 = vadd.f32 %v7634, %v7674
    %v7676 = vpop.f32.mrb[0].mxu0
    %v7677 = vpop.f32.mrb[0].mxu0
    %7678 = vdwg.mxu0
    %v7679 = vpack.c.bf16 %v7673, %v7673
    %v7680 = vpack.c.bf16 %v7675, %v7675
    %v7683 = vunpack.c.l.b16 %v7679
    %v7684 = vunpack.c.l.b16 %v7680
    %v7685 = vpack.c.b16 %v7684, %v7683
    %7687 = vst [vmem:[%s5] sm:$0xff] %v7685
    // Predicated region
    $region38: #{detr_forward.3} parent=1 // pred_check
      _
    $region39: #{detr_forward.3} parent=1 // pred_check_branch
      %7689 = sbr.rel (0) target = $region41
    $region40: #{detr_forward.3} parent=1 // pred_region
      _
    $region41: #{detr_forward.3} parent=1 // pred_fallthru
      _
    // Predicated region
    $region42: #{detr_forward.3} parent=1 // pred_check
      _
    $region43: #{detr_forward.3} parent=1 // pred_check_branch
      %7691 = sbr.rel (0) target = $region45
    $region44: #{detr_forward.3} parent=1 // pred_region
      _
    $region45: #{detr_forward.3} parent=1 // pred_fallthru
      _
    %7692 = vsyncpa [#allocation3], 1
    %7693 = vsyncpa [#allocation5], 1
    %7694 = vsyncpa [#allocation8], 1

</llo_original>
